<compile_context>
chip_gen: v7x
topology: tpu7x:2x2x1
jax: 0.10.0
libtpu: 0.0.40
codegen_flags: <defaults>
</compile_context>

<pallas_src>
import functools

import jax
import jax.numpy as jnp
from jax.experimental import pallas as pl
from jax.experimental.pallas import tpu as pltpu


# ---------------------------------------------------------------------------
# Kernel 1: fused conv3x3(pad=1) + bias + ReLU + 2x2 max-pool, batch-folded.
#   patches: (4, K, B*N)   quadrant q = yi*2+xi of the 2x2 pool window,
#                          K = Cin*9 (row = cin*9 + dy*3 + dx),
#                          column = b*N + yo*Wo + xo  (pooled output position)
#   One MXU dot per quadrant; the pool is an elementwise max of the 4 results
#   (bias-add and ReLU commute with max, so they are applied once at the end).
# ---------------------------------------------------------------------------

def _conv_pool_kernel(patches_ref, w_ref, b_ref, o_ref):
    # patches_ref: (4, K, N) bf16   w_ref: (Cout, K) bf16
    # b_ref: (Cout, 1) f32          o_ref: (Cout, N) bf16
    w = w_ref[...]
    m = jnp.dot(w, patches_ref[0], preferred_element_type=jnp.float32)
    for q in range(1, 4):
        m = jnp.maximum(m, jnp.dot(w, patches_ref[q],
                                   preferred_element_type=jnp.float32))
    o_ref[...] = jnp.maximum(m + b_ref[...], 0.0).astype(o_ref.dtype)


def conv3x3_relu_pool(patches, w_mat, b_col):
    """patches: (4, K, N) bf16, w_mat: (Cout, K) bf16, b_col: (Cout, 1) f32
    -> (Cout, N) bf16 with N = B * pooled_spatial (lane-dense, >=128)."""
    _, K, N = patches.shape
    Cout = w_mat.shape[0]
    # Whole (small) batch in one grid step; for large batches tile the last
    # axis over batch blocks (and mark the axis "parallel" for megacore).
    return pl.pallas_call(
        _conv_pool_kernel,
        out_shape=jax.ShapeDtypeStruct((Cout, N), jnp.bfloat16),
        grid=(1,),
        in_specs=[
            pl.BlockSpec((4, K, N), lambda i: (0, 0, 0)),
            pl.BlockSpec((Cout, K), lambda i: (0, 0)),
            pl.BlockSpec((Cout, 1), lambda i: (0, 0)),
        ],
        out_specs=pl.BlockSpec((Cout, N), lambda i: (0, 0)),
        compiler_params=pltpu.CompilerParams(
            dimension_semantics=("arbitrary",)),
    )(patches, w_mat, b_col)


# ---------------------------------------------------------------------------
# Kernel 2: fused fc1 + ReLU + fc2 + ReLU + fc3, single launch.
# fc1/fc2 weights arrive as int8 (K, N) with per-column f32 scales; fc3 is
# bf16.  Intermediates (B,1024)/(B,512) never leave VMEM; accumulation is f32.
# ---------------------------------------------------------------------------

def _fc_fused_kernel(x_ref, w1_ref, s1_ref, b1_ref,
                     w2_ref, s2_ref, b2_ref, w3_ref, b3_ref, o_ref):
    x = x_ref[...]                                            # bf16 (M, 1568)
    h = jnp.dot(x, w1_ref[...].astype(jnp.bfloat16),
                preferred_element_type=jnp.float32)
    h = jnp.maximum(h * s1_ref[...] + b1_ref[...], 0.0)
    h = jnp.dot(h.astype(jnp.bfloat16), w2_ref[...].astype(jnp.bfloat16),
                preferred_element_type=jnp.float32)
    h = jnp.maximum(h * s2_ref[...] + b2_ref[...], 0.0)
    h = jnp.dot(h.astype(jnp.bfloat16), w3_ref[...],
                preferred_element_type=jnp.float32)
    o_ref[...] = h + b3_ref[...]


def fc_fused(x_bf16, params):
    M, K = x_bf16.shape
    w1, s1, b1 = params["fc1_wq"], params["fc1_s"], params["fc1_bp"]
    w2, s2, b2 = params["fc2_wq"], params["fc2_s"], params["fc2_bp"]
    w3, b3 = params["fc3_wt"], params["fc3_bp"]
    N1, N2, N3 = w1.shape[1], w2.shape[1], w3.shape[1]

    flops = 2 * M * (K * N1 + N1 * N2 + N2 * N3)
    bytes_accessed = int(sum(a.size * jnp.dtype(a.dtype).itemsize
                             for a in (x_bf16, w1, s1, b1, w2, s2, b2, w3, b3))
                         + M * N3 * 4)

    return pl.pallas_call(
        _fc_fused_kernel,
        out_shape=jax.ShapeDtypeStruct((M, N3), jnp.float32),
        grid=(1,),
        in_specs=[
            pl.BlockSpec((M, K), lambda i: (0, 0)),
            pl.BlockSpec((K, N1), lambda i: (0, 0)),
            pl.BlockSpec((1, N1), lambda i: (0, 0)),
            pl.BlockSpec((1, N1), lambda i: (0, 0)),
            pl.BlockSpec((N1, N2), lambda i: (0, 0)),
            pl.BlockSpec((1, N2), lambda i: (0, 0)),
            pl.BlockSpec((1, N2), lambda i: (0, 0)),
            pl.BlockSpec((N2, N3), lambda i: (0, 0)),
            pl.BlockSpec((1, N3), lambda i: (0, 0)),
        ],
        out_specs=pl.BlockSpec((M, N3), lambda i: (0, 0)),
        compiler_params=pltpu.CompilerParams(
            dimension_semantics=("arbitrary",)),
        cost_estimate=pl.CostEstimate(flops=flops, transcendentals=0,
                                      bytes_accessed=bytes_accessed),
    )(x_bf16, w1, s1, b1, w2, s2, b2, w3, b3)


# ---------------------------------------------------------------------------
# Layout glue (cheap, XLA-side): quadrant-ordered im2col for a 3x3/pad-1 conv
# followed by a 2x2/stride-2 max-pool, with the batch folded into the last
# (lane) axis.  Input layout is (C, B, H, W) so the conv kernel's output
# (Cout, B*Ho*Wo) can be reinterpreted as (Cout, B, Ho, Wo) by a pure bitcast.
# ---------------------------------------------------------------------------

def _im2col_pool_quadrants(x_cbhw, dtype=jnp.bfloat16):
    """x: (C, B, H, W), H and W even -> (4, 9*C, B*(H//2)*(W//2)) in `dtype`.
    Row order: c*9 + dy*3 + dx.  Column order: b*(Ho*Wo) + yo*Wo + xo."""
    C, B, H, W = x_cbhw.shape
    Ho, Wo = H // 2, W // 2
    xp = jnp.pad(x_cbhw, ((0, 0), (0, 0), (1, 1), (1, 1)))
    quads = []
    for yi in range(2):
        for xi in range(2):
            taps = []
            for dy in range(3):
                for dx in range(3):
                    sl = xp[:, :, yi + dy:yi + dy + H:2, xi + dx:xi + dx + W:2]
                    taps.append(sl.reshape(C, 1, B, Ho * Wo))
            q = jnp.concatenate(taps, axis=1)                 # (C, 9, B, Ho*Wo)
            quads.append(q.reshape(1, C * 9, B * Ho * Wo))
    return jnp.concatenate(quads, axis=0).astype(dtype)       # (4, 9C, B*Ho*Wo)


# ---------------------------------------------------------------------------
# Full model forward
# ---------------------------------------------------------------------------

def nepali_cnn_forward(x_nchw, params, *, num_classes):
    B = x_nchw.shape[0]

    # conv1 + ReLU + pool1 -> (16, B*196) bf16, lane = b*196 + y*14 + x.
    # (B,1,28,28) -> (1,B,28,28) is a pure reshape (channel dim is 1).
    p1 = _im2col_pool_quadrants(
        x_nchw.astype(jnp.float32).reshape(1, B, 28, 28))     # (4, 9, B*196)
    a1 = conv3x3_relu_pool(p1, params["conv1_wm"], params["conv1_bc"])

    # conv2 + ReLU + pool2 -> (32, B*49) bf16.
    p2 = _im2col_pool_quadrants(a1.reshape(16, B, 14, 14))    # (4, 144, B*49)
    a2 = conv3x3_relu_pool(p2, params["conv2_wm"], params["conv2_bc"])

    # Per-sample CHW flatten -> (B, 1568) bf16 (one small XLA transpose).
    flat = jnp.transpose(a2.reshape(32, B, 49), (1, 0, 2)).reshape(B, 32 * 49)

    # fc1 + ReLU + fc2 + ReLU + fc3, fused single launch.
    m_pad = (-B) % 8
    if m_pad:
        flat = jnp.pad(flat, ((0, m_pad), (0, 0)))
    logits = fc_fused(flat, params)
    return logits[:B, :num_classes]


# ---------------------------------------------------------------------------
# Parameters: PyTorch-shaped init + one-time TPU layout preparation
# ---------------------------------------------------------------------------

def init_params(key, num_classes):
    """Synthetic parameters with the exact shapes of the PyTorch module."""
    ks = jax.random.split(key, 10)

    def u(k, shape, fan_in):
        bound = 1.0 / float(fan_in) ** 0.5
        return jax.random.uniform(k, shape, jnp.float32, -bound, bound)

    return dict(
        conv1_w=u(ks[0], (16, 1, 3, 3), 9),
        conv1_b=u(ks[1], (16,), 9),
        conv2_w=u(ks[2], (32, 16, 3, 3), 16 * 9),
        conv2_b=u(ks[3], (32,), 16 * 9),
        fc1_w=u(ks[4], (1000, 1568), 1568),
        fc1_b=u(ks[5], (1000,), 1568),
        fc2_w=u(ks[6], (500, 1000), 1000),
        fc2_b=u(ks[7], (500,), 1000),
        fc3_w=u(ks[8], (num_classes, 500), 500),
        fc3_b=u(ks[9], (num_classes,), 500),
    )


def _pad_to(x, axis, mult):
    pad = (-x.shape[axis]) % mult
    if pad == 0:
        return x
    widths = [(0, 0)] * x.ndim
    widths[axis] = (0, pad)
    return jnp.pad(x, widths)


def _quantize_int8_cols(w):
    """Symmetric per-output-channel int8 quantization of a (K, N) weight."""
    amax = jnp.max(jnp.abs(w), axis=0, keepdims=True)          # (1, N)
    scale = jnp.where(amax > 0, amax / 127.0, 1.0)
    wq = jnp.clip(jnp.round(w / scale), -127, 127).astype(jnp.int8)
    return wq, scale.astype(jnp.float32)


def prepare_params(p, *, quantize_fc=True):
    """One-time layout prep (outside the jitted forward):
    - conv weights -> (Cout, 9*Cin) bf16 matmul form, biases -> (Cout, 1) f32
    - FC weights pre-transposed to (K, N), N (and K where needed) zero-padded
      to multiples of 128; fc1/fc2 quantized to int8 + per-column f32 scale
      (padding stays exactly zero), fc3 kept bf16; biases zero-padded f32."""
    out = {
        "conv1_wm": p["conv1_w"].reshape(16, 9).astype(jnp.bfloat16),
        "conv1_bc": p["conv1_b"].reshape(16, 1).astype(jnp.float32),
        "conv2_wm": p["conv2_w"].reshape(32, 16 * 9).astype(jnp.bfloat16),
        "conv2_bc": p["conv2_b"].reshape(32, 1).astype(jnp.float32),
    }
    w1 = _pad_to(p["fc1_w"].T, 1, 128)                          # (1568, 1024)
    w2 = _pad_to(_pad_to(p["fc2_w"].T, 0, 128), 1, 128)         # (1024, 512)
    w3 = _pad_to(_pad_to(p["fc3_w"].T, 0, 128), 1, 128)         # (512, 128)
    if quantize_fc:
        out["fc1_wq"], out["fc1_s"] = _quantize_int8_cols(w1)
        out["fc2_wq"], out["fc2_s"] = _quantize_int8_cols(w2)
    else:  # bf16 fallback; the kernel's astype(bf16) becomes a no-op.
        out["fc1_wq"] = w1.astype(jnp.bfloat16)
        out["fc1_s"] = jnp.ones((1, w1.shape[1]), jnp.float32)
        out["fc2_wq"] = w2.astype(jnp.bfloat16)
        out["fc2_s"] = jnp.ones((1, w2.shape[1]), jnp.float32)
    out["fc3_wt"] = w3.astype(jnp.bfloat16)
    out["fc1_bp"] = _pad_to(p["fc1_b"], 0, 128).reshape(1, -1).astype(jnp.float32)
    out["fc2_bp"] = _pad_to(p["fc2_b"], 0, 128).reshape(1, -1).astype(jnp.float32)
    out["fc3_bp"] = _pad_to(p["fc3_b"], 0, 128).reshape(1, -1).astype(jnp.float32)
    return out


if __name__ == "__main__":
    num_classes = 46
    batch = 8   # multiple of 8 so FC rows need no padding; 28x28 spatial is
                # forced by fc1.in_features = 1568 = 32*7*7.

    key = jax.random.PRNGKey(0)
    k_params, k_x = jax.random.split(key)
    params = prepare_params(init_params(k_params, num_classes))
    x = jax.random.normal(k_x, (batch, 1, 28, 28), dtype=jnp.float32)

    fwd = jax.jit(functools.partial(nepali_cnn_forward, num_classes=num_classes))
    out = jax.block_until_ready(fwd(x, params))
    assert out.shape == (batch, num_classes), out.shape
    print("KERNEL_OK")
</pallas_src>

<mosaic_0001>
module attributes {stable_mosaic.version = 11 : i64} {
  func.func @_conv_pool_kernel(%arg0: i32, %arg1: memref<4x9x1568xbf16, #tpu.memory_space<vmem>>, %arg2: memref<16x9xbf16, #tpu.memory_space<vmem>>, %arg3: memref<16x1xf32, #tpu.memory_space<vmem>>, %arg4: memref<16x1568xbf16, #tpu.memory_space<vmem>>) attributes {dimension_semantics = [#tpu.dimension_semantics<arbitrary>], iteration_bounds = array<i64: 1>, scalar_prefetch = 0 : i64, scratch_operands = 0 : i64, tpu.core_type = #tpu.core_type<tc>, window_params = [{pipeline_mode = #tpu.pipeline_mode<synchronous>, transform_indices = @transform_0, window_bounds = array<i64: 4, 9, 1568>}, {pipeline_mode = #tpu.pipeline_mode<synchronous>, transform_indices = @transform_1, window_bounds = array<i64: 16, 9>}, {pipeline_mode = #tpu.pipeline_mode<synchronous>, transform_indices = @transform_2, window_bounds = array<i64: 16, 1>}, {pipeline_mode = #tpu.pipeline_mode<synchronous>, transform_indices = @transform_3, window_bounds = array<i64: 16, 1568>}]} {
    %c0 = arith.constant 0 : index
    %c0_0 = arith.constant 0 : index
    %0 = vector.load %arg2[%c0, %c0_0] : memref<16x9xbf16, #tpu.memory_space<vmem>>, vector<16x9xbf16>
    %c0_1 = arith.constant 0 : index
    %c0_2 = arith.constant 0 : index
    %c0_3 = arith.constant 0 : index
    %1 = vector.load %arg1[%c0_1, %c0_2, %c0_3] : memref<4x9x1568xbf16, #tpu.memory_space<vmem>>, vector<1x9x1568xbf16>
    %2 = vector.shape_cast %1 : vector<1x9x1568xbf16> to vector<9x1568xbf16>
    %cst = arith.constant dense<0.000000e+00> : vector<16x1568xf32>
    %3 = tpu.matmul %0, %2, %cst {dimension_numbers = #tpu.dot_dimension_numbers<[1], [0], [0], [1], [0, 0, 1, 1], [], []>} : vector<16x9xbf16>, vector<9x1568xbf16>, vector<16x1568xf32> -> vector<16x1568xf32>
    %c1 = arith.constant 1 : index
    %c0_4 = arith.constant 0 : index
    %c0_5 = arith.constant 0 : index
    %4 = vector.load %arg1[%c1, %c0_4, %c0_5] : memref<4x9x1568xbf16, #tpu.memory_space<vmem>>, vector<1x9x1568xbf16>
    %5 = vector.shape_cast %4 : vector<1x9x1568xbf16> to vector<9x1568xbf16>
    %cst_6 = arith.constant dense<0.000000e+00> : vector<16x1568xf32>
    %6 = tpu.matmul %0, %5, %cst_6 {dimension_numbers = #tpu.dot_dimension_numbers<[1], [0], [0], [1], [0, 0, 1, 1], [], []>} : vector<16x9xbf16>, vector<9x1568xbf16>, vector<16x1568xf32> -> vector<16x1568xf32>
    %7 = arith.maximumf %3, %6 : vector<16x1568xf32>
    %c2 = arith.constant 2 : index
    %c0_7 = arith.constant 0 : index
    %c0_8 = arith.constant 0 : index
    %8 = vector.load %arg1[%c2, %c0_7, %c0_8] : memref<4x9x1568xbf16, #tpu.memory_space<vmem>>, vector<1x9x1568xbf16>
    %9 = vector.shape_cast %8 : vector<1x9x1568xbf16> to vector<9x1568xbf16>
    %cst_9 = arith.constant dense<0.000000e+00> : vector<16x1568xf32>
    %10 = tpu.matmul %0, %9, %cst_9 {dimension_numbers = #tpu.dot_dimension_numbers<[1], [0], [0], [1], [0, 0, 1, 1], [], []>} : vector<16x9xbf16>, vector<9x1568xbf16>, vector<16x1568xf32> -> vector<16x1568xf32>
    %11 = arith.maximumf %7, %10 : vector<16x1568xf32>
    %c3 = arith.constant 3 : index
    %c0_10 = arith.constant 0 : index
    %c0_11 = arith.constant 0 : index
    %12 = vector.load %arg1[%c3, %c0_10, %c0_11] : memref<4x9x1568xbf16, #tpu.memory_space<vmem>>, vector<1x9x1568xbf16>
    %13 = vector.shape_cast %12 : vector<1x9x1568xbf16> to vector<9x1568xbf16>
    %cst_12 = arith.constant dense<0.000000e+00> : vector<16x1568xf32>
    %14 = tpu.matmul %0, %13, %cst_12 {dimension_numbers = #tpu.dot_dimension_numbers<[1], [0], [0], [1], [0, 0, 1, 1], [], []>} : vector<16x9xbf16>, vector<9x1568xbf16>, vector<16x1568xf32> -> vector<16x1568xf32>
    %15 = arith.maximumf %11, %14 : vector<16x1568xf32>
    %c0_13 = arith.constant 0 : index
    %c0_14 = arith.constant 0 : index
    %16 = vector.load %arg3[%c0_13, %c0_14] : memref<16x1xf32, #tpu.memory_space<vmem>>, vector<16x1xf32>
    %17 = vector.broadcast %16 : vector<16x1xf32> to vector<16x1568xf32>
    %18 = arith.addf %15, %17 : vector<16x1568xf32>
    %cst_15 = arith.constant 0.000000e+00 : f32
    %19 = vector.broadcast %cst_15 : f32 to vector<16x1568xf32>
    %20 = arith.maximumf %18, %19 : vector<16x1568xf32>
    %21 = arith.truncf %20 : vector<16x1568xf32> to vector<16x1568xbf16>
    %c0_16 = arith.constant 0 : index
    %c0_17 = arith.constant 0 : index
    %22 = vector.load %arg4[%c0_16, %c0_17] : memref<16x1568xbf16, #tpu.memory_space<vmem>>, vector<16x1568xbf16>
    tpu.vector_store %arg4[%c0_16, %c0_17], %21 {strides = array<i32>} : memref<16x1568xbf16, #tpu.memory_space<vmem>>, vector<16x1568xbf16>,
    return
  }
  func.func @transform_0(%arg0: i32) -> (i32, i32, i32) {
    %c0_i32 = arith.constant 0 : i32
    %c0_i32_0 = arith.constant 0 : i32
    %c0_i32_1 = arith.constant 0 : i32
    %c0_i32_2 = arith.constant 0 : i32
    return %c0_i32, %c0_i32_0, %c0_i32_1 : i32, i32, i32
  }
  func.func @transform_1(%arg0: i32) -> (i32, i32) {
    %c0_i32 = arith.constant 0 : i32
    %c0_i32_0 = arith.constant 0 : i32
    %c0_i32_1 = arith.constant 0 : i32
    return %c0_i32, %c0_i32_0 : i32, i32
  }
  func.func @transform_2(%arg0: i32) -> (i32, i32) {
    %c0_i32 = arith.constant 0 : i32
    %c0_i32_0 = arith.constant 0 : i32
    %c0_i32_1 = arith.constant 0 : i32
    return %c0_i32, %c0_i32_0 : i32, i32
  }
  func.func @transform_3(%arg0: i32) -> (i32, i32) {
    %c0_i32 = arith.constant 0 : i32
    %c0_i32_0 = arith.constant 0 : i32
    %c0_i32_1 = arith.constant 0 : i32
    return %c0_i32, %c0_i32_0 : i32, i32
  }
}

module attributes {stable_mosaic.version = 11 : i64} {
  func.func @_conv_pool_kernel(%arg0: i32, %arg1: memref<4x144x392xbf16, #tpu.memory_space<vmem>>, %arg2: memref<32x144xbf16, #tpu.memory_space<vmem>>, %arg3: memref<32x1xf32, #tpu.memory_space<vmem>>, %arg4: memref<32x392xbf16, #tpu.memory_space<vmem>>) attributes {dimension_semantics = [#tpu.dimension_semantics<arbitrary>], iteration_bounds = array<i64: 1>, scalar_prefetch = 0 : i64, scratch_operands = 0 : i64, tpu.core_type = #tpu.core_type<tc>, window_params = [{pipeline_mode = #tpu.pipeline_mode<synchronous>, transform_indices = @transform_0, window_bounds = array<i64: 4, 144, 392>}, {pipeline_mode = #tpu.pipeline_mode<synchronous>, transform_indices = @transform_1, window_bounds = array<i64: 32, 144>}, {pipeline_mode = #tpu.pipeline_mode<synchronous>, transform_indices = @transform_2, window_bounds = array<i64: 32, 1>}, {pipeline_mode = #tpu.pipeline_mode<synchronous>, transform_indices = @transform_3, window_bounds = array<i64: 32, 392>}]} {
    %c0 = arith.constant 0 : index
    %c0_0 = arith.constant 0 : index
    %0 = vector.load %arg2[%c0, %c0_0] : memref<32x144xbf16, #tpu.memory_space<vmem>>, vector<32x144xbf16>
    %c0_1 = arith.constant 0 : index
    %c0_2 = arith.constant 0 : index
    %c0_3 = arith.constant 0 : index
    %1 = vector.load %arg1[%c0_1, %c0_2, %c0_3] : memref<4x144x392xbf16, #tpu.memory_space<vmem>>, vector<1x144x392xbf16>
    %2 = vector.shape_cast %1 : vector<1x144x392xbf16> to vector<144x392xbf16>
    %cst = arith.constant dense<0.000000e+00> : vector<32x392xf32>
    %3 = tpu.matmul %0, %2, %cst {dimension_numbers = #tpu.dot_dimension_numbers<[1], [0], [0], [1], [0, 0, 1, 1], [], []>} : vector<32x144xbf16>, vector<144x392xbf16>, vector<32x392xf32> -> vector<32x392xf32>
    %c1 = arith.constant 1 : index
    %c0_4 = arith.constant 0 : index
    %c0_5 = arith.constant 0 : index
    %4 = vector.load %arg1[%c1, %c0_4, %c0_5] : memref<4x144x392xbf16, #tpu.memory_space<vmem>>, vector<1x144x392xbf16>
    %5 = vector.shape_cast %4 : vector<1x144x392xbf16> to vector<144x392xbf16>
    %cst_6 = arith.constant dense<0.000000e+00> : vector<32x392xf32>
    %6 = tpu.matmul %0, %5, %cst_6 {dimension_numbers = #tpu.dot_dimension_numbers<[1], [0], [0], [1], [0, 0, 1, 1], [], []>} : vector<32x144xbf16>, vector<144x392xbf16>, vector<32x392xf32> -> vector<32x392xf32>
    %7 = arith.maximumf %3, %6 : vector<32x392xf32>
    %c2 = arith.constant 2 : index
    %c0_7 = arith.constant 0 : index
    %c0_8 = arith.constant 0 : index
    %8 = vector.load %arg1[%c2, %c0_7, %c0_8] : memref<4x144x392xbf16, #tpu.memory_space<vmem>>, vector<1x144x392xbf16>
    %9 = vector.shape_cast %8 : vector<1x144x392xbf16> to vector<144x392xbf16>
    %cst_9 = arith.constant dense<0.000000e+00> : vector<32x392xf32>
    %10 = tpu.matmul %0, %9, %cst_9 {dimension_numbers = #tpu.dot_dimension_numbers<[1], [0], [0], [1], [0, 0, 1, 1], [], []>} : vector<32x144xbf16>, vector<144x392xbf16>, vector<32x392xf32> -> vector<32x392xf32>
    %11 = arith.maximumf %7, %10 : vector<32x392xf32>
    %c3 = arith.constant 3 : index
    %c0_10 = arith.constant 0 : index
    %c0_11 = arith.constant 0 : index
    %12 = vector.load %arg1[%c3, %c0_10, %c0_11] : memref<4x144x392xbf16, #tpu.memory_space<vmem>>, vector<1x144x392xbf16>
    %13 = vector.shape_cast %12 : vector<1x144x392xbf16> to vector<144x392xbf16>
    %cst_12 = arith.constant dense<0.000000e+00> : vector<32x392xf32>
    %14 = tpu.matmul %0, %13, %cst_12 {dimension_numbers = #tpu.dot_dimension_numbers<[1], [0], [0], [1], [0, 0, 1, 1], [], []>} : vector<32x144xbf16>, vector<144x392xbf16>, vector<32x392xf32> -> vector<32x392xf32>
    %15 = arith.maximumf %11, %14 : vector<32x392xf32>
    %c0_13 = arith.constant 0 : index
    %c0_14 = arith.constant 0 : index
    %16 = vector.load %arg3[%c0_13, %c0_14] : memref<32x1xf32, #tpu.memory_space<vmem>>, vector<32x1xf32>
    %17 = vector.broadcast %16 : vector<32x1xf32> to vector<32x392xf32>
    %18 = arith.addf %15, %17 : vector<32x392xf32>
    %cst_15 = arith.constant 0.000000e+00 : f32
    %19 = vector.broadcast %cst_15 : f32 to vector<32x392xf32>
    %20 = arith.maximumf %18, %19 : vector<32x392xf32>
    %21 = arith.truncf %20 : vector<32x392xf32> to vector<32x392xbf16>
    %c0_16 = arith.constant 0 : index
    %c0_17 = arith.constant 0 : index
    %22 = vector.load %arg4[%c0_16, %c0_17] : memref<32x392xbf16, #tpu.memory_space<vmem>>, vector<32x392xbf16>
    tpu.vector_store %arg4[%c0_16, %c0_17], %21 {strides = array<i32>} : memref<32x392xbf16, #tpu.memory_space<vmem>>, vector<32x392xbf16>,
    return
  }
  func.func @transform_0(%arg0: i32) -> (i32, i32, i32) {
    %c0_i32 = arith.constant 0 : i32
    %c0_i32_0 = arith.constant 0 : i32
    %c0_i32_1 = arith.constant 0 : i32
    %c0_i32_2 = arith.constant 0 : i32
    return %c0_i32, %c0_i32_0, %c0_i32_1 : i32, i32, i32
  }
  func.func @transform_1(%arg0: i32) -> (i32, i32) {
    %c0_i32 = arith.constant 0 : i32
    %c0_i32_0 = arith.constant 0 : i32
    %c0_i32_1 = arith.constant 0 : i32
    return %c0_i32, %c0_i32_0 : i32, i32
  }
  func.func @transform_2(%arg0: i32) -> (i32, i32) {
    %c0_i32 = arith.constant 0 : i32
    %c0_i32_0 = arith.constant 0 : i32
    %c0_i32_1 = arith.constant 0 : i32
    return %c0_i32, %c0_i32_0 : i32, i32
  }
  func.func @transform_3(%arg0: i32) -> (i32, i32) {
    %c0_i32 = arith.constant 0 : i32
    %c0_i32_0 = arith.constant 0 : i32
    %c0_i32_1 = arith.constant 0 : i32
    return %c0_i32, %c0_i32_0 : i32, i32
  }
}

module attributes {stable_mosaic.version = 11 : i64} {
  func.func @_fc_fused_kernel(%arg0: i32, %arg1: memref<8x1568xbf16, #tpu.memory_space<vmem>>, %arg2: memref<1568x1024xi8, #tpu.memory_space<vmem>>, %arg3: memref<1x1024xf32, #tpu.memory_space<vmem>>, %arg4: memref<1x1024xf32, #tpu.memory_space<vmem>>, %arg5: memref<1024x512xi8, #tpu.memory_space<vmem>>, %arg6: memref<1x512xf32, #tpu.memory_space<vmem>>, %arg7: memref<1x512xf32, #tpu.memory_space<vmem>>, %arg8: memref<512x128xbf16, #tpu.memory_space<vmem>>, %arg9: memref<1x128xf32, #tpu.memory_space<vmem>>, %arg10: memref<8x128xf32, #tpu.memory_space<vmem>>) attributes {dimension_semantics = [#tpu.dimension_semantics<arbitrary>], iteration_bounds = array<i64: 1>, scalar_prefetch = 0 : i64, scratch_operands = 0 : i64, tpu.core_type = #tpu.core_type<tc>, window_params = [{pipeline_mode = #tpu.pipeline_mode<synchronous>, transform_indices = @transform_0, window_bounds = array<i64: 8, 1568>}, {pipeline_mode = #tpu.pipeline_mode<synchronous>, transform_indices = @transform_1, window_bounds = array<i64: 1568, 1024>}, {pipeline_mode = #tpu.pipeline_mode<synchronous>, transform_indices = @transform_2, window_bounds = array<i64: 1, 1024>}, {pipeline_mode = #tpu.pipeline_mode<synchronous>, transform_indices = @transform_3, window_bounds = array<i64: 1, 1024>}, {pipeline_mode = #tpu.pipeline_mode<synchronous>, transform_indices = @transform_4, window_bounds = array<i64: 1024, 512>}, {pipeline_mode = #tpu.pipeline_mode<synchronous>, transform_indices = @transform_5, window_bounds = array<i64: 1, 512>}, {pipeline_mode = #tpu.pipeline_mode<synchronous>, transform_indices = @transform_6, window_bounds = array<i64: 1, 512>}, {pipeline_mode = #tpu.pipeline_mode<synchronous>, transform_indices = @transform_7, window_bounds = array<i64: 512, 128>}, {pipeline_mode = #tpu.pipeline_mode<synchronous>, transform_indices = @transform_8, window_bounds = array<i64: 1, 128>}, {pipeline_mode = #tpu.pipeline_mode<synchronous>, transform_indices = @transform_9, window_bounds = array<i64: 8, 128>}]} {
    %c0 = arith.constant 0 : index
    %c0_0 = arith.constant 0 : index
    %0 = vector.load %arg1[%c0, %c0_0] : memref<8x1568xbf16, #tpu.memory_space<vmem>>, vector<8x1568xbf16>
    %c0_1 = arith.constant 0 : index
    %c0_2 = arith.constant 0 : index
    %1 = vector.load %arg2[%c0_1, %c0_2] : memref<1568x1024xi8, #tpu.memory_space<vmem>>, vector<1568x1024xi8>
    %2 = arith.sitofp %1 : vector<1568x1024xi8> to vector<1568x1024xbf16>
    %cst = arith.constant dense<0.000000e+00> : vector<8x1024xf32>
    %3 = tpu.matmul %0, %2, %cst {dimension_numbers = #tpu.dot_dimension_numbers<[1], [0], [0], [1], [0, 0, 1, 1], [], []>} : vector<8x1568xbf16>, vector<1568x1024xbf16>, vector<8x1024xf32> -> vector<8x1024xf32>
    %c0_3 = arith.constant 0 : index
    %c0_4 = arith.constant 0 : index
    %4 = vector.load %arg3[%c0_3, %c0_4] : memref<1x1024xf32, #tpu.memory_space<vmem>>, vector<1x1024xf32>
    %5 = vector.broadcast %4 : vector<1x1024xf32> to vector<8x1024xf32>
    %6 = arith.mulf %3, %5 : vector<8x1024xf32>
    %c0_5 = arith.constant 0 : index
    %c0_6 = arith.constant 0 : index
    %7 = vector.load %arg4[%c0_5, %c0_6] : memref<1x1024xf32, #tpu.memory_space<vmem>>, vector<1x1024xf32>
    %8 = vector.broadcast %7 : vector<1x1024xf32> to vector<8x1024xf32>
    %9 = arith.addf %6, %8 : vector<8x1024xf32>
    %cst_7 = arith.constant 0.000000e+00 : f32
    %10 = vector.broadcast %cst_7 : f32 to vector<8x1024xf32>
    %11 = arith.maximumf %9, %10 : vector<8x1024xf32>
    %12 = arith.truncf %11 : vector<8x1024xf32> to vector<8x1024xbf16>
    %c0_8 = arith.constant 0 : index
    %c0_9 = arith.constant 0 : index
    %13 = vector.load %arg5[%c0_8, %c0_9] : memref<1024x512xi8, #tpu.memory_space<vmem>>, vector<1024x512xi8>
    %14 = arith.sitofp %13 : vector<1024x512xi8> to vector<1024x512xbf16>
    %cst_10 = arith.constant dense<0.000000e+00> : vector<8x512xf32>
    %15 = tpu.matmul %12, %14, %cst_10 {dimension_numbers = #tpu.dot_dimension_numbers<[1], [0], [0], [1], [0, 0, 1, 1], [], []>} : vector<8x1024xbf16>, vector<1024x512xbf16>, vector<8x512xf32> -> vector<8x512xf32>
    %c0_11 = arith.constant 0 : index
    %c0_12 = arith.constant 0 : index
    %16 = vector.load %arg6[%c0_11, %c0_12] : memref<1x512xf32, #tpu.memory_space<vmem>>, vector<1x512xf32>
    %17 = vector.broadcast %16 : vector<1x512xf32> to vector<8x512xf32>
    %18 = arith.mulf %15, %17 : vector<8x512xf32>
    %c0_13 = arith.constant 0 : index
    %c0_14 = arith.constant 0 : index
    %19 = vector.load %arg7[%c0_13, %c0_14] : memref<1x512xf32, #tpu.memory_space<vmem>>, vector<1x512xf32>
    %20 = vector.broadcast %19 : vector<1x512xf32> to vector<8x512xf32>
    %21 = arith.addf %18, %20 : vector<8x512xf32>
    %cst_15 = arith.constant 0.000000e+00 : f32
    %22 = vector.broadcast %cst_15 : f32 to vector<8x512xf32>
    %23 = arith.maximumf %21, %22 : vector<8x512xf32>
    %24 = arith.truncf %23 : vector<8x512xf32> to vector<8x512xbf16>
    %c0_16 = arith.constant 0 : index
    %c0_17 = arith.constant 0 : index
    %25 = vector.load %arg8[%c0_16, %c0_17] : memref<512x128xbf16, #tpu.memory_space<vmem>>, vector<512x128xbf16>
    %cst_18 = arith.constant dense<0.000000e+00> : vector<8x128xf32>
    %26 = tpu.matmul %24, %25, %cst_18 {dimension_numbers = #tpu.dot_dimension_numbers<[1], [0], [0], [1], [0, 0, 1, 1], [], []>} : vector<8x512xbf16>, vector<512x128xbf16>, vector<8x128xf32> -> vector<8x128xf32>
    %c0_19 = arith.constant 0 : index
    %c0_20 = arith.constant 0 : index
    %27 = vector.load %arg9[%c0_19, %c0_20] : memref<1x128xf32, #tpu.memory_space<vmem>>, vector<1x128xf32>
    %28 = vector.broadcast %27 : vector<1x128xf32> to vector<8x128xf32>
    %29 = arith.addf %26, %28 : vector<8x128xf32>
    %c0_21 = arith.constant 0 : index
    %c0_22 = arith.constant 0 : index
    %30 = vector.load %arg10[%c0_21, %c0_22] : memref<8x128xf32, #tpu.memory_space<vmem>>, vector<8x128xf32>
    tpu.vector_store %arg10[%c0_21, %c0_22], %29 {strides = array<i32>} : memref<8x128xf32, #tpu.memory_space<vmem>>, vector<8x128xf32>,
    return
  }
  func.func @transform_0(%arg0: i32) -> (i32, i32) {
    %c0_i32 = arith.constant 0 : i32
    %c0_i32_0 = arith.constant 0 : i32
    %c0_i32_1 = arith.constant 0 : i32
    return %c0_i32, %c0_i32_0 : i32, i32
  }
  func.func @transform_1(%arg0: i32) -> (i32, i32) {
    %c0_i32 = arith.constant 0 : i32
    %c0_i32_0 = arith.constant 0 : i32
    %c0_i32_1 = arith.constant 0 : i32
    return %c0_i32, %c0_i32_0 : i32, i32
  }
  func.func @transform_2(%arg0: i32) -> (i32, i32) {
    %c0_i32 = arith.constant 0 : i32
    %c0_i32_0 = arith.constant 0 : i32
    %c0_i32_1 = arith.constant 0 : i32
    return %c0_i32, %c0_i32_0 : i32, i32
  }
  func.func @transform_3(%arg0: i32) -> (i32, i32) {
    %c0_i32 = arith.constant 0 : i32
    %c0_i32_0 = arith.constant 0 : i32
    %c0_i32_1 = arith.constant 0 : i32
    return %c0_i32, %c0_i32_0 : i32, i32
  }
  func.func @transform_4(%arg0: i32) -> (i32, i32) {
    %c0_i32 = arith.constant 0 : i32
    %c0_i32_0 = arith.constant 0 : i32
    %c0_i32_1 = arith.constant 0 : i32
    return %c0_i32, %c0_i32_0 : i32, i32
  }
  func.func @transform_5(%arg0: i32) -> (i32, i32) {
    %c0_i32 = arith.constant 0 : i32
    %c0_i32_0 = arith.constant 0 : i32
    %c0_i32_1 = arith.constant 0 : i32
    return %c0_i32, %c0_i32_0 : i32, i32
  }
  func.func @transform_6(%arg0: i32) -> (i32, i32) {
    %c0_i32 = arith.constant 0 : i32
    %c0_i32_0 = arith.constant 0 : i32
    %c0_i32_1 = arith.constant 0 : i32
    return %c0_i32, %c0_i32_0 : i32, i32
  }
  func.func @transform_7(%arg0: i32) -> (i32, i32) {
    %c0_i32 = arith.constant 0 : i32
    %c0_i32_0 = arith.constant 0 : i32
    %c0_i32_1 = arith.constant 0 : i32
    return %c0_i32, %c0_i32_0 : i32, i32
  }
  func.func @transform_8(%arg0: i32) -> (i32, i32) {
    %c0_i32 = arith.constant 0 : i32
    %c0_i32_0 = arith.constant 0 : i32
    %c0_i32_1 = arith.constant 0 : i32
    return %c0_i32, %c0_i32_0 : i32, i32
  }
  func.func @transform_9(%arg0: i32) -> (i32, i32) {
    %c0_i32 = arith.constant 0 : i32
    %c0_i32_0 = arith.constant 0 : i32
    %c0_i32_1 = arith.constant 0 : i32
    return %c0_i32, %c0_i32_0 : i32, i32
  }
}

</mosaic_0001>

<llo_original>
// kernel: nepali_cnn_forward.3
$region0: #{nepali_cnn_forward.3}
  #allocation0 [shape = 'u32[]', space=smem, size = 0x4, offset = 0x4, fixed_abs, tag = 'smem constant byte address 0x4 - core index']
  #allocation1 [shape = 'u32[144,128]{1,0:T(1,128)}', space=vmem, size = 0x12000, scoped, tag = 'internal scratch']
  %s0 = inlined_call_operand.vmem [shape: bf16[4,9,1568], index: 0, kind: input, shape index: {}]
  %s1 = inlined_call_operand.vmem [shape: bf16[16,9], index: 1, kind: input, shape index: {}]
  %s2 = inlined_call_operand.vmem [shape: f32[16,1], index: 2, kind: input, shape index: {}]
  %s3 = inlined_call_operand.vmem [shape: bf16[16,1568], index: 3, kind: output, shape index: {}]
  %s4 = sld [smem:[#allocation0]]
  $region22: #{nepali_cnn_forward.3} parent=0
    _
  %s6 = ssub.s32 1, %s4
  %s7 = scalar_select 0, %s6, %s4
  // Predicated region
  $region2: #{nepali_cnn_forward.3} parent=0 // pred_check
    _
  $region3: #{nepali_cnn_forward.3} parent=0 // pred_check_branch
    %9 = sbr.rel (0) target = $region5
  $region4: #{nepali_cnn_forward.3} parent=0 // pred_region
    _
  $region5: #{nepali_cnn_forward.3} parent=0 // pred_fallthru
    _
  // Predicated region
  $region6: #{nepali_cnn_forward.3} parent=0 // pred_check
    _
  $region7: #{nepali_cnn_forward.3} parent=0 // pred_check_branch
    %11 = sbr.rel (0) target = $region9
  $region8: #{nepali_cnn_forward.3} parent=0 // pred_region
    _
  $region9: #{nepali_cnn_forward.3} parent=0 // pred_fallthru
    _
  // Predicated region
  $region10: #{nepali_cnn_forward.3} parent=0 // pred_check
    _
  $region11: #{nepali_cnn_forward.3} parent=0 // pred_check_branch
    %13 = sbr.rel (0) target = $region13
  $region12: #{nepali_cnn_forward.3} parent=0 // pred_region
    _
  $region13: #{nepali_cnn_forward.3} parent=0 // pred_fallthru
    _
  %v15 = vld [vmem:[%s1] sm:$0xf]
  %v16 = vld [vmem:[%s1 + $0x4] sm:$0xf]
  %v17 = vld [vmem:[%s0] sm:$0xff]
  %v18 = vld [vmem:[%s0 + $0x8] sm:$0xff]
  %v19 = vld [vmem:[%s0 + $0x10] sm:$0xff]
  %v20 = vld [vmem:[%s0 + $0x18] sm:$0xff]
  %v21 = vld [vmem:[%s0 + $0x20] sm:$0xff]
  %v22 = vld [vmem:[%s0 + $0x28] sm:$0xff]
  %v23 = vld [vmem:[%s0 + $0x30] sm:$0xf]
  %v24 = vld [vmem:[%s0 + $0x34] sm:$0x11]
  %v25 = vld [vmem:[%s0 + $0x3c] sm:$0x11]
  %v26 = vld [vmem:[%s0 + $0x44] sm:$0x11]
  %v27 = vld [vmem:[%s0 + $0x4c] sm:$0x11]
  %v28 = vld [vmem:[%s0 + $0x54] sm:$0x11]
  %v29 = vld [vmem:[%s0 + $0x5c] sm:$0x11]
  %v30 = vld [vmem:[%s0 + $0x64] sm:$0x1]
  %v33 = vunpack.c.l.b16 %v15
  %v34 = vunpack.c.l.b16 %v16
  %v35 = vpack.c.b16 %v34, %v33
  %v50 = vunpack.c.l.b16 %v17
  %v51 = vunpack.c.h.b16 %v17
  %v52 = vunpack.c.l.b16 %v18
  %v53 = vunpack.c.h.b16 %v18
  %v54 = vunpack.c.l.b16 %v19
  %v55 = vunpack.c.h.b16 %v19
  %v56 = vunpack.c.l.b16 %v20
  %v57 = vunpack.c.h.b16 %v20
  %v58 = vunpack.c.l.b16 %v21
  %v59 = vunpack.c.h.b16 %v21
  %v60 = vunpack.c.l.b16 %v22
  %v61 = vunpack.c.h.b16 %v22
  %v62 = vunpack.c.l.b16 %v23
  %v63 = vunpack.c.l.b16 %v24
  %v64 = vunpack.c.h.b16 %v24
  %v65 = vunpack.c.l.b16 %v25
  %v66 = vunpack.c.h.b16 %v25
  %v67 = vunpack.c.l.b16 %v26
  %v68 = vunpack.c.h.b16 %v26
  %v69 = vunpack.c.l.b16 %v27
  %v70 = vunpack.c.h.b16 %v27
  %v71 = vunpack.c.l.b16 %v28
  %v72 = vunpack.c.h.b16 %v28
  %v73 = vunpack.c.l.b16 %v29
  %v74 = vunpack.c.h.b16 %v29
  %v75 = vunpack.c.l.b16 %v30
  %v76 = vpack.c.b16 %v63, %v50
  %v77 = vpack.c.b16 %v64, %v51
  %v78 = vpack.c.b16 %v65, %v52
  %v79 = vpack.c.b16 %v66, %v53
  %v80 = vpack.c.b16 %v67, %v54
  %v81 = vpack.c.b16 %v68, %v55
  %v82 = vpack.c.b16 %v69, %v56
  %v83 = vpack.c.b16 %v70, %v57
  %v84 = vpack.c.b16 %v71, %v58
  %v85 = vpack.c.b16 %v72, %v59
  %v86 = vpack.c.b16 %v73, %v60
  %v87 = vpack.c.b16 %v74, %v61
  %v88 = vpack.c.b16 %v75, %v62
  %vm89 = vcmask 72704
  %v91 = vsel %vm89, %v35, 0
  %vm93 = vcmask 1043456
  %vm94 = vcmask 1044480
  %v95 = vsel %vm93, 4294967295, 65535
  %v96 = vsel %vm94, %v95, 0
  %v98 = vand.u32 %v76, %v96
  %v101 = vand.u32 %v77, %v96
  %v104 = vand.u32 %v78, %v96
  %v107 = vand.u32 %v79, %v96
  %v110 = vand.u32 %v80, %v96
  %v113 = vand.u32 %v81, %v96
  %v116 = vand.u32 %v82, %v96
  %v119 = vand.u32 %v83, %v96
  %v122 = vand.u32 %v84, %v96
  %v125 = vand.u32 %v85, %v96
  %v128 = vand.u32 %v86, %v96
  %v131 = vand.u32 %v87, %v96
  %v134 = vand.u32 %v88, %v96
  %136 = vmatprep.subr.bf16.mxu0 %v101
  %137 = vmatpush1.bf16.msra.mxu0 %v98
  %138 = vmatprep.subr.bf16.mxu0 0
  %139 = vmatpush1.bf16.msra.mxu0 0
  %140 = vmatprep.subr.bf16.mxu0 0
  %141 = vmatpush1.bf16.msra.mxu0 0
  %142 = vmatprep.subr.bf16.mxu0 0
  %143 = vmatpush1.bf16.msra.mxu0 0
  %144 = vmatprep.subr.bf16.mxu0 0
  %145 = vmatpush1.bf16.msra.mxu0 0
  %146 = vmatprep.subr.bf16.mxu0 0
  %147 = vmatpush1.bf16.msra.mxu0 0
  %148 = vmatprep.subr.bf16.mxu0 0
  %149 = vmatpush1.bf16.msra.mxu0 0
  %150 = vmatprep.subr.bf16.mxu0 0
  %151 = vmatpush1.bf16.msra.mxu0 0
  %152 = vmatprep.subr.bf16.mxu0 0
  %153 = vmatpush1.bf16.msra.mxu0 0
  %154 = vmatprep.subr.bf16.mxu0 0
  %155 = vmatpush1.bf16.msra.mxu0 0
  %156 = vmatprep.subr.bf16.mxu0 0
  %157 = vmatpush1.bf16.msra.mxu0 0
  %158 = vmatprep.subr.bf16.mxu0 0
  %159 = vmatpush1.bf16.msra.mxu0 0
  %160 = vmatprep.subr.bf16.mxu0 0
  %161 = vmatpush1.bf16.msra.mxu0 0
  %162 = vmatprep.subr.bf16.mxu0 0
  %163 = vmatpush1.bf16.msra.mxu0 0
  %164 = vmatprep.subr.bf16.mxu0 0
  %165 = vmatpush1.bf16.msra.mxu0 0
  %166 = vmatprep.subr.bf16.mxu0 0
  %167 = vmatpush1.bf16.msra.mxu0 0
  %168 = vmatprep.mubr.bf16.mxu0 0
  %169 = vmatmul.mubr.bf16.gmra.mrb[0].mxu0 %v91
  %v170 = vpop.f32.mrb[0].mxu0
  %v171 = vadd.f32 0.0, %v170
  %v172 = vpop.f32.mrb[0].mxu0
  %v173 = vadd.f32 0.0, %v172
  %v174 = vpop.f32.mrb[0].mxu0
  %v175 = vadd.f32 0.0, %v174
  %v176 = vpop.f32.mrb[0].mxu0
  %v177 = vadd.f32 0.0, %v176
  %178 = vdwg.mxu0
  %179 = vmatprep.subr.bf16.mxu0 %v107
  %180 = vmatpush1.bf16.msra.mxu0 %v104
  %181 = vmatprep.subr.bf16.mxu0 0
  %182 = vmatpush1.bf16.msra.mxu0 0
  %183 = vmatprep.subr.bf16.mxu0 0
  %184 = vmatpush1.bf16.msra.mxu0 0
  %185 = vmatprep.subr.bf16.mxu0 0
  %186 = vmatpush1.bf16.msra.mxu0 0
  %187 = vmatprep.subr.bf16.mxu0 0
  %188 = vmatpush1.bf16.msra.mxu0 0
  %189 = vmatprep.subr.bf16.mxu0 0
  %190 = vmatpush1.bf16.msra.mxu0 0
  %191 = vmatprep.subr.bf16.mxu0 0
  %192 = vmatpush1.bf16.msra.mxu0 0
  %193 = vmatprep.subr.bf16.mxu0 0
  %194 = vmatpush1.bf16.msra.mxu0 0
  %195 = vmatprep.subr.bf16.mxu0 0
  %196 = vmatpush1.bf16.msra.mxu0 0
  %197 = vmatprep.subr.bf16.mxu0 0
  %198 = vmatpush1.bf16.msra.mxu0 0
  %199 = vmatprep.subr.bf16.mxu0 0
  %200 = vmatpush1.bf16.msra.mxu0 0
  %201 = vmatprep.subr.bf16.mxu0 0
  %202 = vmatpush1.bf16.msra.mxu0 0
  %203 = vmatprep.subr.bf16.mxu0 0
  %204 = vmatpush1.bf16.msra.mxu0 0
  %205 = vmatprep.subr.bf16.mxu0 0
  %206 = vmatpush1.bf16.msra.mxu0 0
  %207 = vmatprep.subr.bf16.mxu0 0
  %208 = vmatpush1.bf16.msra.mxu0 0
  %209 = vmatprep.subr.bf16.mxu0 0
  %210 = vmatpush1.bf16.msra.mxu0 0
  %211 = vmatprep.mubr.bf16.mxu0 0
  %212 = vmatmul.mubr.bf16.gmra.mrb[0].mxu0 %v91
  %v213 = vpop.f32.mrb[0].mxu0
  %v214 = vadd.f32 0.0, %v213
  %v215 = vpop.f32.mrb[0].mxu0
  %v216 = vadd.f32 0.0, %v215
  %v217 = vpop.f32.mrb[0].mxu0
  %v218 = vadd.f32 0.0, %v217
  %v219 = vpop.f32.mrb[0].mxu0
  %v220 = vadd.f32 0.0, %v219
  %221 = vdwg.mxu0
  %222 = vmatprep.subr.bf16.mxu0 %v113
  %223 = vmatpush1.bf16.msra.mxu0 %v110
  %224 = vmatprep.subr.bf16.mxu0 0
  %225 = vmatpush1.bf16.msra.mxu0 0
  %226 = vmatprep.subr.bf16.mxu0 0
  %227 = vmatpush1.bf16.msra.mxu0 0
  %228 = vmatprep.subr.bf16.mxu0 0
  %229 = vmatpush1.bf16.msra.mxu0 0
  %230 = vmatprep.subr.bf16.mxu0 0
  %231 = vmatpush1.bf16.msra.mxu0 0
  %232 = vmatprep.subr.bf16.mxu0 0
  %233 = vmatpush1.bf16.msra.mxu0 0
  %234 = vmatprep.subr.bf16.mxu0 0
  %235 = vmatpush1.bf16.msra.mxu0 0
  %236 = vmatprep.subr.bf16.mxu0 0
  %237 = vmatpush1.bf16.msra.mxu0 0
  %238 = vmatprep.subr.bf16.mxu0 0
  %239 = vmatpush1.bf16.msra.mxu0 0
  %240 = vmatprep.subr.bf16.mxu0 0
  %241 = vmatpush1.bf16.msra.mxu0 0
  %242 = vmatprep.subr.bf16.mxu0 0
  %243 = vmatpush1.bf16.msra.mxu0 0
  %244 = vmatprep.subr.bf16.mxu0 0
  %245 = vmatpush1.bf16.msra.mxu0 0
  %246 = vmatprep.subr.bf16.mxu0 0
  %247 = vmatpush1.bf16.msra.mxu0 0
  %248 = vmatprep.subr.bf16.mxu0 0
  %249 = vmatpush1.bf16.msra.mxu0 0
  %250 = vmatprep.subr.bf16.mxu0 0
  %251 = vmatpush1.bf16.msra.mxu0 0
  %252 = vmatprep.subr.bf16.mxu0 0
  %253 = vmatpush1.bf16.msra.mxu0 0
  %254 = vmatprep.mubr.bf16.mxu0 0
  %255 = vmatmul.mubr.bf16.gmra.mrb[0].mxu0 %v91
  %v256 = vpop.f32.mrb[0].mxu0
  %v257 = vadd.f32 0.0, %v256
  %v258 = vpop.f32.mrb[0].mxu0
  %v259 = vadd.f32 0.0, %v258
  %v260 = vpop.f32.mrb[0].mxu0
  %v261 = vadd.f32 0.0, %v260
  %v262 = vpop.f32.mrb[0].mxu0
  %v263 = vadd.f32 0.0, %v262
  %264 = vdwg.mxu0
  %265 = vmatprep.subr.bf16.mxu0 %v119
  %266 = vmatpush1.bf16.msra.mxu0 %v116
  %267 = vmatprep.subr.bf16.mxu0 0
  %268 = vmatpush1.bf16.msra.mxu0 0
  %269 = vmatprep.subr.bf16.mxu0 0
  %270 = vmatpush1.bf16.msra.mxu0 0
  %271 = vmatprep.subr.bf16.mxu0 0
  %272 = vmatpush1.bf16.msra.mxu0 0
  %273 = vmatprep.subr.bf16.mxu0 0
  %274 = vmatpush1.bf16.msra.mxu0 0
  %275 = vmatprep.subr.bf16.mxu0 0
  %276 = vmatpush1.bf16.msra.mxu0 0
  %277 = vmatprep.subr.bf16.mxu0 0
  %278 = vmatpush1.bf16.msra.mxu0 0
  %279 = vmatprep.subr.bf16.mxu0 0
  %280 = vmatpush1.bf16.msra.mxu0 0
  %281 = vmatprep.subr.bf16.mxu0 0
  %282 = vmatpush1.bf16.msra.mxu0 0
  %283 = vmatprep.subr.bf16.mxu0 0
  %284 = vmatpush1.bf16.msra.mxu0 0
  %285 = vmatprep.subr.bf16.mxu0 0
  %286 = vmatpush1.bf16.msra.mxu0 0
  %287 = vmatprep.subr.bf16.mxu0 0
  %288 = vmatpush1.bf16.msra.mxu0 0
  %289 = vmatprep.subr.bf16.mxu0 0
  %290 = vmatpush1.bf16.msra.mxu0 0
  %291 = vmatprep.subr.bf16.mxu0 0
  %292 = vmatpush1.bf16.msra.mxu0 0
  %293 = vmatprep.subr.bf16.mxu0 0
  %294 = vmatpush1.bf16.msra.mxu0 0
  %295 = vmatprep.subr.bf16.mxu0 0
  %296 = vmatpush1.bf16.msra.mxu0 0
  %297 = vmatprep.mubr.bf16.mxu0 0
  %298 = vmatmul.mubr.bf16.gmra.mrb[0].mxu0 %v91
  %v299 = vpop.f32.mrb[0].mxu0
  %v300 = vadd.f32 0.0, %v299
  %v301 = vpop.f32.mrb[0].mxu0
  %v302 = vadd.f32 0.0, %v301
  %v303 = vpop.f32.mrb[0].mxu0
  %v304 = vadd.f32 0.0, %v303
  %v305 = vpop.f32.mrb[0].mxu0
  %v306 = vadd.f32 0.0, %v305
  %307 = vdwg.mxu0
  %308 = vmatprep.subr.bf16.mxu0 %v125
  %309 = vmatpush1.bf16.msra.mxu0 %v122
  %310 = vmatprep.subr.bf16.mxu0 0
  %311 = vmatpush1.bf16.msra.mxu0 0
  %312 = vmatprep.subr.bf16.mxu0 0
  %313 = vmatpush1.bf16.msra.mxu0 0
  %314 = vmatprep.subr.bf16.mxu0 0
  %315 = vmatpush1.bf16.msra.mxu0 0
  %316 = vmatprep.subr.bf16.mxu0 0
  %317 = vmatpush1.bf16.msra.mxu0 0
  %318 = vmatprep.subr.bf16.mxu0 0
  %319 = vmatpush1.bf16.msra.mxu0 0
  %320 = vmatprep.subr.bf16.mxu0 0
  %321 = vmatpush1.bf16.msra.mxu0 0
  %322 = vmatprep.subr.bf16.mxu0 0
  %323 = vmatpush1.bf16.msra.mxu0 0
  %324 = vmatprep.subr.bf16.mxu0 0
  %325 = vmatpush1.bf16.msra.mxu0 0
  %326 = vmatprep.subr.bf16.mxu0 0
  %327 = vmatpush1.bf16.msra.mxu0 0
  %328 = vmatprep.subr.bf16.mxu0 0
  %329 = vmatpush1.bf16.msra.mxu0 0
  %330 = vmatprep.subr.bf16.mxu0 0
  %331 = vmatpush1.bf16.msra.mxu0 0
  %332 = vmatprep.subr.bf16.mxu0 0
  %333 = vmatpush1.bf16.msra.mxu0 0
  %334 = vmatprep.subr.bf16.mxu0 0
  %335 = vmatpush1.bf16.msra.mxu0 0
  %336 = vmatprep.subr.bf16.mxu0 0
  %337 = vmatpush1.bf16.msra.mxu0 0
  %338 = vmatprep.subr.bf16.mxu0 0
  %339 = vmatpush1.bf16.msra.mxu0 0
  %340 = vmatprep.mubr.bf16.mxu0 0
  %341 = vmatmul.mubr.bf16.gmra.mrb[0].mxu0 %v91
  %v342 = vpop.f32.mrb[0].mxu0
  %v343 = vadd.f32 0.0, %v342
  %v344 = vpop.f32.mrb[0].mxu0
  %v345 = vadd.f32 0.0, %v344
  %v346 = vpop.f32.mrb[0].mxu0
  %v347 = vadd.f32 0.0, %v346
  %v348 = vpop.f32.mrb[0].mxu0
  %v349 = vadd.f32 0.0, %v348
  %350 = vdwg.mxu0
  %351 = vmatprep.subr.bf16.mxu0 %v131
  %352 = vmatpush1.bf16.msra.mxu0 %v128
  %353 = vmatprep.subr.bf16.mxu0 0
  %354 = vmatpush1.bf16.msra.mxu0 0
  %355 = vmatprep.subr.bf16.mxu0 0
  %356 = vmatpush1.bf16.msra.mxu0 0
  %357 = vmatprep.subr.bf16.mxu0 0
  %358 = vmatpush1.bf16.msra.mxu0 0
  %359 = vmatprep.subr.bf16.mxu0 0
  %360 = vmatpush1.bf16.msra.mxu0 0
  %361 = vmatprep.subr.bf16.mxu0 0
  %362 = vmatpush1.bf16.msra.mxu0 0
  %363 = vmatprep.subr.bf16.mxu0 0
  %364 = vmatpush1.bf16.msra.mxu0 0
  %365 = vmatprep.subr.bf16.mxu0 0
  %366 = vmatpush1.bf16.msra.mxu0 0
  %367 = vmatprep.subr.bf16.mxu0 0
  %368 = vmatpush1.bf16.msra.mxu0 0
  %369 = vmatprep.subr.bf16.mxu0 0
  %370 = vmatpush1.bf16.msra.mxu0 0
  %371 = vmatprep.subr.bf16.mxu0 0
  %372 = vmatpush1.bf16.msra.mxu0 0
  %373 = vmatprep.subr.bf16.mxu0 0
  %374 = vmatpush1.bf16.msra.mxu0 0
  %375 = vmatprep.subr.bf16.mxu0 0
  %376 = vmatpush1.bf16.msra.mxu0 0
  %377 = vmatprep.subr.bf16.mxu0 0
  %378 = vmatpush1.bf16.msra.mxu0 0
  %379 = vmatprep.subr.bf16.mxu0 0
  %380 = vmatpush1.bf16.msra.mxu0 0
  %381 = vmatprep.subr.bf16.mxu0 0
  %382 = vmatpush1.bf16.msra.mxu0 0
  %383 = vmatprep.mubr.bf16.mxu0 0
  %384 = vmatmul.mubr.bf16.gmra.mrb[0].mxu0 %v91
  %v385 = vpop.f32.mrb[0].mxu0
  %v386 = vadd.f32 0.0, %v385
  %v387 = vpop.f32.mrb[0].mxu0
  %v388 = vadd.f32 0.0, %v387
  %v389 = vpop.f32.mrb[0].mxu0
  %v390 = vadd.f32 0.0, %v389
  %v391 = vpop.f32.mrb[0].mxu0
  %v392 = vadd.f32 0.0, %v391
  %393 = vdwg.mxu0
  %394 = vmatprep.subr.bf16.mxu0 0
  %395 = vmatpush1.bf16.msra.mxu0 %v134
  %396 = vmatprep.subr.bf16.mxu0 0
  %397 = vmatpush1.bf16.msra.mxu0 0
  %398 = vmatprep.subr.bf16.mxu0 0
  %399 = vmatpush1.bf16.msra.mxu0 0
  %400 = vmatprep.subr.bf16.mxu0 0
  %401 = vmatpush1.bf16.msra.mxu0 0
  %402 = vmatprep.subr.bf16.mxu0 0
  %403 = vmatpush1.bf16.msra.mxu0 0
  %404 = vmatprep.subr.bf16.mxu0 0
  %405 = vmatpush1.bf16.msra.mxu0 0
  %406 = vmatprep.subr.bf16.mxu0 0
  %407 = vmatpush1.bf16.msra.mxu0 0
  %408 = vmatprep.subr.bf16.mxu0 0
  %409 = vmatpush1.bf16.msra.mxu0 0
  %410 = vmatprep.subr.bf16.mxu0 0
  %411 = vmatpush1.bf16.msra.mxu0 0
  %412 = vmatprep.subr.bf16.mxu0 0
  %413 = vmatpush1.bf16.msra.mxu0 0
  %414 = vmatprep.subr.bf16.mxu0 0
  %415 = vmatpush1.bf16.msra.mxu0 0
  %416 = vmatprep.subr.bf16.mxu0 0
  %417 = vmatpush1.bf16.msra.mxu0 0
  %418 = vmatprep.subr.bf16.mxu0 0
  %419 = vmatpush1.bf16.msra.mxu0 0
  %420 = vmatprep.subr.bf16.mxu0 0
  %421 = vmatpush1.bf16.msra.mxu0 0
  %422 = vmatprep.subr.bf16.mxu0 0
  %423 = vmatpush1.bf16.msra.mxu0 0
  %424 = vmatprep.subr.bf16.mxu0 0
  %425 = vmatpush1.bf16.msra.mxu0 0
  %426 = vmatprep.mubr.bf16.mxu0 0
  %427 = vmatmul.mubr.bf16.gmra.mrb[0].mxu0 %v91
  %v428 = vpop.f32.mrb[0].mxu0
  %v429 = vadd.f32 0.0, %v428
  %v430 = vpop.f32.mrb[0].mxu0
  %v431 = vpop.f32.mrb[0].mxu0
  %v432 = vadd.f32 0.0, %v431
  %v433 = vpop.f32.mrb[0].mxu0
  %434 = vdwg.mxu0
  %s435 = scalar_lea.vmem %s0, 104
  %v436 = vld [vmem:[%s435] sm:$0xff]
  %v437 = vld [vmem:[%s435 + $0x8] sm:$0xff]
  %v438 = vld [vmem:[%s435 + $0x10] sm:$0xff]
  %v439 = vld [vmem:[%s435 + $0x18] sm:$0xff]
  %v440 = vld [vmem:[%s435 + $0x20] sm:$0xff]
  %v441 = vld [vmem:[%s435 + $0x28] sm:$0xff]
  %v442 = vld [vmem:[%s435 + $0x30] sm:$0xf]
  %v443 = vld [vmem:[%s435 + $0x34] sm:$0x11]
  %v444 = vld [vmem:[%s435 + $0x3c] sm:$0x11]
  %v445 = vld [vmem:[%s435 + $0x44] sm:$0x11]
  %v446 = vld [vmem:[%s435 + $0x4c] sm:$0x11]
  %v447 = vld [vmem:[%s435 + $0x54] sm:$0x11]
  %v448 = vld [vmem:[%s435 + $0x5c] sm:$0x11]
  %v449 = vld [vmem:[%s435 + $0x64] sm:$0x1]
  %v464 = vunpack.c.l.b16 %v436
  %v465 = vunpack.c.h.b16 %v436
  %v466 = vunpack.c.l.b16 %v437
  %v467 = vunpack.c.h.b16 %v437
  %v468 = vunpack.c.l.b16 %v438
  %v469 = vunpack.c.h.b16 %v438
  %v470 = vunpack.c.l.b16 %v439
  %v471 = vunpack.c.h.b16 %v439
  %v472 = vunpack.c.l.b16 %v440
  %v473 = vunpack.c.h.b16 %v440
  %v474 = vunpack.c.l.b16 %v441
  %v475 = vunpack.c.h.b16 %v441
  %v476 = vunpack.c.l.b16 %v442
  %v477 = vunpack.c.l.b16 %v443
  %v478 = vunpack.c.h.b16 %v443
  %v479 = vunpack.c.l.b16 %v444
  %v480 = vunpack.c.h.b16 %v444
  %v481 = vunpack.c.l.b16 %v445
  %v482 = vunpack.c.h.b16 %v445
  %v483 = vunpack.c.l.b16 %v446
  %v484 = vunpack.c.h.b16 %v446
  %v485 = vunpack.c.l.b16 %v447
  %v486 = vunpack.c.h.b16 %v447
  %v487 = vunpack.c.l.b16 %v448
  %v488 = vunpack.c.h.b16 %v448
  %v489 = vunpack.c.l.b16 %v449
  %v490 = vpack.c.b16 %v477, %v464
  %v491 = vpack.c.b16 %v478, %v465
  %v492 = vpack.c.b16 %v479, %v466
  %v493 = vpack.c.b16 %v480, %v467
  %v494 = vpack.c.b16 %v481, %v468
  %v495 = vpack.c.b16 %v482, %v469
  %v496 = vpack.c.b16 %v483, %v470
  %v497 = vpack.c.b16 %v484, %v471
  %v498 = vpack.c.b16 %v485, %v472
  %v499 = vpack.c.b16 %v486, %v473
  %v500 = vpack.c.b16 %v487, %v474
  %v501 = vpack.c.b16 %v488, %v475
  %v502 = vpack.c.b16 %v489, %v476
  %v504 = vand.u32 %v490, %v96
  %v507 = vand.u32 %v491, %v96
  %v510 = vand.u32 %v492, %v96
  %v513 = vand.u32 %v493, %v96
  %v516 = vand.u32 %v494, %v96
  %v519 = vand.u32 %v495, %v96
  %v522 = vand.u32 %v496, %v96
  %v525 = vand.u32 %v497, %v96
  %v528 = vand.u32 %v498, %v96
  %v531 = vand.u32 %v499, %v96
  %v534 = vand.u32 %v500, %v96
  %v537 = vand.u32 %v501, %v96
  %v540 = vand.u32 %v502, %v96
  %542 = vmatprep.subr.bf16.mxu0 %v507
  %543 = vmatpush1.bf16.msra.mxu0 %v504
  %544 = vmatprep.subr.bf16.mxu0 0
  %545 = vmatpush1.bf16.msra.mxu0 0
  %546 = vmatprep.subr.bf16.mxu0 0
  %547 = vmatpush1.bf16.msra.mxu0 0
  %548 = vmatprep.subr.bf16.mxu0 0
  %549 = vmatpush1.bf16.msra.mxu0 0
  %550 = vmatprep.subr.bf16.mxu0 0
  %551 = vmatpush1.bf16.msra.mxu0 0
  %552 = vmatprep.subr.bf16.mxu0 0
  %553 = vmatpush1.bf16.msra.mxu0 0
  %554 = vmatprep.subr.bf16.mxu0 0
  %555 = vmatpush1.bf16.msra.mxu0 0
  %556 = vmatprep.subr.bf16.mxu0 0
  %557 = vmatpush1.bf16.msra.mxu0 0
  %558 = vmatprep.subr.bf16.mxu0 0
  %559 = vmatpush1.bf16.msra.mxu0 0
  %560 = vmatprep.subr.bf16.mxu0 0
  %561 = vmatpush1.bf16.msra.mxu0 0
  %562 = vmatprep.subr.bf16.mxu0 0
  %563 = vmatpush1.bf16.msra.mxu0 0
  %564 = vmatprep.subr.bf16.mxu0 0
  %565 = vmatpush1.bf16.msra.mxu0 0
  %566 = vmatprep.subr.bf16.mxu0 0
  %567 = vmatpush1.bf16.msra.mxu0 0
  %568 = vmatprep.subr.bf16.mxu0 0
  %569 = vmatpush1.bf16.msra.mxu0 0
  %570 = vmatprep.subr.bf16.mxu0 0
  %571 = vmatpush1.bf16.msra.mxu0 0
  %572 = vmatprep.subr.bf16.mxu0 0
  %573 = vmatpush1.bf16.msra.mxu0 0
  %574 = vmatprep.mubr.bf16.mxu0 0
  %575 = vmatmul.mubr.bf16.gmra.mrb[0].mxu0 %v91
  %v576 = vpop.f32.mrb[0].mxu0
  %v577 = vadd.f32 0.0, %v576
  %v578 = vpop.f32.mrb[0].mxu0
  %v579 = vadd.f32 0.0, %v578
  %v580 = vpop.f32.mrb[0].mxu0
  %v581 = vadd.f32 0.0, %v580
  %v582 = vpop.f32.mrb[0].mxu0
  %v583 = vadd.f32 0.0, %v582
  %584 = vdwg.mxu0
  %585 = vmatprep.subr.bf16.mxu0 %v513
  %586 = vmatpush1.bf16.msra.mxu0 %v510
  %587 = vmatprep.subr.bf16.mxu0 0
  %588 = vmatpush1.bf16.msra.mxu0 0
  %589 = vmatprep.subr.bf16.mxu0 0
  %590 = vmatpush1.bf16.msra.mxu0 0
  %591 = vmatprep.subr.bf16.mxu0 0
  %592 = vmatpush1.bf16.msra.mxu0 0
  %593 = vmatprep.subr.bf16.mxu0 0
  %594 = vmatpush1.bf16.msra.mxu0 0
  %595 = vmatprep.subr.bf16.mxu0 0
  %596 = vmatpush1.bf16.msra.mxu0 0
  %597 = vmatprep.subr.bf16.mxu0 0
  %598 = vmatpush1.bf16.msra.mxu0 0
  %599 = vmatprep.subr.bf16.mxu0 0
  %600 = vmatpush1.bf16.msra.mxu0 0
  %601 = vmatprep.subr.bf16.mxu0 0
  %602 = vmatpush1.bf16.msra.mxu0 0
  %603 = vmatprep.subr.bf16.mxu0 0
  %604 = vmatpush1.bf16.msra.mxu0 0
  %605 = vmatprep.subr.bf16.mxu0 0
  %606 = vmatpush1.bf16.msra.mxu0 0
  %607 = vmatprep.subr.bf16.mxu0 0
  %608 = vmatpush1.bf16.msra.mxu0 0
  %609 = vmatprep.subr.bf16.mxu0 0
  %610 = vmatpush1.bf16.msra.mxu0 0
  %611 = vmatprep.subr.bf16.mxu0 0
  %612 = vmatpush1.bf16.msra.mxu0 0
  %613 = vmatprep.subr.bf16.mxu0 0
  %614 = vmatpush1.bf16.msra.mxu0 0
  %615 = vmatprep.subr.bf16.mxu0 0
  %616 = vmatpush1.bf16.msra.mxu0 0
  %617 = vmatprep.mubr.bf16.mxu0 0
  %618 = vmatmul.mubr.bf16.gmra.mrb[0].mxu0 %v91
  %v619 = vpop.f32.mrb[0].mxu0
  %v620 = vadd.f32 0.0, %v619
  %v621 = vpop.f32.mrb[0].mxu0
  %v622 = vadd.f32 0.0, %v621
  %v623 = vpop.f32.mrb[0].mxu0
  %v624 = vadd.f32 0.0, %v623
  %v625 = vpop.f32.mrb[0].mxu0
  %v626 = vadd.f32 0.0, %v625
  %627 = vdwg.mxu0
  %628 = vmatprep.subr.bf16.mxu0 %v519
  %629 = vmatpush1.bf16.msra.mxu0 %v516
  %630 = vmatprep.subr.bf16.mxu0 0
  %631 = vmatpush1.bf16.msra.mxu0 0
  %632 = vmatprep.subr.bf16.mxu0 0
  %633 = vmatpush1.bf16.msra.mxu0 0
  %634 = vmatprep.subr.bf16.mxu0 0
  %635 = vmatpush1.bf16.msra.mxu0 0
  %636 = vmatprep.subr.bf16.mxu0 0
  %637 = vmatpush1.bf16.msra.mxu0 0
  %638 = vmatprep.subr.bf16.mxu0 0
  %639 = vmatpush1.bf16.msra.mxu0 0
  %640 = vmatprep.subr.bf16.mxu0 0
  %641 = vmatpush1.bf16.msra.mxu0 0
  %642 = vmatprep.subr.bf16.mxu0 0
  %643 = vmatpush1.bf16.msra.mxu0 0
  %644 = vmatprep.subr.bf16.mxu0 0
  %645 = vmatpush1.bf16.msra.mxu0 0
  %646 = vmatprep.subr.bf16.mxu0 0
  %647 = vmatpush1.bf16.msra.mxu0 0
  %648 = vmatprep.subr.bf16.mxu0 0
  %649 = vmatpush1.bf16.msra.mxu0 0
  %650 = vmatprep.subr.bf16.mxu0 0
  %651 = vmatpush1.bf16.msra.mxu0 0
  %652 = vmatprep.subr.bf16.mxu0 0
  %653 = vmatpush1.bf16.msra.mxu0 0
  %654 = vmatprep.subr.bf16.mxu0 0
  %655 = vmatpush1.bf16.msra.mxu0 0
  %656 = vmatprep.subr.bf16.mxu0 0
  %657 = vmatpush1.bf16.msra.mxu0 0
  %658 = vmatprep.subr.bf16.mxu0 0
  %659 = vmatpush1.bf16.msra.mxu0 0
  %660 = vmatprep.mubr.bf16.mxu0 0
  %661 = vmatmul.mubr.bf16.gmra.mrb[0].mxu0 %v91
  %v662 = vpop.f32.mrb[0].mxu0
  %v663 = vadd.f32 0.0, %v662
  %v664 = vpop.f32.mrb[0].mxu0
  %v665 = vadd.f32 0.0, %v664
  %v666 = vpop.f32.mrb[0].mxu0
  %v667 = vadd.f32 0.0, %v666
  %v668 = vpop.f32.mrb[0].mxu0
  %v669 = vadd.f32 0.0, %v668
  %670 = vdwg.mxu0
  %671 = vmatprep.subr.bf16.mxu0 %v525
  %672 = vmatpush1.bf16.msra.mxu0 %v522
  %673 = vmatprep.subr.bf16.mxu0 0
  %674 = vmatpush1.bf16.msra.mxu0 0
  %675 = vmatprep.subr.bf16.mxu0 0
  %676 = vmatpush1.bf16.msra.mxu0 0
  %677 = vmatprep.subr.bf16.mxu0 0
  %678 = vmatpush1.bf16.msra.mxu0 0
  %679 = vmatprep.subr.bf16.mxu0 0
  %680 = vmatpush1.bf16.msra.mxu0 0
  %681 = vmatprep.subr.bf16.mxu0 0
  %682 = vmatpush1.bf16.msra.mxu0 0
  %683 = vmatprep.subr.bf16.mxu0 0
  %684 = vmatpush1.bf16.msra.mxu0 0
  %685 = vmatprep.subr.bf16.mxu0 0
  %686 = vmatpush1.bf16.msra.mxu0 0
  %687 = vmatprep.subr.bf16.mxu0 0
  %688 = vmatpush1.bf16.msra.mxu0 0
  %689 = vmatprep.subr.bf16.mxu0 0
  %690 = vmatpush1.bf16.msra.mxu0 0
  %691 = vmatprep.subr.bf16.mxu0 0
  %692 = vmatpush1.bf16.msra.mxu0 0
  %693 = vmatprep.subr.bf16.mxu0 0
  %694 = vmatpush1.bf16.msra.mxu0 0
  %695 = vmatprep.subr.bf16.mxu0 0
  %696 = vmatpush1.bf16.msra.mxu0 0
  %697 = vmatprep.subr.bf16.mxu0 0
  %698 = vmatpush1.bf16.msra.mxu0 0
  %699 = vmatprep.subr.bf16.mxu0 0
  %700 = vmatpush1.bf16.msra.mxu0 0
  %701 = vmatprep.subr.bf16.mxu0 0
  %702 = vmatpush1.bf16.msra.mxu0 0
  %703 = vmatprep.mubr.bf16.mxu0 0
  %704 = vmatmul.mubr.bf16.gmra.mrb[0].mxu0 %v91
  %v705 = vpop.f32.mrb[0].mxu0
  %v706 = vadd.f32 0.0, %v705
  %v707 = vpop.f32.mrb[0].mxu0
  %v708 = vadd.f32 0.0, %v707
  %v709 = vpop.f32.mrb[0].mxu0
  %v710 = vadd.f32 0.0, %v709
  %v711 = vpop.f32.mrb[0].mxu0
  %v712 = vadd.f32 0.0, %v711
  %713 = vdwg.mxu0
  %714 = vmatprep.subr.bf16.mxu0 %v531
  %715 = vmatpush1.bf16.msra.mxu0 %v528
  %716 = vmatprep.subr.bf16.mxu0 0
  %717 = vmatpush1.bf16.msra.mxu0 0
  %718 = vmatprep.subr.bf16.mxu0 0
  %719 = vmatpush1.bf16.msra.mxu0 0
  %720 = vmatprep.subr.bf16.mxu0 0
  %721 = vmatpush1.bf16.msra.mxu0 0
  %722 = vmatprep.subr.bf16.mxu0 0
  %723 = vmatpush1.bf16.msra.mxu0 0
  %724 = vmatprep.subr.bf16.mxu0 0
  %725 = vmatpush1.bf16.msra.mxu0 0
  %726 = vmatprep.subr.bf16.mxu0 0
  %727 = vmatpush1.bf16.msra.mxu0 0
  %728 = vmatprep.subr.bf16.mxu0 0
  %729 = vmatpush1.bf16.msra.mxu0 0
  %730 = vmatprep.subr.bf16.mxu0 0
  %731 = vmatpush1.bf16.msra.mxu0 0
  %732 = vmatprep.subr.bf16.mxu0 0
  %733 = vmatpush1.bf16.msra.mxu0 0
  %734 = vmatprep.subr.bf16.mxu0 0
  %735 = vmatpush1.bf16.msra.mxu0 0
  %736 = vmatprep.subr.bf16.mxu0 0
  %737 = vmatpush1.bf16.msra.mxu0 0
  %738 = vmatprep.subr.bf16.mxu0 0
  %739 = vmatpush1.bf16.msra.mxu0 0
  %740 = vmatprep.subr.bf16.mxu0 0
  %741 = vmatpush1.bf16.msra.mxu0 0
  %742 = vmatprep.subr.bf16.mxu0 0
  %743 = vmatpush1.bf16.msra.mxu0 0
  %744 = vmatprep.subr.bf16.mxu0 0
  %745 = vmatpush1.bf16.msra.mxu0 0
  %746 = vmatprep.mubr.bf16.mxu0 0
  %747 = vmatmul.mubr.bf16.gmra.mrb[0].mxu0 %v91
  %v748 = vpop.f32.mrb[0].mxu0
  %v749 = vadd.f32 0.0, %v748
  %v750 = vpop.f32.mrb[0].mxu0
  %v751 = vadd.f32 0.0, %v750
  %v752 = vpop.f32.mrb[0].mxu0
  %v753 = vadd.f32 0.0, %v752
  %v754 = vpop.f32.mrb[0].mxu0
  %v755 = vadd.f32 0.0, %v754
  %756 = vdwg.mxu0
  %757 = vmatprep.subr.bf16.mxu0 %v537
  %758 = vmatpush1.bf16.msra.mxu0 %v534
  %759 = vmatprep.subr.bf16.mxu0 0
  %760 = vmatpush1.bf16.msra.mxu0 0
  %761 = vmatprep.subr.bf16.mxu0 0
  %762 = vmatpush1.bf16.msra.mxu0 0
  %763 = vmatprep.subr.bf16.mxu0 0
  %764 = vmatpush1.bf16.msra.mxu0 0
  %765 = vmatprep.subr.bf16.mxu0 0
  %766 = vmatpush1.bf16.msra.mxu0 0
  %767 = vmatprep.subr.bf16.mxu0 0
  %768 = vmatpush1.bf16.msra.mxu0 0
  %769 = vmatprep.subr.bf16.mxu0 0
  %770 = vmatpush1.bf16.msra.mxu0 0
  %771 = vmatprep.subr.bf16.mxu0 0
  %772 = vmatpush1.bf16.msra.mxu0 0
  %773 = vmatprep.subr.bf16.mxu0 0
  %774 = vmatpush1.bf16.msra.mxu0 0
  %775 = vmatprep.subr.bf16.mxu0 0
  %776 = vmatpush1.bf16.msra.mxu0 0
  %777 = vmatprep.subr.bf16.mxu0 0
  %778 = vmatpush1.bf16.msra.mxu0 0
  %779 = vmatprep.subr.bf16.mxu0 0
  %780 = vmatpush1.bf16.msra.mxu0 0
  %781 = vmatprep.subr.bf16.mxu0 0
  %782 = vmatpush1.bf16.msra.mxu0 0
  %783 = vmatprep.subr.bf16.mxu0 0
  %784 = vmatpush1.bf16.msra.mxu0 0
  %785 = vmatprep.subr.bf16.mxu0 0
  %786 = vmatpush1.bf16.msra.mxu0 0
  %787 = vmatprep.subr.bf16.mxu0 0
  %788 = vmatpush1.bf16.msra.mxu0 0
  %789 = vmatprep.mubr.bf16.mxu0 0
  %790 = vmatmul.mubr.bf16.gmra.mrb[0].mxu0 %v91
  %v791 = vpop.f32.mrb[0].mxu0
  %v792 = vadd.f32 0.0, %v791
  %v793 = vpop.f32.mrb[0].mxu0
  %v794 = vadd.f32 0.0, %v793
  %v795 = vpop.f32.mrb[0].mxu0
  %v796 = vadd.f32 0.0, %v795
  %v797 = vpop.f32.mrb[0].mxu0
  %v798 = vadd.f32 0.0, %v797
  %799 = vdwg.mxu0
  %800 = vmatprep.subr.bf16.mxu0 0
  %801 = vmatpush1.bf16.msra.mxu0 %v540
  %802 = vmatprep.subr.bf16.mxu0 0
  %803 = vmatpush1.bf16.msra.mxu0 0
  %804 = vmatprep.subr.bf16.mxu0 0
  %805 = vmatpush1.bf16.msra.mxu0 0
  %806 = vmatprep.subr.bf16.mxu0 0
  %807 = vmatpush1.bf16.msra.mxu0 0
  %808 = vmatprep.subr.bf16.mxu0 0
  %809 = vmatpush1.bf16.msra.mxu0 0
  %810 = vmatprep.subr.bf16.mxu0 0
  %811 = vmatpush1.bf16.msra.mxu0 0
  %812 = vmatprep.subr.bf16.mxu0 0
  %813 = vmatpush1.bf16.msra.mxu0 0
  %814 = vmatprep.subr.bf16.mxu0 0
  %815 = vmatpush1.bf16.msra.mxu0 0
  %816 = vmatprep.subr.bf16.mxu0 0
  %817 = vmatpush1.bf16.msra.mxu0 0
  %818 = vmatprep.subr.bf16.mxu0 0
  %819 = vmatpush1.bf16.msra.mxu0 0
  %820 = vmatprep.subr.bf16.mxu0 0
  %821 = vmatpush1.bf16.msra.mxu0 0
  %822 = vmatprep.subr.bf16.mxu0 0
  %823 = vmatpush1.bf16.msra.mxu0 0
  %824 = vmatprep.subr.bf16.mxu0 0
  %825 = vmatpush1.bf16.msra.mxu0 0
  %826 = vmatprep.subr.bf16.mxu0 0
  %827 = vmatpush1.bf16.msra.mxu0 0
  %828 = vmatprep.subr.bf16.mxu0 0
  %829 = vmatpush1.bf16.msra.mxu0 0
  %830 = vmatprep.subr.bf16.mxu0 0
  %831 = vmatpush1.bf16.msra.mxu0 0
  %832 = vmatprep.mubr.bf16.mxu0 0
  %833 = vmatmul.mubr.bf16.gmra.mrb[0].mxu0 %v91
  %v834 = vpop.f32.mrb[0].mxu0
  %v835 = vadd.f32 0.0, %v834
  %v836 = vpop.f32.mrb[0].mxu0
  %v837 = vpop.f32.mrb[0].mxu0
  %v838 = vadd.f32 0.0, %v837
  %v839 = vpop.f32.mrb[0].mxu0
  %840 = vdwg.mxu0
  %v841 = vmax.f32 %v171, %v577
  %v842 = vmax.f32 %v173, %v579
  %v843 = vmax.f32 %v214, %v620
  %v844 = vmax.f32 %v216, %v622
  %v845 = vmax.f32 %v257, %v663
  %v846 = vmax.f32 %v259, %v665
  %v847 = vmax.f32 %v300, %v706
  %v848 = vmax.f32 %v302, %v708
  %v849 = vmax.f32 %v343, %v749
  %v850 = vmax.f32 %v345, %v751
  %v851 = vmax.f32 %v386, %v792
  %v852 = vmax.f32 %v388, %v794
  %v853 = vmax.f32 %v429, %v835
  %v854 = vmax.f32 %v175, %v581
  %v855 = vmax.f32 %v177, %v583
  %v856 = vmax.f32 %v218, %v624
  %v857 = vmax.f32 %v220, %v626
  %v858 = vmax.f32 %v261, %v667
  %v859 = vmax.f32 %v263, %v669
  %v860 = vmax.f32 %v304, %v710
  %v861 = vmax.f32 %v306, %v712
  %v862 = vmax.f32 %v347, %v753
  %v863 = vmax.f32 %v349, %v755
  %v864 = vmax.f32 %v390, %v796
  %v865 = vmax.f32 %v392, %v798
  %v866 = vmax.f32 %v432, %v838
  %s867 = scalar_lea.vmem %s0, 208
  %v868 = vld [vmem:[%s867] sm:$0xff]
  %v869 = vld [vmem:[%s867 + $0x8] sm:$0xff]
  %v870 = vld [vmem:[%s867 + $0x10] sm:$0xff]
  %v871 = vld [vmem:[%s867 + $0x18] sm:$0xff]
  %v872 = vld [vmem:[%s867 + $0x20] sm:$0xff]
  %v873 = vld [vmem:[%s867 + $0x28] sm:$0xff]
  %v874 = vld [vmem:[%s867 + $0x30] sm:$0xf]
  %v875 = vld [vmem:[%s867 + $0x34] sm:$0x11]
  %v876 = vld [vmem:[%s867 + $0x3c] sm:$0x11]
  %v877 = vld [vmem:[%s867 + $0x44] sm:$0x11]
  %v878 = vld [vmem:[%s867 + $0x4c] sm:$0x11]
  %v879 = vld [vmem:[%s867 + $0x54] sm:$0x11]
  %v880 = vld [vmem:[%s867 + $0x5c] sm:$0x11]
  %v881 = vld [vmem:[%s867 + $0x64] sm:$0x1]
  %v896 = vunpack.c.l.b16 %v868
  %v897 = vunpack.c.h.b16 %v868
  %v898 = vunpack.c.l.b16 %v869
  %v899 = vunpack.c.h.b16 %v869
  %v900 = vunpack.c.l.b16 %v870
  %v901 = vunpack.c.h.b16 %v870
  %v902 = vunpack.c.l.b16 %v871
  %v903 = vunpack.c.h.b16 %v871
  %v904 = vunpack.c.l.b16 %v872
  %v905 = vunpack.c.h.b16 %v872
  %v906 = vunpack.c.l.b16 %v873
  %v907 = vunpack.c.h.b16 %v873
  %v908 = vunpack.c.l.b16 %v874
  %v909 = vunpack.c.l.b16 %v875
  %v910 = vunpack.c.h.b16 %v875
  %v911 = vunpack.c.l.b16 %v876
  %v912 = vunpack.c.h.b16 %v876
  %v913 = vunpack.c.l.b16 %v877
  %v914 = vunpack.c.h.b16 %v877
  %v915 = vunpack.c.l.b16 %v878
  %v916 = vunpack.c.h.b16 %v878
  %v917 = vunpack.c.l.b16 %v879
  %v918 = vunpack.c.h.b16 %v879
  %v919 = vunpack.c.l.b16 %v880
  %v920 = vunpack.c.h.b16 %v880
  %v921 = vunpack.c.l.b16 %v881
  %v922 = vpack.c.b16 %v909, %v896
  %v923 = vpack.c.b16 %v910, %v897
  %v924 = vpack.c.b16 %v911, %v898
  %v925 = vpack.c.b16 %v912, %v899
  %v926 = vpack.c.b16 %v913, %v900
  %v927 = vpack.c.b16 %v914, %v901
  %v928 = vpack.c.b16 %v915, %v902
  %v929 = vpack.c.b16 %v916, %v903
  %v930 = vpack.c.b16 %v917, %v904
  %v931 = vpack.c.b16 %v918, %v905
  %v932 = vpack.c.b16 %v919, %v906
  %v933 = vpack.c.b16 %v920, %v907
  %v934 = vpack.c.b16 %v921, %v908
  %v936 = vand.u32 %v922, %v96
  %v939 = vand.u32 %v923, %v96
  %v942 = vand.u32 %v924, %v96
  %v945 = vand.u32 %v925, %v96
  %v948 = vand.u32 %v926, %v96
  %v951 = vand.u32 %v927, %v96
  %v954 = vand.u32 %v928, %v96
  %v957 = vand.u32 %v929, %v96
  %v960 = vand.u32 %v930, %v96
  %v963 = vand.u32 %v931, %v96
  %v966 = vand.u32 %v932, %v96
  %v969 = vand.u32 %v933, %v96
  %v972 = vand.u32 %v934, %v96
  %974 = vmatprep.subr.bf16.mxu0 %v939
  %975 = vmatpush1.bf16.msra.mxu0 %v936
  %976 = vmatprep.subr.bf16.mxu0 0
  %977 = vmatpush1.bf16.msra.mxu0 0
  %978 = vmatprep.subr.bf16.mxu0 0
  %979 = vmatpush1.bf16.msra.mxu0 0
  %980 = vmatprep.subr.bf16.mxu0 0
  %981 = vmatpush1.bf16.msra.mxu0 0
  %982 = vmatprep.subr.bf16.mxu0 0
  %983 = vmatpush1.bf16.msra.mxu0 0
  %984 = vmatprep.subr.bf16.mxu0 0
  %985 = vmatpush1.bf16.msra.mxu0 0
  %986 = vmatprep.subr.bf16.mxu0 0
  %987 = vmatpush1.bf16.msra.mxu0 0
  %988 = vmatprep.subr.bf16.mxu0 0
  %989 = vmatpush1.bf16.msra.mxu0 0
  %990 = vmatprep.subr.bf16.mxu0 0
  %991 = vmatpush1.bf16.msra.mxu0 0
  %992 = vmatprep.subr.bf16.mxu0 0
  %993 = vmatpush1.bf16.msra.mxu0 0
  %994 = vmatprep.subr.bf16.mxu0 0
  %995 = vmatpush1.bf16.msra.mxu0 0
  %996 = vmatprep.subr.bf16.mxu0 0
  %997 = vmatpush1.bf16.msra.mxu0 0
  %998 = vmatprep.subr.bf16.mxu0 0
  %999 = vmatpush1.bf16.msra.mxu0 0
  %1000 = vmatprep.subr.bf16.mxu0 0
  %1001 = vmatpush1.bf16.msra.mxu0 0
  %1002 = vmatprep.subr.bf16.mxu0 0
  %1003 = vmatpush1.bf16.msra.mxu0 0
  %1004 = vmatprep.subr.bf16.mxu0 0
  %1005 = vmatpush1.bf16.msra.mxu0 0
  %1006 = vmatprep.mubr.bf16.mxu0 0
  %1007 = vmatmul.mubr.bf16.gmra.mrb[0].mxu0 %v91
  %v1008 = vpop.f32.mrb[0].mxu0
  %v1009 = vadd.f32 0.0, %v1008
  %v1010 = vpop.f32.mrb[0].mxu0
  %v1011 = vadd.f32 0.0, %v1010
  %v1012 = vpop.f32.mrb[0].mxu0
  %v1013 = vadd.f32 0.0, %v1012
  %v1014 = vpop.f32.mrb[0].mxu0
  %v1015 = vadd.f32 0.0, %v1014
  %1016 = vdwg.mxu0
  %1017 = vmatprep.subr.bf16.mxu0 %v945
  %1018 = vmatpush1.bf16.msra.mxu0 %v942
  %1019 = vmatprep.subr.bf16.mxu0 0
  %1020 = vmatpush1.bf16.msra.mxu0 0
  %1021 = vmatprep.subr.bf16.mxu0 0
  %1022 = vmatpush1.bf16.msra.mxu0 0
  %1023 = vmatprep.subr.bf16.mxu0 0
  %1024 = vmatpush1.bf16.msra.mxu0 0
  %1025 = vmatprep.subr.bf16.mxu0 0
  %1026 = vmatpush1.bf16.msra.mxu0 0
  %1027 = vmatprep.subr.bf16.mxu0 0
  %1028 = vmatpush1.bf16.msra.mxu0 0
  %1029 = vmatprep.subr.bf16.mxu0 0
  %1030 = vmatpush1.bf16.msra.mxu0 0
  %1031 = vmatprep.subr.bf16.mxu0 0
  %1032 = vmatpush1.bf16.msra.mxu0 0
  %1033 = vmatprep.subr.bf16.mxu0 0
  %1034 = vmatpush1.bf16.msra.mxu0 0
  %1035 = vmatprep.subr.bf16.mxu0 0
  %1036 = vmatpush1.bf16.msra.mxu0 0
  %1037 = vmatprep.subr.bf16.mxu0 0
  %1038 = vmatpush1.bf16.msra.mxu0 0
  %1039 = vmatprep.subr.bf16.mxu0 0
  %1040 = vmatpush1.bf16.msra.mxu0 0
  %1041 = vmatprep.subr.bf16.mxu0 0
  %1042 = vmatpush1.bf16.msra.mxu0 0
  %1043 = vmatprep.subr.bf16.mxu0 0
  %1044 = vmatpush1.bf16.msra.mxu0 0
  %1045 = vmatprep.subr.bf16.mxu0 0
  %1046 = vmatpush1.bf16.msra.mxu0 0
  %1047 = vmatprep.subr.bf16.mxu0 0
  %1048 = vmatpush1.bf16.msra.mxu0 0
  %1049 = vmatprep.mubr.bf16.mxu0 0
  %1050 = vmatmul.mubr.bf16.gmra.mrb[0].mxu0 %v91
  %v1051 = vpop.f32.mrb[0].mxu0
  %v1052 = vadd.f32 0.0, %v1051
  %v1053 = vpop.f32.mrb[0].mxu0
  %v1054 = vadd.f32 0.0, %v1053
  %v1055 = vpop.f32.mrb[0].mxu0
  %v1056 = vadd.f32 0.0, %v1055
  %v1057 = vpop.f32.mrb[0].mxu0
  %v1058 = vadd.f32 0.0, %v1057
  %1059 = vdwg.mxu0
  %1060 = vmatprep.subr.bf16.mxu0 %v951
  %1061 = vmatpush1.bf16.msra.mxu0 %v948
  %1062 = vmatprep.subr.bf16.mxu0 0
  %1063 = vmatpush1.bf16.msra.mxu0 0
  %1064 = vmatprep.subr.bf16.mxu0 0
  %1065 = vmatpush1.bf16.msra.mxu0 0
  %1066 = vmatprep.subr.bf16.mxu0 0
  %1067 = vmatpush1.bf16.msra.mxu0 0
  %1068 = vmatprep.subr.bf16.mxu0 0
  %1069 = vmatpush1.bf16.msra.mxu0 0
  %1070 = vmatprep.subr.bf16.mxu0 0
  %1071 = vmatpush1.bf16.msra.mxu0 0
  %1072 = vmatprep.subr.bf16.mxu0 0
  %1073 = vmatpush1.bf16.msra.mxu0 0
  %1074 = vmatprep.subr.bf16.mxu0 0
  %1075 = vmatpush1.bf16.msra.mxu0 0
  %1076 = vmatprep.subr.bf16.mxu0 0
  %1077 = vmatpush1.bf16.msra.mxu0 0
  %1078 = vmatprep.subr.bf16.mxu0 0
  %1079 = vmatpush1.bf16.msra.mxu0 0
  %1080 = vmatprep.subr.bf16.mxu0 0
  %1081 = vmatpush1.bf16.msra.mxu0 0
  %1082 = vmatprep.subr.bf16.mxu0 0
  %1083 = vmatpush1.bf16.msra.mxu0 0
  %1084 = vmatprep.subr.bf16.mxu0 0
  %1085 = vmatpush1.bf16.msra.mxu0 0
  %1086 = vmatprep.subr.bf16.mxu0 0
  %1087 = vmatpush1.bf16.msra.mxu0 0
  %1088 = vmatprep.subr.bf16.mxu0 0
  %1089 = vmatpush1.bf16.msra.mxu0 0
  %1090 = vmatprep.subr.bf16.mxu0 0
  %1091 = vmatpush1.bf16.msra.mxu0 0
  %1092 = vmatprep.mubr.bf16.mxu0 0
  %1093 = vmatmul.mubr.bf16.gmra.mrb[0].mxu0 %v91
  %v1094 = vpop.f32.mrb[0].mxu0
  %v1095 = vadd.f32 0.0, %v1094
  %v1096 = vpop.f32.mrb[0].mxu0
  %v1097 = vadd.f32 0.0, %v1096
  %v1098 = vpop.f32.mrb[0].mxu0
  %v1099 = vadd.f32 0.0, %v1098
  %v1100 = vpop.f32.mrb[0].mxu0
  %v1101 = vadd.f32 0.0, %v1100
  %1102 = vdwg.mxu0
  %1103 = vmatprep.subr.bf16.mxu0 %v957
  %1104 = vmatpush1.bf16.msra.mxu0 %v954
  %1105 = vmatprep.subr.bf16.mxu0 0
  %1106 = vmatpush1.bf16.msra.mxu0 0
  %1107 = vmatprep.subr.bf16.mxu0 0
  %1108 = vmatpush1.bf16.msra.mxu0 0
  %1109 = vmatprep.subr.bf16.mxu0 0
  %1110 = vmatpush1.bf16.msra.mxu0 0
  %1111 = vmatprep.subr.bf16.mxu0 0
  %1112 = vmatpush1.bf16.msra.mxu0 0
  %1113 = vmatprep.subr.bf16.mxu0 0
  %1114 = vmatpush1.bf16.msra.mxu0 0
  %1115 = vmatprep.subr.bf16.mxu0 0
  %1116 = vmatpush1.bf16.msra.mxu0 0
  %1117 = vmatprep.subr.bf16.mxu0 0
  %1118 = vmatpush1.bf16.msra.mxu0 0
  %1119 = vmatprep.subr.bf16.mxu0 0
  %1120 = vmatpush1.bf16.msra.mxu0 0
  %1121 = vmatprep.subr.bf16.mxu0 0
  %1122 = vmatpush1.bf16.msra.mxu0 0
  %1123 = vmatprep.subr.bf16.mxu0 0
  %1124 = vmatpush1.bf16.msra.mxu0 0
  %1125 = vmatprep.subr.bf16.mxu0 0
  %1126 = vmatpush1.bf16.msra.mxu0 0
  %1127 = vmatprep.subr.bf16.mxu0 0
  %1128 = vmatpush1.bf16.msra.mxu0 0
  %1129 = vmatprep.subr.bf16.mxu0 0
  %1130 = vmatpush1.bf16.msra.mxu0 0
  %1131 = vmatprep.subr.bf16.mxu0 0
  %1132 = vmatpush1.bf16.msra.mxu0 0
  %1133 = vmatprep.subr.bf16.mxu0 0
  %1134 = vmatpush1.bf16.msra.mxu0 0
  %1135 = vmatprep.mubr.bf16.mxu0 0
  %1136 = vmatmul.mubr.bf16.gmra.mrb[0].mxu0 %v91
  %v1137 = vpop.f32.mrb[0].mxu0
  %v1138 = vadd.f32 0.0, %v1137
  %v1139 = vpop.f32.mrb[0].mxu0
  %v1140 = vadd.f32 0.0, %v1139
  %v1141 = vpop.f32.mrb[0].mxu0
  %v1142 = vadd.f32 0.0, %v1141
  %v1143 = vpop.f32.mrb[0].mxu0
  %v1144 = vadd.f32 0.0, %v1143
  %1145 = vdwg.mxu0
  %1146 = vmatprep.subr.bf16.mxu0 %v963
  %1147 = vmatpush1.bf16.msra.mxu0 %v960
  %1148 = vmatprep.subr.bf16.mxu0 0
  %1149 = vmatpush1.bf16.msra.mxu0 0
  %1150 = vmatprep.subr.bf16.mxu0 0
  %1151 = vmatpush1.bf16.msra.mxu0 0
  %1152 = vmatprep.subr.bf16.mxu0 0
  %1153 = vmatpush1.bf16.msra.mxu0 0
  %1154 = vmatprep.subr.bf16.mxu0 0
  %1155 = vmatpush1.bf16.msra.mxu0 0
  %1156 = vmatprep.subr.bf16.mxu0 0
  %1157 = vmatpush1.bf16.msra.mxu0 0
  %1158 = vmatprep.subr.bf16.mxu0 0
  %1159 = vmatpush1.bf16.msra.mxu0 0
  %1160 = vmatprep.subr.bf16.mxu0 0
  %1161 = vmatpush1.bf16.msra.mxu0 0
  %1162 = vmatprep.subr.bf16.mxu0 0
  %1163 = vmatpush1.bf16.msra.mxu0 0
  %1164 = vmatprep.subr.bf16.mxu0 0
  %1165 = vmatpush1.bf16.msra.mxu0 0
  %1166 = vmatprep.subr.bf16.mxu0 0
  %1167 = vmatpush1.bf16.msra.mxu0 0
  %1168 = vmatprep.subr.bf16.mxu0 0
  %1169 = vmatpush1.bf16.msra.mxu0 0
  %1170 = vmatprep.subr.bf16.mxu0 0
  %1171 = vmatpush1.bf16.msra.mxu0 0
  %1172 = vmatprep.subr.bf16.mxu0 0
  %1173 = vmatpush1.bf16.msra.mxu0 0
  %1174 = vmatprep.subr.bf16.mxu0 0
  %1175 = vmatpush1.bf16.msra.mxu0 0
  %1176 = vmatprep.subr.bf16.mxu0 0
  %1177 = vmatpush1.bf16.msra.mxu0 0
  %1178 = vmatprep.mubr.bf16.mxu0 0
  %1179 = vmatmul.mubr.bf16.gmra.mrb[0].mxu0 %v91
  %v1180 = vpop.f32.mrb[0].mxu0
  %v1181 = vadd.f32 0.0, %v1180
  %v1182 = vpop.f32.mrb[0].mxu0
  %v1183 = vadd.f32 0.0, %v1182
  %v1184 = vpop.f32.mrb[0].mxu0
  %v1185 = vadd.f32 0.0, %v1184
  %v1186 = vpop.f32.mrb[0].mxu0
  %v1187 = vadd.f32 0.0, %v1186
  %1188 = vdwg.mxu0
  %1189 = vmatprep.subr.bf16.mxu0 %v969
  %1190 = vmatpush1.bf16.msra.mxu0 %v966
  %1191 = vmatprep.subr.bf16.mxu0 0
  %1192 = vmatpush1.bf16.msra.mxu0 0
  %1193 = vmatprep.subr.bf16.mxu0 0
  %1194 = vmatpush1.bf16.msra.mxu0 0
  %1195 = vmatprep.subr.bf16.mxu0 0
  %1196 = vmatpush1.bf16.msra.mxu0 0
  %1197 = vmatprep.subr.bf16.mxu0 0
  %1198 = vmatpush1.bf16.msra.mxu0 0
  %1199 = vmatprep.subr.bf16.mxu0 0
  %1200 = vmatpush1.bf16.msra.mxu0 0
  %1201 = vmatprep.subr.bf16.mxu0 0
  %1202 = vmatpush1.bf16.msra.mxu0 0
  %1203 = vmatprep.subr.bf16.mxu0 0
  %1204 = vmatpush1.bf16.msra.mxu0 0
  %1205 = vmatprep.subr.bf16.mxu0 0
  %1206 = vmatpush1.bf16.msra.mxu0 0
  %1207 = vmatprep.subr.bf16.mxu0 0
  %1208 = vmatpush1.bf16.msra.mxu0 0
  %1209 = vmatprep.subr.bf16.mxu0 0
  %1210 = vmatpush1.bf16.msra.mxu0 0
  %1211 = vmatprep.subr.bf16.mxu0 0
  %1212 = vmatpush1.bf16.msra.mxu0 0
  %1213 = vmatprep.subr.bf16.mxu0 0
  %1214 = vmatpush1.bf16.msra.mxu0 0
  %1215 = vmatprep.subr.bf16.mxu0 0
  %1216 = vmatpush1.bf16.msra.mxu0 0
  %1217 = vmatprep.subr.bf16.mxu0 0
  %1218 = vmatpush1.bf16.msra.mxu0 0
  %1219 = vmatprep.subr.bf16.mxu0 0
  %1220 = vmatpush1.bf16.msra.mxu0 0
  %1221 = vmatprep.mubr.bf16.mxu0 0
  %1222 = vmatmul.mubr.bf16.gmra.mrb[0].mxu0 %v91
  %v1223 = vpop.f32.mrb[0].mxu0
  %v1224 = vadd.f32 0.0, %v1223
  %v1225 = vpop.f32.mrb[0].mxu0
  %v1226 = vadd.f32 0.0, %v1225
  %v1227 = vpop.f32.mrb[0].mxu0
  %v1228 = vadd.f32 0.0, %v1227
  %v1229 = vpop.f32.mrb[0].mxu0
  %v1230 = vadd.f32 0.0, %v1229
  %1231 = vdwg.mxu0
  %1232 = vmatprep.subr.bf16.mxu0 0
  %1233 = vmatpush1.bf16.msra.mxu0 %v972
  %1234 = vmatprep.subr.bf16.mxu0 0
  %1235 = vmatpush1.bf16.msra.mxu0 0
  %1236 = vmatprep.subr.bf16.mxu0 0
  %1237 = vmatpush1.bf16.msra.mxu0 0
  %1238 = vmatprep.subr.bf16.mxu0 0
  %1239 = vmatpush1.bf16.msra.mxu0 0
  %1240 = vmatprep.subr.bf16.mxu0 0
  %1241 = vmatpush1.bf16.msra.mxu0 0
  %1242 = vmatprep.subr.bf16.mxu0 0
  %1243 = vmatpush1.bf16.msra.mxu0 0
  %1244 = vmatprep.subr.bf16.mxu0 0
  %1245 = vmatpush1.bf16.msra.mxu0 0
  %1246 = vmatprep.subr.bf16.mxu0 0
  %1247 = vmatpush1.bf16.msra.mxu0 0
  %1248 = vmatprep.subr.bf16.mxu0 0
  %1249 = vmatpush1.bf16.msra.mxu0 0
  %1250 = vmatprep.subr.bf16.mxu0 0
  %1251 = vmatpush1.bf16.msra.mxu0 0
  %1252 = vmatprep.subr.bf16.mxu0 0
  %1253 = vmatpush1.bf16.msra.mxu0 0
  %1254 = vmatprep.subr.bf16.mxu0 0
  %1255 = vmatpush1.bf16.msra.mxu0 0
  %1256 = vmatprep.subr.bf16.mxu0 0
  %1257 = vmatpush1.bf16.msra.mxu0 0
  %1258 = vmatprep.subr.bf16.mxu0 0
  %1259 = vmatpush1.bf16.msra.mxu0 0
  %1260 = vmatprep.subr.bf16.mxu0 0
  %1261 = vmatpush1.bf16.msra.mxu0 0
  %1262 = vmatprep.subr.bf16.mxu0 0
  %1263 = vmatpush1.bf16.msra.mxu0 0
  %1264 = vmatprep.mubr.bf16.mxu0 0
  %1265 = vmatmul.mubr.bf16.gmra.mrb[0].mxu0 %v91
  %v1266 = vpop.f32.mrb[0].mxu0
  %v1267 = vadd.f32 0.0, %v1266
  %v1268 = vpop.f32.mrb[0].mxu0
  %v1269 = vpop.f32.mrb[0].mxu0
  %v1270 = vadd.f32 0.0, %v1269
  %v1271 = vpop.f32.mrb[0].mxu0
  %1272 = vdwg.mxu0
  %v1273 = vmax.f32 %v841, %v1009
  %v1274 = vmax.f32 %v842, %v1011
  %v1275 = vmax.f32 %v843, %v1052
  %v1276 = vmax.f32 %v844, %v1054
  %v1277 = vmax.f32 %v845, %v1095
  %v1278 = vmax.f32 %v846, %v1097
  %v1279 = vmax.f32 %v847, %v1138
  %v1280 = vmax.f32 %v848, %v1140
  %v1281 = vmax.f32 %v849, %v1181
  %v1282 = vmax.f32 %v850, %v1183
  %v1283 = vmax.f32 %v851, %v1224
  %v1284 = vmax.f32 %v852, %v1226
  %v1285 = vmax.f32 %v853, %v1267
  %v1286 = vmax.f32 %v854, %v1013
  %v1287 = vmax.f32 %v855, %v1015
  %v1288 = vmax.f32 %v856, %v1056
  %v1289 = vmax.f32 %v857, %v1058
  %v1290 = vmax.f32 %v858, %v1099
  %v1291 = vmax.f32 %v859, %v1101
  %v1292 = vmax.f32 %v860, %v1142
  %v1293 = vmax.f32 %v861, %v1144
  %v1294 = vmax.f32 %v862, %v1185
  %v1295 = vmax.f32 %v863, %v1187
  %v1296 = vmax.f32 %v864, %v1228
  %v1297 = vmax.f32 %v865, %v1230
  %v1298 = vmax.f32 %v866, %v1270
  %s1299 = scalar_lea.vmem %s0, 312
  %v1300 = vld [vmem:[%s1299] sm:$0xff]
  %v1301 = vld [vmem:[%s1299 + $0x8] sm:$0xff]
  %v1302 = vld [vmem:[%s1299 + $0x10] sm:$0xff]
  %v1303 = vld [vmem:[%s1299 + $0x18] sm:$0xff]
  %v1304 = vld [vmem:[%s1299 + $0x20] sm:$0xff]
  %v1305 = vld [vmem:[%s1299 + $0x28] sm:$0xff]
  %v1306 = vld [vmem:[%s1299 + $0x30] sm:$0xf]
  %v1307 = vld [vmem:[%s1299 + $0x34] sm:$0x11]
  %v1308 = vld [vmem:[%s1299 + $0x3c] sm:$0x11]
  %v1309 = vld [vmem:[%s1299 + $0x44] sm:$0x11]
  %v1310 = vld [vmem:[%s1299 + $0x4c] sm:$0x11]
  %v1311 = vld [vmem:[%s1299 + $0x54] sm:$0x11]
  %v1312 = vld [vmem:[%s1299 + $0x5c] sm:$0x11]
  %v1313 = vld [vmem:[%s1299 + $0x64] sm:$0x1]
  %v1328 = vunpack.c.l.b16 %v1300
  %v1329 = vunpack.c.h.b16 %v1300
  %v1330 = vunpack.c.l.b16 %v1301
  %v1331 = vunpack.c.h.b16 %v1301
  %v1332 = vunpack.c.l.b16 %v1302
  %v1333 = vunpack.c.h.b16 %v1302
  %v1334 = vunpack.c.l.b16 %v1303
  %v1335 = vunpack.c.h.b16 %v1303
  %v1336 = vunpack.c.l.b16 %v1304
  %v1337 = vunpack.c.h.b16 %v1304
  %v1338 = vunpack.c.l.b16 %v1305
  %v1339 = vunpack.c.h.b16 %v1305
  %v1340 = vunpack.c.l.b16 %v1306
  %v1341 = vunpack.c.l.b16 %v1307
  %v1342 = vunpack.c.h.b16 %v1307
  %v1343 = vunpack.c.l.b16 %v1308
  %v1344 = vunpack.c.h.b16 %v1308
  %v1345 = vunpack.c.l.b16 %v1309
  %v1346 = vunpack.c.h.b16 %v1309
  %v1347 = vunpack.c.l.b16 %v1310
  %v1348 = vunpack.c.h.b16 %v1310
  %v1349 = vunpack.c.l.b16 %v1311
  %v1350 = vunpack.c.h.b16 %v1311
  %v1351 = vunpack.c.l.b16 %v1312
  %v1352 = vunpack.c.h.b16 %v1312
  %v1353 = vunpack.c.l.b16 %v1313
  %v1354 = vpack.c.b16 %v1341, %v1328
  %v1355 = vpack.c.b16 %v1342, %v1329
  %v1356 = vpack.c.b16 %v1343, %v1330
  %v1357 = vpack.c.b16 %v1344, %v1331
  %v1358 = vpack.c.b16 %v1345, %v1332
  %v1359 = vpack.c.b16 %v1346, %v1333
  %v1360 = vpack.c.b16 %v1347, %v1334
  %v1361 = vpack.c.b16 %v1348, %v1335
  %v1362 = vpack.c.b16 %v1349, %v1336
  %v1363 = vpack.c.b16 %v1350, %v1337
  %v1364 = vpack.c.b16 %v1351, %v1338
  %v1365 = vpack.c.b16 %v1352, %v1339
  %v1366 = vpack.c.b16 %v1353, %v1340
  %v1368 = vand.u32 %v1354, %v96
  %v1371 = vand.u32 %v1355, %v96
  %v1374 = vand.u32 %v1356, %v96
  %v1377 = vand.u32 %v1357, %v96
  %v1380 = vand.u32 %v1358, %v96
  %v1383 = vand.u32 %v1359, %v96
  %v1386 = vand.u32 %v1360, %v96
  %v1389 = vand.u32 %v1361, %v96
  %v1392 = vand.u32 %v1362, %v96
  %v1395 = vand.u32 %v1363, %v96
  %v1398 = vand.u32 %v1364, %v96
  %v1401 = vand.u32 %v1365, %v96
  %v1404 = vand.u32 %v1366, %v96
  %1406 = vmatprep.subr.bf16.mxu0 %v1371
  %1407 = vmatpush1.bf16.msra.mxu0 %v1368
  %1408 = vmatprep.subr.bf16.mxu0 0
  %1409 = vmatpush1.bf16.msra.mxu0 0
  %1410 = vmatprep.subr.bf16.mxu0 0
  %1411 = vmatpush1.bf16.msra.mxu0 0
  %1412 = vmatprep.subr.bf16.mxu0 0
  %1413 = vmatpush1.bf16.msra.mxu0 0
  %1414 = vmatprep.subr.bf16.mxu0 0
  %1415 = vmatpush1.bf16.msra.mxu0 0
  %1416 = vmatprep.subr.bf16.mxu0 0
  %1417 = vmatpush1.bf16.msra.mxu0 0
  %1418 = vmatprep.subr.bf16.mxu0 0
  %1419 = vmatpush1.bf16.msra.mxu0 0
  %1420 = vmatprep.subr.bf16.mxu0 0
  %1421 = vmatpush1.bf16.msra.mxu0 0
  %1422 = vmatprep.subr.bf16.mxu0 0
  %1423 = vmatpush1.bf16.msra.mxu0 0
  %1424 = vmatprep.subr.bf16.mxu0 0
  %1425 = vmatpush1.bf16.msra.mxu0 0
  %1426 = vmatprep.subr.bf16.mxu0 0
  %1427 = vmatpush1.bf16.msra.mxu0 0
  %1428 = vmatprep.subr.bf16.mxu0 0
  %1429 = vmatpush1.bf16.msra.mxu0 0
  %1430 = vmatprep.subr.bf16.mxu0 0
  %1431 = vmatpush1.bf16.msra.mxu0 0
  %1432 = vmatprep.subr.bf16.mxu0 0
  %1433 = vmatpush1.bf16.msra.mxu0 0
  %1434 = vmatprep.subr.bf16.mxu0 0
  %1435 = vmatpush1.bf16.msra.mxu0 0
  %1436 = vmatprep.subr.bf16.mxu0 0
  %1437 = vmatpush1.bf16.msra.mxu0 0
  %1438 = vmatprep.mubr.bf16.mxu0 0
  %1439 = vmatmul.mubr.bf16.gmra.mrb[0].mxu0 %v91
  %v1440 = vpop.f32.mrb[0].mxu0
  %v1441 = vadd.f32 0.0, %v1440
  %v1442 = vpop.f32.mrb[0].mxu0
  %v1443 = vadd.f32 0.0, %v1442
  %v1444 = vpop.f32.mrb[0].mxu0
  %v1445 = vadd.f32 0.0, %v1444
  %v1446 = vpop.f32.mrb[0].mxu0
  %v1447 = vadd.f32 0.0, %v1446
  %1448 = vdwg.mxu0
  %1449 = vmatprep.subr.bf16.mxu0 %v1377
  %1450 = vmatpush1.bf16.msra.mxu0 %v1374
  %1451 = vmatprep.subr.bf16.mxu0 0
  %1452 = vmatpush1.bf16.msra.mxu0 0
  %1453 = vmatprep.subr.bf16.mxu0 0
  %1454 = vmatpush1.bf16.msra.mxu0 0
  %1455 = vmatprep.subr.bf16.mxu0 0
  %1456 = vmatpush1.bf16.msra.mxu0 0
  %1457 = vmatprep.subr.bf16.mxu0 0
  %1458 = vmatpush1.bf16.msra.mxu0 0
  %1459 = vmatprep.subr.bf16.mxu0 0
  %1460 = vmatpush1.bf16.msra.mxu0 0
  %1461 = vmatprep.subr.bf16.mxu0 0
  %1462 = vmatpush1.bf16.msra.mxu0 0
  %1463 = vmatprep.subr.bf16.mxu0 0
  %1464 = vmatpush1.bf16.msra.mxu0 0
  %1465 = vmatprep.subr.bf16.mxu0 0
  %1466 = vmatpush1.bf16.msra.mxu0 0
  %1467 = vmatprep.subr.bf16.mxu0 0
  %1468 = vmatpush1.bf16.msra.mxu0 0
  %1469 = vmatprep.subr.bf16.mxu0 0
  %1470 = vmatpush1.bf16.msra.mxu0 0
  %1471 = vmatprep.subr.bf16.mxu0 0
  %1472 = vmatpush1.bf16.msra.mxu0 0
  %1473 = vmatprep.subr.bf16.mxu0 0
  %1474 = vmatpush1.bf16.msra.mxu0 0
  %1475 = vmatprep.subr.bf16.mxu0 0
  %1476 = vmatpush1.bf16.msra.mxu0 0
  %1477 = vmatprep.subr.bf16.mxu0 0
  %1478 = vmatpush1.bf16.msra.mxu0 0
  %1479 = vmatprep.subr.bf16.mxu0 0
  %1480 = vmatpush1.bf16.msra.mxu0 0
  %1481 = vmatprep.mubr.bf16.mxu0 0
  %1482 = vmatmul.mubr.bf16.gmra.mrb[0].mxu0 %v91
  %v1483 = vpop.f32.mrb[0].mxu0
  %v1484 = vadd.f32 0.0, %v1483
  %v1485 = vpop.f32.mrb[0].mxu0
  %v1486 = vadd.f32 0.0, %v1485
  %v1487 = vpop.f32.mrb[0].mxu0
  %v1488 = vadd.f32 0.0, %v1487
  %v1489 = vpop.f32.mrb[0].mxu0
  %v1490 = vadd.f32 0.0, %v1489
  %1491 = vdwg.mxu0
  %1492 = vmatprep.subr.bf16.mxu0 %v1383
  %1493 = vmatpush1.bf16.msra.mxu0 %v1380
  %1494 = vmatprep.subr.bf16.mxu0 0
  %1495 = vmatpush1.bf16.msra.mxu0 0
  %1496 = vmatprep.subr.bf16.mxu0 0
  %1497 = vmatpush1.bf16.msra.mxu0 0
  %1498 = vmatprep.subr.bf16.mxu0 0
  %1499 = vmatpush1.bf16.msra.mxu0 0
  %1500 = vmatprep.subr.bf16.mxu0 0
  %1501 = vmatpush1.bf16.msra.mxu0 0
  %1502 = vmatprep.subr.bf16.mxu0 0
  %1503 = vmatpush1.bf16.msra.mxu0 0
  %1504 = vmatprep.subr.bf16.mxu0 0
  %1505 = vmatpush1.bf16.msra.mxu0 0
  %1506 = vmatprep.subr.bf16.mxu0 0
  %1507 = vmatpush1.bf16.msra.mxu0 0
  %1508 = vmatprep.subr.bf16.mxu0 0
  %1509 = vmatpush1.bf16.msra.mxu0 0
  %1510 = vmatprep.subr.bf16.mxu0 0
  %1511 = vmatpush1.bf16.msra.mxu0 0
  %1512 = vmatprep.subr.bf16.mxu0 0
  %1513 = vmatpush1.bf16.msra.mxu0 0
  %1514 = vmatprep.subr.bf16.mxu0 0
  %1515 = vmatpush1.bf16.msra.mxu0 0
  %1516 = vmatprep.subr.bf16.mxu0 0
  %1517 = vmatpush1.bf16.msra.mxu0 0
  %1518 = vmatprep.subr.bf16.mxu0 0
  %1519 = vmatpush1.bf16.msra.mxu0 0
  %1520 = vmatprep.subr.bf16.mxu0 0
  %1521 = vmatpush1.bf16.msra.mxu0 0
  %1522 = vmatprep.subr.bf16.mxu0 0
  %1523 = vmatpush1.bf16.msra.mxu0 0
  %1524 = vmatprep.mubr.bf16.mxu0 0
  %1525 = vmatmul.mubr.bf16.gmra.mrb[0].mxu0 %v91
  %v1526 = vpop.f32.mrb[0].mxu0
  %v1527 = vadd.f32 0.0, %v1526
  %v1528 = vpop.f32.mrb[0].mxu0
  %v1529 = vadd.f32 0.0, %v1528
  %v1530 = vpop.f32.mrb[0].mxu0
  %v1531 = vadd.f32 0.0, %v1530
  %v1532 = vpop.f32.mrb[0].mxu0
  %v1533 = vadd.f32 0.0, %v1532
  %1534 = vdwg.mxu0
  %1535 = vmatprep.subr.bf16.mxu0 %v1389
  %1536 = vmatpush1.bf16.msra.mxu0 %v1386
  %1537 = vmatprep.subr.bf16.mxu0 0
  %1538 = vmatpush1.bf16.msra.mxu0 0
  %1539 = vmatprep.subr.bf16.mxu0 0
  %1540 = vmatpush1.bf16.msra.mxu0 0
  %1541 = vmatprep.subr.bf16.mxu0 0
  %1542 = vmatpush1.bf16.msra.mxu0 0
  %1543 = vmatprep.subr.bf16.mxu0 0
  %1544 = vmatpush1.bf16.msra.mxu0 0
  %1545 = vmatprep.subr.bf16.mxu0 0
  %1546 = vmatpush1.bf16.msra.mxu0 0
  %1547 = vmatprep.subr.bf16.mxu0 0
  %1548 = vmatpush1.bf16.msra.mxu0 0
  %1549 = vmatprep.subr.bf16.mxu0 0
  %1550 = vmatpush1.bf16.msra.mxu0 0
  %1551 = vmatprep.subr.bf16.mxu0 0
  %1552 = vmatpush1.bf16.msra.mxu0 0
  %1553 = vmatprep.subr.bf16.mxu0 0
  %1554 = vmatpush1.bf16.msra.mxu0 0
  %1555 = vmatprep.subr.bf16.mxu0 0
  %1556 = vmatpush1.bf16.msra.mxu0 0
  %1557 = vmatprep.subr.bf16.mxu0 0
  %1558 = vmatpush1.bf16.msra.mxu0 0
  %1559 = vmatprep.subr.bf16.mxu0 0
  %1560 = vmatpush1.bf16.msra.mxu0 0
  %1561 = vmatprep.subr.bf16.mxu0 0
  %1562 = vmatpush1.bf16.msra.mxu0 0
  %1563 = vmatprep.subr.bf16.mxu0 0
  %1564 = vmatpush1.bf16.msra.mxu0 0
  %1565 = vmatprep.subr.bf16.mxu0 0
  %1566 = vmatpush1.bf16.msra.mxu0 0
  %1567 = vmatprep.mubr.bf16.mxu0 0
  %1568 = vmatmul.mubr.bf16.gmra.mrb[0].mxu0 %v91
  %v1569 = vpop.f32.mrb[0].mxu0
  %v1570 = vadd.f32 0.0, %v1569
  %v1571 = vpop.f32.mrb[0].mxu0
  %v1572 = vadd.f32 0.0, %v1571
  %v1573 = vpop.f32.mrb[0].mxu0
  %v1574 = vadd.f32 0.0, %v1573
  %v1575 = vpop.f32.mrb[0].mxu0
  %v1576 = vadd.f32 0.0, %v1575
  %1577 = vdwg.mxu0
  %1578 = vmatprep.subr.bf16.mxu0 %v1395
  %1579 = vmatpush1.bf16.msra.mxu0 %v1392
  %1580 = vmatprep.subr.bf16.mxu0 0
  %1581 = vmatpush1.bf16.msra.mxu0 0
  %1582 = vmatprep.subr.bf16.mxu0 0
  %1583 = vmatpush1.bf16.msra.mxu0 0
  %1584 = vmatprep.subr.bf16.mxu0 0
  %1585 = vmatpush1.bf16.msra.mxu0 0
  %1586 = vmatprep.subr.bf16.mxu0 0
  %1587 = vmatpush1.bf16.msra.mxu0 0
  %1588 = vmatprep.subr.bf16.mxu0 0
  %1589 = vmatpush1.bf16.msra.mxu0 0
  %1590 = vmatprep.subr.bf16.mxu0 0
  %1591 = vmatpush1.bf16.msra.mxu0 0
  %1592 = vmatprep.subr.bf16.mxu0 0
  %1593 = vmatpush1.bf16.msra.mxu0 0
  %1594 = vmatprep.subr.bf16.mxu0 0
  %1595 = vmatpush1.bf16.msra.mxu0 0
  %1596 = vmatprep.subr.bf16.mxu0 0
  %1597 = vmatpush1.bf16.msra.mxu0 0
  %1598 = vmatprep.subr.bf16.mxu0 0
  %1599 = vmatpush1.bf16.msra.mxu0 0
  %1600 = vmatprep.subr.bf16.mxu0 0
  %1601 = vmatpush1.bf16.msra.mxu0 0
  %1602 = vmatprep.subr.bf16.mxu0 0
  %1603 = vmatpush1.bf16.msra.mxu0 0
  %1604 = vmatprep.subr.bf16.mxu0 0
  %1605 = vmatpush1.bf16.msra.mxu0 0
  %1606 = vmatprep.subr.bf16.mxu0 0
  %1607 = vmatpush1.bf16.msra.mxu0 0
  %1608 = vmatprep.subr.bf16.mxu0 0
  %1609 = vmatpush1.bf16.msra.mxu0 0
  %1610 = vmatprep.mubr.bf16.mxu0 0
  %1611 = vmatmul.mubr.bf16.gmra.mrb[0].mxu0 %v91
  %v1612 = vpop.f32.mrb[0].mxu0
  %v1613 = vadd.f32 0.0, %v1612
  %v1614 = vpop.f32.mrb[0].mxu0
  %v1615 = vadd.f32 0.0, %v1614
  %v1616 = vpop.f32.mrb[0].mxu0
  %v1617 = vadd.f32 0.0, %v1616
  %v1618 = vpop.f32.mrb[0].mxu0
  %v1619 = vadd.f32 0.0, %v1618
  %1620 = vdwg.mxu0
  %1621 = vmatprep.subr.bf16.mxu0 %v1401
  %1622 = vmatpush1.bf16.msra.mxu0 %v1398
  %1623 = vmatprep.subr.bf16.mxu0 0
  %1624 = vmatpush1.bf16.msra.mxu0 0
  %1625 = vmatprep.subr.bf16.mxu0 0
  %1626 = vmatpush1.bf16.msra.mxu0 0
  %1627 = vmatprep.subr.bf16.mxu0 0
  %1628 = vmatpush1.bf16.msra.mxu0 0
  %1629 = vmatprep.subr.bf16.mxu0 0
  %1630 = vmatpush1.bf16.msra.mxu0 0
  %1631 = vmatprep.subr.bf16.mxu0 0
  %1632 = vmatpush1.bf16.msra.mxu0 0
  %1633 = vmatprep.subr.bf16.mxu0 0
  %1634 = vmatpush1.bf16.msra.mxu0 0
  %1635 = vmatprep.subr.bf16.mxu0 0
  %1636 = vmatpush1.bf16.msra.mxu0 0
  %1637 = vmatprep.subr.bf16.mxu0 0
  %1638 = vmatpush1.bf16.msra.mxu0 0
  %1639 = vmatprep.subr.bf16.mxu0 0
  %1640 = vmatpush1.bf16.msra.mxu0 0
  %1641 = vmatprep.subr.bf16.mxu0 0
  %1642 = vmatpush1.bf16.msra.mxu0 0
  %1643 = vmatprep.subr.bf16.mxu0 0
  %1644 = vmatpush1.bf16.msra.mxu0 0
  %1645 = vmatprep.subr.bf16.mxu0 0
  %1646 = vmatpush1.bf16.msra.mxu0 0
  %1647 = vmatprep.subr.bf16.mxu0 0
  %1648 = vmatpush1.bf16.msra.mxu0 0
  %1649 = vmatprep.subr.bf16.mxu0 0
  %1650 = vmatpush1.bf16.msra.mxu0 0
  %1651 = vmatprep.subr.bf16.mxu0 0
  %1652 = vmatpush1.bf16.msra.mxu0 0
  %1653 = vmatprep.mubr.bf16.mxu0 0
  %1654 = vmatmul.mubr.bf16.gmra.mrb[0].mxu0 %v91
  %v1655 = vpop.f32.mrb[0].mxu0
  %v1656 = vadd.f32 0.0, %v1655
  %v1657 = vpop.f32.mrb[0].mxu0
  %v1658 = vadd.f32 0.0, %v1657
  %v1659 = vpop.f32.mrb[0].mxu0
  %v1660 = vadd.f32 0.0, %v1659
  %v1661 = vpop.f32.mrb[0].mxu0
  %v1662 = vadd.f32 0.0, %v1661
  %1663 = vdwg.mxu0
  %1664 = vmatprep.subr.bf16.mxu0 0
  %1665 = vmatpush1.bf16.msra.mxu0 %v1404
  %1666 = vmatprep.subr.bf16.mxu0 0
  %1667 = vmatpush1.bf16.msra.mxu0 0
  %1668 = vmatprep.subr.bf16.mxu0 0
  %1669 = vmatpush1.bf16.msra.mxu0 0
  %1670 = vmatprep.subr.bf16.mxu0 0
  %1671 = vmatpush1.bf16.msra.mxu0 0
  %1672 = vmatprep.subr.bf16.mxu0 0
  %1673 = vmatpush1.bf16.msra.mxu0 0
  %1674 = vmatprep.subr.bf16.mxu0 0
  %1675 = vmatpush1.bf16.msra.mxu0 0
  %1676 = vmatprep.subr.bf16.mxu0 0
  %1677 = vmatpush1.bf16.msra.mxu0 0
  %1678 = vmatprep.subr.bf16.mxu0 0
  %1679 = vmatpush1.bf16.msra.mxu0 0
  %1680 = vmatprep.subr.bf16.mxu0 0
  %1681 = vmatpush1.bf16.msra.mxu0 0
  %1682 = vmatprep.subr.bf16.mxu0 0
  %1683 = vmatpush1.bf16.msra.mxu0 0
  %1684 = vmatprep.subr.bf16.mxu0 0
  %1685 = vmatpush1.bf16.msra.mxu0 0
  %1686 = vmatprep.subr.bf16.mxu0 0
  %1687 = vmatpush1.bf16.msra.mxu0 0
  %1688 = vmatprep.subr.bf16.mxu0 0
  %1689 = vmatpush1.bf16.msra.mxu0 0
  %1690 = vmatprep.subr.bf16.mxu0 0
  %1691 = vmatpush1.bf16.msra.mxu0 0
  %1692 = vmatprep.subr.bf16.mxu0 0
  %1693 = vmatpush1.bf16.msra.mxu0 0
  %1694 = vmatprep.subr.bf16.mxu0 0
  %1695 = vmatpush1.bf16.msra.mxu0 0
  %1696 = vmatprep.mubr.bf16.mxu0 0
  %1697 = vmatmul.mubr.bf16.gmra.mrb[0].mxu0 %v91
  %v1698 = vpop.f32.mrb[0].mxu0
  %v1699 = vadd.f32 0.0, %v1698
  %v1700 = vpop.f32.mrb[0].mxu0
  %v1701 = vpop.f32.mrb[0].mxu0
  %v1702 = vadd.f32 0.0, %v1701
  %v1703 = vpop.f32.mrb[0].mxu0
  %1704 = vdwg.mxu0
  %v1705 = vmax.f32 %v1273, %v1441
  %v1706 = vmax.f32 %v1274, %v1443
  %v1707 = vmax.f32 %v1275, %v1484
  %v1708 = vmax.f32 %v1276, %v1486
  %v1709 = vmax.f32 %v1277, %v1527
  %v1710 = vmax.f32 %v1278, %v1529
  %v1711 = vmax.f32 %v1279, %v1570
  %v1712 = vmax.f32 %v1280, %v1572
  %v1713 = vmax.f32 %v1281, %v1613
  %v1714 = vmax.f32 %v1282, %v1615
  %v1715 = vmax.f32 %v1283, %v1656
  %v1716 = vmax.f32 %v1284, %v1658
  %v1717 = vmax.f32 %v1285, %v1699
  %v1718 = vmax.f32 %v1286, %v1445
  %v1719 = vmax.f32 %v1287, %v1447
  %v1720 = vmax.f32 %v1288, %v1488
  %v1721 = vmax.f32 %v1289, %v1490
  %v1722 = vmax.f32 %v1290, %v1531
  %v1723 = vmax.f32 %v1291, %v1533
  %v1724 = vmax.f32 %v1292, %v1574
  %v1725 = vmax.f32 %v1293, %v1576
  %v1726 = vmax.f32 %v1294, %v1617
  %v1727 = vmax.f32 %v1295, %v1619
  %v1728 = vmax.f32 %v1296, %v1660
  %v1729 = vmax.f32 %v1297, %v1662
  %v1730 = vmax.f32 %v1298, %v1702
  %v1731 = vld [vmem:[%s2] sm:$0xff]
  %v1732 = vld [vmem:[%s2 + $0x8] sm:$0xff]
  %1734 = vset.pattern.permute.xlu0 0
  %1735 = vperm.xlu0 %1734, %v1731
  %v1736 = vpop.permute.xlu0 %1735
  %1739 = vset.pattern.permute.xlu0 0
  %1740 = vperm.xlu0 %1739, %v1732
  %v1741 = vpop.permute.xlu0 %1740
  %v1743 = vadd.f32 %v1705, %v1736
  %v1744 = vadd.f32 %v1706, %v1736
  %v1745 = vadd.f32 %v1707, %v1736
  %v1746 = vadd.f32 %v1708, %v1736
  %v1747 = vadd.f32 %v1709, %v1736
  %v1748 = vadd.f32 %v1710, %v1736
  %v1749 = vadd.f32 %v1711, %v1736
  %v1750 = vadd.f32 %v1712, %v1736
  %v1751 = vadd.f32 %v1713, %v1736
  %v1752 = vadd.f32 %v1714, %v1736
  %v1753 = vadd.f32 %v1715, %v1736
  %v1754 = vadd.f32 %v1716, %v1736
  %v1755 = vadd.f32 %v1717, %v1736
  %v1756 = vadd.f32 %v1718, %v1741
  %v1757 = vadd.f32 %v1719, %v1741
  %v1758 = vadd.f32 %v1720, %v1741
  %v1759 = vadd.f32 %v1721, %v1741
  %v1760 = vadd.f32 %v1722, %v1741
  %v1761 = vadd.f32 %v1723, %v1741
  %v1762 = vadd.f32 %v1724, %v1741
  %v1763 = vadd.f32 %v1725, %v1741
  %v1764 = vadd.f32 %v1726, %v1741
  %v1765 = vadd.f32 %v1727, %v1741
  %v1766 = vadd.f32 %v1728, %v1741
  %v1767 = vadd.f32 %v1729, %v1741
  %v1768 = vadd.f32 %v1730, %v1741
  %v1769 = vmax.f32 %v1743, 0.0
  %v1770 = vmax.f32 %v1744, 0.0
  %v1771 = vmax.f32 %v1745, 0.0
  %v1772 = vmax.f32 %v1746, 0.0
  %v1773 = vmax.f32 %v1747, 0.0
  %v1774 = vmax.f32 %v1748, 0.0
  %v1775 = vmax.f32 %v1749, 0.0
  %v1776 = vmax.f32 %v1750, 0.0
  %v1777 = vmax.f32 %v1751, 0.0
  %v1778 = vmax.f32 %v1752, 0.0
  %v1779 = vmax.f32 %v1753, 0.0
  %v1780 = vmax.f32 %v1754, 0.0
  %v1781 = vmax.f32 %v1755, 0.0
  %v1782 = vmax.f32 %v1756, 0.0
  %v1783 = vmax.f32 %v1757, 0.0
  %v1784 = vmax.f32 %v1758, 0.0
  %v1785 = vmax.f32 %v1759, 0.0
  %v1786 = vmax.f32 %v1760, 0.0
  %v1787 = vmax.f32 %v1761, 0.0
  %v1788 = vmax.f32 %v1762, 0.0
  %v1789 = vmax.f32 %v1763, 0.0
  %v1790 = vmax.f32 %v1764, 0.0
  %v1791 = vmax.f32 %v1765, 0.0
  %v1792 = vmax.f32 %v1766, 0.0
  %v1793 = vmax.f32 %v1767, 0.0
  %v1794 = vmax.f32 %v1768, 0.0
  %v1795 = vpack.c.bf16 %v1782, %v1769
  %v1796 = vpack.c.bf16 %v1783, %v1770
  %v1797 = vpack.c.bf16 %v1784, %v1771
  %v1798 = vpack.c.bf16 %v1785, %v1772
  %v1799 = vpack.c.bf16 %v1786, %v1773
  %v1800 = vpack.c.bf16 %v1787, %v1774
  %v1801 = vpack.c.bf16 %v1788, %v1775
  %v1802 = vpack.c.bf16 %v1789, %v1776
  %v1803 = vpack.c.bf16 %v1790, %v1777
  %v1804 = vpack.c.bf16 %v1791, %v1778
  %v1805 = vpack.c.bf16 %v1792, %v1779
  %v1806 = vpack.c.bf16 %v1793, %v1780
  %v1807 = vpack.c.bf16 %v1794, %v1781
  %v1821 = vunpack.c.l.b16 %v1795
  %v1822 = vunpack.c.l.b16 %v1796
  %v1823 = vunpack.c.l.b16 %v1797
  %v1824 = vunpack.c.l.b16 %v1798
  %v1825 = vunpack.c.l.b16 %v1799
  %v1826 = vunpack.c.l.b16 %v1800
  %v1827 = vunpack.c.l.b16 %v1801
  %v1828 = vunpack.c.l.b16 %v1802
  %v1829 = vunpack.c.l.b16 %v1803
  %v1830 = vunpack.c.l.b16 %v1804
  %v1831 = vunpack.c.l.b16 %v1805
  %v1832 = vunpack.c.l.b16 %v1806
  %v1833 = vunpack.c.l.b16 %v1807
  %v1834 = vunpack.c.h.b16 %v1795
  %v1835 = vunpack.c.h.b16 %v1796
  %v1836 = vunpack.c.h.b16 %v1797
  %v1837 = vunpack.c.h.b16 %v1798
  %v1838 = vunpack.c.h.b16 %v1799
  %v1839 = vunpack.c.h.b16 %v1800
  %v1840 = vunpack.c.h.b16 %v1801
  %v1841 = vunpack.c.h.b16 %v1802
  %v1842 = vunpack.c.h.b16 %v1803
  %v1843 = vunpack.c.h.b16 %v1804
  %v1844 = vunpack.c.h.b16 %v1805
  %v1845 = vunpack.c.h.b16 %v1806
  %v1846 = vunpack.c.h.b16 %v1807
  %v1847 = vpack.c.b16 %v1822, %v1821
  %v1848 = vpack.c.b16 %v1824, %v1823
  %v1849 = vpack.c.b16 %v1826, %v1825
  %v1850 = vpack.c.b16 %v1828, %v1827
  %v1851 = vpack.c.b16 %v1830, %v1829
  %v1852 = vpack.c.b16 %v1832, %v1831
  %v1853 = vpack.c.b16 %v1833, %v1833
  %v1854 = vpack.c.b16 %v1835, %v1834
  %v1855 = vpack.c.b16 %v1837, %v1836
  %v1856 = vpack.c.b16 %v1839, %v1838
  %v1857 = vpack.c.b16 %v1841, %v1840
  %v1858 = vpack.c.b16 %v1843, %v1842
  %v1859 = vpack.c.b16 %v1845, %v1844
  %v1860 = vpack.c.b16 %v1846, %v1846
  %1875 = vst [vmem:[%s3] sm:$0xff] %v1847
  %1876 = vst [vmem:[%s3 + $0x8] sm:$0xff] %v1848
  %1877 = vst [vmem:[%s3 + $0x10] sm:$0xff] %v1849
  %1878 = vst [vmem:[%s3 + $0x18] sm:$0xff] %v1850
  %1879 = vst [vmem:[%s3 + $0x20] sm:$0xff] %v1851
  %1880 = vst [vmem:[%s3 + $0x28] sm:$0xff] %v1852
  %vm1881 = vcmask 257024
  %1882 = vst.msk [vmem:[%s3 + $0x30] sm:$0xf] %vm1881, %v1853
  %1883 = vst [vmem:[%s3 + $0x34] sm:$0xff] %v1854
  %1884 = vst [vmem:[%s3 + $0x3c] sm:$0xff] %v1855
  %1885 = vst [vmem:[%s3 + $0x44] sm:$0xff] %v1856
  %1886 = vst [vmem:[%s3 + $0x4c] sm:$0xff] %v1857
  %1887 = vst [vmem:[%s3 + $0x54] sm:$0xff] %v1858
  %1888 = vst [vmem:[%s3 + $0x5c] sm:$0xff] %v1859
  %1889 = vst.msk [vmem:[%s3 + $0x64] sm:$0xf] %vm1881, %v1860
  // Predicated region
  $region14: #{nepali_cnn_forward.3} parent=0 // pred_check
    _
  $region15: #{nepali_cnn_forward.3} parent=0 // pred_check_branch
    %1891 = sbr.rel (0) target = $region17
  $region16: #{nepali_cnn_forward.3} parent=0 // pred_region
    _
  $region17: #{nepali_cnn_forward.3} parent=0 // pred_fallthru
    _
  // Predicated region
  $region18: #{nepali_cnn_forward.3} parent=0 // pred_check
    _
  $region19: #{nepali_cnn_forward.3} parent=0 // pred_check_branch
    %1893 = sbr.rel (0) target = $region21
  $region20: #{nepali_cnn_forward.3} parent=0 // pred_region
    _
  $region21: #{nepali_cnn_forward.3} parent=0 // pred_fallthru
    _

// kernel: nepali_cnn_forward.4
$region0: #{nepali_cnn_forward.4}
  #allocation0 [shape = 'u32[]', space=smem, size = 0x4, offset = 0x4, fixed_abs, tag = 'smem constant byte address 0x4 - core index']
  #allocation1 [shape = 'u32[144,128]{1,0:T(1,128)}', space=vmem, size = 0x12000, scoped, tag = 'internal scratch']
  %s0 = inlined_call_operand.vmem [shape: bf16[4,144,392], index: 0, kind: input, shape index: {}]
  %s1 = inlined_call_operand.vmem [shape: bf16[32,144], index: 1, kind: input, shape index: {}]
  %s2 = inlined_call_operand.vmem [shape: f32[32,1], index: 2, kind: input, shape index: {}]
  %s3 = inlined_call_operand.vmem [shape: bf16[32,392], index: 3, kind: output, shape index: {}]
  %s4 = sld [smem:[#allocation0]]
  $region22: #{nepali_cnn_forward.4} parent=0
    _
  %s6 = ssub.s32 1, %s4
  %s7 = scalar_select 0, %s6, %s4
  // Predicated region
  $region2: #{nepali_cnn_forward.4} parent=0 // pred_check
    _
  $region3: #{nepali_cnn_forward.4} parent=0 // pred_check_branch
    %9 = sbr.rel (0) target = $region5
  $region4: #{nepali_cnn_forward.4} parent=0 // pred_region
    _
  $region5: #{nepali_cnn_forward.4} parent=0 // pred_fallthru
    _
  // Predicated region
  $region6: #{nepali_cnn_forward.4} parent=0 // pred_check
    _
  $region7: #{nepali_cnn_forward.4} parent=0 // pred_check_branch
    %11 = sbr.rel (0) target = $region9
  $region8: #{nepali_cnn_forward.4} parent=0 // pred_region
    _
  $region9: #{nepali_cnn_forward.4} parent=0 // pred_fallthru
    _
  // Predicated region
  $region10: #{nepali_cnn_forward.4} parent=0 // pred_check
    _
  $region11: #{nepali_cnn_forward.4} parent=0 // pred_check_branch
    %13 = sbr.rel (0) target = $region13
  $region12: #{nepali_cnn_forward.4} parent=0 // pred_region
    _
  $region13: #{nepali_cnn_forward.4} parent=0 // pred_fallthru
    _
  %v15 = vld [vmem:[%s1] sm:$0xff]
  %v16 = vld [vmem:[%s1 + $0x8] sm:$0xff]
  %v17 = vld [vmem:[%s1 + $0x10] sm:$0xff]
  %v18 = vld [vmem:[%s1 + $0x18] sm:$0xff]
  %v19 = vld [vmem:[%s0] sm:$0xff]
  %v20 = vld [vmem:[%s0 + $0x8] sm:$0xff]
  %v21 = vld [vmem:[%s0 + $0x10] sm:$0xff]
  %v22 = vld [vmem:[%s0 + $0x18] sm:$0xff]
  %v23 = vld [vmem:[%s0 + $0x20] sm:$0xff]
  %v24 = vld [vmem:[%s0 + $0x28] sm:$0xff]
  %v25 = vld [vmem:[%s0 + $0x30] sm:$0xff]
  %v26 = vld [vmem:[%s0 + $0x38] sm:$0xff]
  %v27 = vld [vmem:[%s0 + $0x40] sm:$0xff]
  %v28 = vld [vmem:[%s0 + $0x48] sm:$0xff]
  %v29 = vld [vmem:[%s0 + $0x50] sm:$0xff]
  %v30 = vld [vmem:[%s0 + $0x58] sm:$0xff]
  %v31 = vld [vmem:[%s0 + $0x60] sm:$0xff]
  %v32 = vld [vmem:[%s0 + $0x68] sm:$0xff]
  %v33 = vld [vmem:[%s0 + $0x70] sm:$0xff]
  %v34 = vld [vmem:[%s0 + $0x78] sm:$0xff]
  %v35 = vld [vmem:[%s0 + $0x80] sm:$0xff]
  %v36 = vld [vmem:[%s0 + $0x88] sm:$0xff]
  %v37 = vld [vmem:[%s0 + $0x90] sm:$0xff]
  %v38 = vld [vmem:[%s0 + $0x98] sm:$0xff]
  %v39 = vld [vmem:[%s0 + $0xa0] sm:$0xff]
  %v40 = vld [vmem:[%s0 + $0xa8] sm:$0xff]
  %v41 = vld [vmem:[%s0 + $0xb0] sm:$0xff]
  %v42 = vld [vmem:[%s0 + $0xb8] sm:$0xff]
  %v43 = vld [vmem:[%s0 + $0xc0] sm:$0xff]
  %v44 = vld [vmem:[%s0 + $0xc8] sm:$0xff]
  %v45 = vld [vmem:[%s0 + $0xd0] sm:$0xff]
  %v46 = vld [vmem:[%s0 + $0xd8] sm:$0xff]
  %v47 = vld [vmem:[%s0 + $0xe0] sm:$0xff]
  %v48 = vld [vmem:[%s0 + $0xe8] sm:$0xff]
  %v49 = vld [vmem:[%s0 + $0xf0] sm:$0xff]
  %v50 = vld [vmem:[%s0 + $0xf8] sm:$0xff]
  %v51 = vld [vmem:[%s0 + $0x100] sm:$0xff]
  %v52 = vld [vmem:[%s0 + $0x108] sm:$0xff]
  %v53 = vld [vmem:[%s0 + $0x110] sm:$0xff]
  %v54 = vld [vmem:[%s0 + $0x118] sm:$0xff]
  %v59 = vunpack.c.l.b16 %v15
  %v60 = vunpack.c.h.b16 %v15
  %v61 = vunpack.c.l.b16 %v16
  %v62 = vunpack.c.h.b16 %v16
  %v63 = vunpack.c.l.b16 %v17
  %v64 = vunpack.c.h.b16 %v17
  %v65 = vunpack.c.l.b16 %v18
  %v66 = vunpack.c.h.b16 %v18
  %v67 = vpack.c.b16 %v61, %v59
  %v68 = vpack.c.b16 %v62, %v60
  %v69 = vpack.c.b16 %v65, %v63
  %v70 = vpack.c.b16 %v66, %v64
  %v109 = vunpack.c.l.b16 %v19
  %v110 = vunpack.c.h.b16 %v19
  %v111 = vunpack.c.l.b16 %v20
  %v112 = vunpack.c.h.b16 %v20
  %v113 = vunpack.c.l.b16 %v21
  %v114 = vunpack.c.h.b16 %v21
  %v115 = vunpack.c.l.b16 %v22
  %v116 = vunpack.c.h.b16 %v22
  %v117 = vunpack.c.l.b16 %v23
  %v118 = vunpack.c.h.b16 %v23
  %v119 = vunpack.c.l.b16 %v24
  %v120 = vunpack.c.h.b16 %v24
  %v121 = vunpack.c.l.b16 %v25
  %v122 = vunpack.c.h.b16 %v25
  %v123 = vunpack.c.l.b16 %v26
  %v124 = vunpack.c.h.b16 %v26
  %v125 = vunpack.c.l.b16 %v27
  %v126 = vunpack.c.h.b16 %v27
  %v127 = vunpack.c.l.b16 %v28
  %v128 = vunpack.c.h.b16 %v28
  %v129 = vunpack.c.l.b16 %v29
  %v130 = vunpack.c.h.b16 %v29
  %v131 = vunpack.c.l.b16 %v30
  %v132 = vunpack.c.h.b16 %v30
  %v133 = vunpack.c.l.b16 %v31
  %v134 = vunpack.c.h.b16 %v31
  %v135 = vunpack.c.l.b16 %v32
  %v136 = vunpack.c.h.b16 %v32
  %v137 = vunpack.c.l.b16 %v33
  %v138 = vunpack.c.h.b16 %v33
  %v139 = vunpack.c.l.b16 %v34
  %v140 = vunpack.c.h.b16 %v34
  %v141 = vunpack.c.l.b16 %v35
  %v142 = vunpack.c.h.b16 %v35
  %v143 = vunpack.c.l.b16 %v36
  %v144 = vunpack.c.h.b16 %v36
  %v145 = vunpack.c.l.b16 %v37
  %v146 = vunpack.c.h.b16 %v37
  %v147 = vunpack.c.l.b16 %v38
  %v148 = vunpack.c.h.b16 %v38
  %v149 = vunpack.c.l.b16 %v39
  %v150 = vunpack.c.h.b16 %v39
  %v151 = vunpack.c.l.b16 %v40
  %v152 = vunpack.c.h.b16 %v40
  %v153 = vunpack.c.l.b16 %v41
  %v154 = vunpack.c.h.b16 %v41
  %v155 = vunpack.c.l.b16 %v42
  %v156 = vunpack.c.h.b16 %v42
  %v157 = vunpack.c.l.b16 %v43
  %v158 = vunpack.c.h.b16 %v43
  %v159 = vunpack.c.l.b16 %v44
  %v160 = vunpack.c.h.b16 %v44
  %v161 = vunpack.c.l.b16 %v45
  %v162 = vunpack.c.h.b16 %v45
  %v163 = vunpack.c.l.b16 %v46
  %v164 = vunpack.c.h.b16 %v46
  %v165 = vunpack.c.l.b16 %v47
  %v166 = vunpack.c.h.b16 %v47
  %v167 = vunpack.c.l.b16 %v48
  %v168 = vunpack.c.h.b16 %v48
  %v169 = vunpack.c.l.b16 %v49
  %v170 = vunpack.c.h.b16 %v49
  %v171 = vunpack.c.l.b16 %v50
  %v172 = vunpack.c.h.b16 %v50
  %v173 = vunpack.c.l.b16 %v51
  %v174 = vunpack.c.h.b16 %v51
  %v175 = vunpack.c.l.b16 %v52
  %v176 = vunpack.c.h.b16 %v52
  %v177 = vunpack.c.l.b16 %v53
  %v178 = vunpack.c.h.b16 %v53
  %v179 = vunpack.c.l.b16 %v54
  %v180 = vunpack.c.h.b16 %v54
  %v181 = vpack.c.b16 %v113, %v109
  %v182 = vpack.c.b16 %v114, %v110
  %v183 = vpack.c.b16 %v115, %v111
  %v184 = vpack.c.b16 %v116, %v112
  %v185 = vpack.c.b16 %v121, %v117
  %v186 = vpack.c.b16 %v122, %v118
  %v187 = vpack.c.b16 %v123, %v119
  %v188 = vpack.c.b16 %v124, %v120
  %v189 = vpack.c.b16 %v129, %v125
  %v190 = vpack.c.b16 %v130, %v126
  %v191 = vpack.c.b16 %v131, %v127
  %v192 = vpack.c.b16 %v132, %v128
  %v193 = vpack.c.b16 %v137, %v133
  %v194 = vpack.c.b16 %v138, %v134
  %v195 = vpack.c.b16 %v139, %v135
  %v196 = vpack.c.b16 %v140, %v136
  %v197 = vpack.c.b16 %v145, %v141
  %v198 = vpack.c.b16 %v146, %v142
  %v199 = vpack.c.b16 %v147, %v143
  %v200 = vpack.c.b16 %v148, %v144
  %v201 = vpack.c.b16 %v153, %v149
  %v202 = vpack.c.b16 %v154, %v150
  %v203 = vpack.c.b16 %v155, %v151
  %v204 = vpack.c.b16 %v156, %v152
  %v205 = vpack.c.b16 %v161, %v157
  %v206 = vpack.c.b16 %v162, %v158
  %v207 = vpack.c.b16 %v163, %v159
  %v208 = vpack.c.b16 %v164, %v160
  %v209 = vpack.c.b16 %v169, %v165
  %v210 = vpack.c.b16 %v170, %v166
  %v211 = vpack.c.b16 %v171, %v167
  %v212 = vpack.c.b16 %v172, %v168
  %v213 = vpack.c.b16 %v177, %v173
  %v214 = vpack.c.b16 %v178, %v174
  %v215 = vpack.c.b16 %v179, %v175
  %v216 = vpack.c.b16 %v180, %v176
  %vm253 = vcmask 130048
  %v255 = vsel %vm253, %v68, 0
  %v258 = vsel %vm253, %v70, 0
  %260 = vmatprep.subr.bf16.mxu0 %v182
  %261 = vmatpush1.bf16.msra.mxu0 %v181
  %262 = vmatprep.subr.bf16.mxu0 %v186
  %263 = vmatpush1.bf16.msra.mxu0 %v185
  %264 = vmatprep.subr.bf16.mxu0 %v190
  %265 = vmatpush1.bf16.msra.mxu0 %v189
  %266 = vmatprep.subr.bf16.mxu0 %v194
  %267 = vmatpush1.bf16.msra.mxu0 %v193
  %268 = vmatprep.subr.bf16.mxu0 %v198
  %269 = vmatpush1.bf16.msra.mxu0 %v197
  %270 = vmatprep.subr.bf16.mxu0 %v202
  %271 = vmatpush1.bf16.msra.mxu0 %v201
  %272 = vmatprep.subr.bf16.mxu0 %v206
  %273 = vmatpush1.bf16.msra.mxu0 %v205
  %274 = vmatprep.subr.bf16.mxu0 %v210
  %275 = vmatpush1.bf16.msra.mxu0 %v209
  %276 = vmatprep.subr.bf16.mxu0 %v214
  %277 = vmatpush1.bf16.msra.mxu0 %v213
  %278 = vmatprep.subr.bf16.mxu0 0
  %279 = vmatpush1.bf16.msra.mxu0 0
  %280 = vmatprep.subr.bf16.mxu0 0
  %281 = vmatpush1.bf16.msra.mxu0 0
  %282 = vmatprep.subr.bf16.mxu0 0
  %283 = vmatpush1.bf16.msra.mxu0 0
  %284 = vmatprep.subr.bf16.mxu0 0
  %285 = vmatpush1.bf16.msra.mxu0 0
  %286 = vmatprep.subr.bf16.mxu0 0
  %287 = vmatpush1.bf16.msra.mxu0 0
  %288 = vmatprep.subr.bf16.mxu0 0
  %289 = vmatpush1.bf16.msra.mxu0 0
  %290 = vmatprep.subr.bf16.mxu0 0
  %291 = vmatpush1.bf16.msra.mxu0 0
  %292 = vmatprep.mubr.bf16.mxu0 %v255
  %293 = vmatmul.mubr.bf16.gmra.mrb[0].mxu0 %v67
  %v294 = vpop.f32.mrb[0].mxu0
  %v295 = vadd.f32 0.0, %v294
  %v296 = vpop.f32.mrb[0].mxu0
  %v297 = vadd.f32 0.0, %v296
  %v298 = vpop.f32.mrb[0].mxu0
  %v299 = vadd.f32 0.0, %v298
  %v300 = vpop.f32.mrb[0].mxu0
  %v301 = vadd.f32 0.0, %v300
  %302 = vmatprep.mubr.bf16.mxu0 %v258
  %303 = vmatmul.mubr.bf16.gmra.mrb[0].mxu0 %v69
  %v304 = vpop.f32.mrb[0].mxu0
  %v305 = vadd.f32 0.0, %v304
  %v306 = vpop.f32.mrb[0].mxu0
  %v307 = vadd.f32 0.0, %v306
  %v308 = vpop.f32.mrb[0].mxu0
  %v309 = vadd.f32 0.0, %v308
  %v310 = vpop.f32.mrb[0].mxu0
  %v311 = vadd.f32 0.0, %v310
  %312 = vdwg.mxu0
  %313 = vmatprep.subr.bf16.mxu0 %v184
  %314 = vmatpush1.bf16.msra.mxu0 %v183
  %315 = vmatprep.subr.bf16.mxu0 %v188
  %316 = vmatpush1.bf16.msra.mxu0 %v187
  %317 = vmatprep.subr.bf16.mxu0 %v192
  %318 = vmatpush1.bf16.msra.mxu0 %v191
  %319 = vmatprep.subr.bf16.mxu0 %v196
  %320 = vmatpush1.bf16.msra.mxu0 %v195
  %321 = vmatprep.subr.bf16.mxu0 %v200
  %322 = vmatpush1.bf16.msra.mxu0 %v199
  %323 = vmatprep.subr.bf16.mxu0 %v204
  %324 = vmatpush1.bf16.msra.mxu0 %v203
  %325 = vmatprep.subr.bf16.mxu0 %v208
  %326 = vmatpush1.bf16.msra.mxu0 %v207
  %327 = vmatprep.subr.bf16.mxu0 %v212
  %328 = vmatpush1.bf16.msra.mxu0 %v211
  %329 = vmatprep.subr.bf16.mxu0 %v216
  %330 = vmatpush1.bf16.msra.mxu0 %v215
  %331 = vmatprep.subr.bf16.mxu0 0
  %332 = vmatpush1.bf16.msra.mxu0 0
  %333 = vmatprep.subr.bf16.mxu0 0
  %334 = vmatpush1.bf16.msra.mxu0 0
  %335 = vmatprep.subr.bf16.mxu0 0
  %336 = vmatpush1.bf16.msra.mxu0 0
  %337 = vmatprep.subr.bf16.mxu0 0
  %338 = vmatpush1.bf16.msra.mxu0 0
  %339 = vmatprep.subr.bf16.mxu0 0
  %340 = vmatpush1.bf16.msra.mxu0 0
  %341 = vmatprep.subr.bf16.mxu0 0
  %342 = vmatpush1.bf16.msra.mxu0 0
  %343 = vmatprep.subr.bf16.mxu0 0
  %344 = vmatpush1.bf16.msra.mxu0 0
  %345 = vmatprep.mubr.bf16.mxu0 %v255
  %346 = vmatmul.mubr.bf16.gmra.mrb[0].mxu0 %v67
  %v347 = vpop.f32.mrb[0].mxu0
  %v348 = vadd.f32 0.0, %v347
  %v349 = vpop.f32.mrb[0].mxu0
  %v350 = vadd.f32 0.0, %v349
  %v351 = vpop.f32.mrb[0].mxu0
  %v352 = vadd.f32 0.0, %v351
  %v353 = vpop.f32.mrb[0].mxu0
  %v354 = vadd.f32 0.0, %v353
  %355 = vmatprep.mubr.bf16.mxu0 %v258
  %356 = vmatmul.mubr.bf16.gmra.mrb[0].mxu0 %v69
  %v357 = vpop.f32.mrb[0].mxu0
  %v358 = vadd.f32 0.0, %v357
  %v359 = vpop.f32.mrb[0].mxu0
  %v360 = vadd.f32 0.0, %v359
  %v361 = vpop.f32.mrb[0].mxu0
  %v362 = vadd.f32 0.0, %v361
  %v363 = vpop.f32.mrb[0].mxu0
  %v364 = vadd.f32 0.0, %v363
  %365 = vdwg.mxu0
  %s366 = scalar_lea.vmem %s0, 288
  %v367 = vld [vmem:[%s366] sm:$0xff]
  %v368 = vld [vmem:[%s366 + $0x8] sm:$0xff]
  %v369 = vld [vmem:[%s366 + $0x10] sm:$0xff]
  %v370 = vld [vmem:[%s366 + $0x18] sm:$0xff]
  %v371 = vld [vmem:[%s366 + $0x20] sm:$0xff]
  %v372 = vld [vmem:[%s366 + $0x28] sm:$0xff]
  %v373 = vld [vmem:[%s366 + $0x30] sm:$0xff]
  %v374 = vld [vmem:[%s366 + $0x38] sm:$0xff]
  %v375 = vld [vmem:[%s366 + $0x40] sm:$0xff]
  %v376 = vld [vmem:[%s366 + $0x48] sm:$0xff]
  %v377 = vld [vmem:[%s366 + $0x50] sm:$0xff]
  %v378 = vld [vmem:[%s366 + $0x58] sm:$0xff]
  %v379 = vld [vmem:[%s366 + $0x60] sm:$0xff]
  %v380 = vld [vmem:[%s366 + $0x68] sm:$0xff]
  %v381 = vld [vmem:[%s366 + $0x70] sm:$0xff]
  %v382 = vld [vmem:[%s366 + $0x78] sm:$0xff]
  %v383 = vld [vmem:[%s366 + $0x80] sm:$0xff]
  %v384 = vld [vmem:[%s366 + $0x88] sm:$0xff]
  %v385 = vld [vmem:[%s366 + $0x90] sm:$0xff]
  %v386 = vld [vmem:[%s366 + $0x98] sm:$0xff]
  %v387 = vld [vmem:[%s366 + $0xa0] sm:$0xff]
  %v388 = vld [vmem:[%s366 + $0xa8] sm:$0xff]
  %v389 = vld [vmem:[%s366 + $0xb0] sm:$0xff]
  %v390 = vld [vmem:[%s366 + $0xb8] sm:$0xff]
  %v391 = vld [vmem:[%s366 + $0xc0] sm:$0xff]
  %v392 = vld [vmem:[%s366 + $0xc8] sm:$0xff]
  %v393 = vld [vmem:[%s366 + $0xd0] sm:$0xff]
  %v394 = vld [vmem:[%s366 + $0xd8] sm:$0xff]
  %v395 = vld [vmem:[%s366 + $0xe0] sm:$0xff]
  %v396 = vld [vmem:[%s366 + $0xe8] sm:$0xff]
  %v397 = vld [vmem:[%s366 + $0xf0] sm:$0xff]
  %v398 = vld [vmem:[%s366 + $0xf8] sm:$0xff]
  %v399 = vld [vmem:[%s366 + $0x100] sm:$0xff]
  %v400 = vld [vmem:[%s366 + $0x108] sm:$0xff]
  %v401 = vld [vmem:[%s366 + $0x110] sm:$0xff]
  %v402 = vld [vmem:[%s366 + $0x118] sm:$0xff]
  %v439 = vunpack.c.l.b16 %v367
  %v440 = vunpack.c.h.b16 %v367
  %v441 = vunpack.c.l.b16 %v368
  %v442 = vunpack.c.h.b16 %v368
  %v443 = vunpack.c.l.b16 %v369
  %v444 = vunpack.c.h.b16 %v369
  %v445 = vunpack.c.l.b16 %v370
  %v446 = vunpack.c.h.b16 %v370
  %v447 = vunpack.c.l.b16 %v371
  %v448 = vunpack.c.h.b16 %v371
  %v449 = vunpack.c.l.b16 %v372
  %v450 = vunpack.c.h.b16 %v372
  %v451 = vunpack.c.l.b16 %v373
  %v452 = vunpack.c.h.b16 %v373
  %v453 = vunpack.c.l.b16 %v374
  %v454 = vunpack.c.h.b16 %v374
  %v455 = vunpack.c.l.b16 %v375
  %v456 = vunpack.c.h.b16 %v375
  %v457 = vunpack.c.l.b16 %v376
  %v458 = vunpack.c.h.b16 %v376
  %v459 = vunpack.c.l.b16 %v377
  %v460 = vunpack.c.h.b16 %v377
  %v461 = vunpack.c.l.b16 %v378
  %v462 = vunpack.c.h.b16 %v378
  %v463 = vunpack.c.l.b16 %v379
  %v464 = vunpack.c.h.b16 %v379
  %v465 = vunpack.c.l.b16 %v380
  %v466 = vunpack.c.h.b16 %v380
  %v467 = vunpack.c.l.b16 %v381
  %v468 = vunpack.c.h.b16 %v381
  %v469 = vunpack.c.l.b16 %v382
  %v470 = vunpack.c.h.b16 %v382
  %v471 = vunpack.c.l.b16 %v383
  %v472 = vunpack.c.h.b16 %v383
  %v473 = vunpack.c.l.b16 %v384
  %v474 = vunpack.c.h.b16 %v384
  %v475 = vunpack.c.l.b16 %v385
  %v476 = vunpack.c.h.b16 %v385
  %v477 = vunpack.c.l.b16 %v386
  %v478 = vunpack.c.h.b16 %v386
  %v479 = vunpack.c.l.b16 %v387
  %v480 = vunpack.c.h.b16 %v387
  %v481 = vunpack.c.l.b16 %v388
  %v482 = vunpack.c.h.b16 %v388
  %v483 = vunpack.c.l.b16 %v389
  %v484 = vunpack.c.h.b16 %v389
  %v485 = vunpack.c.l.b16 %v390
  %v486 = vunpack.c.h.b16 %v390
  %v487 = vunpack.c.l.b16 %v391
  %v488 = vunpack.c.h.b16 %v391
  %v489 = vunpack.c.l.b16 %v392
  %v490 = vunpack.c.h.b16 %v392
  %v491 = vunpack.c.l.b16 %v393
  %v492 = vunpack.c.h.b16 %v393
  %v493 = vunpack.c.l.b16 %v394
  %v494 = vunpack.c.h.b16 %v394
  %v495 = vunpack.c.l.b16 %v395
  %v496 = vunpack.c.h.b16 %v395
  %v497 = vunpack.c.l.b16 %v396
  %v498 = vunpack.c.h.b16 %v396
  %v499 = vunpack.c.l.b16 %v397
  %v500 = vunpack.c.h.b16 %v397
  %v501 = vunpack.c.l.b16 %v398
  %v502 = vunpack.c.h.b16 %v398
  %v503 = vunpack.c.l.b16 %v399
  %v504 = vunpack.c.h.b16 %v399
  %v505 = vunpack.c.l.b16 %v400
  %v506 = vunpack.c.h.b16 %v400
  %v507 = vunpack.c.l.b16 %v401
  %v508 = vunpack.c.h.b16 %v401
  %v509 = vunpack.c.l.b16 %v402
  %v510 = vunpack.c.h.b16 %v402
  %v511 = vpack.c.b16 %v443, %v439
  %v512 = vpack.c.b16 %v444, %v440
  %v513 = vpack.c.b16 %v445, %v441
  %v514 = vpack.c.b16 %v446, %v442
  %v515 = vpack.c.b16 %v451, %v447
  %v516 = vpack.c.b16 %v452, %v448
  %v517 = vpack.c.b16 %v453, %v449
  %v518 = vpack.c.b16 %v454, %v450
  %v519 = vpack.c.b16 %v459, %v455
  %v520 = vpack.c.b16 %v460, %v456
  %v521 = vpack.c.b16 %v461, %v457
  %v522 = vpack.c.b16 %v462, %v458
  %v523 = vpack.c.b16 %v467, %v463
  %v524 = vpack.c.b16 %v468, %v464
  %v525 = vpack.c.b16 %v469, %v465
  %v526 = vpack.c.b16 %v470, %v466
  %v527 = vpack.c.b16 %v475, %v471
  %v528 = vpack.c.b16 %v476, %v472
  %v529 = vpack.c.b16 %v477, %v473
  %v530 = vpack.c.b16 %v478, %v474
  %v531 = vpack.c.b16 %v483, %v479
  %v532 = vpack.c.b16 %v484, %v480
  %v533 = vpack.c.b16 %v485, %v481
  %v534 = vpack.c.b16 %v486, %v482
  %v535 = vpack.c.b16 %v491, %v487
  %v536 = vpack.c.b16 %v492, %v488
  %v537 = vpack.c.b16 %v493, %v489
  %v538 = vpack.c.b16 %v494, %v490
  %v539 = vpack.c.b16 %v499, %v495
  %v540 = vpack.c.b16 %v500, %v496
  %v541 = vpack.c.b16 %v501, %v497
  %v542 = vpack.c.b16 %v502, %v498
  %v543 = vpack.c.b16 %v507, %v503
  %v544 = vpack.c.b16 %v508, %v504
  %v545 = vpack.c.b16 %v509, %v505
  %v546 = vpack.c.b16 %v510, %v506
  %583 = vmatprep.subr.bf16.mxu0 %v512
  %584 = vmatpush1.bf16.msra.mxu0 %v511
  %585 = vmatprep.subr.bf16.mxu0 %v516
  %586 = vmatpush1.bf16.msra.mxu0 %v515
  %587 = vmatprep.subr.bf16.mxu0 %v520
  %588 = vmatpush1.bf16.msra.mxu0 %v519
  %589 = vmatprep.subr.bf16.mxu0 %v524
  %590 = vmatpush1.bf16.msra.mxu0 %v523
  %591 = vmatprep.subr.bf16.mxu0 %v528
  %592 = vmatpush1.bf16.msra.mxu0 %v527
  %593 = vmatprep.subr.bf16.mxu0 %v532
  %594 = vmatpush1.bf16.msra.mxu0 %v531
  %595 = vmatprep.subr.bf16.mxu0 %v536
  %596 = vmatpush1.bf16.msra.mxu0 %v535
  %597 = vmatprep.subr.bf16.mxu0 %v540
  %598 = vmatpush1.bf16.msra.mxu0 %v539
  %599 = vmatprep.subr.bf16.mxu0 %v544
  %600 = vmatpush1.bf16.msra.mxu0 %v543
  %601 = vmatprep.subr.bf16.mxu0 0
  %602 = vmatpush1.bf16.msra.mxu0 0
  %603 = vmatprep.subr.bf16.mxu0 0
  %604 = vmatpush1.bf16.msra.mxu0 0
  %605 = vmatprep.subr.bf16.mxu0 0
  %606 = vmatpush1.bf16.msra.mxu0 0
  %607 = vmatprep.subr.bf16.mxu0 0
  %608 = vmatpush1.bf16.msra.mxu0 0
  %609 = vmatprep.subr.bf16.mxu0 0
  %610 = vmatpush1.bf16.msra.mxu0 0
  %611 = vmatprep.subr.bf16.mxu0 0
  %612 = vmatpush1.bf16.msra.mxu0 0
  %613 = vmatprep.subr.bf16.mxu0 0
  %614 = vmatpush1.bf16.msra.mxu0 0
  %615 = vmatprep.mubr.bf16.mxu0 %v255
  %616 = vmatmul.mubr.bf16.gmra.mrb[0].mxu0 %v67
  %v617 = vpop.f32.mrb[0].mxu0
  %v618 = vadd.f32 0.0, %v617
  %v619 = vpop.f32.mrb[0].mxu0
  %v620 = vadd.f32 0.0, %v619
  %v621 = vpop.f32.mrb[0].mxu0
  %v622 = vadd.f32 0.0, %v621
  %v623 = vpop.f32.mrb[0].mxu0
  %v624 = vadd.f32 0.0, %v623
  %625 = vmatprep.mubr.bf16.mxu0 %v258
  %626 = vmatmul.mubr.bf16.gmra.mrb[0].mxu0 %v69
  %v627 = vpop.f32.mrb[0].mxu0
  %v628 = vadd.f32 0.0, %v627
  %v629 = vpop.f32.mrb[0].mxu0
  %v630 = vadd.f32 0.0, %v629
  %v631 = vpop.f32.mrb[0].mxu0
  %v632 = vadd.f32 0.0, %v631
  %v633 = vpop.f32.mrb[0].mxu0
  %v634 = vadd.f32 0.0, %v633
  %635 = vdwg.mxu0
  %636 = vmatprep.subr.bf16.mxu0 %v514
  %637 = vmatpush1.bf16.msra.mxu0 %v513
  %638 = vmatprep.subr.bf16.mxu0 %v518
  %639 = vmatpush1.bf16.msra.mxu0 %v517
  %640 = vmatprep.subr.bf16.mxu0 %v522
  %641 = vmatpush1.bf16.msra.mxu0 %v521
  %642 = vmatprep.subr.bf16.mxu0 %v526
  %643 = vmatpush1.bf16.msra.mxu0 %v525
  %644 = vmatprep.subr.bf16.mxu0 %v530
  %645 = vmatpush1.bf16.msra.mxu0 %v529
  %646 = vmatprep.subr.bf16.mxu0 %v534
  %647 = vmatpush1.bf16.msra.mxu0 %v533
  %648 = vmatprep.subr.bf16.mxu0 %v538
  %649 = vmatpush1.bf16.msra.mxu0 %v537
  %650 = vmatprep.subr.bf16.mxu0 %v542
  %651 = vmatpush1.bf16.msra.mxu0 %v541
  %652 = vmatprep.subr.bf16.mxu0 %v546
  %653 = vmatpush1.bf16.msra.mxu0 %v545
  %654 = vmatprep.subr.bf16.mxu0 0
  %655 = vmatpush1.bf16.msra.mxu0 0
  %656 = vmatprep.subr.bf16.mxu0 0
  %657 = vmatpush1.bf16.msra.mxu0 0
  %658 = vmatprep.subr.bf16.mxu0 0
  %659 = vmatpush1.bf16.msra.mxu0 0
  %660 = vmatprep.subr.bf16.mxu0 0
  %661 = vmatpush1.bf16.msra.mxu0 0
  %662 = vmatprep.subr.bf16.mxu0 0
  %663 = vmatpush1.bf16.msra.mxu0 0
  %664 = vmatprep.subr.bf16.mxu0 0
  %665 = vmatpush1.bf16.msra.mxu0 0
  %666 = vmatprep.subr.bf16.mxu0 0
  %667 = vmatpush1.bf16.msra.mxu0 0
  %668 = vmatprep.mubr.bf16.mxu0 %v255
  %669 = vmatmul.mubr.bf16.gmra.mrb[0].mxu0 %v67
  %v670 = vpop.f32.mrb[0].mxu0
  %v671 = vadd.f32 0.0, %v670
  %v672 = vpop.f32.mrb[0].mxu0
  %v673 = vadd.f32 0.0, %v672
  %v674 = vpop.f32.mrb[0].mxu0
  %v675 = vadd.f32 0.0, %v674
  %v676 = vpop.f32.mrb[0].mxu0
  %v677 = vadd.f32 0.0, %v676
  %678 = vmatprep.mubr.bf16.mxu0 %v258
  %679 = vmatmul.mubr.bf16.gmra.mrb[0].mxu0 %v69
  %v680 = vpop.f32.mrb[0].mxu0
  %v681 = vadd.f32 0.0, %v680
  %v682 = vpop.f32.mrb[0].mxu0
  %v683 = vadd.f32 0.0, %v682
  %v684 = vpop.f32.mrb[0].mxu0
  %v685 = vadd.f32 0.0, %v684
  %v686 = vpop.f32.mrb[0].mxu0
  %v687 = vadd.f32 0.0, %v686
  %688 = vdwg.mxu0
  %v689 = vmax.f32 %v295, %v618
  %v690 = vmax.f32 %v297, %v620
  %v691 = vmax.f32 %v348, %v671
  %v692 = vmax.f32 %v350, %v673
  %v693 = vmax.f32 %v299, %v622
  %v694 = vmax.f32 %v301, %v624
  %v695 = vmax.f32 %v352, %v675
  %v696 = vmax.f32 %v354, %v677
  %v697 = vmax.f32 %v305, %v628
  %v698 = vmax.f32 %v307, %v630
  %v699 = vmax.f32 %v358, %v681
  %v700 = vmax.f32 %v360, %v683
  %v701 = vmax.f32 %v309, %v632
  %v702 = vmax.f32 %v311, %v634
  %v703 = vmax.f32 %v362, %v685
  %v704 = vmax.f32 %v364, %v687
  %s705 = scalar_lea.vmem %s0, 576
  %v706 = vld [vmem:[%s705] sm:$0xff]
  %v707 = vld [vmem:[%s705 + $0x8] sm:$0xff]
  %v708 = vld [vmem:[%s705 + $0x10] sm:$0xff]
  %v709 = vld [vmem:[%s705 + $0x18] sm:$0xff]
  %v710 = vld [vmem:[%s705 + $0x20] sm:$0xff]
  %v711 = vld [vmem:[%s705 + $0x28] sm:$0xff]
  %v712 = vld [vmem:[%s705 + $0x30] sm:$0xff]
  %v713 = vld [vmem:[%s705 + $0x38] sm:$0xff]
  %v714 = vld [vmem:[%s705 + $0x40] sm:$0xff]
  %v715 = vld [vmem:[%s705 + $0x48] sm:$0xff]
  %v716 = vld [vmem:[%s705 + $0x50] sm:$0xff]
  %v717 = vld [vmem:[%s705 + $0x58] sm:$0xff]
  %v718 = vld [vmem:[%s705 + $0x60] sm:$0xff]
  %v719 = vld [vmem:[%s705 + $0x68] sm:$0xff]
  %v720 = vld [vmem:[%s705 + $0x70] sm:$0xff]
  %v721 = vld [vmem:[%s705 + $0x78] sm:$0xff]
  %v722 = vld [vmem:[%s705 + $0x80] sm:$0xff]
  %v723 = vld [vmem:[%s705 + $0x88] sm:$0xff]
  %v724 = vld [vmem:[%s705 + $0x90] sm:$0xff]
  %v725 = vld [vmem:[%s705 + $0x98] sm:$0xff]
  %v726 = vld [vmem:[%s705 + $0xa0] sm:$0xff]
  %v727 = vld [vmem:[%s705 + $0xa8] sm:$0xff]
  %v728 = vld [vmem:[%s705 + $0xb0] sm:$0xff]
  %v729 = vld [vmem:[%s705 + $0xb8] sm:$0xff]
  %v730 = vld [vmem:[%s705 + $0xc0] sm:$0xff]
  %v731 = vld [vmem:[%s705 + $0xc8] sm:$0xff]
  %v732 = vld [vmem:[%s705 + $0xd0] sm:$0xff]
  %v733 = vld [vmem:[%s705 + $0xd8] sm:$0xff]
  %v734 = vld [vmem:[%s705 + $0xe0] sm:$0xff]
  %v735 = vld [vmem:[%s705 + $0xe8] sm:$0xff]
  %v736 = vld [vmem:[%s705 + $0xf0] sm:$0xff]
  %v737 = vld [vmem:[%s705 + $0xf8] sm:$0xff]
  %v738 = vld [vmem:[%s705 + $0x100] sm:$0xff]
  %v739 = vld [vmem:[%s705 + $0x108] sm:$0xff]
  %v740 = vld [vmem:[%s705 + $0x110] sm:$0xff]
  %v741 = vld [vmem:[%s705 + $0x118] sm:$0xff]
  %v778 = vunpack.c.l.b16 %v706
  %v779 = vunpack.c.h.b16 %v706
  %v780 = vunpack.c.l.b16 %v707
  %v781 = vunpack.c.h.b16 %v707
  %v782 = vunpack.c.l.b16 %v708
  %v783 = vunpack.c.h.b16 %v708
  %v784 = vunpack.c.l.b16 %v709
  %v785 = vunpack.c.h.b16 %v709
  %v786 = vunpack.c.l.b16 %v710
  %v787 = vunpack.c.h.b16 %v710
  %v788 = vunpack.c.l.b16 %v711
  %v789 = vunpack.c.h.b16 %v711
  %v790 = vunpack.c.l.b16 %v712
  %v791 = vunpack.c.h.b16 %v712
  %v792 = vunpack.c.l.b16 %v713
  %v793 = vunpack.c.h.b16 %v713
  %v794 = vunpack.c.l.b16 %v714
  %v795 = vunpack.c.h.b16 %v714
  %v796 = vunpack.c.l.b16 %v715
  %v797 = vunpack.c.h.b16 %v715
  %v798 = vunpack.c.l.b16 %v716
  %v799 = vunpack.c.h.b16 %v716
  %v800 = vunpack.c.l.b16 %v717
  %v801 = vunpack.c.h.b16 %v717
  %v802 = vunpack.c.l.b16 %v718
  %v803 = vunpack.c.h.b16 %v718
  %v804 = vunpack.c.l.b16 %v719
  %v805 = vunpack.c.h.b16 %v719
  %v806 = vunpack.c.l.b16 %v720
  %v807 = vunpack.c.h.b16 %v720
  %v808 = vunpack.c.l.b16 %v721
  %v809 = vunpack.c.h.b16 %v721
  %v810 = vunpack.c.l.b16 %v722
  %v811 = vunpack.c.h.b16 %v722
  %v812 = vunpack.c.l.b16 %v723
  %v813 = vunpack.c.h.b16 %v723
  %v814 = vunpack.c.l.b16 %v724
  %v815 = vunpack.c.h.b16 %v724
  %v816 = vunpack.c.l.b16 %v725
  %v817 = vunpack.c.h.b16 %v725
  %v818 = vunpack.c.l.b16 %v726
  %v819 = vunpack.c.h.b16 %v726
  %v820 = vunpack.c.l.b16 %v727
  %v821 = vunpack.c.h.b16 %v727
  %v822 = vunpack.c.l.b16 %v728
  %v823 = vunpack.c.h.b16 %v728
  %v824 = vunpack.c.l.b16 %v729
  %v825 = vunpack.c.h.b16 %v729
  %v826 = vunpack.c.l.b16 %v730
  %v827 = vunpack.c.h.b16 %v730
  %v828 = vunpack.c.l.b16 %v731
  %v829 = vunpack.c.h.b16 %v731
  %v830 = vunpack.c.l.b16 %v732
  %v831 = vunpack.c.h.b16 %v732
  %v832 = vunpack.c.l.b16 %v733
  %v833 = vunpack.c.h.b16 %v733
  %v834 = vunpack.c.l.b16 %v734
  %v835 = vunpack.c.h.b16 %v734
  %v836 = vunpack.c.l.b16 %v735
  %v837 = vunpack.c.h.b16 %v735
  %v838 = vunpack.c.l.b16 %v736
  %v839 = vunpack.c.h.b16 %v736
  %v840 = vunpack.c.l.b16 %v737
  %v841 = vunpack.c.h.b16 %v737
  %v842 = vunpack.c.l.b16 %v738
  %v843 = vunpack.c.h.b16 %v738
  %v844 = vunpack.c.l.b16 %v739
  %v845 = vunpack.c.h.b16 %v739
  %v846 = vunpack.c.l.b16 %v740
  %v847 = vunpack.c.h.b16 %v740
  %v848 = vunpack.c.l.b16 %v741
  %v849 = vunpack.c.h.b16 %v741
  %v850 = vpack.c.b16 %v782, %v778
  %v851 = vpack.c.b16 %v783, %v779
  %v852 = vpack.c.b16 %v784, %v780
  %v853 = vpack.c.b16 %v785, %v781
  %v854 = vpack.c.b16 %v790, %v786
  %v855 = vpack.c.b16 %v791, %v787
  %v856 = vpack.c.b16 %v792, %v788
  %v857 = vpack.c.b16 %v793, %v789
  %v858 = vpack.c.b16 %v798, %v794
  %v859 = vpack.c.b16 %v799, %v795
  %v860 = vpack.c.b16 %v800, %v796
  %v861 = vpack.c.b16 %v801, %v797
  %v862 = vpack.c.b16 %v806, %v802
  %v863 = vpack.c.b16 %v807, %v803
  %v864 = vpack.c.b16 %v808, %v804
  %v865 = vpack.c.b16 %v809, %v805
  %v866 = vpack.c.b16 %v814, %v810
  %v867 = vpack.c.b16 %v815, %v811
  %v868 = vpack.c.b16 %v816, %v812
  %v869 = vpack.c.b16 %v817, %v813
  %v870 = vpack.c.b16 %v822, %v818
  %v871 = vpack.c.b16 %v823, %v819
  %v872 = vpack.c.b16 %v824, %v820
  %v873 = vpack.c.b16 %v825, %v821
  %v874 = vpack.c.b16 %v830, %v826
  %v875 = vpack.c.b16 %v831, %v827
  %v876 = vpack.c.b16 %v832, %v828
  %v877 = vpack.c.b16 %v833, %v829
  %v878 = vpack.c.b16 %v838, %v834
  %v879 = vpack.c.b16 %v839, %v835
  %v880 = vpack.c.b16 %v840, %v836
  %v881 = vpack.c.b16 %v841, %v837
  %v882 = vpack.c.b16 %v846, %v842
  %v883 = vpack.c.b16 %v847, %v843
  %v884 = vpack.c.b16 %v848, %v844
  %v885 = vpack.c.b16 %v849, %v845
  %922 = vmatprep.subr.bf16.mxu0 %v851
  %923 = vmatpush1.bf16.msra.mxu0 %v850
  %924 = vmatprep.subr.bf16.mxu0 %v855
  %925 = vmatpush1.bf16.msra.mxu0 %v854
  %926 = vmatprep.subr.bf16.mxu0 %v859
  %927 = vmatpush1.bf16.msra.mxu0 %v858
  %928 = vmatprep.subr.bf16.mxu0 %v863
  %929 = vmatpush1.bf16.msra.mxu0 %v862
  %930 = vmatprep.subr.bf16.mxu0 %v867
  %931 = vmatpush1.bf16.msra.mxu0 %v866
  %932 = vmatprep.subr.bf16.mxu0 %v871
  %933 = vmatpush1.bf16.msra.mxu0 %v870
  %934 = vmatprep.subr.bf16.mxu0 %v875
  %935 = vmatpush1.bf16.msra.mxu0 %v874
  %936 = vmatprep.subr.bf16.mxu0 %v879
  %937 = vmatpush1.bf16.msra.mxu0 %v878
  %938 = vmatprep.subr.bf16.mxu0 %v883
  %939 = vmatpush1.bf16.msra.mxu0 %v882
  %940 = vmatprep.subr.bf16.mxu0 0
  %941 = vmatpush1.bf16.msra.mxu0 0
  %942 = vmatprep.subr.bf16.mxu0 0
  %943 = vmatpush1.bf16.msra.mxu0 0
  %944 = vmatprep.subr.bf16.mxu0 0
  %945 = vmatpush1.bf16.msra.mxu0 0
  %946 = vmatprep.subr.bf16.mxu0 0
  %947 = vmatpush1.bf16.msra.mxu0 0
  %948 = vmatprep.subr.bf16.mxu0 0
  %949 = vmatpush1.bf16.msra.mxu0 0
  %950 = vmatprep.subr.bf16.mxu0 0
  %951 = vmatpush1.bf16.msra.mxu0 0
  %952 = vmatprep.subr.bf16.mxu0 0
  %953 = vmatpush1.bf16.msra.mxu0 0
  %954 = vmatprep.mubr.bf16.mxu0 %v255
  %955 = vmatmul.mubr.bf16.gmra.mrb[0].mxu0 %v67
  %v956 = vpop.f32.mrb[0].mxu0
  %v957 = vadd.f32 0.0, %v956
  %v958 = vpop.f32.mrb[0].mxu0
  %v959 = vadd.f32 0.0, %v958
  %v960 = vpop.f32.mrb[0].mxu0
  %v961 = vadd.f32 0.0, %v960
  %v962 = vpop.f32.mrb[0].mxu0
  %v963 = vadd.f32 0.0, %v962
  %964 = vmatprep.mubr.bf16.mxu0 %v258
  %965 = vmatmul.mubr.bf16.gmra.mrb[0].mxu0 %v69
  %v966 = vpop.f32.mrb[0].mxu0
  %v967 = vadd.f32 0.0, %v966
  %v968 = vpop.f32.mrb[0].mxu0
  %v969 = vadd.f32 0.0, %v968
  %v970 = vpop.f32.mrb[0].mxu0
  %v971 = vadd.f32 0.0, %v970
  %v972 = vpop.f32.mrb[0].mxu0
  %v973 = vadd.f32 0.0, %v972
  %974 = vdwg.mxu0
  %975 = vmatprep.subr.bf16.mxu0 %v853
  %976 = vmatpush1.bf16.msra.mxu0 %v852
  %977 = vmatprep.subr.bf16.mxu0 %v857
  %978 = vmatpush1.bf16.msra.mxu0 %v856
  %979 = vmatprep.subr.bf16.mxu0 %v861
  %980 = vmatpush1.bf16.msra.mxu0 %v860
  %981 = vmatprep.subr.bf16.mxu0 %v865
  %982 = vmatpush1.bf16.msra.mxu0 %v864
  %983 = vmatprep.subr.bf16.mxu0 %v869
  %984 = vmatpush1.bf16.msra.mxu0 %v868
  %985 = vmatprep.subr.bf16.mxu0 %v873
  %986 = vmatpush1.bf16.msra.mxu0 %v872
  %987 = vmatprep.subr.bf16.mxu0 %v877
  %988 = vmatpush1.bf16.msra.mxu0 %v876
  %989 = vmatprep.subr.bf16.mxu0 %v881
  %990 = vmatpush1.bf16.msra.mxu0 %v880
  %991 = vmatprep.subr.bf16.mxu0 %v885
  %992 = vmatpush1.bf16.msra.mxu0 %v884
  %993 = vmatprep.subr.bf16.mxu0 0
  %994 = vmatpush1.bf16.msra.mxu0 0
  %995 = vmatprep.subr.bf16.mxu0 0
  %996 = vmatpush1.bf16.msra.mxu0 0
  %997 = vmatprep.subr.bf16.mxu0 0
  %998 = vmatpush1.bf16.msra.mxu0 0
  %999 = vmatprep.subr.bf16.mxu0 0
  %1000 = vmatpush1.bf16.msra.mxu0 0
  %1001 = vmatprep.subr.bf16.mxu0 0
  %1002 = vmatpush1.bf16.msra.mxu0 0
  %1003 = vmatprep.subr.bf16.mxu0 0
  %1004 = vmatpush1.bf16.msra.mxu0 0
  %1005 = vmatprep.subr.bf16.mxu0 0
  %1006 = vmatpush1.bf16.msra.mxu0 0
  %1007 = vmatprep.mubr.bf16.mxu0 %v255
  %1008 = vmatmul.mubr.bf16.gmra.mrb[0].mxu0 %v67
  %v1009 = vpop.f32.mrb[0].mxu0
  %v1010 = vadd.f32 0.0, %v1009
  %v1011 = vpop.f32.mrb[0].mxu0
  %v1012 = vadd.f32 0.0, %v1011
  %v1013 = vpop.f32.mrb[0].mxu0
  %v1014 = vadd.f32 0.0, %v1013
  %v1015 = vpop.f32.mrb[0].mxu0
  %v1016 = vadd.f32 0.0, %v1015
  %1017 = vmatprep.mubr.bf16.mxu0 %v258
  %1018 = vmatmul.mubr.bf16.gmra.mrb[0].mxu0 %v69
  %v1019 = vpop.f32.mrb[0].mxu0
  %v1020 = vadd.f32 0.0, %v1019
  %v1021 = vpop.f32.mrb[0].mxu0
  %v1022 = vadd.f32 0.0, %v1021
  %v1023 = vpop.f32.mrb[0].mxu0
  %v1024 = vadd.f32 0.0, %v1023
  %v1025 = vpop.f32.mrb[0].mxu0
  %v1026 = vadd.f32 0.0, %v1025
  %1027 = vdwg.mxu0
  %v1028 = vmax.f32 %v689, %v957
  %v1029 = vmax.f32 %v690, %v959
  %v1030 = vmax.f32 %v691, %v1010
  %v1031 = vmax.f32 %v692, %v1012
  %v1032 = vmax.f32 %v693, %v961
  %v1033 = vmax.f32 %v694, %v963
  %v1034 = vmax.f32 %v695, %v1014
  %v1035 = vmax.f32 %v696, %v1016
  %v1036 = vmax.f32 %v697, %v967
  %v1037 = vmax.f32 %v698, %v969
  %v1038 = vmax.f32 %v699, %v1020
  %v1039 = vmax.f32 %v700, %v1022
  %v1040 = vmax.f32 %v701, %v971
  %v1041 = vmax.f32 %v702, %v973
  %v1042 = vmax.f32 %v703, %v1024
  %v1043 = vmax.f32 %v704, %v1026
  %s1044 = scalar_lea.vmem %s0, 864
  %v1045 = vld [vmem:[%s1044] sm:$0xff]
  %v1046 = vld [vmem:[%s1044 + $0x8] sm:$0xff]
  %v1047 = vld [vmem:[%s1044 + $0x10] sm:$0xff]
  %v1048 = vld [vmem:[%s1044 + $0x18] sm:$0xff]
  %v1049 = vld [vmem:[%s1044 + $0x20] sm:$0xff]
  %v1050 = vld [vmem:[%s1044 + $0x28] sm:$0xff]
  %v1051 = vld [vmem:[%s1044 + $0x30] sm:$0xff]
  %v1052 = vld [vmem:[%s1044 + $0x38] sm:$0xff]
  %v1053 = vld [vmem:[%s1044 + $0x40] sm:$0xff]
  %v1054 = vld [vmem:[%s1044 + $0x48] sm:$0xff]
  %v1055 = vld [vmem:[%s1044 + $0x50] sm:$0xff]
  %v1056 = vld [vmem:[%s1044 + $0x58] sm:$0xff]
  %v1057 = vld [vmem:[%s1044 + $0x60] sm:$0xff]
  %v1058 = vld [vmem:[%s1044 + $0x68] sm:$0xff]
  %v1059 = vld [vmem:[%s1044 + $0x70] sm:$0xff]
  %v1060 = vld [vmem:[%s1044 + $0x78] sm:$0xff]
  %v1061 = vld [vmem:[%s1044 + $0x80] sm:$0xff]
  %v1062 = vld [vmem:[%s1044 + $0x88] sm:$0xff]
  %v1063 = vld [vmem:[%s1044 + $0x90] sm:$0xff]
  %v1064 = vld [vmem:[%s1044 + $0x98] sm:$0xff]
  %v1065 = vld [vmem:[%s1044 + $0xa0] sm:$0xff]
  %v1066 = vld [vmem:[%s1044 + $0xa8] sm:$0xff]
  %v1067 = vld [vmem:[%s1044 + $0xb0] sm:$0xff]
  %v1068 = vld [vmem:[%s1044 + $0xb8] sm:$0xff]
  %v1069 = vld [vmem:[%s1044 + $0xc0] sm:$0xff]
  %v1070 = vld [vmem:[%s1044 + $0xc8] sm:$0xff]
  %v1071 = vld [vmem:[%s1044 + $0xd0] sm:$0xff]
  %v1072 = vld [vmem:[%s1044 + $0xd8] sm:$0xff]
  %v1073 = vld [vmem:[%s1044 + $0xe0] sm:$0xff]
  %v1074 = vld [vmem:[%s1044 + $0xe8] sm:$0xff]
  %v1075 = vld [vmem:[%s1044 + $0xf0] sm:$0xff]
  %v1076 = vld [vmem:[%s1044 + $0xf8] sm:$0xff]
  %v1077 = vld [vmem:[%s1044 + $0x100] sm:$0xff]
  %v1078 = vld [vmem:[%s1044 + $0x108] sm:$0xff]
  %v1079 = vld [vmem:[%s1044 + $0x110] sm:$0xff]
  %v1080 = vld [vmem:[%s1044 + $0x118] sm:$0xff]
  %v1117 = vunpack.c.l.b16 %v1045
  %v1118 = vunpack.c.h.b16 %v1045
  %v1119 = vunpack.c.l.b16 %v1046
  %v1120 = vunpack.c.h.b16 %v1046
  %v1121 = vunpack.c.l.b16 %v1047
  %v1122 = vunpack.c.h.b16 %v1047
  %v1123 = vunpack.c.l.b16 %v1048
  %v1124 = vunpack.c.h.b16 %v1048
  %v1125 = vunpack.c.l.b16 %v1049
  %v1126 = vunpack.c.h.b16 %v1049
  %v1127 = vunpack.c.l.b16 %v1050
  %v1128 = vunpack.c.h.b16 %v1050
  %v1129 = vunpack.c.l.b16 %v1051
  %v1130 = vunpack.c.h.b16 %v1051
  %v1131 = vunpack.c.l.b16 %v1052
  %v1132 = vunpack.c.h.b16 %v1052
  %v1133 = vunpack.c.l.b16 %v1053
  %v1134 = vunpack.c.h.b16 %v1053
  %v1135 = vunpack.c.l.b16 %v1054
  %v1136 = vunpack.c.h.b16 %v1054
  %v1137 = vunpack.c.l.b16 %v1055
  %v1138 = vunpack.c.h.b16 %v1055
  %v1139 = vunpack.c.l.b16 %v1056
  %v1140 = vunpack.c.h.b16 %v1056
  %v1141 = vunpack.c.l.b16 %v1057
  %v1142 = vunpack.c.h.b16 %v1057
  %v1143 = vunpack.c.l.b16 %v1058
  %v1144 = vunpack.c.h.b16 %v1058
  %v1145 = vunpack.c.l.b16 %v1059
  %v1146 = vunpack.c.h.b16 %v1059
  %v1147 = vunpack.c.l.b16 %v1060
  %v1148 = vunpack.c.h.b16 %v1060
  %v1149 = vunpack.c.l.b16 %v1061
  %v1150 = vunpack.c.h.b16 %v1061
  %v1151 = vunpack.c.l.b16 %v1062
  %v1152 = vunpack.c.h.b16 %v1062
  %v1153 = vunpack.c.l.b16 %v1063
  %v1154 = vunpack.c.h.b16 %v1063
  %v1155 = vunpack.c.l.b16 %v1064
  %v1156 = vunpack.c.h.b16 %v1064
  %v1157 = vunpack.c.l.b16 %v1065
  %v1158 = vunpack.c.h.b16 %v1065
  %v1159 = vunpack.c.l.b16 %v1066
  %v1160 = vunpack.c.h.b16 %v1066
  %v1161 = vunpack.c.l.b16 %v1067
  %v1162 = vunpack.c.h.b16 %v1067
  %v1163 = vunpack.c.l.b16 %v1068
  %v1164 = vunpack.c.h.b16 %v1068
  %v1165 = vunpack.c.l.b16 %v1069
  %v1166 = vunpack.c.h.b16 %v1069
  %v1167 = vunpack.c.l.b16 %v1070
  %v1168 = vunpack.c.h.b16 %v1070
  %v1169 = vunpack.c.l.b16 %v1071
  %v1170 = vunpack.c.h.b16 %v1071
  %v1171 = vunpack.c.l.b16 %v1072
  %v1172 = vunpack.c.h.b16 %v1072
  %v1173 = vunpack.c.l.b16 %v1073
  %v1174 = vunpack.c.h.b16 %v1073
  %v1175 = vunpack.c.l.b16 %v1074
  %v1176 = vunpack.c.h.b16 %v1074
  %v1177 = vunpack.c.l.b16 %v1075
  %v1178 = vunpack.c.h.b16 %v1075
  %v1179 = vunpack.c.l.b16 %v1076
  %v1180 = vunpack.c.h.b16 %v1076
  %v1181 = vunpack.c.l.b16 %v1077
  %v1182 = vunpack.c.h.b16 %v1077
  %v1183 = vunpack.c.l.b16 %v1078
  %v1184 = vunpack.c.h.b16 %v1078
  %v1185 = vunpack.c.l.b16 %v1079
  %v1186 = vunpack.c.h.b16 %v1079
  %v1187 = vunpack.c.l.b16 %v1080
  %v1188 = vunpack.c.h.b16 %v1080
  %v1189 = vpack.c.b16 %v1121, %v1117
  %v1190 = vpack.c.b16 %v1122, %v1118
  %v1191 = vpack.c.b16 %v1123, %v1119
  %v1192 = vpack.c.b16 %v1124, %v1120
  %v1193 = vpack.c.b16 %v1129, %v1125
  %v1194 = vpack.c.b16 %v1130, %v1126
  %v1195 = vpack.c.b16 %v1131, %v1127
  %v1196 = vpack.c.b16 %v1132, %v1128
  %v1197 = vpack.c.b16 %v1137, %v1133
  %v1198 = vpack.c.b16 %v1138, %v1134
  %v1199 = vpack.c.b16 %v1139, %v1135
  %v1200 = vpack.c.b16 %v1140, %v1136
  %v1201 = vpack.c.b16 %v1145, %v1141
  %v1202 = vpack.c.b16 %v1146, %v1142
  %v1203 = vpack.c.b16 %v1147, %v1143
  %v1204 = vpack.c.b16 %v1148, %v1144
  %v1205 = vpack.c.b16 %v1153, %v1149
  %v1206 = vpack.c.b16 %v1154, %v1150
  %v1207 = vpack.c.b16 %v1155, %v1151
  %v1208 = vpack.c.b16 %v1156, %v1152
  %v1209 = vpack.c.b16 %v1161, %v1157
  %v1210 = vpack.c.b16 %v1162, %v1158
  %v1211 = vpack.c.b16 %v1163, %v1159
  %v1212 = vpack.c.b16 %v1164, %v1160
  %v1213 = vpack.c.b16 %v1169, %v1165
  %v1214 = vpack.c.b16 %v1170, %v1166
  %v1215 = vpack.c.b16 %v1171, %v1167
  %v1216 = vpack.c.b16 %v1172, %v1168
  %v1217 = vpack.c.b16 %v1177, %v1173
  %v1218 = vpack.c.b16 %v1178, %v1174
  %v1219 = vpack.c.b16 %v1179, %v1175
  %v1220 = vpack.c.b16 %v1180, %v1176
  %v1221 = vpack.c.b16 %v1185, %v1181
  %v1222 = vpack.c.b16 %v1186, %v1182
  %v1223 = vpack.c.b16 %v1187, %v1183
  %v1224 = vpack.c.b16 %v1188, %v1184
  %1261 = vmatprep.subr.bf16.mxu0 %v1190
  %1262 = vmatpush1.bf16.msra.mxu0 %v1189
  %1263 = vmatprep.subr.bf16.mxu0 %v1194
  %1264 = vmatpush1.bf16.msra.mxu0 %v1193
  %1265 = vmatprep.subr.bf16.mxu0 %v1198
  %1266 = vmatpush1.bf16.msra.mxu0 %v1197
  %1267 = vmatprep.subr.bf16.mxu0 %v1202
  %1268 = vmatpush1.bf16.msra.mxu0 %v1201
  %1269 = vmatprep.subr.bf16.mxu0 %v1206
  %1270 = vmatpush1.bf16.msra.mxu0 %v1205
  %1271 = vmatprep.subr.bf16.mxu0 %v1210
  %1272 = vmatpush1.bf16.msra.mxu0 %v1209
  %1273 = vmatprep.subr.bf16.mxu0 %v1214
  %1274 = vmatpush1.bf16.msra.mxu0 %v1213
  %1275 = vmatprep.subr.bf16.mxu0 %v1218
  %1276 = vmatpush1.bf16.msra.mxu0 %v1217
  %1277 = vmatprep.subr.bf16.mxu0 %v1222
  %1278 = vmatpush1.bf16.msra.mxu0 %v1221
  %1279 = vmatprep.subr.bf16.mxu0 0
  %1280 = vmatpush1.bf16.msra.mxu0 0
  %1281 = vmatprep.subr.bf16.mxu0 0
  %1282 = vmatpush1.bf16.msra.mxu0 0
  %1283 = vmatprep.subr.bf16.mxu0 0
  %1284 = vmatpush1.bf16.msra.mxu0 0
  %1285 = vmatprep.subr.bf16.mxu0 0
  %1286 = vmatpush1.bf16.msra.mxu0 0
  %1287 = vmatprep.subr.bf16.mxu0 0
  %1288 = vmatpush1.bf16.msra.mxu0 0
  %1289 = vmatprep.subr.bf16.mxu0 0
  %1290 = vmatpush1.bf16.msra.mxu0 0
  %1291 = vmatprep.subr.bf16.mxu0 0
  %1292 = vmatpush1.bf16.msra.mxu0 0
  %1293 = vmatprep.mubr.bf16.mxu0 %v255
  %1294 = vmatmul.mubr.bf16.gmra.mrb[0].mxu0 %v67
  %v1295 = vpop.f32.mrb[0].mxu0
  %v1296 = vadd.f32 0.0, %v1295
  %v1297 = vpop.f32.mrb[0].mxu0
  %v1298 = vadd.f32 0.0, %v1297
  %v1299 = vpop.f32.mrb[0].mxu0
  %v1300 = vadd.f32 0.0, %v1299
  %v1301 = vpop.f32.mrb[0].mxu0
  %v1302 = vadd.f32 0.0, %v1301
  %1303 = vmatprep.mubr.bf16.mxu0 %v258
  %1304 = vmatmul.mubr.bf16.gmra.mrb[0].mxu0 %v69
  %v1305 = vpop.f32.mrb[0].mxu0
  %v1306 = vadd.f32 0.0, %v1305
  %v1307 = vpop.f32.mrb[0].mxu0
  %v1308 = vadd.f32 0.0, %v1307
  %v1309 = vpop.f32.mrb[0].mxu0
  %v1310 = vadd.f32 0.0, %v1309
  %v1311 = vpop.f32.mrb[0].mxu0
  %v1312 = vadd.f32 0.0, %v1311
  %1313 = vdwg.mxu0
  %1314 = vmatprep.subr.bf16.mxu0 %v1192
  %1315 = vmatpush1.bf16.msra.mxu0 %v1191
  %1316 = vmatprep.subr.bf16.mxu0 %v1196
  %1317 = vmatpush1.bf16.msra.mxu0 %v1195
  %1318 = vmatprep.subr.bf16.mxu0 %v1200
  %1319 = vmatpush1.bf16.msra.mxu0 %v1199
  %1320 = vmatprep.subr.bf16.mxu0 %v1204
  %1321 = vmatpush1.bf16.msra.mxu0 %v1203
  %1322 = vmatprep.subr.bf16.mxu0 %v1208
  %1323 = vmatpush1.bf16.msra.mxu0 %v1207
  %1324 = vmatprep.subr.bf16.mxu0 %v1212
  %1325 = vmatpush1.bf16.msra.mxu0 %v1211
  %1326 = vmatprep.subr.bf16.mxu0 %v1216
  %1327 = vmatpush1.bf16.msra.mxu0 %v1215
  %1328 = vmatprep.subr.bf16.mxu0 %v1220
  %1329 = vmatpush1.bf16.msra.mxu0 %v1219
  %1330 = vmatprep.subr.bf16.mxu0 %v1224
  %1331 = vmatpush1.bf16.msra.mxu0 %v1223
  %1332 = vmatprep.subr.bf16.mxu0 0
  %1333 = vmatpush1.bf16.msra.mxu0 0
  %1334 = vmatprep.subr.bf16.mxu0 0
  %1335 = vmatpush1.bf16.msra.mxu0 0
  %1336 = vmatprep.subr.bf16.mxu0 0
  %1337 = vmatpush1.bf16.msra.mxu0 0
  %1338 = vmatprep.subr.bf16.mxu0 0
  %1339 = vmatpush1.bf16.msra.mxu0 0
  %1340 = vmatprep.subr.bf16.mxu0 0
  %1341 = vmatpush1.bf16.msra.mxu0 0
  %1342 = vmatprep.subr.bf16.mxu0 0
  %1343 = vmatpush1.bf16.msra.mxu0 0
  %1344 = vmatprep.subr.bf16.mxu0 0
  %1345 = vmatpush1.bf16.msra.mxu0 0
  %1346 = vmatprep.mubr.bf16.mxu0 %v255
  %1347 = vmatmul.mubr.bf16.gmra.mrb[0].mxu0 %v67
  %v1348 = vpop.f32.mrb[0].mxu0
  %v1349 = vadd.f32 0.0, %v1348
  %v1350 = vpop.f32.mrb[0].mxu0
  %v1351 = vadd.f32 0.0, %v1350
  %v1352 = vpop.f32.mrb[0].mxu0
  %v1353 = vadd.f32 0.0, %v1352
  %v1354 = vpop.f32.mrb[0].mxu0
  %v1355 = vadd.f32 0.0, %v1354
  %1356 = vmatprep.mubr.bf16.mxu0 %v258
  %1357 = vmatmul.mubr.bf16.gmra.mrb[0].mxu0 %v69
  %v1358 = vpop.f32.mrb[0].mxu0
  %v1359 = vadd.f32 0.0, %v1358
  %v1360 = vpop.f32.mrb[0].mxu0
  %v1361 = vadd.f32 0.0, %v1360
  %v1362 = vpop.f32.mrb[0].mxu0
  %v1363 = vadd.f32 0.0, %v1362
  %v1364 = vpop.f32.mrb[0].mxu0
  %v1365 = vadd.f32 0.0, %v1364
  %1366 = vdwg.mxu0
  %v1367 = vmax.f32 %v1028, %v1296
  %v1368 = vmax.f32 %v1029, %v1298
  %v1369 = vmax.f32 %v1030, %v1349
  %v1370 = vmax.f32 %v1031, %v1351
  %v1371 = vmax.f32 %v1032, %v1300
  %v1372 = vmax.f32 %v1033, %v1302
  %v1373 = vmax.f32 %v1034, %v1353
  %v1374 = vmax.f32 %v1035, %v1355
  %v1375 = vmax.f32 %v1036, %v1306
  %v1376 = vmax.f32 %v1037, %v1308
  %v1377 = vmax.f32 %v1038, %v1359
  %v1378 = vmax.f32 %v1039, %v1361
  %v1379 = vmax.f32 %v1040, %v1310
  %v1380 = vmax.f32 %v1041, %v1312
  %v1381 = vmax.f32 %v1042, %v1363
  %v1382 = vmax.f32 %v1043, %v1365
  %v1383 = vld [vmem:[%s2] sm:$0xff]
  %v1384 = vld [vmem:[%s2 + $0x8] sm:$0xff]
  %v1385 = vld [vmem:[%s2 + $0x10] sm:$0xff]
  %v1386 = vld [vmem:[%s2 + $0x18] sm:$0xff]
  %1388 = vset.pattern.permute.xlu0 0
  %1389 = vperm.xlu0 %1388, %v1383
  %v1390 = vpop.permute.xlu0 %1389
  %1393 = vset.pattern.permute.xlu0 0
  %1394 = vperm.xlu0 %1393, %v1384
  %v1395 = vpop.permute.xlu0 %1394
  %1398 = vset.pattern.permute.xlu0 0
  %1399 = vperm.xlu0 %1398, %v1385
  %v1400 = vpop.permute.xlu0 %1399
  %1403 = vset.pattern.permute.xlu0 0
  %1404 = vperm.xlu0 %1403, %v1386
  %v1405 = vpop.permute.xlu0 %1404
  %v1407 = vadd.f32 %v1367, %v1390
  %v1408 = vadd.f32 %v1368, %v1390
  %v1409 = vadd.f32 %v1369, %v1390
  %v1410 = vadd.f32 %v1370, %v1390
  %v1411 = vadd.f32 %v1371, %v1395
  %v1412 = vadd.f32 %v1372, %v1395
  %v1413 = vadd.f32 %v1373, %v1395
  %v1414 = vadd.f32 %v1374, %v1395
  %v1415 = vadd.f32 %v1375, %v1400
  %v1416 = vadd.f32 %v1376, %v1400
  %v1417 = vadd.f32 %v1377, %v1400
  %v1418 = vadd.f32 %v1378, %v1400
  %v1419 = vadd.f32 %v1379, %v1405
  %v1420 = vadd.f32 %v1380, %v1405
  %v1421 = vadd.f32 %v1381, %v1405
  %v1422 = vadd.f32 %v1382, %v1405
  %v1423 = vmax.f32 %v1407, 0.0
  %v1424 = vmax.f32 %v1408, 0.0
  %v1425 = vmax.f32 %v1409, 0.0
  %v1426 = vmax.f32 %v1410, 0.0
  %v1427 = vmax.f32 %v1411, 0.0
  %v1428 = vmax.f32 %v1412, 0.0
  %v1429 = vmax.f32 %v1413, 0.0
  %v1430 = vmax.f32 %v1414, 0.0
  %v1431 = vmax.f32 %v1415, 0.0
  %v1432 = vmax.f32 %v1416, 0.0
  %v1433 = vmax.f32 %v1417, 0.0
  %v1434 = vmax.f32 %v1418, 0.0
  %v1435 = vmax.f32 %v1419, 0.0
  %v1436 = vmax.f32 %v1420, 0.0
  %v1437 = vmax.f32 %v1421, 0.0
  %v1438 = vmax.f32 %v1422, 0.0
  %v1439 = vpack.c.bf16 %v1427, %v1423
  %v1440 = vpack.c.bf16 %v1428, %v1424
  %v1441 = vpack.c.bf16 %v1429, %v1425
  %v1442 = vpack.c.bf16 %v1430, %v1426
  %v1443 = vpack.c.bf16 %v1435, %v1431
  %v1444 = vpack.c.bf16 %v1436, %v1432
  %v1445 = vpack.c.bf16 %v1437, %v1433
  %v1446 = vpack.c.bf16 %v1438, %v1434
  %v1455 = vunpack.c.l.b16 %v1439
  %v1456 = vunpack.c.l.b16 %v1440
  %v1457 = vunpack.c.l.b16 %v1441
  %v1458 = vunpack.c.l.b16 %v1442
  %v1459 = vunpack.c.h.b16 %v1439
  %v1460 = vunpack.c.h.b16 %v1440
  %v1461 = vunpack.c.h.b16 %v1441
  %v1462 = vunpack.c.h.b16 %v1442
  %v1463 = vunpack.c.l.b16 %v1443
  %v1464 = vunpack.c.l.b16 %v1444
  %v1465 = vunpack.c.l.b16 %v1445
  %v1466 = vunpack.c.l.b16 %v1446
  %v1467 = vunpack.c.h.b16 %v1443
  %v1468 = vunpack.c.h.b16 %v1444
  %v1469 = vunpack.c.h.b16 %v1445
  %v1470 = vunpack.c.h.b16 %v1446
  %v1471 = vpack.c.b16 %v1456, %v1455
  %v1472 = vpack.c.b16 %v1458, %v1457
  %v1473 = vpack.c.b16 %v1460, %v1459
  %v1474 = vpack.c.b16 %v1462, %v1461
  %v1475 = vpack.c.b16 %v1464, %v1463
  %v1476 = vpack.c.b16 %v1466, %v1465
  %v1477 = vpack.c.b16 %v1468, %v1467
  %v1478 = vpack.c.b16 %v1470, %v1469
  %1487 = vst [vmem:[%s3] sm:$0xff] %v1471
  %vm1488 = vcmask 1043456
  %vm1489 = vcmask 64516
  %vm1490 = vmor %vm1489, %vm1488
  %1491 = vst.msk [vmem:[%s3 + $0x8] sm:$0xff] %vm1490, %v1472
  %1492 = vst [vmem:[%s3 + $0x10] sm:$0xff] %v1473
  %1493 = vst.msk [vmem:[%s3 + $0x18] sm:$0xff] %vm1490, %v1474
  %1494 = vst [vmem:[%s3 + $0x20] sm:$0xff] %v1475
  %1495 = vst.msk [vmem:[%s3 + $0x28] sm:$0xff] %vm1490, %v1476
  %1496 = vst [vmem:[%s3 + $0x30] sm:$0xff] %v1477
  %1497 = vst.msk [vmem:[%s3 + $0x38] sm:$0xff] %vm1490, %v1478
  // Predicated region
  $region14: #{nepali_cnn_forward.4} parent=0 // pred_check
    _
  $region15: #{nepali_cnn_forward.4} parent=0 // pred_check_branch
    %1499 = sbr.rel (0) target = $region17
  $region16: #{nepali_cnn_forward.4} parent=0 // pred_region
    _
  $region17: #{nepali_cnn_forward.4} parent=0 // pred_fallthru
    _
  // Predicated region
  $region18: #{nepali_cnn_forward.4} parent=0 // pred_check
    _
  $region19: #{nepali_cnn_forward.4} parent=0 // pred_check_branch
    %1501 = sbr.rel (0) target = $region21
  $region20: #{nepali_cnn_forward.4} parent=0 // pred_region
    _
  $region21: #{nepali_cnn_forward.4} parent=0 // pred_fallthru
    _

// kernel: nepali_cnn_forward.5
$region0: #{nepali_cnn_forward.5}
  #allocation0 [shape = 'u32[]', space=smem, size = 0x4, offset = 0x4, fixed_abs, tag = 'smem constant byte address 0x4 - core index']
  #allocation1 [shape = 'u32[144,128]{1,0:T(1,128)}', space=vmem, size = 0x12000, scoped, tag = 'internal scratch']
  %s0 = inlined_call_operand.vmem [shape: bf16[8,1568], index: 0, kind: input, shape index: {}]
  %s1 = inlined_call_operand.vmem [shape: s8[1568,1024], index: 1, kind: input, shape index: {}]
  %s2 = inlined_call_operand.vmem [shape: f32[1,1024], index: 2, kind: input, shape index: {}]
  %s3 = inlined_call_operand.vmem [shape: f32[1,1024], index: 3, kind: input, shape index: {}]
  %s4 = inlined_call_operand.vmem [shape: s8[1024,512], index: 4, kind: input, shape index: {}]
  %s5 = inlined_call_operand.vmem [shape: f32[1,512], index: 5, kind: input, shape index: {}]
  %s6 = inlined_call_operand.vmem [shape: f32[1,512], index: 6, kind: input, shape index: {}]
  %s7 = inlined_call_operand.vmem [shape: bf16[512,128], index: 7, kind: input, shape index: {}]
  %s8 = inlined_call_operand.vmem [shape: f32[1,128], index: 8, kind: input, shape index: {}]
  %s9 = inlined_call_operand.hbm [shape: f32[8,128], index: 9, kind: output, shape index: {}]
  %s10 = sld [smem:[#allocation0]]
  $region46: #{nepali_cnn_forward.5} parent=0
    _
  %s12 = ssub.s32 1, %s10
  %s13 = scalar_select 0, %s12, %s10
  $region1: #{nepali_cnn_forward.5} parent=0
    #allocation2 [shape = 'u8[4096]{0}', space=vmem, size = 0x1000, scoped, tag = 'output window, operand 0, single buffered']
    #allocation3 [shape = 's32[1]{0}', space=sflag, size = 0x4, scoped, tag = 'scoped memory for nepali_cnn_forward.5']
    %14 = vsyncpa [#allocation3], 0
    // Predicated region
    $region2: #{nepali_cnn_forward.5} parent=1 // pred_check
      _
    $region3: #{nepali_cnn_forward.5} parent=1 // pred_check_branch
      %16 = sbr.rel (0) target = $region5
    $region4: #{nepali_cnn_forward.5} parent=1 // pred_region
      _
    $region5: #{nepali_cnn_forward.5} parent=1 // pred_fallthru
      _
    // Predicated region
    $region6: #{nepali_cnn_forward.5} parent=1 // pred_check
      _
    $region7: #{nepali_cnn_forward.5} parent=1 // pred_check_branch
      %18 = sbr.rel (0) target = $region9
    $region8: #{nepali_cnn_forward.5} parent=1 // pred_region
      _
    $region9: #{nepali_cnn_forward.5} parent=1 // pred_fallthru
      _
    // Predicated region
    $region10: #{nepali_cnn_forward.5} parent=1 // pred_check
      _
    $region11: #{nepali_cnn_forward.5} parent=1 // pred_check_branch
      %20 = sbr.rel (0) target = $region13
    $region12: #{nepali_cnn_forward.5} parent=1 // pred_region
      _
    $region13: #{nepali_cnn_forward.5} parent=1 // pred_fallthru
      _
    // Predicated region
    $region14: #{nepali_cnn_forward.5} parent=1 // pred_check
      _
    $region15: #{nepali_cnn_forward.5} parent=1 // pred_check_branch
      %22 = sbr.rel (0) target = $region17
    $region16: #{nepali_cnn_forward.5} parent=1 // pred_region
      _
    $region17: #{nepali_cnn_forward.5} parent=1 // pred_fallthru
      _
    // Predicated region
    $region18: #{nepali_cnn_forward.5} parent=1 // pred_check
      _
    $region19: #{nepali_cnn_forward.5} parent=1 // pred_check_branch
      %24 = sbr.rel (0) target = $region21
    $region20: #{nepali_cnn_forward.5} parent=1 // pred_region
      _
    $region21: #{nepali_cnn_forward.5} parent=1 // pred_fallthru
      _
    // Predicated region
    $region22: #{nepali_cnn_forward.5} parent=1 // pred_check
      _
    $region23: #{nepali_cnn_forward.5} parent=1 // pred_check_branch
      %26 = sbr.rel (0) target = $region25
    $region24: #{nepali_cnn_forward.5} parent=1 // pred_region
      _
    $region25: #{nepali_cnn_forward.5} parent=1 // pred_fallthru
      _
    // Predicated region
    $region26: #{nepali_cnn_forward.5} parent=1 // pred_check
      _
    $region27: #{nepali_cnn_forward.5} parent=1 // pred_check_branch
      %28 = sbr.rel (0) target = $region29
    $region28: #{nepali_cnn_forward.5} parent=1 // pred_region
      _
    $region29: #{nepali_cnn_forward.5} parent=1 // pred_fallthru
      _
    // Predicated region
    $region30: #{nepali_cnn_forward.5} parent=1 // pred_check
      _
    $region31: #{nepali_cnn_forward.5} parent=1 // pred_check_branch
      %30 = sbr.rel (0) target = $region33
    $region32: #{nepali_cnn_forward.5} parent=1 // pred_region
      _
    $region33: #{nepali_cnn_forward.5} parent=1 // pred_fallthru
      _
    // Predicated region
    $region34: #{nepali_cnn_forward.5} parent=1 // pred_check
      _
    $region35: #{nepali_cnn_forward.5} parent=1 // pred_check_branch
      %32 = sbr.rel (0) target = $region37
    $region36: #{nepali_cnn_forward.5} parent=1 // pred_region
      _
    $region37: #{nepali_cnn_forward.5} parent=1 // pred_fallthru
      _
    %v34 = vld [vmem:[%s0] sm:$0xff]
    %v35 = vld [vmem:[%s0 + $0x8] sm:$0xff]
    %v36 = vld [vmem:[%s0 + $0x10] sm:$0xff]
    %v37 = vld [vmem:[%s0 + $0x18] sm:$0xff]
    %v38 = vld [vmem:[%s0 + $0x20] sm:$0xff]
    %v39 = vld [vmem:[%s0 + $0x28] sm:$0xff]
    %v40 = vld [vmem:[%s0 + $0x30] sm:$0xf]
    %v41 = vld [vmem:[%s1] sm:$0xff]
    %v42 = vld [vmem:[%s1 + $0x8] sm:$0xff]
    %v43 = vld [vmem:[%s1 + $0x10] sm:$0xff]
    %v44 = vld [vmem:[%s1 + $0x18] sm:$0xff]
    %v45 = vld [vmem:[%s1 + $0x20] sm:$0xff]
    %v46 = vld [vmem:[%s1 + $0x28] sm:$0xff]
    %v47 = vld [vmem:[%s1 + $0x30] sm:$0xff]
    %v48 = vld [vmem:[%s1 + $0x38] sm:$0xff]
    %v49 = vld [vmem:[%s1 + $0x40] sm:$0xff]
    %v50 = vld [vmem:[%s1 + $0x48] sm:$0xff]
    %v51 = vld [vmem:[%s1 + $0x50] sm:$0xff]
    %v52 = vld [vmem:[%s1 + $0x58] sm:$0xff]
    %v53 = vld [vmem:[%s1 + $0x60] sm:$0xff]
    %v54 = vld [vmem:[%s1 + $0x68] sm:$0xff]
    %v55 = vld [vmem:[%s1 + $0x70] sm:$0xff]
    %v56 = vld [vmem:[%s1 + $0x78] sm:$0xff]
    %v57 = vld [vmem:[%s1 + $0x80] sm:$0xff]
    %v58 = vld [vmem:[%s1 + $0x88] sm:$0xff]
    %v59 = vld [vmem:[%s1 + $0x90] sm:$0xff]
    %v60 = vld [vmem:[%s1 + $0x98] sm:$0xff]
    %v61 = vld [vmem:[%s1 + $0xa0] sm:$0xff]
    %v62 = vld [vmem:[%s1 + $0xa8] sm:$0xff]
    %v63 = vld [vmem:[%s1 + $0xb0] sm:$0xff]
    %v64 = vld [vmem:[%s1 + $0xb8] sm:$0xff]
    %v65 = vld [vmem:[%s1 + $0xc0] sm:$0xff]
    %v66 = vld [vmem:[%s1 + $0xc8] sm:$0xff]
    %v67 = vld [vmem:[%s1 + $0xd0] sm:$0xff]
    %v68 = vld [vmem:[%s1 + $0xd8] sm:$0xff]
    %v69 = vld [vmem:[%s1 + $0xe0] sm:$0xff]
    %v70 = vld [vmem:[%s1 + $0xe8] sm:$0xff]
    %v71 = vld [vmem:[%s1 + $0xf0] sm:$0xff]
    %v72 = vld [vmem:[%s1 + $0xf8] sm:$0xff]
    %v73 = vld [vmem:[%s1 + $0x100] sm:$0xff]
    %v74 = vld [vmem:[%s1 + $0x108] sm:$0xff]
    %v75 = vld [vmem:[%s1 + $0x110] sm:$0xff]
    %v76 = vld [vmem:[%s1 + $0x118] sm:$0xff]
    %v77 = vld [vmem:[%s1 + $0x120] sm:$0xff]
    %v78 = vld [vmem:[%s1 + $0x128] sm:$0xff]
    %v79 = vld [vmem:[%s1 + $0x130] sm:$0xff]
    %v80 = vld [vmem:[%s1 + $0x138] sm:$0xff]
    %v81 = vld [vmem:[%s1 + $0x140] sm:$0xff]
    %v82 = vld [vmem:[%s1 + $0x148] sm:$0xff]
    %v83 = vld [vmem:[%s1 + $0x150] sm:$0xff]
    %v84 = vld [vmem:[%s1 + $0x158] sm:$0xff]
    %v85 = vld [vmem:[%s1 + $0x160] sm:$0xff]
    %v86 = vld [vmem:[%s1 + $0x168] sm:$0xff]
    %v87 = vld [vmem:[%s1 + $0x170] sm:$0xff]
    %v88 = vld [vmem:[%s1 + $0x178] sm:$0xff]
    %v89 = vld [vmem:[%s1 + $0x180] sm:$0xff]
    %v90 = vld [vmem:[%s1 + $0x188] sm:$0xff]
    %v91 = vld [vmem:[%s1 + $0x190] sm:$0xff]
    %v92 = vld [vmem:[%s1 + $0x198] sm:$0xff]
    %v93 = vld [vmem:[%s1 + $0x1a0] sm:$0xff]
    %v94 = vld [vmem:[%s1 + $0x1a8] sm:$0xff]
    %v95 = vld [vmem:[%s1 + $0x1b0] sm:$0xff]
    %v96 = vld [vmem:[%s1 + $0x1b8] sm:$0xff]
    %v97 = vld [vmem:[%s1 + $0x1c0] sm:$0xff]
    %v98 = vld [vmem:[%s1 + $0x1c8] sm:$0xff]
    %v99 = vld [vmem:[%s1 + $0x1d0] sm:$0xff]
    %v100 = vld [vmem:[%s1 + $0x1d8] sm:$0xff]
    %v101 = vld [vmem:[%s1 + $0x1e0] sm:$0xff]
    %v102 = vld [vmem:[%s1 + $0x1e8] sm:$0xff]
    %v103 = vld [vmem:[%s1 + $0x1f0] sm:$0xff]
    %v104 = vld [vmem:[%s1 + $0x1f8] sm:$0xff]
    %v105 = vld [vmem:[%s1 + $0x200] sm:$0xff]
    %v106 = vld [vmem:[%s1 + $0x208] sm:$0xff]
    %v107 = vld [vmem:[%s1 + $0x210] sm:$0xff]
    %v108 = vld [vmem:[%s1 + $0x218] sm:$0xff]
    %v109 = vld [vmem:[%s1 + $0x220] sm:$0xff]
    %v110 = vld [vmem:[%s1 + $0x228] sm:$0xff]
    %v111 = vld [vmem:[%s1 + $0x230] sm:$0xff]
    %v112 = vld [vmem:[%s1 + $0x238] sm:$0xff]
    %v113 = vld [vmem:[%s1 + $0x240] sm:$0xff]
    %v114 = vld [vmem:[%s1 + $0x248] sm:$0xff]
    %v115 = vld [vmem:[%s1 + $0x250] sm:$0xff]
    %v116 = vld [vmem:[%s1 + $0x258] sm:$0xff]
    %v117 = vld [vmem:[%s1 + $0x260] sm:$0xff]
    %v118 = vld [vmem:[%s1 + $0x268] sm:$0xff]
    %v119 = vld [vmem:[%s1 + $0x270] sm:$0xff]
    %v120 = vld [vmem:[%s1 + $0x278] sm:$0xff]
    %v121 = vld [vmem:[%s1 + $0x280] sm:$0xff]
    %v122 = vld [vmem:[%s1 + $0x288] sm:$0xff]
    %v123 = vld [vmem:[%s1 + $0x290] sm:$0xff]
    %v124 = vld [vmem:[%s1 + $0x298] sm:$0xff]
    %v125 = vld [vmem:[%s1 + $0x2a0] sm:$0xff]
    %v126 = vld [vmem:[%s1 + $0x2a8] sm:$0xff]
    %v127 = vld [vmem:[%s1 + $0x2b0] sm:$0xff]
    %v128 = vld [vmem:[%s1 + $0x2b8] sm:$0xff]
    %v129 = vld [vmem:[%s1 + $0x2c0] sm:$0xff]
    %v130 = vld [vmem:[%s1 + $0x2c8] sm:$0xff]
    %v131 = vld [vmem:[%s1 + $0x2d0] sm:$0xff]
    %v132 = vld [vmem:[%s1 + $0x2d8] sm:$0xff]
    %v133 = vld [vmem:[%s1 + $0x2e0] sm:$0xff]
    %v134 = vld [vmem:[%s1 + $0x2e8] sm:$0xff]
    %v135 = vld [vmem:[%s1 + $0x2f0] sm:$0xff]
    %v136 = vld [vmem:[%s1 + $0x2f8] sm:$0xff]
    %v137 = vld [vmem:[%s1 + $0x300] sm:$0xff]
    %v138 = vld [vmem:[%s1 + $0x308] sm:$0xff]
    %v139 = vld [vmem:[%s1 + $0x310] sm:$0xff]
    %v140 = vld [vmem:[%s1 + $0x318] sm:$0xff]
    %v141 = vld [vmem:[%s1 + $0x320] sm:$0xff]
    %v142 = vld [vmem:[%s1 + $0x328] sm:$0xff]
    %v143 = vld [vmem:[%s1 + $0x330] sm:$0xff]
    %v144 = vld [vmem:[%s1 + $0x338] sm:$0xff]
    %v145 = vld [vmem:[%s1 + $0x340] sm:$0xff]
    %v146 = vld [vmem:[%s1 + $0x348] sm:$0xff]
    %v147 = vld [vmem:[%s1 + $0x350] sm:$0xff]
    %v148 = vld [vmem:[%s1 + $0x358] sm:$0xff]
    %v149 = vld [vmem:[%s1 + $0x360] sm:$0xff]
    %v150 = vld [vmem:[%s1 + $0x368] sm:$0xff]
    %v151 = vld [vmem:[%s1 + $0x370] sm:$0xff]
    %v152 = vld [vmem:[%s1 + $0x378] sm:$0xff]
    %v153 = vld [vmem:[%s1 + $0x380] sm:$0xff]
    %v154 = vld [vmem:[%s1 + $0x388] sm:$0xff]
    %v155 = vld [vmem:[%s1 + $0x390] sm:$0xff]
    %v156 = vld [vmem:[%s1 + $0x398] sm:$0xff]
    %v157 = vld [vmem:[%s1 + $0x3a0] sm:$0xff]
    %v158 = vld [vmem:[%s1 + $0x3a8] sm:$0xff]
    %v159 = vld [vmem:[%s1 + $0x3b0] sm:$0xff]
    %v160 = vld [vmem:[%s1 + $0x3b8] sm:$0xff]
    %v161 = vld [vmem:[%s1 + $0x3c0] sm:$0xff]
    %v162 = vld [vmem:[%s1 + $0x3c8] sm:$0xff]
    %v163 = vld [vmem:[%s1 + $0x3d0] sm:$0xff]
    %v164 = vld [vmem:[%s1 + $0x3d8] sm:$0xff]
    %v165 = vld [vmem:[%s1 + $0x3e0] sm:$0xff]
    %v166 = vld [vmem:[%s1 + $0x3e8] sm:$0xff]
    %v167 = vld [vmem:[%s1 + $0x3f0] sm:$0xff]
    %v168 = vld [vmem:[%s1 + $0x3f8] sm:$0xff]
    %v169 = vld [vmem:[%s1 + $0x400] sm:$0xff]
    %v170 = vld [vmem:[%s1 + $0x408] sm:$0xff]
    %v171 = vld [vmem:[%s1 + $0x410] sm:$0xff]
    %v172 = vld [vmem:[%s1 + $0x418] sm:$0xff]
    %v173 = vld [vmem:[%s1 + $0x420] sm:$0xff]
    %v174 = vld [vmem:[%s1 + $0x428] sm:$0xff]
    %v175 = vld [vmem:[%s1 + $0x430] sm:$0xff]
    %v176 = vld [vmem:[%s1 + $0x438] sm:$0xff]
    %v177 = vld [vmem:[%s1 + $0x440] sm:$0xff]
    %v178 = vld [vmem:[%s1 + $0x448] sm:$0xff]
    %v179 = vld [vmem:[%s1 + $0x450] sm:$0xff]
    %v180 = vld [vmem:[%s1 + $0x458] sm:$0xff]
    %v181 = vld [vmem:[%s1 + $0x460] sm:$0xff]
    %v182 = vld [vmem:[%s1 + $0x468] sm:$0xff]
    %v183 = vld [vmem:[%s1 + $0x470] sm:$0xff]
    %v184 = vld [vmem:[%s1 + $0x478] sm:$0xff]
    %v185 = vld [vmem:[%s1 + $0x480] sm:$0xff]
    %v186 = vld [vmem:[%s1 + $0x488] sm:$0xff]
    %v187 = vld [vmem:[%s1 + $0x490] sm:$0xff]
    %v188 = vld [vmem:[%s1 + $0x498] sm:$0xff]
    %v189 = vld [vmem:[%s1 + $0x4a0] sm:$0xff]
    %v190 = vld [vmem:[%s1 + $0x4a8] sm:$0xff]
    %v191 = vld [vmem:[%s1 + $0x4b0] sm:$0xff]
    %v192 = vld [vmem:[%s1 + $0x4b8] sm:$0xff]
    %v193 = vld [vmem:[%s1 + $0x4c0] sm:$0xff]
    %v194 = vld [vmem:[%s1 + $0x4c8] sm:$0xff]
    %v195 = vld [vmem:[%s1 + $0x4d0] sm:$0xff]
    %v196 = vld [vmem:[%s1 + $0x4d8] sm:$0xff]
    %v197 = vld [vmem:[%s1 + $0x4e0] sm:$0xff]
    %v198 = vld [vmem:[%s1 + $0x4e8] sm:$0xff]
    %v199 = vld [vmem:[%s1 + $0x4f0] sm:$0xff]
    %v200 = vld [vmem:[%s1 + $0x4f8] sm:$0xff]
    %v201 = vld [vmem:[%s1 + $0x500] sm:$0xff]
    %v202 = vld [vmem:[%s1 + $0x508] sm:$0xff]
    %v203 = vld [vmem:[%s1 + $0x510] sm:$0xff]
    %v204 = vld [vmem:[%s1 + $0x518] sm:$0xff]
    %v205 = vld [vmem:[%s1 + $0x520] sm:$0xff]
    %v206 = vld [vmem:[%s1 + $0x528] sm:$0xff]
    %v207 = vld [vmem:[%s1 + $0x530] sm:$0xff]
    %v208 = vld [vmem:[%s1 + $0x538] sm:$0xff]
    %v209 = vld [vmem:[%s1 + $0x540] sm:$0xff]
    %v210 = vld [vmem:[%s1 + $0x548] sm:$0xff]
    %v211 = vld [vmem:[%s1 + $0x550] sm:$0xff]
    %v212 = vld [vmem:[%s1 + $0x558] sm:$0xff]
    %v213 = vld [vmem:[%s1 + $0x560] sm:$0xff]
    %v214 = vld [vmem:[%s1 + $0x568] sm:$0xff]
    %v215 = vld [vmem:[%s1 + $0x570] sm:$0xff]
    %v216 = vld [vmem:[%s1 + $0x578] sm:$0xff]
    %v217 = vld [vmem:[%s1 + $0x580] sm:$0xff]
    %v218 = vld [vmem:[%s1 + $0x588] sm:$0xff]
    %v219 = vld [vmem:[%s1 + $0x590] sm:$0xff]
    %v220 = vld [vmem:[%s1 + $0x598] sm:$0xff]
    %v221 = vld [vmem:[%s1 + $0x5a0] sm:$0xff]
    %v222 = vld [vmem:[%s1 + $0x5a8] sm:$0xff]
    %v223 = vld [vmem:[%s1 + $0x5b0] sm:$0xff]
    %v224 = vld [vmem:[%s1 + $0x5b8] sm:$0xff]
    %v225 = vld [vmem:[%s1 + $0x5c0] sm:$0xff]
    %v226 = vld [vmem:[%s1 + $0x5c8] sm:$0xff]
    %v227 = vld [vmem:[%s1 + $0x5d0] sm:$0xff]
    %v228 = vld [vmem:[%s1 + $0x5d8] sm:$0xff]
    %v229 = vld [vmem:[%s1 + $0x5e0] sm:$0xff]
    %v230 = vld [vmem:[%s1 + $0x5e8] sm:$0xff]
    %v231 = vld [vmem:[%s1 + $0x5f0] sm:$0xff]
    %v232 = vld [vmem:[%s1 + $0x5f8] sm:$0xff]
    %v233 = vld [vmem:[%s1 + $0x600] sm:$0xff]
    %v234 = vld [vmem:[%s1 + $0x608] sm:$0xff]
    %v235 = vld [vmem:[%s1 + $0x610] sm:$0xff]
    %v236 = vld [vmem:[%s1 + $0x618] sm:$0xff]
    %v237 = vld [vmem:[%s1 + $0x620] sm:$0xff]
    %v238 = vld [vmem:[%s1 + $0x628] sm:$0xff]
    %v239 = vld [vmem:[%s1 + $0x630] sm:$0xff]
    %v240 = vld [vmem:[%s1 + $0x638] sm:$0xff]
    %v241 = vld [vmem:[%s1 + $0x640] sm:$0xff]
    %v242 = vld [vmem:[%s1 + $0x648] sm:$0xff]
    %v243 = vld [vmem:[%s1 + $0x650] sm:$0xff]
    %v244 = vld [vmem:[%s1 + $0x658] sm:$0xff]
    %v245 = vld [vmem:[%s1 + $0x660] sm:$0xff]
    %v246 = vld [vmem:[%s1 + $0x668] sm:$0xff]
    %v247 = vld [vmem:[%s1 + $0x670] sm:$0xff]
    %v248 = vld [vmem:[%s1 + $0x678] sm:$0xff]
    %v249 = vld [vmem:[%s1 + $0x680] sm:$0xff]
    %v250 = vld [vmem:[%s1 + $0x688] sm:$0xff]
    %v251 = vld [vmem:[%s1 + $0x690] sm:$0xff]
    %v252 = vld [vmem:[%s1 + $0x698] sm:$0xff]
    %v253 = vld [vmem:[%s1 + $0x6a0] sm:$0xff]
    %v254 = vld [vmem:[%s1 + $0x6a8] sm:$0xff]
    %v255 = vld [vmem:[%s1 + $0x6b0] sm:$0xff]
    %v256 = vld [vmem:[%s1 + $0x6b8] sm:$0xff]
    %v257 = vld [vmem:[%s1 + $0x6c0] sm:$0xff]
    %v258 = vld [vmem:[%s1 + $0x6c8] sm:$0xff]
    %v259 = vld [vmem:[%s1 + $0x6d0] sm:$0xff]
    %v260 = vld [vmem:[%s1 + $0x6d8] sm:$0xff]
    %v261 = vld [vmem:[%s1 + $0x6e0] sm:$0xff]
    %v262 = vld [vmem:[%s1 + $0x6e8] sm:$0xff]
    %v263 = vld [vmem:[%s1 + $0x6f0] sm:$0xff]
    %v264 = vld [vmem:[%s1 + $0x6f8] sm:$0xff]
    %v265 = vld [vmem:[%s1 + $0x700] sm:$0xff]
    %v266 = vld [vmem:[%s1 + $0x708] sm:$0xff]
    %v267 = vld [vmem:[%s1 + $0x710] sm:$0xff]
    %v268 = vld [vmem:[%s1 + $0x718] sm:$0xff]
    %v269 = vld [vmem:[%s1 + $0x720] sm:$0xff]
    %v270 = vld [vmem:[%s1 + $0x728] sm:$0xff]
    %v271 = vld [vmem:[%s1 + $0x730] sm:$0xff]
    %v272 = vld [vmem:[%s1 + $0x738] sm:$0xff]
    %v273 = vld [vmem:[%s1 + $0x740] sm:$0xff]
    %v274 = vld [vmem:[%s1 + $0x748] sm:$0xff]
    %v275 = vld [vmem:[%s1 + $0x750] sm:$0xff]
    %v276 = vld [vmem:[%s1 + $0x758] sm:$0xff]
    %v277 = vld [vmem:[%s1 + $0x760] sm:$0xff]
    %v278 = vld [vmem:[%s1 + $0x768] sm:$0xff]
    %v279 = vld [vmem:[%s1 + $0x770] sm:$0xff]
    %v280 = vld [vmem:[%s1 + $0x778] sm:$0xff]
    %v281 = vld [vmem:[%s1 + $0x780] sm:$0xff]
    %v282 = vld [vmem:[%s1 + $0x788] sm:$0xff]
    %v283 = vld [vmem:[%s1 + $0x790] sm:$0xff]
    %v284 = vld [vmem:[%s1 + $0x798] sm:$0xff]
    %v285 = vld [vmem:[%s1 + $0x7a0] sm:$0xff]
    %v286 = vld [vmem:[%s1 + $0x7a8] sm:$0xff]
    %v287 = vld [vmem:[%s1 + $0x7b0] sm:$0xff]
    %v288 = vld [vmem:[%s1 + $0x7b8] sm:$0xff]
    %v289 = vld [vmem:[%s1 + $0x7c0] sm:$0xff]
    %v290 = vld [vmem:[%s1 + $0x7c8] sm:$0xff]
    %v291 = vld [vmem:[%s1 + $0x7d0] sm:$0xff]
    %v292 = vld [vmem:[%s1 + $0x7d8] sm:$0xff]
    %v293 = vld [vmem:[%s1 + $0x7e0] sm:$0xff]
    %v294 = vld [vmem:[%s1 + $0x7e8] sm:$0xff]
    %v295 = vld [vmem:[%s1 + $0x7f0] sm:$0xff]
    %v296 = vld [vmem:[%s1 + $0x7f8] sm:$0xff]
    %v297 = vld [vmem:[%s1 + $0x800] sm:$0xff]
    %v298 = vld [vmem:[%s1 + $0x808] sm:$0xff]
    %v299 = vld [vmem:[%s1 + $0x810] sm:$0xff]
    %v300 = vld [vmem:[%s1 + $0x818] sm:$0xff]
    %v301 = vld [vmem:[%s1 + $0x820] sm:$0xff]
    %v302 = vld [vmem:[%s1 + $0x828] sm:$0xff]
    %v303 = vld [vmem:[%s1 + $0x830] sm:$0xff]
    %v304 = vld [vmem:[%s1 + $0x838] sm:$0xff]
    %v305 = vld [vmem:[%s1 + $0x840] sm:$0xff]
    %v306 = vld [vmem:[%s1 + $0x848] sm:$0xff]
    %v307 = vld [vmem:[%s1 + $0x850] sm:$0xff]
    %v308 = vld [vmem:[%s1 + $0x858] sm:$0xff]
    %v309 = vld [vmem:[%s1 + $0x860] sm:$0xff]
    %v310 = vld [vmem:[%s1 + $0x868] sm:$0xff]
    %v311 = vld [vmem:[%s1 + $0x870] sm:$0xff]
    %v312 = vld [vmem:[%s1 + $0x878] sm:$0xff]
    %v313 = vld [vmem:[%s1 + $0x880] sm:$0xff]
    %v314 = vld [vmem:[%s1 + $0x888] sm:$0xff]
    %v315 = vld [vmem:[%s1 + $0x890] sm:$0xff]
    %v316 = vld [vmem:[%s1 + $0x898] sm:$0xff]
    %v317 = vld [vmem:[%s1 + $0x8a0] sm:$0xff]
    %v318 = vld [vmem:[%s1 + $0x8a8] sm:$0xff]
    %v319 = vld [vmem:[%s1 + $0x8b0] sm:$0xff]
    %v320 = vld [vmem:[%s1 + $0x8b8] sm:$0xff]
    %v321 = vld [vmem:[%s1 + $0x8c0] sm:$0xff]
    %v322 = vld [vmem:[%s1 + $0x8c8] sm:$0xff]
    %v323 = vld [vmem:[%s1 + $0x8d0] sm:$0xff]
    %v324 = vld [vmem:[%s1 + $0x8d8] sm:$0xff]
    %v325 = vld [vmem:[%s1 + $0x8e0] sm:$0xff]
    %v326 = vld [vmem:[%s1 + $0x8e8] sm:$0xff]
    %v327 = vld [vmem:[%s1 + $0x8f0] sm:$0xff]
    %v328 = vld [vmem:[%s1 + $0x8f8] sm:$0xff]
    %v329 = vld [vmem:[%s1 + $0x900] sm:$0xff]
    %v330 = vld [vmem:[%s1 + $0x908] sm:$0xff]
    %v331 = vld [vmem:[%s1 + $0x910] sm:$0xff]
    %v332 = vld [vmem:[%s1 + $0x918] sm:$0xff]
    %v333 = vld [vmem:[%s1 + $0x920] sm:$0xff]
    %v334 = vld [vmem:[%s1 + $0x928] sm:$0xff]
    %v335 = vld [vmem:[%s1 + $0x930] sm:$0xff]
    %v336 = vld [vmem:[%s1 + $0x938] sm:$0xff]
    %v337 = vld [vmem:[%s1 + $0x940] sm:$0xff]
    %v338 = vld [vmem:[%s1 + $0x948] sm:$0xff]
    %v339 = vld [vmem:[%s1 + $0x950] sm:$0xff]
    %v340 = vld [vmem:[%s1 + $0x958] sm:$0xff]
    %v341 = vld [vmem:[%s1 + $0x960] sm:$0xff]
    %v342 = vld [vmem:[%s1 + $0x968] sm:$0xff]
    %v343 = vld [vmem:[%s1 + $0x970] sm:$0xff]
    %v344 = vld [vmem:[%s1 + $0x978] sm:$0xff]
    %v345 = vld [vmem:[%s1 + $0x980] sm:$0xff]
    %v346 = vld [vmem:[%s1 + $0x988] sm:$0xff]
    %v347 = vld [vmem:[%s1 + $0x990] sm:$0xff]
    %v348 = vld [vmem:[%s1 + $0x998] sm:$0xff]
    %v349 = vld [vmem:[%s1 + $0x9a0] sm:$0xff]
    %v350 = vld [vmem:[%s1 + $0x9a8] sm:$0xff]
    %v351 = vld [vmem:[%s1 + $0x9b0] sm:$0xff]
    %v352 = vld [vmem:[%s1 + $0x9b8] sm:$0xff]
    %v353 = vld [vmem:[%s1 + $0x9c0] sm:$0xff]
    %v354 = vld [vmem:[%s1 + $0x9c8] sm:$0xff]
    %v355 = vld [vmem:[%s1 + $0x9d0] sm:$0xff]
    %v356 = vld [vmem:[%s1 + $0x9d8] sm:$0xff]
    %v357 = vld [vmem:[%s1 + $0x9e0] sm:$0xff]
    %v358 = vld [vmem:[%s1 + $0x9e8] sm:$0xff]
    %v359 = vld [vmem:[%s1 + $0x9f0] sm:$0xff]
    %v360 = vld [vmem:[%s1 + $0x9f8] sm:$0xff]
    %v361 = vld [vmem:[%s1 + $0xa00] sm:$0xff]
    %v362 = vld [vmem:[%s1 + $0xa08] sm:$0xff]
    %v363 = vld [vmem:[%s1 + $0xa10] sm:$0xff]
    %v364 = vld [vmem:[%s1 + $0xa18] sm:$0xff]
    %v365 = vld [vmem:[%s1 + $0xa20] sm:$0xff]
    %v366 = vld [vmem:[%s1 + $0xa28] sm:$0xff]
    %v367 = vld [vmem:[%s1 + $0xa30] sm:$0xff]
    %v368 = vld [vmem:[%s1 + $0xa38] sm:$0xff]
    %v369 = vld [vmem:[%s1 + $0xa40] sm:$0xff]
    %v370 = vld [vmem:[%s1 + $0xa48] sm:$0xff]
    %v371 = vld [vmem:[%s1 + $0xa50] sm:$0xff]
    %v372 = vld [vmem:[%s1 + $0xa58] sm:$0xff]
    %v373 = vld [vmem:[%s1 + $0xa60] sm:$0xff]
    %v374 = vld [vmem:[%s1 + $0xa68] sm:$0xff]
    %v375 = vld [vmem:[%s1 + $0xa70] sm:$0xff]
    %v376 = vld [vmem:[%s1 + $0xa78] sm:$0xff]
    %v377 = vld [vmem:[%s1 + $0xa80] sm:$0xff]
    %v378 = vld [vmem:[%s1 + $0xa88] sm:$0xff]
    %v379 = vld [vmem:[%s1 + $0xa90] sm:$0xff]
    %v380 = vld [vmem:[%s1 + $0xa98] sm:$0xff]
    %v381 = vld [vmem:[%s1 + $0xaa0] sm:$0xff]
    %v382 = vld [vmem:[%s1 + $0xaa8] sm:$0xff]
    %v383 = vld [vmem:[%s1 + $0xab0] sm:$0xff]
    %v384 = vld [vmem:[%s1 + $0xab8] sm:$0xff]
    %v385 = vld [vmem:[%s1 + $0xac0] sm:$0xff]
    %v386 = vld [vmem:[%s1 + $0xac8] sm:$0xff]
    %v387 = vld [vmem:[%s1 + $0xad0] sm:$0xff]
    %v388 = vld [vmem:[%s1 + $0xad8] sm:$0xff]
    %v389 = vld [vmem:[%s1 + $0xae0] sm:$0xff]
    %v390 = vld [vmem:[%s1 + $0xae8] sm:$0xff]
    %v391 = vld [vmem:[%s1 + $0xaf0] sm:$0xff]
    %v392 = vld [vmem:[%s1 + $0xaf8] sm:$0xff]
    %v393 = vld [vmem:[%s1 + $0xb00] sm:$0xff]
    %v394 = vld [vmem:[%s1 + $0xb08] sm:$0xff]
    %v395 = vld [vmem:[%s1 + $0xb10] sm:$0xff]
    %v396 = vld [vmem:[%s1 + $0xb18] sm:$0xff]
    %v397 = vld [vmem:[%s1 + $0xb20] sm:$0xff]
    %v398 = vld [vmem:[%s1 + $0xb28] sm:$0xff]
    %v399 = vld [vmem:[%s1 + $0xb30] sm:$0xff]
    %v400 = vld [vmem:[%s1 + $0xb38] sm:$0xff]
    %v401 = vld [vmem:[%s1 + $0xb40] sm:$0xff]
    %v402 = vld [vmem:[%s1 + $0xb48] sm:$0xff]
    %v403 = vld [vmem:[%s1 + $0xb50] sm:$0xff]
    %v404 = vld [vmem:[%s1 + $0xb58] sm:$0xff]
    %v405 = vld [vmem:[%s1 + $0xb60] sm:$0xff]
    %v406 = vld [vmem:[%s1 + $0xb68] sm:$0xff]
    %v407 = vld [vmem:[%s1 + $0xb70] sm:$0xff]
    %v408 = vld [vmem:[%s1 + $0xb78] sm:$0xff]
    %v409 = vld [vmem:[%s1 + $0xb80] sm:$0xff]
    %v410 = vld [vmem:[%s1 + $0xb88] sm:$0xff]
    %v411 = vld [vmem:[%s1 + $0xb90] sm:$0xff]
    %v412 = vld [vmem:[%s1 + $0xb98] sm:$0xff]
    %v413 = vld [vmem:[%s1 + $0xba0] sm:$0xff]
    %v414 = vld [vmem:[%s1 + $0xba8] sm:$0xff]
    %v415 = vld [vmem:[%s1 + $0xbb0] sm:$0xff]
    %v416 = vld [vmem:[%s1 + $0xbb8] sm:$0xff]
    %v417 = vld [vmem:[%s1 + $0xbc0] sm:$0xff]
    %v418 = vld [vmem:[%s1 + $0xbc8] sm:$0xff]
    %v419 = vld [vmem:[%s1 + $0xbd0] sm:$0xff]
    %v420 = vld [vmem:[%s1 + $0xbd8] sm:$0xff]
    %v421 = vld [vmem:[%s1 + $0xbe0] sm:$0xff]
    %v422 = vld [vmem:[%s1 + $0xbe8] sm:$0xff]
    %v423 = vld [vmem:[%s1 + $0xbf0] sm:$0xff]
    %v424 = vld [vmem:[%s1 + $0xbf8] sm:$0xff]
    %v425 = vld [vmem:[%s1 + $0xc00] sm:$0xff]
    %v426 = vld [vmem:[%s1 + $0xc08] sm:$0xff]
    %v427 = vld [vmem:[%s1 + $0xc10] sm:$0xff]
    %v428 = vld [vmem:[%s1 + $0xc18] sm:$0xff]
    %v429 = vld [vmem:[%s1 + $0xc20] sm:$0xff]
    %v430 = vld [vmem:[%s1 + $0xc28] sm:$0xff]
    %v431 = vld [vmem:[%s1 + $0xc30] sm:$0xff]
    %v432 = vld [vmem:[%s1 + $0xc38] sm:$0xff]
    %v433 = vunpack.c.l.s8.bf16 %v41
    %v434 = vunpack.c.l.s8.bf16 %v42
    %v435 = vunpack.c.l.s8.bf16 %v43
    %v436 = vunpack.c.l.s8.bf16 %v44
    %v437 = vunpack.c.l.s8.bf16 %v45
    %v438 = vunpack.c.l.s8.bf16 %v46
    %v439 = vunpack.c.l.s8.bf16 %v47
    %v440 = vunpack.c.l.s8.bf16 %v48
    %v441 = vunpack.c.h.s8.bf16 %v41
    %v442 = vunpack.c.h.s8.bf16 %v42
    %v443 = vunpack.c.h.s8.bf16 %v43
    %v444 = vunpack.c.h.s8.bf16 %v44
    %v445 = vunpack.c.h.s8.bf16 %v45
    %v446 = vunpack.c.h.s8.bf16 %v46
    %v447 = vunpack.c.h.s8.bf16 %v47
    %v448 = vunpack.c.h.s8.bf16 %v48
    %v449 = vunpack.c.l.s8.bf16 %v49
    %v450 = vunpack.c.l.s8.bf16 %v50
    %v451 = vunpack.c.l.s8.bf16 %v51
    %v452 = vunpack.c.l.s8.bf16 %v52
    %v453 = vunpack.c.l.s8.bf16 %v53
    %v454 = vunpack.c.l.s8.bf16 %v54
    %v455 = vunpack.c.l.s8.bf16 %v55
    %v456 = vunpack.c.l.s8.bf16 %v56
    %v457 = vunpack.c.h.s8.bf16 %v49
    %v458 = vunpack.c.h.s8.bf16 %v50
    %v459 = vunpack.c.h.s8.bf16 %v51
    %v460 = vunpack.c.h.s8.bf16 %v52
    %v461 = vunpack.c.h.s8.bf16 %v53
    %v462 = vunpack.c.h.s8.bf16 %v54
    %v463 = vunpack.c.h.s8.bf16 %v55
    %v464 = vunpack.c.h.s8.bf16 %v56
    %v465 = vunpack.c.l.s8.bf16 %v57
    %v466 = vunpack.c.l.s8.bf16 %v58
    %v467 = vunpack.c.l.s8.bf16 %v59
    %v468 = vunpack.c.l.s8.bf16 %v60
    %v469 = vunpack.c.l.s8.bf16 %v61
    %v470 = vunpack.c.l.s8.bf16 %v62
    %v471 = vunpack.c.l.s8.bf16 %v63
    %v472 = vunpack.c.l.s8.bf16 %v64
    %v473 = vunpack.c.h.s8.bf16 %v57
    %v474 = vunpack.c.h.s8.bf16 %v58
    %v475 = vunpack.c.h.s8.bf16 %v59
    %v476 = vunpack.c.h.s8.bf16 %v60
    %v477 = vunpack.c.h.s8.bf16 %v61
    %v478 = vunpack.c.h.s8.bf16 %v62
    %v479 = vunpack.c.h.s8.bf16 %v63
    %v480 = vunpack.c.h.s8.bf16 %v64
    %v481 = vunpack.c.l.s8.bf16 %v65
    %v482 = vunpack.c.l.s8.bf16 %v66
    %v483 = vunpack.c.l.s8.bf16 %v67
    %v484 = vunpack.c.l.s8.bf16 %v68
    %v485 = vunpack.c.l.s8.bf16 %v69
    %v486 = vunpack.c.l.s8.bf16 %v70
    %v487 = vunpack.c.l.s8.bf16 %v71
    %v488 = vunpack.c.l.s8.bf16 %v72
    %v489 = vunpack.c.h.s8.bf16 %v65
    %v490 = vunpack.c.h.s8.bf16 %v66
    %v491 = vunpack.c.h.s8.bf16 %v67
    %v492 = vunpack.c.h.s8.bf16 %v68
    %v493 = vunpack.c.h.s8.bf16 %v69
    %v494 = vunpack.c.h.s8.bf16 %v70
    %v495 = vunpack.c.h.s8.bf16 %v71
    %v496 = vunpack.c.h.s8.bf16 %v72
    %v497 = vunpack.c.l.s8.bf16 %v73
    %v498 = vunpack.c.l.s8.bf16 %v74
    %v499 = vunpack.c.l.s8.bf16 %v75
    %v500 = vunpack.c.l.s8.bf16 %v76
    %v501 = vunpack.c.l.s8.bf16 %v77
    %v502 = vunpack.c.l.s8.bf16 %v78
    %v503 = vunpack.c.l.s8.bf16 %v79
    %v504 = vunpack.c.l.s8.bf16 %v80
    %v505 = vunpack.c.h.s8.bf16 %v73
    %v506 = vunpack.c.h.s8.bf16 %v74
    %v507 = vunpack.c.h.s8.bf16 %v75
    %v508 = vunpack.c.h.s8.bf16 %v76
    %v509 = vunpack.c.h.s8.bf16 %v77
    %v510 = vunpack.c.h.s8.bf16 %v78
    %v511 = vunpack.c.h.s8.bf16 %v79
    %v512 = vunpack.c.h.s8.bf16 %v80
    %v513 = vunpack.c.l.s8.bf16 %v81
    %v514 = vunpack.c.l.s8.bf16 %v82
    %v515 = vunpack.c.l.s8.bf16 %v83
    %v516 = vunpack.c.l.s8.bf16 %v84
    %v517 = vunpack.c.l.s8.bf16 %v85
    %v518 = vunpack.c.l.s8.bf16 %v86
    %v519 = vunpack.c.l.s8.bf16 %v87
    %v520 = vunpack.c.l.s8.bf16 %v88
    %v521 = vunpack.c.h.s8.bf16 %v81
    %v522 = vunpack.c.h.s8.bf16 %v82
    %v523 = vunpack.c.h.s8.bf16 %v83
    %v524 = vunpack.c.h.s8.bf16 %v84
    %v525 = vunpack.c.h.s8.bf16 %v85
    %v526 = vunpack.c.h.s8.bf16 %v86
    %v527 = vunpack.c.h.s8.bf16 %v87
    %v528 = vunpack.c.h.s8.bf16 %v88
    %v529 = vunpack.c.l.s8.bf16 %v89
    %v530 = vunpack.c.l.s8.bf16 %v90
    %v531 = vunpack.c.l.s8.bf16 %v91
    %v532 = vunpack.c.l.s8.bf16 %v92
    %v533 = vunpack.c.l.s8.bf16 %v93
    %v534 = vunpack.c.l.s8.bf16 %v94
    %v535 = vunpack.c.l.s8.bf16 %v95
    %v536 = vunpack.c.l.s8.bf16 %v96
    %v537 = vunpack.c.h.s8.bf16 %v89
    %v538 = vunpack.c.h.s8.bf16 %v90
    %v539 = vunpack.c.h.s8.bf16 %v91
    %v540 = vunpack.c.h.s8.bf16 %v92
    %v541 = vunpack.c.h.s8.bf16 %v93
    %v542 = vunpack.c.h.s8.bf16 %v94
    %v543 = vunpack.c.h.s8.bf16 %v95
    %v544 = vunpack.c.h.s8.bf16 %v96
    %v545 = vunpack.c.l.s8.bf16 %v97
    %v546 = vunpack.c.l.s8.bf16 %v98
    %v547 = vunpack.c.l.s8.bf16 %v99
    %v548 = vunpack.c.l.s8.bf16 %v100
    %v549 = vunpack.c.l.s8.bf16 %v101
    %v550 = vunpack.c.l.s8.bf16 %v102
    %v551 = vunpack.c.l.s8.bf16 %v103
    %v552 = vunpack.c.l.s8.bf16 %v104
    %v553 = vunpack.c.h.s8.bf16 %v97
    %v554 = vunpack.c.h.s8.bf16 %v98
    %v555 = vunpack.c.h.s8.bf16 %v99
    %v556 = vunpack.c.h.s8.bf16 %v100
    %v557 = vunpack.c.h.s8.bf16 %v101
    %v558 = vunpack.c.h.s8.bf16 %v102
    %v559 = vunpack.c.h.s8.bf16 %v103
    %v560 = vunpack.c.h.s8.bf16 %v104
    %v561 = vunpack.c.l.s8.bf16 %v105
    %v562 = vunpack.c.l.s8.bf16 %v106
    %v563 = vunpack.c.l.s8.bf16 %v107
    %v564 = vunpack.c.l.s8.bf16 %v108
    %v565 = vunpack.c.l.s8.bf16 %v109
    %v566 = vunpack.c.l.s8.bf16 %v110
    %v567 = vunpack.c.l.s8.bf16 %v111
    %v568 = vunpack.c.l.s8.bf16 %v112
    %v569 = vunpack.c.h.s8.bf16 %v105
    %v570 = vunpack.c.h.s8.bf16 %v106
    %v571 = vunpack.c.h.s8.bf16 %v107
    %v572 = vunpack.c.h.s8.bf16 %v108
    %v573 = vunpack.c.h.s8.bf16 %v109
    %v574 = vunpack.c.h.s8.bf16 %v110
    %v575 = vunpack.c.h.s8.bf16 %v111
    %v576 = vunpack.c.h.s8.bf16 %v112
    %v577 = vunpack.c.l.s8.bf16 %v113
    %v578 = vunpack.c.l.s8.bf16 %v114
    %v579 = vunpack.c.l.s8.bf16 %v115
    %v580 = vunpack.c.l.s8.bf16 %v116
    %v581 = vunpack.c.l.s8.bf16 %v117
    %v582 = vunpack.c.l.s8.bf16 %v118
    %v583 = vunpack.c.l.s8.bf16 %v119
    %v584 = vunpack.c.l.s8.bf16 %v120
    %v585 = vunpack.c.h.s8.bf16 %v113
    %v586 = vunpack.c.h.s8.bf16 %v114
    %v587 = vunpack.c.h.s8.bf16 %v115
    %v588 = vunpack.c.h.s8.bf16 %v116
    %v589 = vunpack.c.h.s8.bf16 %v117
    %v590 = vunpack.c.h.s8.bf16 %v118
    %v591 = vunpack.c.h.s8.bf16 %v119
    %v592 = vunpack.c.h.s8.bf16 %v120
    %v593 = vunpack.c.l.s8.bf16 %v121
    %v594 = vunpack.c.l.s8.bf16 %v122
    %v595 = vunpack.c.l.s8.bf16 %v123
    %v596 = vunpack.c.l.s8.bf16 %v124
    %v597 = vunpack.c.l.s8.bf16 %v125
    %v598 = vunpack.c.l.s8.bf16 %v126
    %v599 = vunpack.c.l.s8.bf16 %v127
    %v600 = vunpack.c.l.s8.bf16 %v128
    %v601 = vunpack.c.h.s8.bf16 %v121
    %v602 = vunpack.c.h.s8.bf16 %v122
    %v603 = vunpack.c.h.s8.bf16 %v123
    %v604 = vunpack.c.h.s8.bf16 %v124
    %v605 = vunpack.c.h.s8.bf16 %v125
    %v606 = vunpack.c.h.s8.bf16 %v126
    %v607 = vunpack.c.h.s8.bf16 %v127
    %v608 = vunpack.c.h.s8.bf16 %v128
    %v609 = vunpack.c.l.s8.bf16 %v129
    %v610 = vunpack.c.l.s8.bf16 %v130
    %v611 = vunpack.c.l.s8.bf16 %v131
    %v612 = vunpack.c.l.s8.bf16 %v132
    %v613 = vunpack.c.l.s8.bf16 %v133
    %v614 = vunpack.c.l.s8.bf16 %v134
    %v615 = vunpack.c.l.s8.bf16 %v135
    %v616 = vunpack.c.l.s8.bf16 %v136
    %v617 = vunpack.c.h.s8.bf16 %v129
    %v618 = vunpack.c.h.s8.bf16 %v130
    %v619 = vunpack.c.h.s8.bf16 %v131
    %v620 = vunpack.c.h.s8.bf16 %v132
    %v621 = vunpack.c.h.s8.bf16 %v133
    %v622 = vunpack.c.h.s8.bf16 %v134
    %v623 = vunpack.c.h.s8.bf16 %v135
    %v624 = vunpack.c.h.s8.bf16 %v136
    %v625 = vunpack.c.l.s8.bf16 %v137
    %v626 = vunpack.c.l.s8.bf16 %v138
    %v627 = vunpack.c.l.s8.bf16 %v139
    %v628 = vunpack.c.l.s8.bf16 %v140
    %v629 = vunpack.c.l.s8.bf16 %v141
    %v630 = vunpack.c.l.s8.bf16 %v142
    %v631 = vunpack.c.l.s8.bf16 %v143
    %v632 = vunpack.c.l.s8.bf16 %v144
    %v633 = vunpack.c.h.s8.bf16 %v137
    %v634 = vunpack.c.h.s8.bf16 %v138
    %v635 = vunpack.c.h.s8.bf16 %v139
    %v636 = vunpack.c.h.s8.bf16 %v140
    %v637 = vunpack.c.h.s8.bf16 %v141
    %v638 = vunpack.c.h.s8.bf16 %v142
    %v639 = vunpack.c.h.s8.bf16 %v143
    %v640 = vunpack.c.h.s8.bf16 %v144
    %v641 = vunpack.c.l.s8.bf16 %v145
    %v642 = vunpack.c.l.s8.bf16 %v146
    %v643 = vunpack.c.l.s8.bf16 %v147
    %v644 = vunpack.c.l.s8.bf16 %v148
    %v645 = vunpack.c.l.s8.bf16 %v149
    %v646 = vunpack.c.l.s8.bf16 %v150
    %v647 = vunpack.c.l.s8.bf16 %v151
    %v648 = vunpack.c.l.s8.bf16 %v152
    %v649 = vunpack.c.h.s8.bf16 %v145
    %v650 = vunpack.c.h.s8.bf16 %v146
    %v651 = vunpack.c.h.s8.bf16 %v147
    %v652 = vunpack.c.h.s8.bf16 %v148
    %v653 = vunpack.c.h.s8.bf16 %v149
    %v654 = vunpack.c.h.s8.bf16 %v150
    %v655 = vunpack.c.h.s8.bf16 %v151
    %v656 = vunpack.c.h.s8.bf16 %v152
    %v657 = vunpack.c.l.s8.bf16 %v153
    %v658 = vunpack.c.l.s8.bf16 %v154
    %v659 = vunpack.c.l.s8.bf16 %v155
    %v660 = vunpack.c.l.s8.bf16 %v156
    %v661 = vunpack.c.l.s8.bf16 %v157
    %v662 = vunpack.c.l.s8.bf16 %v158
    %v663 = vunpack.c.l.s8.bf16 %v159
    %v664 = vunpack.c.l.s8.bf16 %v160
    %v665 = vunpack.c.h.s8.bf16 %v153
    %v666 = vunpack.c.h.s8.bf16 %v154
    %v667 = vunpack.c.h.s8.bf16 %v155
    %v668 = vunpack.c.h.s8.bf16 %v156
    %v669 = vunpack.c.h.s8.bf16 %v157
    %v670 = vunpack.c.h.s8.bf16 %v158
    %v671 = vunpack.c.h.s8.bf16 %v159
    %v672 = vunpack.c.h.s8.bf16 %v160
    %v673 = vunpack.c.l.s8.bf16 %v161
    %v674 = vunpack.c.l.s8.bf16 %v162
    %v675 = vunpack.c.l.s8.bf16 %v163
    %v676 = vunpack.c.l.s8.bf16 %v164
    %v677 = vunpack.c.l.s8.bf16 %v165
    %v678 = vunpack.c.l.s8.bf16 %v166
    %v679 = vunpack.c.l.s8.bf16 %v167
    %v680 = vunpack.c.l.s8.bf16 %v168
    %v681 = vunpack.c.h.s8.bf16 %v161
    %v682 = vunpack.c.h.s8.bf16 %v162
    %v683 = vunpack.c.h.s8.bf16 %v163
    %v684 = vunpack.c.h.s8.bf16 %v164
    %v685 = vunpack.c.h.s8.bf16 %v165
    %v686 = vunpack.c.h.s8.bf16 %v166
    %v687 = vunpack.c.h.s8.bf16 %v167
    %v688 = vunpack.c.h.s8.bf16 %v168
    %v689 = vunpack.c.l.s8.bf16 %v169
    %v690 = vunpack.c.l.s8.bf16 %v170
    %v691 = vunpack.c.l.s8.bf16 %v171
    %v692 = vunpack.c.l.s8.bf16 %v172
    %v693 = vunpack.c.l.s8.bf16 %v173
    %v694 = vunpack.c.l.s8.bf16 %v174
    %v695 = vunpack.c.l.s8.bf16 %v175
    %v696 = vunpack.c.l.s8.bf16 %v176
    %v697 = vunpack.c.h.s8.bf16 %v169
    %v698 = vunpack.c.h.s8.bf16 %v170
    %v699 = vunpack.c.h.s8.bf16 %v171
    %v700 = vunpack.c.h.s8.bf16 %v172
    %v701 = vunpack.c.h.s8.bf16 %v173
    %v702 = vunpack.c.h.s8.bf16 %v174
    %v703 = vunpack.c.h.s8.bf16 %v175
    %v704 = vunpack.c.h.s8.bf16 %v176
    %v705 = vunpack.c.l.s8.bf16 %v177
    %v706 = vunpack.c.l.s8.bf16 %v178
    %v707 = vunpack.c.l.s8.bf16 %v179
    %v708 = vunpack.c.l.s8.bf16 %v180
    %v709 = vunpack.c.l.s8.bf16 %v181
    %v710 = vunpack.c.l.s8.bf16 %v182
    %v711 = vunpack.c.l.s8.bf16 %v183
    %v712 = vunpack.c.l.s8.bf16 %v184
    %v713 = vunpack.c.h.s8.bf16 %v177
    %v714 = vunpack.c.h.s8.bf16 %v178
    %v715 = vunpack.c.h.s8.bf16 %v179
    %v716 = vunpack.c.h.s8.bf16 %v180
    %v717 = vunpack.c.h.s8.bf16 %v181
    %v718 = vunpack.c.h.s8.bf16 %v182
    %v719 = vunpack.c.h.s8.bf16 %v183
    %v720 = vunpack.c.h.s8.bf16 %v184
    %v721 = vunpack.c.l.s8.bf16 %v185
    %v722 = vunpack.c.l.s8.bf16 %v186
    %v723 = vunpack.c.l.s8.bf16 %v187
    %v724 = vunpack.c.l.s8.bf16 %v188
    %v725 = vunpack.c.l.s8.bf16 %v189
    %v726 = vunpack.c.l.s8.bf16 %v190
    %v727 = vunpack.c.l.s8.bf16 %v191
    %v728 = vunpack.c.l.s8.bf16 %v192
    %v729 = vunpack.c.h.s8.bf16 %v185
    %v730 = vunpack.c.h.s8.bf16 %v186
    %v731 = vunpack.c.h.s8.bf16 %v187
    %v732 = vunpack.c.h.s8.bf16 %v188
    %v733 = vunpack.c.h.s8.bf16 %v189
    %v734 = vunpack.c.h.s8.bf16 %v190
    %v735 = vunpack.c.h.s8.bf16 %v191
    %v736 = vunpack.c.h.s8.bf16 %v192
    %v737 = vunpack.c.l.s8.bf16 %v193
    %v738 = vunpack.c.l.s8.bf16 %v194
    %v739 = vunpack.c.l.s8.bf16 %v195
    %v740 = vunpack.c.l.s8.bf16 %v196
    %v741 = vunpack.c.l.s8.bf16 %v197
    %v742 = vunpack.c.l.s8.bf16 %v198
    %v743 = vunpack.c.l.s8.bf16 %v199
    %v744 = vunpack.c.l.s8.bf16 %v200
    %v745 = vunpack.c.h.s8.bf16 %v193
    %v746 = vunpack.c.h.s8.bf16 %v194
    %v747 = vunpack.c.h.s8.bf16 %v195
    %v748 = vunpack.c.h.s8.bf16 %v196
    %v749 = vunpack.c.h.s8.bf16 %v197
    %v750 = vunpack.c.h.s8.bf16 %v198
    %v751 = vunpack.c.h.s8.bf16 %v199
    %v752 = vunpack.c.h.s8.bf16 %v200
    %v753 = vunpack.c.l.s8.bf16 %v201
    %v754 = vunpack.c.l.s8.bf16 %v202
    %v755 = vunpack.c.l.s8.bf16 %v203
    %v756 = vunpack.c.l.s8.bf16 %v204
    %v757 = vunpack.c.l.s8.bf16 %v205
    %v758 = vunpack.c.l.s8.bf16 %v206
    %v759 = vunpack.c.l.s8.bf16 %v207
    %v760 = vunpack.c.l.s8.bf16 %v208
    %v761 = vunpack.c.h.s8.bf16 %v201
    %v762 = vunpack.c.h.s8.bf16 %v202
    %v763 = vunpack.c.h.s8.bf16 %v203
    %v764 = vunpack.c.h.s8.bf16 %v204
    %v765 = vunpack.c.h.s8.bf16 %v205
    %v766 = vunpack.c.h.s8.bf16 %v206
    %v767 = vunpack.c.h.s8.bf16 %v207
    %v768 = vunpack.c.h.s8.bf16 %v208
    %v769 = vunpack.c.l.s8.bf16 %v209
    %v770 = vunpack.c.l.s8.bf16 %v210
    %v771 = vunpack.c.l.s8.bf16 %v211
    %v772 = vunpack.c.l.s8.bf16 %v212
    %v773 = vunpack.c.l.s8.bf16 %v213
    %v774 = vunpack.c.l.s8.bf16 %v214
    %v775 = vunpack.c.l.s8.bf16 %v215
    %v776 = vunpack.c.l.s8.bf16 %v216
    %v777 = vunpack.c.h.s8.bf16 %v209
    %v778 = vunpack.c.h.s8.bf16 %v210
    %v779 = vunpack.c.h.s8.bf16 %v211
    %v780 = vunpack.c.h.s8.bf16 %v212
    %v781 = vunpack.c.h.s8.bf16 %v213
    %v782 = vunpack.c.h.s8.bf16 %v214
    %v783 = vunpack.c.h.s8.bf16 %v215
    %v784 = vunpack.c.h.s8.bf16 %v216
    %v785 = vunpack.c.l.s8.bf16 %v217
    %v786 = vunpack.c.l.s8.bf16 %v218
    %v787 = vunpack.c.l.s8.bf16 %v219
    %v788 = vunpack.c.l.s8.bf16 %v220
    %v789 = vunpack.c.l.s8.bf16 %v221
    %v790 = vunpack.c.l.s8.bf16 %v222
    %v791 = vunpack.c.l.s8.bf16 %v223
    %v792 = vunpack.c.l.s8.bf16 %v224
    %v793 = vunpack.c.h.s8.bf16 %v217
    %v794 = vunpack.c.h.s8.bf16 %v218
    %v795 = vunpack.c.h.s8.bf16 %v219
    %v796 = vunpack.c.h.s8.bf16 %v220
    %v797 = vunpack.c.h.s8.bf16 %v221
    %v798 = vunpack.c.h.s8.bf16 %v222
    %v799 = vunpack.c.h.s8.bf16 %v223
    %v800 = vunpack.c.h.s8.bf16 %v224
    %v801 = vunpack.c.l.s8.bf16 %v225
    %v802 = vunpack.c.l.s8.bf16 %v226
    %v803 = vunpack.c.l.s8.bf16 %v227
    %v804 = vunpack.c.l.s8.bf16 %v228
    %v805 = vunpack.c.l.s8.bf16 %v229
    %v806 = vunpack.c.l.s8.bf16 %v230
    %v807 = vunpack.c.l.s8.bf16 %v231
    %v808 = vunpack.c.l.s8.bf16 %v232
    %v809 = vunpack.c.h.s8.bf16 %v225
    %v810 = vunpack.c.h.s8.bf16 %v226
    %v811 = vunpack.c.h.s8.bf16 %v227
    %v812 = vunpack.c.h.s8.bf16 %v228
    %v813 = vunpack.c.h.s8.bf16 %v229
    %v814 = vunpack.c.h.s8.bf16 %v230
    %v815 = vunpack.c.h.s8.bf16 %v231
    %v816 = vunpack.c.h.s8.bf16 %v232
    %v817 = vunpack.c.l.s8.bf16 %v233
    %v818 = vunpack.c.l.s8.bf16 %v234
    %v819 = vunpack.c.l.s8.bf16 %v235
    %v820 = vunpack.c.l.s8.bf16 %v236
    %v821 = vunpack.c.l.s8.bf16 %v237
    %v822 = vunpack.c.l.s8.bf16 %v238
    %v823 = vunpack.c.l.s8.bf16 %v239
    %v824 = vunpack.c.l.s8.bf16 %v240
    %v825 = vunpack.c.h.s8.bf16 %v233
    %v826 = vunpack.c.h.s8.bf16 %v234
    %v827 = vunpack.c.h.s8.bf16 %v235
    %v828 = vunpack.c.h.s8.bf16 %v236
    %v829 = vunpack.c.h.s8.bf16 %v237
    %v830 = vunpack.c.h.s8.bf16 %v238
    %v831 = vunpack.c.h.s8.bf16 %v239
    %v832 = vunpack.c.h.s8.bf16 %v240
    %v833 = vunpack.c.l.s8.bf16 %v241
    %v834 = vunpack.c.l.s8.bf16 %v242
    %v835 = vunpack.c.l.s8.bf16 %v243
    %v836 = vunpack.c.l.s8.bf16 %v244
    %v837 = vunpack.c.l.s8.bf16 %v245
    %v838 = vunpack.c.l.s8.bf16 %v246
    %v839 = vunpack.c.l.s8.bf16 %v247
    %v840 = vunpack.c.l.s8.bf16 %v248
    %v841 = vunpack.c.h.s8.bf16 %v241
    %v842 = vunpack.c.h.s8.bf16 %v242
    %v843 = vunpack.c.h.s8.bf16 %v243
    %v844 = vunpack.c.h.s8.bf16 %v244
    %v845 = vunpack.c.h.s8.bf16 %v245
    %v846 = vunpack.c.h.s8.bf16 %v246
    %v847 = vunpack.c.h.s8.bf16 %v247
    %v848 = vunpack.c.h.s8.bf16 %v248
    %v849 = vunpack.c.l.s8.bf16 %v249
    %v850 = vunpack.c.l.s8.bf16 %v250
    %v851 = vunpack.c.l.s8.bf16 %v251
    %v852 = vunpack.c.l.s8.bf16 %v252
    %v853 = vunpack.c.l.s8.bf16 %v253
    %v854 = vunpack.c.l.s8.bf16 %v254
    %v855 = vunpack.c.l.s8.bf16 %v255
    %v856 = vunpack.c.l.s8.bf16 %v256
    %v857 = vunpack.c.h.s8.bf16 %v249
    %v858 = vunpack.c.h.s8.bf16 %v250
    %v859 = vunpack.c.h.s8.bf16 %v251
    %v860 = vunpack.c.h.s8.bf16 %v252
    %v861 = vunpack.c.h.s8.bf16 %v253
    %v862 = vunpack.c.h.s8.bf16 %v254
    %v863 = vunpack.c.h.s8.bf16 %v255
    %v864 = vunpack.c.h.s8.bf16 %v256
    %v865 = vunpack.c.l.s8.bf16 %v257
    %v866 = vunpack.c.l.s8.bf16 %v258
    %v867 = vunpack.c.l.s8.bf16 %v259
    %v868 = vunpack.c.l.s8.bf16 %v260
    %v869 = vunpack.c.l.s8.bf16 %v261
    %v870 = vunpack.c.l.s8.bf16 %v262
    %v871 = vunpack.c.l.s8.bf16 %v263
    %v872 = vunpack.c.l.s8.bf16 %v264
    %v873 = vunpack.c.h.s8.bf16 %v257
    %v874 = vunpack.c.h.s8.bf16 %v258
    %v875 = vunpack.c.h.s8.bf16 %v259
    %v876 = vunpack.c.h.s8.bf16 %v260
    %v877 = vunpack.c.h.s8.bf16 %v261
    %v878 = vunpack.c.h.s8.bf16 %v262
    %v879 = vunpack.c.h.s8.bf16 %v263
    %v880 = vunpack.c.h.s8.bf16 %v264
    %v881 = vunpack.c.l.s8.bf16 %v265
    %v882 = vunpack.c.l.s8.bf16 %v266
    %v883 = vunpack.c.l.s8.bf16 %v267
    %v884 = vunpack.c.l.s8.bf16 %v268
    %v885 = vunpack.c.l.s8.bf16 %v269
    %v886 = vunpack.c.l.s8.bf16 %v270
    %v887 = vunpack.c.l.s8.bf16 %v271
    %v888 = vunpack.c.l.s8.bf16 %v272
    %v889 = vunpack.c.h.s8.bf16 %v265
    %v890 = vunpack.c.h.s8.bf16 %v266
    %v891 = vunpack.c.h.s8.bf16 %v267
    %v892 = vunpack.c.h.s8.bf16 %v268
    %v893 = vunpack.c.h.s8.bf16 %v269
    %v894 = vunpack.c.h.s8.bf16 %v270
    %v895 = vunpack.c.h.s8.bf16 %v271
    %v896 = vunpack.c.h.s8.bf16 %v272
    %v897 = vunpack.c.l.s8.bf16 %v273
    %v898 = vunpack.c.l.s8.bf16 %v274
    %v899 = vunpack.c.l.s8.bf16 %v275
    %v900 = vunpack.c.l.s8.bf16 %v276
    %v901 = vunpack.c.l.s8.bf16 %v277
    %v902 = vunpack.c.l.s8.bf16 %v278
    %v903 = vunpack.c.l.s8.bf16 %v279
    %v904 = vunpack.c.l.s8.bf16 %v280
    %v905 = vunpack.c.h.s8.bf16 %v273
    %v906 = vunpack.c.h.s8.bf16 %v274
    %v907 = vunpack.c.h.s8.bf16 %v275
    %v908 = vunpack.c.h.s8.bf16 %v276
    %v909 = vunpack.c.h.s8.bf16 %v277
    %v910 = vunpack.c.h.s8.bf16 %v278
    %v911 = vunpack.c.h.s8.bf16 %v279
    %v912 = vunpack.c.h.s8.bf16 %v280
    %v913 = vunpack.c.l.s8.bf16 %v281
    %v914 = vunpack.c.l.s8.bf16 %v282
    %v915 = vunpack.c.l.s8.bf16 %v283
    %v916 = vunpack.c.l.s8.bf16 %v284
    %v917 = vunpack.c.l.s8.bf16 %v285
    %v918 = vunpack.c.l.s8.bf16 %v286
    %v919 = vunpack.c.l.s8.bf16 %v287
    %v920 = vunpack.c.l.s8.bf16 %v288
    %v921 = vunpack.c.h.s8.bf16 %v281
    %v922 = vunpack.c.h.s8.bf16 %v282
    %v923 = vunpack.c.h.s8.bf16 %v283
    %v924 = vunpack.c.h.s8.bf16 %v284
    %v925 = vunpack.c.h.s8.bf16 %v285
    %v926 = vunpack.c.h.s8.bf16 %v286
    %v927 = vunpack.c.h.s8.bf16 %v287
    %v928 = vunpack.c.h.s8.bf16 %v288
    %v929 = vunpack.c.l.s8.bf16 %v289
    %v930 = vunpack.c.l.s8.bf16 %v290
    %v931 = vunpack.c.l.s8.bf16 %v291
    %v932 = vunpack.c.l.s8.bf16 %v292
    %v933 = vunpack.c.l.s8.bf16 %v293
    %v934 = vunpack.c.l.s8.bf16 %v294
    %v935 = vunpack.c.l.s8.bf16 %v295
    %v936 = vunpack.c.l.s8.bf16 %v296
    %v937 = vunpack.c.h.s8.bf16 %v289
    %v938 = vunpack.c.h.s8.bf16 %v290
    %v939 = vunpack.c.h.s8.bf16 %v291
    %v940 = vunpack.c.h.s8.bf16 %v292
    %v941 = vunpack.c.h.s8.bf16 %v293
    %v942 = vunpack.c.h.s8.bf16 %v294
    %v943 = vunpack.c.h.s8.bf16 %v295
    %v944 = vunpack.c.h.s8.bf16 %v296
    %v945 = vunpack.c.l.s8.bf16 %v297
    %v946 = vunpack.c.l.s8.bf16 %v298
    %v947 = vunpack.c.l.s8.bf16 %v299
    %v948 = vunpack.c.l.s8.bf16 %v300
    %v949 = vunpack.c.l.s8.bf16 %v301
    %v950 = vunpack.c.l.s8.bf16 %v302
    %v951 = vunpack.c.l.s8.bf16 %v303
    %v952 = vunpack.c.l.s8.bf16 %v304
    %v953 = vunpack.c.h.s8.bf16 %v297
    %v954 = vunpack.c.h.s8.bf16 %v298
    %v955 = vunpack.c.h.s8.bf16 %v299
    %v956 = vunpack.c.h.s8.bf16 %v300
    %v957 = vunpack.c.h.s8.bf16 %v301
    %v958 = vunpack.c.h.s8.bf16 %v302
    %v959 = vunpack.c.h.s8.bf16 %v303
    %v960 = vunpack.c.h.s8.bf16 %v304
    %v961 = vunpack.c.l.s8.bf16 %v305
    %v962 = vunpack.c.l.s8.bf16 %v306
    %v963 = vunpack.c.l.s8.bf16 %v307
    %v964 = vunpack.c.l.s8.bf16 %v308
    %v965 = vunpack.c.l.s8.bf16 %v309
    %v966 = vunpack.c.l.s8.bf16 %v310
    %v967 = vunpack.c.l.s8.bf16 %v311
    %v968 = vunpack.c.l.s8.bf16 %v312
    %v969 = vunpack.c.h.s8.bf16 %v305
    %v970 = vunpack.c.h.s8.bf16 %v306
    %v971 = vunpack.c.h.s8.bf16 %v307
    %v972 = vunpack.c.h.s8.bf16 %v308
    %v973 = vunpack.c.h.s8.bf16 %v309
    %v974 = vunpack.c.h.s8.bf16 %v310
    %v975 = vunpack.c.h.s8.bf16 %v311
    %v976 = vunpack.c.h.s8.bf16 %v312
    %v977 = vunpack.c.l.s8.bf16 %v313
    %v978 = vunpack.c.l.s8.bf16 %v314
    %v979 = vunpack.c.l.s8.bf16 %v315
    %v980 = vunpack.c.l.s8.bf16 %v316
    %v981 = vunpack.c.l.s8.bf16 %v317
    %v982 = vunpack.c.l.s8.bf16 %v318
    %v983 = vunpack.c.l.s8.bf16 %v319
    %v984 = vunpack.c.l.s8.bf16 %v320
    %v985 = vunpack.c.h.s8.bf16 %v313
    %v986 = vunpack.c.h.s8.bf16 %v314
    %v987 = vunpack.c.h.s8.bf16 %v315
    %v988 = vunpack.c.h.s8.bf16 %v316
    %v989 = vunpack.c.h.s8.bf16 %v317
    %v990 = vunpack.c.h.s8.bf16 %v318
    %v991 = vunpack.c.h.s8.bf16 %v319
    %v992 = vunpack.c.h.s8.bf16 %v320
    %v993 = vunpack.c.l.s8.bf16 %v321
    %v994 = vunpack.c.l.s8.bf16 %v322
    %v995 = vunpack.c.l.s8.bf16 %v323
    %v996 = vunpack.c.l.s8.bf16 %v324
    %v997 = vunpack.c.l.s8.bf16 %v325
    %v998 = vunpack.c.l.s8.bf16 %v326
    %v999 = vunpack.c.l.s8.bf16 %v327
    %v1000 = vunpack.c.l.s8.bf16 %v328
    %v1001 = vunpack.c.h.s8.bf16 %v321
    %v1002 = vunpack.c.h.s8.bf16 %v322
    %v1003 = vunpack.c.h.s8.bf16 %v323
    %v1004 = vunpack.c.h.s8.bf16 %v324
    %v1005 = vunpack.c.h.s8.bf16 %v325
    %v1006 = vunpack.c.h.s8.bf16 %v326
    %v1007 = vunpack.c.h.s8.bf16 %v327
    %v1008 = vunpack.c.h.s8.bf16 %v328
    %v1009 = vunpack.c.l.s8.bf16 %v329
    %v1010 = vunpack.c.l.s8.bf16 %v330
    %v1011 = vunpack.c.l.s8.bf16 %v331
    %v1012 = vunpack.c.l.s8.bf16 %v332
    %v1013 = vunpack.c.l.s8.bf16 %v333
    %v1014 = vunpack.c.l.s8.bf16 %v334
    %v1015 = vunpack.c.l.s8.bf16 %v335
    %v1016 = vunpack.c.l.s8.bf16 %v336
    %v1017 = vunpack.c.h.s8.bf16 %v329
    %v1018 = vunpack.c.h.s8.bf16 %v330
    %v1019 = vunpack.c.h.s8.bf16 %v331
    %v1020 = vunpack.c.h.s8.bf16 %v332
    %v1021 = vunpack.c.h.s8.bf16 %v333
    %v1022 = vunpack.c.h.s8.bf16 %v334
    %v1023 = vunpack.c.h.s8.bf16 %v335
    %v1024 = vunpack.c.h.s8.bf16 %v336
    %v1025 = vunpack.c.l.s8.bf16 %v337
    %v1026 = vunpack.c.l.s8.bf16 %v338
    %v1027 = vunpack.c.l.s8.bf16 %v339
    %v1028 = vunpack.c.l.s8.bf16 %v340
    %v1029 = vunpack.c.l.s8.bf16 %v341
    %v1030 = vunpack.c.l.s8.bf16 %v342
    %v1031 = vunpack.c.l.s8.bf16 %v343
    %v1032 = vunpack.c.l.s8.bf16 %v344
    %v1033 = vunpack.c.h.s8.bf16 %v337
    %v1034 = vunpack.c.h.s8.bf16 %v338
    %v1035 = vunpack.c.h.s8.bf16 %v339
    %v1036 = vunpack.c.h.s8.bf16 %v340
    %v1037 = vunpack.c.h.s8.bf16 %v341
    %v1038 = vunpack.c.h.s8.bf16 %v342
    %v1039 = vunpack.c.h.s8.bf16 %v343
    %v1040 = vunpack.c.h.s8.bf16 %v344
    %v1041 = vunpack.c.l.s8.bf16 %v345
    %v1042 = vunpack.c.l.s8.bf16 %v346
    %v1043 = vunpack.c.l.s8.bf16 %v347
    %v1044 = vunpack.c.l.s8.bf16 %v348
    %v1045 = vunpack.c.l.s8.bf16 %v349
    %v1046 = vunpack.c.l.s8.bf16 %v350
    %v1047 = vunpack.c.l.s8.bf16 %v351
    %v1048 = vunpack.c.l.s8.bf16 %v352
    %v1049 = vunpack.c.h.s8.bf16 %v345
    %v1050 = vunpack.c.h.s8.bf16 %v346
    %v1051 = vunpack.c.h.s8.bf16 %v347
    %v1052 = vunpack.c.h.s8.bf16 %v348
    %v1053 = vunpack.c.h.s8.bf16 %v349
    %v1054 = vunpack.c.h.s8.bf16 %v350
    %v1055 = vunpack.c.h.s8.bf16 %v351
    %v1056 = vunpack.c.h.s8.bf16 %v352
    %v1057 = vunpack.c.l.s8.bf16 %v353
    %v1058 = vunpack.c.l.s8.bf16 %v354
    %v1059 = vunpack.c.l.s8.bf16 %v355
    %v1060 = vunpack.c.l.s8.bf16 %v356
    %v1061 = vunpack.c.l.s8.bf16 %v357
    %v1062 = vunpack.c.l.s8.bf16 %v358
    %v1063 = vunpack.c.l.s8.bf16 %v359
    %v1064 = vunpack.c.l.s8.bf16 %v360
    %v1065 = vunpack.c.h.s8.bf16 %v353
    %v1066 = vunpack.c.h.s8.bf16 %v354
    %v1067 = vunpack.c.h.s8.bf16 %v355
    %v1068 = vunpack.c.h.s8.bf16 %v356
    %v1069 = vunpack.c.h.s8.bf16 %v357
    %v1070 = vunpack.c.h.s8.bf16 %v358
    %v1071 = vunpack.c.h.s8.bf16 %v359
    %v1072 = vunpack.c.h.s8.bf16 %v360
    %v1073 = vunpack.c.l.s8.bf16 %v361
    %v1074 = vunpack.c.l.s8.bf16 %v362
    %v1075 = vunpack.c.l.s8.bf16 %v363
    %v1076 = vunpack.c.l.s8.bf16 %v364
    %v1077 = vunpack.c.l.s8.bf16 %v365
    %v1078 = vunpack.c.l.s8.bf16 %v366
    %v1079 = vunpack.c.l.s8.bf16 %v367
    %v1080 = vunpack.c.l.s8.bf16 %v368
    %v1081 = vunpack.c.h.s8.bf16 %v361
    %v1082 = vunpack.c.h.s8.bf16 %v362
    %v1083 = vunpack.c.h.s8.bf16 %v363
    %v1084 = vunpack.c.h.s8.bf16 %v364
    %v1085 = vunpack.c.h.s8.bf16 %v365
    %v1086 = vunpack.c.h.s8.bf16 %v366
    %v1087 = vunpack.c.h.s8.bf16 %v367
    %v1088 = vunpack.c.h.s8.bf16 %v368
    %v1089 = vunpack.c.l.s8.bf16 %v369
    %v1090 = vunpack.c.l.s8.bf16 %v370
    %v1091 = vunpack.c.l.s8.bf16 %v371
    %v1092 = vunpack.c.l.s8.bf16 %v372
    %v1093 = vunpack.c.l.s8.bf16 %v373
    %v1094 = vunpack.c.l.s8.bf16 %v374
    %v1095 = vunpack.c.l.s8.bf16 %v375
    %v1096 = vunpack.c.l.s8.bf16 %v376
    %v1097 = vunpack.c.h.s8.bf16 %v369
    %v1098 = vunpack.c.h.s8.bf16 %v370
    %v1099 = vunpack.c.h.s8.bf16 %v371
    %v1100 = vunpack.c.h.s8.bf16 %v372
    %v1101 = vunpack.c.h.s8.bf16 %v373
    %v1102 = vunpack.c.h.s8.bf16 %v374
    %v1103 = vunpack.c.h.s8.bf16 %v375
    %v1104 = vunpack.c.h.s8.bf16 %v376
    %v1105 = vunpack.c.l.s8.bf16 %v377
    %v1106 = vunpack.c.l.s8.bf16 %v378
    %v1107 = vunpack.c.l.s8.bf16 %v379
    %v1108 = vunpack.c.l.s8.bf16 %v380
    %v1109 = vunpack.c.l.s8.bf16 %v381
    %v1110 = vunpack.c.l.s8.bf16 %v382
    %v1111 = vunpack.c.l.s8.bf16 %v383
    %v1112 = vunpack.c.l.s8.bf16 %v384
    %v1113 = vunpack.c.h.s8.bf16 %v377
    %v1114 = vunpack.c.h.s8.bf16 %v378
    %v1115 = vunpack.c.h.s8.bf16 %v379
    %v1116 = vunpack.c.h.s8.bf16 %v380
    %v1117 = vunpack.c.h.s8.bf16 %v381
    %v1118 = vunpack.c.h.s8.bf16 %v382
    %v1119 = vunpack.c.h.s8.bf16 %v383
    %v1120 = vunpack.c.h.s8.bf16 %v384
    %v1121 = vunpack.c.l.s8.bf16 %v385
    %v1122 = vunpack.c.l.s8.bf16 %v386
    %v1123 = vunpack.c.l.s8.bf16 %v387
    %v1124 = vunpack.c.l.s8.bf16 %v388
    %v1125 = vunpack.c.l.s8.bf16 %v389
    %v1126 = vunpack.c.l.s8.bf16 %v390
    %v1127 = vunpack.c.l.s8.bf16 %v391
    %v1128 = vunpack.c.l.s8.bf16 %v392
    %v1129 = vunpack.c.h.s8.bf16 %v385
    %v1130 = vunpack.c.h.s8.bf16 %v386
    %v1131 = vunpack.c.h.s8.bf16 %v387
    %v1132 = vunpack.c.h.s8.bf16 %v388
    %v1133 = vunpack.c.h.s8.bf16 %v389
    %v1134 = vunpack.c.h.s8.bf16 %v390
    %v1135 = vunpack.c.h.s8.bf16 %v391
    %v1136 = vunpack.c.h.s8.bf16 %v392
    %v1137 = vunpack.c.l.s8.bf16 %v393
    %v1138 = vunpack.c.l.s8.bf16 %v394
    %v1139 = vunpack.c.l.s8.bf16 %v395
    %v1140 = vunpack.c.l.s8.bf16 %v396
    %v1141 = vunpack.c.l.s8.bf16 %v397
    %v1142 = vunpack.c.l.s8.bf16 %v398
    %v1143 = vunpack.c.l.s8.bf16 %v399
    %v1144 = vunpack.c.l.s8.bf16 %v400
    %v1145 = vunpack.c.h.s8.bf16 %v393
    %v1146 = vunpack.c.h.s8.bf16 %v394
    %v1147 = vunpack.c.h.s8.bf16 %v395
    %v1148 = vunpack.c.h.s8.bf16 %v396
    %v1149 = vunpack.c.h.s8.bf16 %v397
    %v1150 = vunpack.c.h.s8.bf16 %v398
    %v1151 = vunpack.c.h.s8.bf16 %v399
    %v1152 = vunpack.c.h.s8.bf16 %v400
    %v1153 = vunpack.c.l.s8.bf16 %v401
    %v1154 = vunpack.c.l.s8.bf16 %v402
    %v1155 = vunpack.c.l.s8.bf16 %v403
    %v1156 = vunpack.c.l.s8.bf16 %v404
    %v1157 = vunpack.c.l.s8.bf16 %v405
    %v1158 = vunpack.c.l.s8.bf16 %v406
    %v1159 = vunpack.c.l.s8.bf16 %v407
    %v1160 = vunpack.c.l.s8.bf16 %v408
    %v1161 = vunpack.c.h.s8.bf16 %v401
    %v1162 = vunpack.c.h.s8.bf16 %v402
    %v1163 = vunpack.c.h.s8.bf16 %v403
    %v1164 = vunpack.c.h.s8.bf16 %v404
    %v1165 = vunpack.c.h.s8.bf16 %v405
    %v1166 = vunpack.c.h.s8.bf16 %v406
    %v1167 = vunpack.c.h.s8.bf16 %v407
    %v1168 = vunpack.c.h.s8.bf16 %v408
    %v1169 = vunpack.c.l.s8.bf16 %v409
    %v1170 = vunpack.c.l.s8.bf16 %v410
    %v1171 = vunpack.c.l.s8.bf16 %v411
    %v1172 = vunpack.c.l.s8.bf16 %v412
    %v1173 = vunpack.c.l.s8.bf16 %v413
    %v1174 = vunpack.c.l.s8.bf16 %v414
    %v1175 = vunpack.c.l.s8.bf16 %v415
    %v1176 = vunpack.c.l.s8.bf16 %v416
    %v1177 = vunpack.c.h.s8.bf16 %v409
    %v1178 = vunpack.c.h.s8.bf16 %v410
    %v1179 = vunpack.c.h.s8.bf16 %v411
    %v1180 = vunpack.c.h.s8.bf16 %v412
    %v1181 = vunpack.c.h.s8.bf16 %v413
    %v1182 = vunpack.c.h.s8.bf16 %v414
    %v1183 = vunpack.c.h.s8.bf16 %v415
    %v1184 = vunpack.c.h.s8.bf16 %v416
    %v1185 = vunpack.c.l.s8.bf16 %v417
    %v1186 = vunpack.c.l.s8.bf16 %v418
    %v1187 = vunpack.c.l.s8.bf16 %v419
    %v1188 = vunpack.c.l.s8.bf16 %v420
    %v1189 = vunpack.c.l.s8.bf16 %v421
    %v1190 = vunpack.c.l.s8.bf16 %v422
    %v1191 = vunpack.c.l.s8.bf16 %v423
    %v1192 = vunpack.c.l.s8.bf16 %v424
    %v1193 = vunpack.c.h.s8.bf16 %v417
    %v1194 = vunpack.c.h.s8.bf16 %v418
    %v1195 = vunpack.c.h.s8.bf16 %v419
    %v1196 = vunpack.c.h.s8.bf16 %v420
    %v1197 = vunpack.c.h.s8.bf16 %v421
    %v1198 = vunpack.c.h.s8.bf16 %v422
    %v1199 = vunpack.c.h.s8.bf16 %v423
    %v1200 = vunpack.c.h.s8.bf16 %v424
    %v1201 = vunpack.c.l.s8.bf16 %v425
    %v1202 = vunpack.c.l.s8.bf16 %v426
    %v1203 = vunpack.c.l.s8.bf16 %v427
    %v1204 = vunpack.c.l.s8.bf16 %v428
    %v1205 = vunpack.c.l.s8.bf16 %v429
    %v1206 = vunpack.c.l.s8.bf16 %v430
    %v1207 = vunpack.c.l.s8.bf16 %v431
    %v1208 = vunpack.c.l.s8.bf16 %v432
    %v1209 = vunpack.c.h.s8.bf16 %v425
    %v1210 = vunpack.c.h.s8.bf16 %v426
    %v1211 = vunpack.c.h.s8.bf16 %v427
    %v1212 = vunpack.c.h.s8.bf16 %v428
    %v1213 = vunpack.c.h.s8.bf16 %v429
    %v1214 = vunpack.c.h.s8.bf16 %v430
    %v1215 = vunpack.c.h.s8.bf16 %v431
    %v1216 = vunpack.c.h.s8.bf16 %v432
    %v1224 = vunpack.c.l.b16 %v34
    %v1225 = vunpack.c.h.b16 %v34
    %v1226 = vunpack.c.l.b16 %v35
    %v1227 = vunpack.c.h.b16 %v35
    %v1228 = vunpack.c.l.b16 %v36
    %v1229 = vunpack.c.h.b16 %v36
    %v1230 = vunpack.c.l.b16 %v37
    %v1231 = vunpack.c.h.b16 %v37
    %v1232 = vunpack.c.l.b16 %v38
    %v1233 = vunpack.c.h.b16 %v38
    %v1234 = vunpack.c.l.b16 %v39
    %v1235 = vunpack.c.h.b16 %v39
    %v1236 = vunpack.c.l.b16 %v40
    %v1237 = vpack.c.b16 %v1224, %v1224
    %v1238 = vpack.c.b16 %v1225, %v1225
    %v1239 = vpack.c.b16 %v1226, %v1226
    %v1240 = vpack.c.b16 %v1227, %v1227
    %v1241 = vpack.c.b16 %v1228, %v1228
    %v1242 = vpack.c.b16 %v1229, %v1229
    %v1243 = vpack.c.b16 %v1230, %v1230
    %v1244 = vpack.c.b16 %v1231, %v1231
    %v1245 = vpack.c.b16 %v1232, %v1232
    %v1246 = vpack.c.b16 %v1233, %v1233
    %v1247 = vpack.c.b16 %v1234, %v1234
    %v1248 = vpack.c.b16 %v1235, %v1235
    %v1249 = vpack.c.b16 %v1236, %v1236
    %vm1262 = vcmask 261120
    %v1264 = vsel %vm1262, %v1249, 0
    %1266 = vmatprep.subr.bf16.mxu0 %v434
    %1267 = vmatpush1.bf16.msra.mxu0 %v433
    %1268 = vmatprep.subr.bf16.mxu0 %v442
    %1269 = vmatpush1.bf16.msra.mxu0 %v441
    %1270 = vmatprep.subr.bf16.mxu0 %v450
    %1271 = vmatpush1.bf16.msra.mxu0 %v449
    %1272 = vmatprep.subr.bf16.mxu0 %v458
    %1273 = vmatpush1.bf16.msra.mxu0 %v457
    %1274 = vmatprep.subr.bf16.mxu0 %v466
    %1275 = vmatpush1.bf16.msra.mxu0 %v465
    %1276 = vmatprep.subr.bf16.mxu0 %v474
    %1277 = vmatpush1.bf16.msra.mxu0 %v473
    %1278 = vmatprep.subr.bf16.mxu0 %v482
    %1279 = vmatpush1.bf16.msra.mxu0 %v481
    %1280 = vmatprep.subr.bf16.mxu0 %v490
    %1281 = vmatpush1.bf16.msra.mxu0 %v489
    %1282 = vmatprep.subr.bf16.mxu0 %v498
    %1283 = vmatpush1.bf16.msra.mxu0 %v497
    %1284 = vmatprep.subr.bf16.mxu0 %v506
    %1285 = vmatpush1.bf16.msra.mxu0 %v505
    %1286 = vmatprep.subr.bf16.mxu0 %v514
    %1287 = vmatpush1.bf16.msra.mxu0 %v513
    %1288 = vmatprep.subr.bf16.mxu0 %v522
    %1289 = vmatpush1.bf16.msra.mxu0 %v521
    %1290 = vmatprep.subr.bf16.mxu0 %v530
    %1291 = vmatpush1.bf16.msra.mxu0 %v529
    %1292 = vmatprep.subr.bf16.mxu0 %v538
    %1293 = vmatpush1.bf16.msra.mxu0 %v537
    %1294 = vmatprep.subr.bf16.mxu0 %v546
    %1295 = vmatpush1.bf16.msra.mxu0 %v545
    %1296 = vmatprep.subr.bf16.mxu0 %v554
    %1297 = vmatpush1.bf16.msra.mxu0 %v553
    %1298 = vmatprep.mubr.bf16.mxu0 %v1238
    %1299 = vmatmul.mubr.bf16.gmra.mrb[0].mxu0 %v1237
    %v1300 = vpop.f32.mrb[0].mxu0
    %v1301 = vadd.f32 0.0, %v1300
    %v1302 = vpop.f32.mrb[0].mxu0
    %v1303 = vadd.f32 0.0, %v1302
    %v1304 = vpop.f32.mrb[0].mxu0
    %v1305 = vpop.f32.mrb[0].mxu0
    %1306 = vdwg.mxu0
    %1307 = vmatprep.subr.bf16.mxu0 %v562
    %1308 = vmatpush1.bf16.msra.mxu0 %v561
    %1309 = vmatprep.subr.bf16.mxu0 %v570
    %1310 = vmatpush1.bf16.msra.mxu0 %v569
    %1311 = vmatprep.subr.bf16.mxu0 %v578
    %1312 = vmatpush1.bf16.msra.mxu0 %v577
    %1313 = vmatprep.subr.bf16.mxu0 %v586
    %1314 = vmatpush1.bf16.msra.mxu0 %v585
    %1315 = vmatprep.subr.bf16.mxu0 %v594
    %1316 = vmatpush1.bf16.msra.mxu0 %v593
    %1317 = vmatprep.subr.bf16.mxu0 %v602
    %1318 = vmatpush1.bf16.msra.mxu0 %v601
    %1319 = vmatprep.subr.bf16.mxu0 %v610
    %1320 = vmatpush1.bf16.msra.mxu0 %v609
    %1321 = vmatprep.subr.bf16.mxu0 %v618
    %1322 = vmatpush1.bf16.msra.mxu0 %v617
    %1323 = vmatprep.subr.bf16.mxu0 %v626
    %1324 = vmatpush1.bf16.msra.mxu0 %v625
    %1325 = vmatprep.subr.bf16.mxu0 %v634
    %1326 = vmatpush1.bf16.msra.mxu0 %v633
    %1327 = vmatprep.subr.bf16.mxu0 %v642
    %1328 = vmatpush1.bf16.msra.mxu0 %v641
    %1329 = vmatprep.subr.bf16.mxu0 %v650
    %1330 = vmatpush1.bf16.msra.mxu0 %v649
    %1331 = vmatprep.subr.bf16.mxu0 %v658
    %1332 = vmatpush1.bf16.msra.mxu0 %v657
    %1333 = vmatprep.subr.bf16.mxu0 %v666
    %1334 = vmatpush1.bf16.msra.mxu0 %v665
    %1335 = vmatprep.subr.bf16.mxu0 %v674
    %1336 = vmatpush1.bf16.msra.mxu0 %v673
    %1337 = vmatprep.subr.bf16.mxu0 %v682
    %1338 = vmatpush1.bf16.msra.mxu0 %v681
    %1339 = vmatprep.mubr.bf16.mxu0 %v1240
    %1340 = vmatmul.mubr.bf16.gmra.mrb[0].mxu0 %v1239
    %v1341 = vpop.f32.mrb[0].mxu0
    %v1342 = vadd.f32 %v1301, %v1341
    %v1343 = vpop.f32.mrb[0].mxu0
    %v1344 = vadd.f32 %v1303, %v1343
    %v1345 = vpop.f32.mrb[0].mxu0
    %v1346 = vpop.f32.mrb[0].mxu0
    %1347 = vdwg.mxu0
    %1348 = vmatprep.subr.bf16.mxu0 %v690
    %1349 = vmatpush1.bf16.msra.mxu0 %v689
    %1350 = vmatprep.subr.bf16.mxu0 %v698
    %1351 = vmatpush1.bf16.msra.mxu0 %v697
    %1352 = vmatprep.subr.bf16.mxu0 %v706
    %1353 = vmatpush1.bf16.msra.mxu0 %v705
    %1354 = vmatprep.subr.bf16.mxu0 %v714
    %1355 = vmatpush1.bf16.msra.mxu0 %v713
    %1356 = vmatprep.subr.bf16.mxu0 %v722
    %1357 = vmatpush1.bf16.msra.mxu0 %v721
    %1358 = vmatprep.subr.bf16.mxu0 %v730
    %1359 = vmatpush1.bf16.msra.mxu0 %v729
    %1360 = vmatprep.subr.bf16.mxu0 %v738
    %1361 = vmatpush1.bf16.msra.mxu0 %v737
    %1362 = vmatprep.subr.bf16.mxu0 %v746
    %1363 = vmatpush1.bf16.msra.mxu0 %v745
    %1364 = vmatprep.subr.bf16.mxu0 %v754
    %1365 = vmatpush1.bf16.msra.mxu0 %v753
    %1366 = vmatprep.subr.bf16.mxu0 %v762
    %1367 = vmatpush1.bf16.msra.mxu0 %v761
    %1368 = vmatprep.subr.bf16.mxu0 %v770
    %1369 = vmatpush1.bf16.msra.mxu0 %v769
    %1370 = vmatprep.subr.bf16.mxu0 %v778
    %1371 = vmatpush1.bf16.msra.mxu0 %v777
    %1372 = vmatprep.subr.bf16.mxu0 %v786
    %1373 = vmatpush1.bf16.msra.mxu0 %v785
    %1374 = vmatprep.subr.bf16.mxu0 %v794
    %1375 = vmatpush1.bf16.msra.mxu0 %v793
    %1376 = vmatprep.subr.bf16.mxu0 %v802
    %1377 = vmatpush1.bf16.msra.mxu0 %v801
    %1378 = vmatprep.subr.bf16.mxu0 %v810
    %1379 = vmatpush1.bf16.msra.mxu0 %v809
    %1380 = vmatprep.mubr.bf16.mxu0 %v1242
    %1381 = vmatmul.mubr.bf16.gmra.mrb[0].mxu0 %v1241
    %v1382 = vpop.f32.mrb[0].mxu0
    %v1383 = vadd.f32 %v1342, %v1382
    %v1384 = vpop.f32.mrb[0].mxu0
    %v1385 = vadd.f32 %v1344, %v1384
    %v1386 = vpop.f32.mrb[0].mxu0
    %v1387 = vpop.f32.mrb[0].mxu0
    %1388 = vdwg.mxu0
    %1389 = vmatprep.subr.bf16.mxu0 %v818
    %1390 = vmatpush1.bf16.msra.mxu0 %v817
    %1391 = vmatprep.subr.bf16.mxu0 %v826
    %1392 = vmatpush1.bf16.msra.mxu0 %v825
    %1393 = vmatprep.subr.bf16.mxu0 %v834
    %1394 = vmatpush1.bf16.msra.mxu0 %v833
    %1395 = vmatprep.subr.bf16.mxu0 %v842
    %1396 = vmatpush1.bf16.msra.mxu0 %v841
    %1397 = vmatprep.subr.bf16.mxu0 %v850
    %1398 = vmatpush1.bf16.msra.mxu0 %v849
    %1399 = vmatprep.subr.bf16.mxu0 %v858
    %1400 = vmatpush1.bf16.msra.mxu0 %v857
    %1401 = vmatprep.subr.bf16.mxu0 %v866
    %1402 = vmatpush1.bf16.msra.mxu0 %v865
    %1403 = vmatprep.subr.bf16.mxu0 %v874
    %1404 = vmatpush1.bf16.msra.mxu0 %v873
    %1405 = vmatprep.subr.bf16.mxu0 %v882
    %1406 = vmatpush1.bf16.msra.mxu0 %v881
    %1407 = vmatprep.subr.bf16.mxu0 %v890
    %1408 = vmatpush1.bf16.msra.mxu0 %v889
    %1409 = vmatprep.subr.bf16.mxu0 %v898
    %1410 = vmatpush1.bf16.msra.mxu0 %v897
    %1411 = vmatprep.subr.bf16.mxu0 %v906
    %1412 = vmatpush1.bf16.msra.mxu0 %v905
    %1413 = vmatprep.subr.bf16.mxu0 %v914
    %1414 = vmatpush1.bf16.msra.mxu0 %v913
    %1415 = vmatprep.subr.bf16.mxu0 %v922
    %1416 = vmatpush1.bf16.msra.mxu0 %v921
    %1417 = vmatprep.subr.bf16.mxu0 %v930
    %1418 = vmatpush1.bf16.msra.mxu0 %v929
    %1419 = vmatprep.subr.bf16.mxu0 %v938
    %1420 = vmatpush1.bf16.msra.mxu0 %v937
    %1421 = vmatprep.mubr.bf16.mxu0 %v1244
    %1422 = vmatmul.mubr.bf16.gmra.mrb[0].mxu0 %v1243
    %v1423 = vpop.f32.mrb[0].mxu0
    %v1424 = vadd.f32 %v1383, %v1423
    %v1425 = vpop.f32.mrb[0].mxu0
    %v1426 = vadd.f32 %v1385, %v1425
    %v1427 = vpop.f32.mrb[0].mxu0
    %v1428 = vpop.f32.mrb[0].mxu0
    %1429 = vdwg.mxu0
    %1430 = vmatprep.subr.bf16.mxu0 %v946
    %1431 = vmatpush1.bf16.msra.mxu0 %v945
    %1432 = vmatprep.subr.bf16.mxu0 %v954
    %1433 = vmatpush1.bf16.msra.mxu0 %v953
    %1434 = vmatprep.subr.bf16.mxu0 %v962
    %1435 = vmatpush1.bf16.msra.mxu0 %v961
    %1436 = vmatprep.subr.bf16.mxu0 %v970
    %1437 = vmatpush1.bf16.msra.mxu0 %v969
    %1438 = vmatprep.subr.bf16.mxu0 %v978
    %1439 = vmatpush1.bf16.msra.mxu0 %v977
    %1440 = vmatprep.subr.bf16.mxu0 %v986
    %1441 = vmatpush1.bf16.msra.mxu0 %v985
    %1442 = vmatprep.subr.bf16.mxu0 %v994
    %1443 = vmatpush1.bf16.msra.mxu0 %v993
    %1444 = vmatprep.subr.bf16.mxu0 %v1002
    %1445 = vmatpush1.bf16.msra.mxu0 %v1001
    %1446 = vmatprep.subr.bf16.mxu0 %v1010
    %1447 = vmatpush1.bf16.msra.mxu0 %v1009
    %1448 = vmatprep.subr.bf16.mxu0 %v1018
    %1449 = vmatpush1.bf16.msra.mxu0 %v1017
    %1450 = vmatprep.subr.bf16.mxu0 %v1026
    %1451 = vmatpush1.bf16.msra.mxu0 %v1025
    %1452 = vmatprep.subr.bf16.mxu0 %v1034
    %1453 = vmatpush1.bf16.msra.mxu0 %v1033
    %1454 = vmatprep.subr.bf16.mxu0 %v1042
    %1455 = vmatpush1.bf16.msra.mxu0 %v1041
    %1456 = vmatprep.subr.bf16.mxu0 %v1050
    %1457 = vmatpush1.bf16.msra.mxu0 %v1049
    %1458 = vmatprep.subr.bf16.mxu0 %v1058
    %1459 = vmatpush1.bf16.msra.mxu0 %v1057
    %1460 = vmatprep.subr.bf16.mxu0 %v1066
    %1461 = vmatpush1.bf16.msra.mxu0 %v1065
    %1462 = vmatprep.mubr.bf16.mxu0 %v1246
    %1463 = vmatmul.mubr.bf16.gmra.mrb[0].mxu0 %v1245
    %v1464 = vpop.f32.mrb[0].mxu0
    %v1465 = vadd.f32 %v1424, %v1464
    %v1466 = vpop.f32.mrb[0].mxu0
    %v1467 = vadd.f32 %v1426, %v1466
    %v1468 = vpop.f32.mrb[0].mxu0
    %v1469 = vpop.f32.mrb[0].mxu0
    %1470 = vdwg.mxu0
    %1471 = vmatprep.subr.bf16.mxu0 %v1074
    %1472 = vmatpush1.bf16.msra.mxu0 %v1073
    %1473 = vmatprep.subr.bf16.mxu0 %v1082
    %1474 = vmatpush1.bf16.msra.mxu0 %v1081
    %1475 = vmatprep.subr.bf16.mxu0 %v1090
    %1476 = vmatpush1.bf16.msra.mxu0 %v1089
    %1477 = vmatprep.subr.bf16.mxu0 %v1098
    %1478 = vmatpush1.bf16.msra.mxu0 %v1097
    %1479 = vmatprep.subr.bf16.mxu0 %v1106
    %1480 = vmatpush1.bf16.msra.mxu0 %v1105
    %1481 = vmatprep.subr.bf16.mxu0 %v1114
    %1482 = vmatpush1.bf16.msra.mxu0 %v1113
    %1483 = vmatprep.subr.bf16.mxu0 %v1122
    %1484 = vmatpush1.bf16.msra.mxu0 %v1121
    %1485 = vmatprep.subr.bf16.mxu0 %v1130
    %1486 = vmatpush1.bf16.msra.mxu0 %v1129
    %1487 = vmatprep.subr.bf16.mxu0 %v1138
    %1488 = vmatpush1.bf16.msra.mxu0 %v1137
    %1489 = vmatprep.subr.bf16.mxu0 %v1146
    %1490 = vmatpush1.bf16.msra.mxu0 %v1145
    %1491 = vmatprep.subr.bf16.mxu0 %v1154
    %1492 = vmatpush1.bf16.msra.mxu0 %v1153
    %1493 = vmatprep.subr.bf16.mxu0 %v1162
    %1494 = vmatpush1.bf16.msra.mxu0 %v1161
    %1495 = vmatprep.subr.bf16.mxu0 %v1170
    %1496 = vmatpush1.bf16.msra.mxu0 %v1169
    %1497 = vmatprep.subr.bf16.mxu0 %v1178
    %1498 = vmatpush1.bf16.msra.mxu0 %v1177
    %1499 = vmatprep.subr.bf16.mxu0 %v1186
    %1500 = vmatpush1.bf16.msra.mxu0 %v1185
    %1501 = vmatprep.subr.bf16.mxu0 %v1194
    %1502 = vmatpush1.bf16.msra.mxu0 %v1193
    %1503 = vmatprep.mubr.bf16.mxu0 %v1248
    %1504 = vmatmul.mubr.bf16.gmra.mrb[0].mxu0 %v1247
    %v1505 = vpop.f32.mrb[0].mxu0
    %v1506 = vadd.f32 %v1465, %v1505
    %v1507 = vpop.f32.mrb[0].mxu0
    %v1508 = vadd.f32 %v1467, %v1507
    %v1509 = vpop.f32.mrb[0].mxu0
    %v1510 = vpop.f32.mrb[0].mxu0
    %1511 = vdwg.mxu0
    %1512 = vmatprep.subr.bf16.mxu0 %v1202
    %1513 = vmatpush1.bf16.msra.mxu0 %v1201
    %1514 = vmatprep.subr.bf16.mxu0 %v1210
    %1515 = vmatpush1.bf16.msra.mxu0 %v1209
    %1516 = vmatprep.subr.bf16.mxu0 0
    %1517 = vmatpush1.bf16.msra.mxu0 0
    %1518 = vmatprep.subr.bf16.mxu0 0
    %1519 = vmatpush1.bf16.msra.mxu0 0
    %1520 = vmatprep.subr.bf16.mxu0 0
    %1521 = vmatpush1.bf16.msra.mxu0 0
    %1522 = vmatprep.subr.bf16.mxu0 0
    %1523 = vmatpush1.bf16.msra.mxu0 0
    %1524 = vmatprep.subr.bf16.mxu0 0
    %1525 = vmatpush1.bf16.msra.mxu0 0
    %1526 = vmatprep.subr.bf16.mxu0 0
    %1527 = vmatpush1.bf16.msra.mxu0 0
    %1528 = vmatprep.subr.bf16.mxu0 0
    %1529 = vmatpush1.bf16.msra.mxu0 0
    %1530 = vmatprep.subr.bf16.mxu0 0
    %1531 = vmatpush1.bf16.msra.mxu0 0
    %1532 = vmatprep.subr.bf16.mxu0 0
    %1533 = vmatpush1.bf16.msra.mxu0 0
    %1534 = vmatprep.subr.bf16.mxu0 0
    %1535 = vmatpush1.bf16.msra.mxu0 0
    %1536 = vmatprep.subr.bf16.mxu0 0
    %1537 = vmatpush1.bf16.msra.mxu0 0
    %1538 = vmatprep.subr.bf16.mxu0 0
    %1539 = vmatpush1.bf16.msra.mxu0 0
    %1540 = vmatprep.subr.bf16.mxu0 0
    %1541 = vmatpush1.bf16.msra.mxu0 0
    %1542 = vmatprep.subr.bf16.mxu0 0
    %1543 = vmatpush1.bf16.msra.mxu0 0
    %1544 = vmatprep.mubr.bf16.mxu0 0
    %1545 = vmatmul.mubr.bf16.gmra.mrb[0].mxu0 %v1264
    %v1546 = vpop.f32.mrb[0].mxu0
    %v1547 = vadd.f32 %v1506, %v1546
    %v1548 = vpop.f32.mrb[0].mxu0
    %v1549 = vadd.f32 %v1508, %v1548
    %v1550 = vpop.f32.mrb[0].mxu0
    %v1551 = vpop.f32.mrb[0].mxu0
    %1552 = vdwg.mxu0
    %1553 = vmatprep.subr.bf16.mxu0 %v436
    %1554 = vmatpush1.bf16.msra.mxu0 %v435
    %1555 = vmatprep.subr.bf16.mxu0 %v444
    %1556 = vmatpush1.bf16.msra.mxu0 %v443
    %1557 = vmatprep.subr.bf16.mxu0 %v452
    %1558 = vmatpush1.bf16.msra.mxu0 %v451
    %1559 = vmatprep.subr.bf16.mxu0 %v460
    %1560 = vmatpush1.bf16.msra.mxu0 %v459
    %1561 = vmatprep.subr.bf16.mxu0 %v468
    %1562 = vmatpush1.bf16.msra.mxu0 %v467
    %1563 = vmatprep.subr.bf16.mxu0 %v476
    %1564 = vmatpush1.bf16.msra.mxu0 %v475
    %1565 = vmatprep.subr.bf16.mxu0 %v484
    %1566 = vmatpush1.bf16.msra.mxu0 %v483
    %1567 = vmatprep.subr.bf16.mxu0 %v492
    %1568 = vmatpush1.bf16.msra.mxu0 %v491
    %1569 = vmatprep.subr.bf16.mxu0 %v500
    %1570 = vmatpush1.bf16.msra.mxu0 %v499
    %1571 = vmatprep.subr.bf16.mxu0 %v508
    %1572 = vmatpush1.bf16.msra.mxu0 %v507
    %1573 = vmatprep.subr.bf16.mxu0 %v516
    %1574 = vmatpush1.bf16.msra.mxu0 %v515
    %1575 = vmatprep.subr.bf16.mxu0 %v524
    %1576 = vmatpush1.bf16.msra.mxu0 %v523
    %1577 = vmatprep.subr.bf16.mxu0 %v532
    %1578 = vmatpush1.bf16.msra.mxu0 %v531
    %1579 = vmatprep.subr.bf16.mxu0 %v540
    %1580 = vmatpush1.bf16.msra.mxu0 %v539
    %1581 = vmatprep.subr.bf16.mxu0 %v548
    %1582 = vmatpush1.bf16.msra.mxu0 %v547
    %1583 = vmatprep.subr.bf16.mxu0 %v556
    %1584 = vmatpush1.bf16.msra.mxu0 %v555
    %1585 = vmatprep.mubr.bf16.mxu0 %v1238
    %1586 = vmatmul.mubr.bf16.gmra.mrb[0].mxu0 %v1237
    %v1587 = vpop.f32.mrb[0].mxu0
    %v1588 = vadd.f32 0.0, %v1587
    %v1589 = vpop.f32.mrb[0].mxu0
    %v1590 = vadd.f32 0.0, %v1589
    %v1591 = vpop.f32.mrb[0].mxu0
    %v1592 = vpop.f32.mrb[0].mxu0
    %1593 = vdwg.mxu0
    %1594 = vmatprep.subr.bf16.mxu0 %v564
    %1595 = vmatpush1.bf16.msra.mxu0 %v563
    %1596 = vmatprep.subr.bf16.mxu0 %v572
    %1597 = vmatpush1.bf16.msra.mxu0 %v571
    %1598 = vmatprep.subr.bf16.mxu0 %v580
    %1599 = vmatpush1.bf16.msra.mxu0 %v579
    %1600 = vmatprep.subr.bf16.mxu0 %v588
    %1601 = vmatpush1.bf16.msra.mxu0 %v587
    %1602 = vmatprep.subr.bf16.mxu0 %v596
    %1603 = vmatpush1.bf16.msra.mxu0 %v595
    %1604 = vmatprep.subr.bf16.mxu0 %v604
    %1605 = vmatpush1.bf16.msra.mxu0 %v603
    %1606 = vmatprep.subr.bf16.mxu0 %v612
    %1607 = vmatpush1.bf16.msra.mxu0 %v611
    %1608 = vmatprep.subr.bf16.mxu0 %v620
    %1609 = vmatpush1.bf16.msra.mxu0 %v619
    %1610 = vmatprep.subr.bf16.mxu0 %v628
    %1611 = vmatpush1.bf16.msra.mxu0 %v627
    %1612 = vmatprep.subr.bf16.mxu0 %v636
    %1613 = vmatpush1.bf16.msra.mxu0 %v635
    %1614 = vmatprep.subr.bf16.mxu0 %v644
    %1615 = vmatpush1.bf16.msra.mxu0 %v643
    %1616 = vmatprep.subr.bf16.mxu0 %v652
    %1617 = vmatpush1.bf16.msra.mxu0 %v651
    %1618 = vmatprep.subr.bf16.mxu0 %v660
    %1619 = vmatpush1.bf16.msra.mxu0 %v659
    %1620 = vmatprep.subr.bf16.mxu0 %v668
    %1621 = vmatpush1.bf16.msra.mxu0 %v667
    %1622 = vmatprep.subr.bf16.mxu0 %v676
    %1623 = vmatpush1.bf16.msra.mxu0 %v675
    %1624 = vmatprep.subr.bf16.mxu0 %v684
    %1625 = vmatpush1.bf16.msra.mxu0 %v683
    %1626 = vmatprep.mubr.bf16.mxu0 %v1240
    %1627 = vmatmul.mubr.bf16.gmra.mrb[0].mxu0 %v1239
    %v1628 = vpop.f32.mrb[0].mxu0
    %v1629 = vadd.f32 %v1588, %v1628
    %v1630 = vpop.f32.mrb[0].mxu0
    %v1631 = vadd.f32 %v1590, %v1630
    %v1632 = vpop.f32.mrb[0].mxu0
    %v1633 = vpop.f32.mrb[0].mxu0
    %1634 = vdwg.mxu0
    %1635 = vmatprep.subr.bf16.mxu0 %v692
    %1636 = vmatpush1.bf16.msra.mxu0 %v691
    %1637 = vmatprep.subr.bf16.mxu0 %v700
    %1638 = vmatpush1.bf16.msra.mxu0 %v699
    %1639 = vmatprep.subr.bf16.mxu0 %v708
    %1640 = vmatpush1.bf16.msra.mxu0 %v707
    %1641 = vmatprep.subr.bf16.mxu0 %v716
    %1642 = vmatpush1.bf16.msra.mxu0 %v715
    %1643 = vmatprep.subr.bf16.mxu0 %v724
    %1644 = vmatpush1.bf16.msra.mxu0 %v723
    %1645 = vmatprep.subr.bf16.mxu0 %v732
    %1646 = vmatpush1.bf16.msra.mxu0 %v731
    %1647 = vmatprep.subr.bf16.mxu0 %v740
    %1648 = vmatpush1.bf16.msra.mxu0 %v739
    %1649 = vmatprep.subr.bf16.mxu0 %v748
    %1650 = vmatpush1.bf16.msra.mxu0 %v747
    %1651 = vmatprep.subr.bf16.mxu0 %v756
    %1652 = vmatpush1.bf16.msra.mxu0 %v755
    %1653 = vmatprep.subr.bf16.mxu0 %v764
    %1654 = vmatpush1.bf16.msra.mxu0 %v763
    %1655 = vmatprep.subr.bf16.mxu0 %v772
    %1656 = vmatpush1.bf16.msra.mxu0 %v771
    %1657 = vmatprep.subr.bf16.mxu0 %v780
    %1658 = vmatpush1.bf16.msra.mxu0 %v779
    %1659 = vmatprep.subr.bf16.mxu0 %v788
    %1660 = vmatpush1.bf16.msra.mxu0 %v787
    %1661 = vmatprep.subr.bf16.mxu0 %v796
    %1662 = vmatpush1.bf16.msra.mxu0 %v795
    %1663 = vmatprep.subr.bf16.mxu0 %v804
    %1664 = vmatpush1.bf16.msra.mxu0 %v803
    %1665 = vmatprep.subr.bf16.mxu0 %v812
    %1666 = vmatpush1.bf16.msra.mxu0 %v811
    %1667 = vmatprep.mubr.bf16.mxu0 %v1242
    %1668 = vmatmul.mubr.bf16.gmra.mrb[0].mxu0 %v1241
    %v1669 = vpop.f32.mrb[0].mxu0
    %v1670 = vadd.f32 %v1629, %v1669
    %v1671 = vpop.f32.mrb[0].mxu0
    %v1672 = vadd.f32 %v1631, %v1671
    %v1673 = vpop.f32.mrb[0].mxu0
    %v1674 = vpop.f32.mrb[0].mxu0
    %1675 = vdwg.mxu0
    %1676 = vmatprep.subr.bf16.mxu0 %v820
    %1677 = vmatpush1.bf16.msra.mxu0 %v819
    %1678 = vmatprep.subr.bf16.mxu0 %v828
    %1679 = vmatpush1.bf16.msra.mxu0 %v827
    %1680 = vmatprep.subr.bf16.mxu0 %v836
    %1681 = vmatpush1.bf16.msra.mxu0 %v835
    %1682 = vmatprep.subr.bf16.mxu0 %v844
    %1683 = vmatpush1.bf16.msra.mxu0 %v843
    %1684 = vmatprep.subr.bf16.mxu0 %v852
    %1685 = vmatpush1.bf16.msra.mxu0 %v851
    %1686 = vmatprep.subr.bf16.mxu0 %v860
    %1687 = vmatpush1.bf16.msra.mxu0 %v859
    %1688 = vmatprep.subr.bf16.mxu0 %v868
    %1689 = vmatpush1.bf16.msra.mxu0 %v867
    %1690 = vmatprep.subr.bf16.mxu0 %v876
    %1691 = vmatpush1.bf16.msra.mxu0 %v875
    %1692 = vmatprep.subr.bf16.mxu0 %v884
    %1693 = vmatpush1.bf16.msra.mxu0 %v883
    %1694 = vmatprep.subr.bf16.mxu0 %v892
    %1695 = vmatpush1.bf16.msra.mxu0 %v891
    %1696 = vmatprep.subr.bf16.mxu0 %v900
    %1697 = vmatpush1.bf16.msra.mxu0 %v899
    %1698 = vmatprep.subr.bf16.mxu0 %v908
    %1699 = vmatpush1.bf16.msra.mxu0 %v907
    %1700 = vmatprep.subr.bf16.mxu0 %v916
    %1701 = vmatpush1.bf16.msra.mxu0 %v915
    %1702 = vmatprep.subr.bf16.mxu0 %v924
    %1703 = vmatpush1.bf16.msra.mxu0 %v923
    %1704 = vmatprep.subr.bf16.mxu0 %v932
    %1705 = vmatpush1.bf16.msra.mxu0 %v931
    %1706 = vmatprep.subr.bf16.mxu0 %v940
    %1707 = vmatpush1.bf16.msra.mxu0 %v939
    %1708 = vmatprep.mubr.bf16.mxu0 %v1244
    %1709 = vmatmul.mubr.bf16.gmra.mrb[0].mxu0 %v1243
    %v1710 = vpop.f32.mrb[0].mxu0
    %v1711 = vadd.f32 %v1670, %v1710
    %v1712 = vpop.f32.mrb[0].mxu0
    %v1713 = vadd.f32 %v1672, %v1712
    %v1714 = vpop.f32.mrb[0].mxu0
    %v1715 = vpop.f32.mrb[0].mxu0
    %1716 = vdwg.mxu0
    %1717 = vmatprep.subr.bf16.mxu0 %v948
    %1718 = vmatpush1.bf16.msra.mxu0 %v947
    %1719 = vmatprep.subr.bf16.mxu0 %v956
    %1720 = vmatpush1.bf16.msra.mxu0 %v955
    %1721 = vmatprep.subr.bf16.mxu0 %v964
    %1722 = vmatpush1.bf16.msra.mxu0 %v963
    %1723 = vmatprep.subr.bf16.mxu0 %v972
    %1724 = vmatpush1.bf16.msra.mxu0 %v971
    %1725 = vmatprep.subr.bf16.mxu0 %v980
    %1726 = vmatpush1.bf16.msra.mxu0 %v979
    %1727 = vmatprep.subr.bf16.mxu0 %v988
    %1728 = vmatpush1.bf16.msra.mxu0 %v987
    %1729 = vmatprep.subr.bf16.mxu0 %v996
    %1730 = vmatpush1.bf16.msra.mxu0 %v995
    %1731 = vmatprep.subr.bf16.mxu0 %v1004
    %1732 = vmatpush1.bf16.msra.mxu0 %v1003
    %1733 = vmatprep.subr.bf16.mxu0 %v1012
    %1734 = vmatpush1.bf16.msra.mxu0 %v1011
    %1735 = vmatprep.subr.bf16.mxu0 %v1020
    %1736 = vmatpush1.bf16.msra.mxu0 %v1019
    %1737 = vmatprep.subr.bf16.mxu0 %v1028
    %1738 = vmatpush1.bf16.msra.mxu0 %v1027
    %1739 = vmatprep.subr.bf16.mxu0 %v1036
    %1740 = vmatpush1.bf16.msra.mxu0 %v1035
    %1741 = vmatprep.subr.bf16.mxu0 %v1044
    %1742 = vmatpush1.bf16.msra.mxu0 %v1043
    %1743 = vmatprep.subr.bf16.mxu0 %v1052
    %1744 = vmatpush1.bf16.msra.mxu0 %v1051
    %1745 = vmatprep.subr.bf16.mxu0 %v1060
    %1746 = vmatpush1.bf16.msra.mxu0 %v1059
    %1747 = vmatprep.subr.bf16.mxu0 %v1068
    %1748 = vmatpush1.bf16.msra.mxu0 %v1067
    %1749 = vmatprep.mubr.bf16.mxu0 %v1246
    %1750 = vmatmul.mubr.bf16.gmra.mrb[0].mxu0 %v1245
    %v1751 = vpop.f32.mrb[0].mxu0
    %v1752 = vadd.f32 %v1711, %v1751
    %v1753 = vpop.f32.mrb[0].mxu0
    %v1754 = vadd.f32 %v1713, %v1753
    %v1755 = vpop.f32.mrb[0].mxu0
    %v1756 = vpop.f32.mrb[0].mxu0
    %1757 = vdwg.mxu0
    %1758 = vmatprep.subr.bf16.mxu0 %v1076
    %1759 = vmatpush1.bf16.msra.mxu0 %v1075
    %1760 = vmatprep.subr.bf16.mxu0 %v1084
    %1761 = vmatpush1.bf16.msra.mxu0 %v1083
    %1762 = vmatprep.subr.bf16.mxu0 %v1092
    %1763 = vmatpush1.bf16.msra.mxu0 %v1091
    %1764 = vmatprep.subr.bf16.mxu0 %v1100
    %1765 = vmatpush1.bf16.msra.mxu0 %v1099
    %1766 = vmatprep.subr.bf16.mxu0 %v1108
    %1767 = vmatpush1.bf16.msra.mxu0 %v1107
    %1768 = vmatprep.subr.bf16.mxu0 %v1116
    %1769 = vmatpush1.bf16.msra.mxu0 %v1115
    %1770 = vmatprep.subr.bf16.mxu0 %v1124
    %1771 = vmatpush1.bf16.msra.mxu0 %v1123
    %1772 = vmatprep.subr.bf16.mxu0 %v1132
    %1773 = vmatpush1.bf16.msra.mxu0 %v1131
    %1774 = vmatprep.subr.bf16.mxu0 %v1140
    %1775 = vmatpush1.bf16.msra.mxu0 %v1139
    %1776 = vmatprep.subr.bf16.mxu0 %v1148
    %1777 = vmatpush1.bf16.msra.mxu0 %v1147
    %1778 = vmatprep.subr.bf16.mxu0 %v1156
    %1779 = vmatpush1.bf16.msra.mxu0 %v1155
    %1780 = vmatprep.subr.bf16.mxu0 %v1164
    %1781 = vmatpush1.bf16.msra.mxu0 %v1163
    %1782 = vmatprep.subr.bf16.mxu0 %v1172
    %1783 = vmatpush1.bf16.msra.mxu0 %v1171
    %1784 = vmatprep.subr.bf16.mxu0 %v1180
    %1785 = vmatpush1.bf16.msra.mxu0 %v1179
    %1786 = vmatprep.subr.bf16.mxu0 %v1188
    %1787 = vmatpush1.bf16.msra.mxu0 %v1187
    %1788 = vmatprep.subr.bf16.mxu0 %v1196
    %1789 = vmatpush1.bf16.msra.mxu0 %v1195
    %1790 = vmatprep.mubr.bf16.mxu0 %v1248
    %1791 = vmatmul.mubr.bf16.gmra.mrb[0].mxu0 %v1247
    %v1792 = vpop.f32.mrb[0].mxu0
    %v1793 = vadd.f32 %v1752, %v1792
    %v1794 = vpop.f32.mrb[0].mxu0
    %v1795 = vadd.f32 %v1754, %v1794
    %v1796 = vpop.f32.mrb[0].mxu0
    %v1797 = vpop.f32.mrb[0].mxu0
    %1798 = vdwg.mxu0
    %1799 = vmatprep.subr.bf16.mxu0 %v1204
    %1800 = vmatpush1.bf16.msra.mxu0 %v1203
    %1801 = vmatprep.subr.bf16.mxu0 %v1212
    %1802 = vmatpush1.bf16.msra.mxu0 %v1211
    %1803 = vmatprep.subr.bf16.mxu0 0
    %1804 = vmatpush1.bf16.msra.mxu0 0
    %1805 = vmatprep.subr.bf16.mxu0 0
    %1806 = vmatpush1.bf16.msra.mxu0 0
    %1807 = vmatprep.subr.bf16.mxu0 0
    %1808 = vmatpush1.bf16.msra.mxu0 0
    %1809 = vmatprep.subr.bf16.mxu0 0
    %1810 = vmatpush1.bf16.msra.mxu0 0
    %1811 = vmatprep.subr.bf16.mxu0 0
    %1812 = vmatpush1.bf16.msra.mxu0 0
    %1813 = vmatprep.subr.bf16.mxu0 0
    %1814 = vmatpush1.bf16.msra.mxu0 0
    %1815 = vmatprep.subr.bf16.mxu0 0
    %1816 = vmatpush1.bf16.msra.mxu0 0
    %1817 = vmatprep.subr.bf16.mxu0 0
    %1818 = vmatpush1.bf16.msra.mxu0 0
    %1819 = vmatprep.subr.bf16.mxu0 0
    %1820 = vmatpush1.bf16.msra.mxu0 0
    %1821 = vmatprep.subr.bf16.mxu0 0
    %1822 = vmatpush1.bf16.msra.mxu0 0
    %1823 = vmatprep.subr.bf16.mxu0 0
    %1824 = vmatpush1.bf16.msra.mxu0 0
    %1825 = vmatprep.subr.bf16.mxu0 0
    %1826 = vmatpush1.bf16.msra.mxu0 0
    %1827 = vmatprep.subr.bf16.mxu0 0
    %1828 = vmatpush1.bf16.msra.mxu0 0
    %1829 = vmatprep.subr.bf16.mxu0 0
    %1830 = vmatpush1.bf16.msra.mxu0 0
    %1831 = vmatprep.mubr.bf16.mxu0 0
    %1832 = vmatmul.mubr.bf16.gmra.mrb[0].mxu0 %v1264
    %v1833 = vpop.f32.mrb[0].mxu0
    %v1834 = vadd.f32 %v1793, %v1833
    %v1835 = vpop.f32.mrb[0].mxu0
    %v1836 = vadd.f32 %v1795, %v1835
    %v1837 = vpop.f32.mrb[0].mxu0
    %v1838 = vpop.f32.mrb[0].mxu0
    %1839 = vdwg.mxu0
    %1840 = vmatprep.subr.bf16.mxu0 %v438
    %1841 = vmatpush1.bf16.msra.mxu0 %v437
    %1842 = vmatprep.subr.bf16.mxu0 %v446
    %1843 = vmatpush1.bf16.msra.mxu0 %v445
    %1844 = vmatprep.subr.bf16.mxu0 %v454
    %1845 = vmatpush1.bf16.msra.mxu0 %v453
    %1846 = vmatprep.subr.bf16.mxu0 %v462
    %1847 = vmatpush1.bf16.msra.mxu0 %v461
    %1848 = vmatprep.subr.bf16.mxu0 %v470
    %1849 = vmatpush1.bf16.msra.mxu0 %v469
    %1850 = vmatprep.subr.bf16.mxu0 %v478
    %1851 = vmatpush1.bf16.msra.mxu0 %v477
    %1852 = vmatprep.subr.bf16.mxu0 %v486
    %1853 = vmatpush1.bf16.msra.mxu0 %v485
    %1854 = vmatprep.subr.bf16.mxu0 %v494
    %1855 = vmatpush1.bf16.msra.mxu0 %v493
    %1856 = vmatprep.subr.bf16.mxu0 %v502
    %1857 = vmatpush1.bf16.msra.mxu0 %v501
    %1858 = vmatprep.subr.bf16.mxu0 %v510
    %1859 = vmatpush1.bf16.msra.mxu0 %v509
    %1860 = vmatprep.subr.bf16.mxu0 %v518
    %1861 = vmatpush1.bf16.msra.mxu0 %v517
    %1862 = vmatprep.subr.bf16.mxu0 %v526
    %1863 = vmatpush1.bf16.msra.mxu0 %v525
    %1864 = vmatprep.subr.bf16.mxu0 %v534
    %1865 = vmatpush1.bf16.msra.mxu0 %v533
    %1866 = vmatprep.subr.bf16.mxu0 %v542
    %1867 = vmatpush1.bf16.msra.mxu0 %v541
    %1868 = vmatprep.subr.bf16.mxu0 %v550
    %1869 = vmatpush1.bf16.msra.mxu0 %v549
    %1870 = vmatprep.subr.bf16.mxu0 %v558
    %1871 = vmatpush1.bf16.msra.mxu0 %v557
    %1872 = vmatprep.mubr.bf16.mxu0 %v1238
    %1873 = vmatmul.mubr.bf16.gmra.mrb[0].mxu0 %v1237
    %v1874 = vpop.f32.mrb[0].mxu0
    %v1875 = vadd.f32 0.0, %v1874
    %v1876 = vpop.f32.mrb[0].mxu0
    %v1877 = vadd.f32 0.0, %v1876
    %v1878 = vpop.f32.mrb[0].mxu0
    %v1879 = vpop.f32.mrb[0].mxu0
    %1880 = vdwg.mxu0
    %1881 = vmatprep.subr.bf16.mxu0 %v566
    %1882 = vmatpush1.bf16.msra.mxu0 %v565
    %1883 = vmatprep.subr.bf16.mxu0 %v574
    %1884 = vmatpush1.bf16.msra.mxu0 %v573
    %1885 = vmatprep.subr.bf16.mxu0 %v582
    %1886 = vmatpush1.bf16.msra.mxu0 %v581
    %1887 = vmatprep.subr.bf16.mxu0 %v590
    %1888 = vmatpush1.bf16.msra.mxu0 %v589
    %1889 = vmatprep.subr.bf16.mxu0 %v598
    %1890 = vmatpush1.bf16.msra.mxu0 %v597
    %1891 = vmatprep.subr.bf16.mxu0 %v606
    %1892 = vmatpush1.bf16.msra.mxu0 %v605
    %1893 = vmatprep.subr.bf16.mxu0 %v614
    %1894 = vmatpush1.bf16.msra.mxu0 %v613
    %1895 = vmatprep.subr.bf16.mxu0 %v622
    %1896 = vmatpush1.bf16.msra.mxu0 %v621
    %1897 = vmatprep.subr.bf16.mxu0 %v630
    %1898 = vmatpush1.bf16.msra.mxu0 %v629
    %1899 = vmatprep.subr.bf16.mxu0 %v638
    %1900 = vmatpush1.bf16.msra.mxu0 %v637
    %1901 = vmatprep.subr.bf16.mxu0 %v646
    %1902 = vmatpush1.bf16.msra.mxu0 %v645
    %1903 = vmatprep.subr.bf16.mxu0 %v654
    %1904 = vmatpush1.bf16.msra.mxu0 %v653
    %1905 = vmatprep.subr.bf16.mxu0 %v662
    %1906 = vmatpush1.bf16.msra.mxu0 %v661
    %1907 = vmatprep.subr.bf16.mxu0 %v670
    %1908 = vmatpush1.bf16.msra.mxu0 %v669
    %1909 = vmatprep.subr.bf16.mxu0 %v678
    %1910 = vmatpush1.bf16.msra.mxu0 %v677
    %1911 = vmatprep.subr.bf16.mxu0 %v686
    %1912 = vmatpush1.bf16.msra.mxu0 %v685
    %1913 = vmatprep.mubr.bf16.mxu0 %v1240
    %1914 = vmatmul.mubr.bf16.gmra.mrb[0].mxu0 %v1239
    %v1915 = vpop.f32.mrb[0].mxu0
    %v1916 = vadd.f32 %v1875, %v1915
    %v1917 = vpop.f32.mrb[0].mxu0
    %v1918 = vadd.f32 %v1877, %v1917
    %v1919 = vpop.f32.mrb[0].mxu0
    %v1920 = vpop.f32.mrb[0].mxu0
    %1921 = vdwg.mxu0
    %1922 = vmatprep.subr.bf16.mxu0 %v694
    %1923 = vmatpush1.bf16.msra.mxu0 %v693
    %1924 = vmatprep.subr.bf16.mxu0 %v702
    %1925 = vmatpush1.bf16.msra.mxu0 %v701
    %1926 = vmatprep.subr.bf16.mxu0 %v710
    %1927 = vmatpush1.bf16.msra.mxu0 %v709
    %1928 = vmatprep.subr.bf16.mxu0 %v718
    %1929 = vmatpush1.bf16.msra.mxu0 %v717
    %1930 = vmatprep.subr.bf16.mxu0 %v726
    %1931 = vmatpush1.bf16.msra.mxu0 %v725
    %1932 = vmatprep.subr.bf16.mxu0 %v734
    %1933 = vmatpush1.bf16.msra.mxu0 %v733
    %1934 = vmatprep.subr.bf16.mxu0 %v742
    %1935 = vmatpush1.bf16.msra.mxu0 %v741
    %1936 = vmatprep.subr.bf16.mxu0 %v750
    %1937 = vmatpush1.bf16.msra.mxu0 %v749
    %1938 = vmatprep.subr.bf16.mxu0 %v758
    %1939 = vmatpush1.bf16.msra.mxu0 %v757
    %1940 = vmatprep.subr.bf16.mxu0 %v766
    %1941 = vmatpush1.bf16.msra.mxu0 %v765
    %1942 = vmatprep.subr.bf16.mxu0 %v774
    %1943 = vmatpush1.bf16.msra.mxu0 %v773
    %1944 = vmatprep.subr.bf16.mxu0 %v782
    %1945 = vmatpush1.bf16.msra.mxu0 %v781
    %1946 = vmatprep.subr.bf16.mxu0 %v790
    %1947 = vmatpush1.bf16.msra.mxu0 %v789
    %1948 = vmatprep.subr.bf16.mxu0 %v798
    %1949 = vmatpush1.bf16.msra.mxu0 %v797
    %1950 = vmatprep.subr.bf16.mxu0 %v806
    %1951 = vmatpush1.bf16.msra.mxu0 %v805
    %1952 = vmatprep.subr.bf16.mxu0 %v814
    %1953 = vmatpush1.bf16.msra.mxu0 %v813
    %1954 = vmatprep.mubr.bf16.mxu0 %v1242
    %1955 = vmatmul.mubr.bf16.gmra.mrb[0].mxu0 %v1241
    %v1956 = vpop.f32.mrb[0].mxu0
    %v1957 = vadd.f32 %v1916, %v1956
    %v1958 = vpop.f32.mrb[0].mxu0
    %v1959 = vadd.f32 %v1918, %v1958
    %v1960 = vpop.f32.mrb[0].mxu0
    %v1961 = vpop.f32.mrb[0].mxu0
    %1962 = vdwg.mxu0
    %1963 = vmatprep.subr.bf16.mxu0 %v822
    %1964 = vmatpush1.bf16.msra.mxu0 %v821
    %1965 = vmatprep.subr.bf16.mxu0 %v830
    %1966 = vmatpush1.bf16.msra.mxu0 %v829
    %1967 = vmatprep.subr.bf16.mxu0 %v838
    %1968 = vmatpush1.bf16.msra.mxu0 %v837
    %1969 = vmatprep.subr.bf16.mxu0 %v846
    %1970 = vmatpush1.bf16.msra.mxu0 %v845
    %1971 = vmatprep.subr.bf16.mxu0 %v854
    %1972 = vmatpush1.bf16.msra.mxu0 %v853
    %1973 = vmatprep.subr.bf16.mxu0 %v862
    %1974 = vmatpush1.bf16.msra.mxu0 %v861
    %1975 = vmatprep.subr.bf16.mxu0 %v870
    %1976 = vmatpush1.bf16.msra.mxu0 %v869
    %1977 = vmatprep.subr.bf16.mxu0 %v878
    %1978 = vmatpush1.bf16.msra.mxu0 %v877
    %1979 = vmatprep.subr.bf16.mxu0 %v886
    %1980 = vmatpush1.bf16.msra.mxu0 %v885
    %1981 = vmatprep.subr.bf16.mxu0 %v894
    %1982 = vmatpush1.bf16.msra.mxu0 %v893
    %1983 = vmatprep.subr.bf16.mxu0 %v902
    %1984 = vmatpush1.bf16.msra.mxu0 %v901
    %1985 = vmatprep.subr.bf16.mxu0 %v910
    %1986 = vmatpush1.bf16.msra.mxu0 %v909
    %1987 = vmatprep.subr.bf16.mxu0 %v918
    %1988 = vmatpush1.bf16.msra.mxu0 %v917
    %1989 = vmatprep.subr.bf16.mxu0 %v926
    %1990 = vmatpush1.bf16.msra.mxu0 %v925
    %1991 = vmatprep.subr.bf16.mxu0 %v934
    %1992 = vmatpush1.bf16.msra.mxu0 %v933
    %1993 = vmatprep.subr.bf16.mxu0 %v942
    %1994 = vmatpush1.bf16.msra.mxu0 %v941
    %1995 = vmatprep.mubr.bf16.mxu0 %v1244
    %1996 = vmatmul.mubr.bf16.gmra.mrb[0].mxu0 %v1243
    %v1997 = vpop.f32.mrb[0].mxu0
    %v1998 = vadd.f32 %v1957, %v1997
    %v1999 = vpop.f32.mrb[0].mxu0
    %v2000 = vadd.f32 %v1959, %v1999
    %v2001 = vpop.f32.mrb[0].mxu0
    %v2002 = vpop.f32.mrb[0].mxu0
    %2003 = vdwg.mxu0
    %2004 = vmatprep.subr.bf16.mxu0 %v950
    %2005 = vmatpush1.bf16.msra.mxu0 %v949
    %2006 = vmatprep.subr.bf16.mxu0 %v958
    %2007 = vmatpush1.bf16.msra.mxu0 %v957
    %2008 = vmatprep.subr.bf16.mxu0 %v966
    %2009 = vmatpush1.bf16.msra.mxu0 %v965
    %2010 = vmatprep.subr.bf16.mxu0 %v974
    %2011 = vmatpush1.bf16.msra.mxu0 %v973
    %2012 = vmatprep.subr.bf16.mxu0 %v982
    %2013 = vmatpush1.bf16.msra.mxu0 %v981
    %2014 = vmatprep.subr.bf16.mxu0 %v990
    %2015 = vmatpush1.bf16.msra.mxu0 %v989
    %2016 = vmatprep.subr.bf16.mxu0 %v998
    %2017 = vmatpush1.bf16.msra.mxu0 %v997
    %2018 = vmatprep.subr.bf16.mxu0 %v1006
    %2019 = vmatpush1.bf16.msra.mxu0 %v1005
    %2020 = vmatprep.subr.bf16.mxu0 %v1014
    %2021 = vmatpush1.bf16.msra.mxu0 %v1013
    %2022 = vmatprep.subr.bf16.mxu0 %v1022
    %2023 = vmatpush1.bf16.msra.mxu0 %v1021
    %2024 = vmatprep.subr.bf16.mxu0 %v1030
    %2025 = vmatpush1.bf16.msra.mxu0 %v1029
    %2026 = vmatprep.subr.bf16.mxu0 %v1038
    %2027 = vmatpush1.bf16.msra.mxu0 %v1037
    %2028 = vmatprep.subr.bf16.mxu0 %v1046
    %2029 = vmatpush1.bf16.msra.mxu0 %v1045
    %2030 = vmatprep.subr.bf16.mxu0 %v1054
    %2031 = vmatpush1.bf16.msra.mxu0 %v1053
    %2032 = vmatprep.subr.bf16.mxu0 %v1062
    %2033 = vmatpush1.bf16.msra.mxu0 %v1061
    %2034 = vmatprep.subr.bf16.mxu0 %v1070
    %2035 = vmatpush1.bf16.msra.mxu0 %v1069
    %2036 = vmatprep.mubr.bf16.mxu0 %v1246
    %2037 = vmatmul.mubr.bf16.gmra.mrb[0].mxu0 %v1245
    %v2038 = vpop.f32.mrb[0].mxu0
    %v2039 = vadd.f32 %v1998, %v2038
    %v2040 = vpop.f32.mrb[0].mxu0
    %v2041 = vadd.f32 %v2000, %v2040
    %v2042 = vpop.f32.mrb[0].mxu0
    %v2043 = vpop.f32.mrb[0].mxu0
    %2044 = vdwg.mxu0
    %2045 = vmatprep.subr.bf16.mxu0 %v1078
    %2046 = vmatpush1.bf16.msra.mxu0 %v1077
    %2047 = vmatprep.subr.bf16.mxu0 %v1086
    %2048 = vmatpush1.bf16.msra.mxu0 %v1085
    %2049 = vmatprep.subr.bf16.mxu0 %v1094
    %2050 = vmatpush1.bf16.msra.mxu0 %v1093
    %2051 = vmatprep.subr.bf16.mxu0 %v1102
    %2052 = vmatpush1.bf16.msra.mxu0 %v1101
    %2053 = vmatprep.subr.bf16.mxu0 %v1110
    %2054 = vmatpush1.bf16.msra.mxu0 %v1109
    %2055 = vmatprep.subr.bf16.mxu0 %v1118
    %2056 = vmatpush1.bf16.msra.mxu0 %v1117
    %2057 = vmatprep.subr.bf16.mxu0 %v1126
    %2058 = vmatpush1.bf16.msra.mxu0 %v1125
    %2059 = vmatprep.subr.bf16.mxu0 %v1134
    %2060 = vmatpush1.bf16.msra.mxu0 %v1133
    %2061 = vmatprep.subr.bf16.mxu0 %v1142
    %2062 = vmatpush1.bf16.msra.mxu0 %v1141
    %2063 = vmatprep.subr.bf16.mxu0 %v1150
    %2064 = vmatpush1.bf16.msra.mxu0 %v1149
    %2065 = vmatprep.subr.bf16.mxu0 %v1158
    %2066 = vmatpush1.bf16.msra.mxu0 %v1157
    %2067 = vmatprep.subr.bf16.mxu0 %v1166
    %2068 = vmatpush1.bf16.msra.mxu0 %v1165
    %2069 = vmatprep.subr.bf16.mxu0 %v1174
    %2070 = vmatpush1.bf16.msra.mxu0 %v1173
    %2071 = vmatprep.subr.bf16.mxu0 %v1182
    %2072 = vmatpush1.bf16.msra.mxu0 %v1181
    %2073 = vmatprep.subr.bf16.mxu0 %v1190
    %2074 = vmatpush1.bf16.msra.mxu0 %v1189
    %2075 = vmatprep.subr.bf16.mxu0 %v1198
    %2076 = vmatpush1.bf16.msra.mxu0 %v1197
    %2077 = vmatprep.mubr.bf16.mxu0 %v1248
    %2078 = vmatmul.mubr.bf16.gmra.mrb[0].mxu0 %v1247
    %v2079 = vpop.f32.mrb[0].mxu0
    %v2080 = vadd.f32 %v2039, %v2079
    %v2081 = vpop.f32.mrb[0].mxu0
    %v2082 = vadd.f32 %v2041, %v2081
    %v2083 = vpop.f32.mrb[0].mxu0
    %v2084 = vpop.f32.mrb[0].mxu0
    %2085 = vdwg.mxu0
    %2086 = vmatprep.subr.bf16.mxu0 %v1206
    %2087 = vmatpush1.bf16.msra.mxu0 %v1205
    %2088 = vmatprep.subr.bf16.mxu0 %v1214
    %2089 = vmatpush1.bf16.msra.mxu0 %v1213
    %2090 = vmatprep.subr.bf16.mxu0 0
    %2091 = vmatpush1.bf16.msra.mxu0 0
    %2092 = vmatprep.subr.bf16.mxu0 0
    %2093 = vmatpush1.bf16.msra.mxu0 0
    %2094 = vmatprep.subr.bf16.mxu0 0
    %2095 = vmatpush1.bf16.msra.mxu0 0
    %2096 = vmatprep.subr.bf16.mxu0 0
    %2097 = vmatpush1.bf16.msra.mxu0 0
    %2098 = vmatprep.subr.bf16.mxu0 0
    %2099 = vmatpush1.bf16.msra.mxu0 0
    %2100 = vmatprep.subr.bf16.mxu0 0
    %2101 = vmatpush1.bf16.msra.mxu0 0
    %2102 = vmatprep.subr.bf16.mxu0 0
    %2103 = vmatpush1.bf16.msra.mxu0 0
    %2104 = vmatprep.subr.bf16.mxu0 0
    %2105 = vmatpush1.bf16.msra.mxu0 0
    %2106 = vmatprep.subr.bf16.mxu0 0
    %2107 = vmatpush1.bf16.msra.mxu0 0
    %2108 = vmatprep.subr.bf16.mxu0 0
    %2109 = vmatpush1.bf16.msra.mxu0 0
    %2110 = vmatprep.subr.bf16.mxu0 0
    %2111 = vmatpush1.bf16.msra.mxu0 0
    %2112 = vmatprep.subr.bf16.mxu0 0
    %2113 = vmatpush1.bf16.msra.mxu0 0
    %2114 = vmatprep.subr.bf16.mxu0 0
    %2115 = vmatpush1.bf16.msra.mxu0 0
    %2116 = vmatprep.subr.bf16.mxu0 0
    %2117 = vmatpush1.bf16.msra.mxu0 0
    %2118 = vmatprep.mubr.bf16.mxu0 0
    %2119 = vmatmul.mubr.bf16.gmra.mrb[0].mxu0 %v1264
    %v2120 = vpop.f32.mrb[0].mxu0
    %v2121 = vadd.f32 %v2080, %v2120
    %v2122 = vpop.f32.mrb[0].mxu0
    %v2123 = vadd.f32 %v2082, %v2122
    %v2124 = vpop.f32.mrb[0].mxu0
    %v2125 = vpop.f32.mrb[0].mxu0
    %2126 = vdwg.mxu0
    %2127 = vmatprep.subr.bf16.mxu0 %v440
    %2128 = vmatpush1.bf16.msra.mxu0 %v439
    %2129 = vmatprep.subr.bf16.mxu0 %v448
    %2130 = vmatpush1.bf16.msra.mxu0 %v447
    %2131 = vmatprep.subr.bf16.mxu0 %v456
    %2132 = vmatpush1.bf16.msra.mxu0 %v455
    %2133 = vmatprep.subr.bf16.mxu0 %v464
    %2134 = vmatpush1.bf16.msra.mxu0 %v463
    %2135 = vmatprep.subr.bf16.mxu0 %v472
    %2136 = vmatpush1.bf16.msra.mxu0 %v471
    %2137 = vmatprep.subr.bf16.mxu0 %v480
    %2138 = vmatpush1.bf16.msra.mxu0 %v479
    %2139 = vmatprep.subr.bf16.mxu0 %v488
    %2140 = vmatpush1.bf16.msra.mxu0 %v487
    %2141 = vmatprep.subr.bf16.mxu0 %v496
    %2142 = vmatpush1.bf16.msra.mxu0 %v495
    %2143 = vmatprep.subr.bf16.mxu0 %v504
    %2144 = vmatpush1.bf16.msra.mxu0 %v503
    %2145 = vmatprep.subr.bf16.mxu0 %v512
    %2146 = vmatpush1.bf16.msra.mxu0 %v511
    %2147 = vmatprep.subr.bf16.mxu0 %v520
    %2148 = vmatpush1.bf16.msra.mxu0 %v519
    %2149 = vmatprep.subr.bf16.mxu0 %v528
    %2150 = vmatpush1.bf16.msra.mxu0 %v527
    %2151 = vmatprep.subr.bf16.mxu0 %v536
    %2152 = vmatpush1.bf16.msra.mxu0 %v535
    %2153 = vmatprep.subr.bf16.mxu0 %v544
    %2154 = vmatpush1.bf16.msra.mxu0 %v543
    %2155 = vmatprep.subr.bf16.mxu0 %v552
    %2156 = vmatpush1.bf16.msra.mxu0 %v551
    %2157 = vmatprep.subr.bf16.mxu0 %v560
    %2158 = vmatpush1.bf16.msra.mxu0 %v559
    %2159 = vmatprep.mubr.bf16.mxu0 %v1238
    %2160 = vmatmul.mubr.bf16.gmra.mrb[0].mxu0 %v1237
    %v2161 = vpop.f32.mrb[0].mxu0
    %v2162 = vadd.f32 0.0, %v2161
    %v2163 = vpop.f32.mrb[0].mxu0
    %v2164 = vadd.f32 0.0, %v2163
    %v2165 = vpop.f32.mrb[0].mxu0
    %v2166 = vpop.f32.mrb[0].mxu0
    %2167 = vdwg.mxu0
    %2168 = vmatprep.subr.bf16.mxu0 %v568
    %2169 = vmatpush1.bf16.msra.mxu0 %v567
    %2170 = vmatprep.subr.bf16.mxu0 %v576
    %2171 = vmatpush1.bf16.msra.mxu0 %v575
    %2172 = vmatprep.subr.bf16.mxu0 %v584
    %2173 = vmatpush1.bf16.msra.mxu0 %v583
    %2174 = vmatprep.subr.bf16.mxu0 %v592
    %2175 = vmatpush1.bf16.msra.mxu0 %v591
    %2176 = vmatprep.subr.bf16.mxu0 %v600
    %2177 = vmatpush1.bf16.msra.mxu0 %v599
    %2178 = vmatprep.subr.bf16.mxu0 %v608
    %2179 = vmatpush1.bf16.msra.mxu0 %v607
    %2180 = vmatprep.subr.bf16.mxu0 %v616
    %2181 = vmatpush1.bf16.msra.mxu0 %v615
    %2182 = vmatprep.subr.bf16.mxu0 %v624
    %2183 = vmatpush1.bf16.msra.mxu0 %v623
    %2184 = vmatprep.subr.bf16.mxu0 %v632
    %2185 = vmatpush1.bf16.msra.mxu0 %v631
    %2186 = vmatprep.subr.bf16.mxu0 %v640
    %2187 = vmatpush1.bf16.msra.mxu0 %v639
    %2188 = vmatprep.subr.bf16.mxu0 %v648
    %2189 = vmatpush1.bf16.msra.mxu0 %v647
    %2190 = vmatprep.subr.bf16.mxu0 %v656
    %2191 = vmatpush1.bf16.msra.mxu0 %v655
    %2192 = vmatprep.subr.bf16.mxu0 %v664
    %2193 = vmatpush1.bf16.msra.mxu0 %v663
    %2194 = vmatprep.subr.bf16.mxu0 %v672
    %2195 = vmatpush1.bf16.msra.mxu0 %v671
    %2196 = vmatprep.subr.bf16.mxu0 %v680
    %2197 = vmatpush1.bf16.msra.mxu0 %v679
    %2198 = vmatprep.subr.bf16.mxu0 %v688
    %2199 = vmatpush1.bf16.msra.mxu0 %v687
    %2200 = vmatprep.mubr.bf16.mxu0 %v1240
    %2201 = vmatmul.mubr.bf16.gmra.mrb[0].mxu0 %v1239
    %v2202 = vpop.f32.mrb[0].mxu0
    %v2203 = vadd.f32 %v2162, %v2202
    %v2204 = vpop.f32.mrb[0].mxu0
    %v2205 = vadd.f32 %v2164, %v2204
    %v2206 = vpop.f32.mrb[0].mxu0
    %v2207 = vpop.f32.mrb[0].mxu0
    %2208 = vdwg.mxu0
    %2209 = vmatprep.subr.bf16.mxu0 %v696
    %2210 = vmatpush1.bf16.msra.mxu0 %v695
    %2211 = vmatprep.subr.bf16.mxu0 %v704
    %2212 = vmatpush1.bf16.msra.mxu0 %v703
    %2213 = vmatprep.subr.bf16.mxu0 %v712
    %2214 = vmatpush1.bf16.msra.mxu0 %v711
    %2215 = vmatprep.subr.bf16.mxu0 %v720
    %2216 = vmatpush1.bf16.msra.mxu0 %v719
    %2217 = vmatprep.subr.bf16.mxu0 %v728
    %2218 = vmatpush1.bf16.msra.mxu0 %v727
    %2219 = vmatprep.subr.bf16.mxu0 %v736
    %2220 = vmatpush1.bf16.msra.mxu0 %v735
    %2221 = vmatprep.subr.bf16.mxu0 %v744
    %2222 = vmatpush1.bf16.msra.mxu0 %v743
    %2223 = vmatprep.subr.bf16.mxu0 %v752
    %2224 = vmatpush1.bf16.msra.mxu0 %v751
    %2225 = vmatprep.subr.bf16.mxu0 %v760
    %2226 = vmatpush1.bf16.msra.mxu0 %v759
    %2227 = vmatprep.subr.bf16.mxu0 %v768
    %2228 = vmatpush1.bf16.msra.mxu0 %v767
    %2229 = vmatprep.subr.bf16.mxu0 %v776
    %2230 = vmatpush1.bf16.msra.mxu0 %v775
    %2231 = vmatprep.subr.bf16.mxu0 %v784
    %2232 = vmatpush1.bf16.msra.mxu0 %v783
    %2233 = vmatprep.subr.bf16.mxu0 %v792
    %2234 = vmatpush1.bf16.msra.mxu0 %v791
    %2235 = vmatprep.subr.bf16.mxu0 %v800
    %2236 = vmatpush1.bf16.msra.mxu0 %v799
    %2237 = vmatprep.subr.bf16.mxu0 %v808
    %2238 = vmatpush1.bf16.msra.mxu0 %v807
    %2239 = vmatprep.subr.bf16.mxu0 %v816
    %2240 = vmatpush1.bf16.msra.mxu0 %v815
    %2241 = vmatprep.mubr.bf16.mxu0 %v1242
    %2242 = vmatmul.mubr.bf16.gmra.mrb[0].mxu0 %v1241
    %v2243 = vpop.f32.mrb[0].mxu0
    %v2244 = vadd.f32 %v2203, %v2243
    %v2245 = vpop.f32.mrb[0].mxu0
    %v2246 = vadd.f32 %v2205, %v2245
    %v2247 = vpop.f32.mrb[0].mxu0
    %v2248 = vpop.f32.mrb[0].mxu0
    %2249 = vdwg.mxu0
    %2250 = vmatprep.subr.bf16.mxu0 %v824
    %2251 = vmatpush1.bf16.msra.mxu0 %v823
    %2252 = vmatprep.subr.bf16.mxu0 %v832
    %2253 = vmatpush1.bf16.msra.mxu0 %v831
    %2254 = vmatprep.subr.bf16.mxu0 %v840
    %2255 = vmatpush1.bf16.msra.mxu0 %v839
    %2256 = vmatprep.subr.bf16.mxu0 %v848
    %2257 = vmatpush1.bf16.msra.mxu0 %v847
    %2258 = vmatprep.subr.bf16.mxu0 %v856
    %2259 = vmatpush1.bf16.msra.mxu0 %v855
    %2260 = vmatprep.subr.bf16.mxu0 %v864
    %2261 = vmatpush1.bf16.msra.mxu0 %v863
    %2262 = vmatprep.subr.bf16.mxu0 %v872
    %2263 = vmatpush1.bf16.msra.mxu0 %v871
    %2264 = vmatprep.subr.bf16.mxu0 %v880
    %2265 = vmatpush1.bf16.msra.mxu0 %v879
    %2266 = vmatprep.subr.bf16.mxu0 %v888
    %2267 = vmatpush1.bf16.msra.mxu0 %v887
    %2268 = vmatprep.subr.bf16.mxu0 %v896
    %2269 = vmatpush1.bf16.msra.mxu0 %v895
    %2270 = vmatprep.subr.bf16.mxu0 %v904
    %2271 = vmatpush1.bf16.msra.mxu0 %v903
    %2272 = vmatprep.subr.bf16.mxu0 %v912
    %2273 = vmatpush1.bf16.msra.mxu0 %v911
    %2274 = vmatprep.subr.bf16.mxu0 %v920
    %2275 = vmatpush1.bf16.msra.mxu0 %v919
    %2276 = vmatprep.subr.bf16.mxu0 %v928
    %2277 = vmatpush1.bf16.msra.mxu0 %v927
    %2278 = vmatprep.subr.bf16.mxu0 %v936
    %2279 = vmatpush1.bf16.msra.mxu0 %v935
    %2280 = vmatprep.subr.bf16.mxu0 %v944
    %2281 = vmatpush1.bf16.msra.mxu0 %v943
    %2282 = vmatprep.mubr.bf16.mxu0 %v1244
    %2283 = vmatmul.mubr.bf16.gmra.mrb[0].mxu0 %v1243
    %v2284 = vpop.f32.mrb[0].mxu0
    %v2285 = vadd.f32 %v2244, %v2284
    %v2286 = vpop.f32.mrb[0].mxu0
    %v2287 = vadd.f32 %v2246, %v2286
    %v2288 = vpop.f32.mrb[0].mxu0
    %v2289 = vpop.f32.mrb[0].mxu0
    %2290 = vdwg.mxu0
    %2291 = vmatprep.subr.bf16.mxu0 %v952
    %2292 = vmatpush1.bf16.msra.mxu0 %v951
    %2293 = vmatprep.subr.bf16.mxu0 %v960
    %2294 = vmatpush1.bf16.msra.mxu0 %v959
    %2295 = vmatprep.subr.bf16.mxu0 %v968
    %2296 = vmatpush1.bf16.msra.mxu0 %v967
    %2297 = vmatprep.subr.bf16.mxu0 %v976
    %2298 = vmatpush1.bf16.msra.mxu0 %v975
    %2299 = vmatprep.subr.bf16.mxu0 %v984
    %2300 = vmatpush1.bf16.msra.mxu0 %v983
    %2301 = vmatprep.subr.bf16.mxu0 %v992
    %2302 = vmatpush1.bf16.msra.mxu0 %v991
    %2303 = vmatprep.subr.bf16.mxu0 %v1000
    %2304 = vmatpush1.bf16.msra.mxu0 %v999
    %2305 = vmatprep.subr.bf16.mxu0 %v1008
    %2306 = vmatpush1.bf16.msra.mxu0 %v1007
    %2307 = vmatprep.subr.bf16.mxu0 %v1016
    %2308 = vmatpush1.bf16.msra.mxu0 %v1015
    %2309 = vmatprep.subr.bf16.mxu0 %v1024
    %2310 = vmatpush1.bf16.msra.mxu0 %v1023
    %2311 = vmatprep.subr.bf16.mxu0 %v1032
    %2312 = vmatpush1.bf16.msra.mxu0 %v1031
    %2313 = vmatprep.subr.bf16.mxu0 %v1040
    %2314 = vmatpush1.bf16.msra.mxu0 %v1039
    %2315 = vmatprep.subr.bf16.mxu0 %v1048
    %2316 = vmatpush1.bf16.msra.mxu0 %v1047
    %2317 = vmatprep.subr.bf16.mxu0 %v1056
    %2318 = vmatpush1.bf16.msra.mxu0 %v1055
    %2319 = vmatprep.subr.bf16.mxu0 %v1064
    %2320 = vmatpush1.bf16.msra.mxu0 %v1063
    %2321 = vmatprep.subr.bf16.mxu0 %v1072
    %2322 = vmatpush1.bf16.msra.mxu0 %v1071
    %2323 = vmatprep.mubr.bf16.mxu0 %v1246
    %2324 = vmatmul.mubr.bf16.gmra.mrb[0].mxu0 %v1245
    %v2325 = vpop.f32.mrb[0].mxu0
    %v2326 = vadd.f32 %v2285, %v2325
    %v2327 = vpop.f32.mrb[0].mxu0
    %v2328 = vadd.f32 %v2287, %v2327
    %v2329 = vpop.f32.mrb[0].mxu0
    %v2330 = vpop.f32.mrb[0].mxu0
    %2331 = vdwg.mxu0
    %2332 = vmatprep.subr.bf16.mxu0 %v1080
    %2333 = vmatpush1.bf16.msra.mxu0 %v1079
    %2334 = vmatprep.subr.bf16.mxu0 %v1088
    %2335 = vmatpush1.bf16.msra.mxu0 %v1087
    %2336 = vmatprep.subr.bf16.mxu0 %v1096
    %2337 = vmatpush1.bf16.msra.mxu0 %v1095
    %2338 = vmatprep.subr.bf16.mxu0 %v1104
    %2339 = vmatpush1.bf16.msra.mxu0 %v1103
    %2340 = vmatprep.subr.bf16.mxu0 %v1112
    %2341 = vmatpush1.bf16.msra.mxu0 %v1111
    %2342 = vmatprep.subr.bf16.mxu0 %v1120
    %2343 = vmatpush1.bf16.msra.mxu0 %v1119
    %2344 = vmatprep.subr.bf16.mxu0 %v1128
    %2345 = vmatpush1.bf16.msra.mxu0 %v1127
    %2346 = vmatprep.subr.bf16.mxu0 %v1136
    %2347 = vmatpush1.bf16.msra.mxu0 %v1135
    %2348 = vmatprep.subr.bf16.mxu0 %v1144
    %2349 = vmatpush1.bf16.msra.mxu0 %v1143
    %2350 = vmatprep.subr.bf16.mxu0 %v1152
    %2351 = vmatpush1.bf16.msra.mxu0 %v1151
    %2352 = vmatprep.subr.bf16.mxu0 %v1160
    %2353 = vmatpush1.bf16.msra.mxu0 %v1159
    %2354 = vmatprep.subr.bf16.mxu0 %v1168
    %2355 = vmatpush1.bf16.msra.mxu0 %v1167
    %2356 = vmatprep.subr.bf16.mxu0 %v1176
    %2357 = vmatpush1.bf16.msra.mxu0 %v1175
    %2358 = vmatprep.subr.bf16.mxu0 %v1184
    %2359 = vmatpush1.bf16.msra.mxu0 %v1183
    %2360 = vmatprep.subr.bf16.mxu0 %v1192
    %2361 = vmatpush1.bf16.msra.mxu0 %v1191
    %2362 = vmatprep.subr.bf16.mxu0 %v1200
    %2363 = vmatpush1.bf16.msra.mxu0 %v1199
    %2364 = vmatprep.mubr.bf16.mxu0 %v1248
    %2365 = vmatmul.mubr.bf16.gmra.mrb[0].mxu0 %v1247
    %v2366 = vpop.f32.mrb[0].mxu0
    %v2367 = vadd.f32 %v2326, %v2366
    %v2368 = vpop.f32.mrb[0].mxu0
    %v2369 = vadd.f32 %v2328, %v2368
    %v2370 = vpop.f32.mrb[0].mxu0
    %v2371 = vpop.f32.mrb[0].mxu0
    %2372 = vdwg.mxu0
    %2373 = vmatprep.subr.bf16.mxu0 %v1208
    %2374 = vmatpush1.bf16.msra.mxu0 %v1207
    %2375 = vmatprep.subr.bf16.mxu0 %v1216
    %2376 = vmatpush1.bf16.msra.mxu0 %v1215
    %2377 = vmatprep.subr.bf16.mxu0 0
    %2378 = vmatpush1.bf16.msra.mxu0 0
    %2379 = vmatprep.subr.bf16.mxu0 0
    %2380 = vmatpush1.bf16.msra.mxu0 0
    %2381 = vmatprep.subr.bf16.mxu0 0
    %2382 = vmatpush1.bf16.msra.mxu0 0
    %2383 = vmatprep.subr.bf16.mxu0 0
    %2384 = vmatpush1.bf16.msra.mxu0 0
    %2385 = vmatprep.subr.bf16.mxu0 0
    %2386 = vmatpush1.bf16.msra.mxu0 0
    %2387 = vmatprep.subr.bf16.mxu0 0
    %2388 = vmatpush1.bf16.msra.mxu0 0
    %2389 = vmatprep.subr.bf16.mxu0 0
    %2390 = vmatpush1.bf16.msra.mxu0 0
    %2391 = vmatprep.subr.bf16.mxu0 0
    %2392 = vmatpush1.bf16.msra.mxu0 0
    %2393 = vmatprep.subr.bf16.mxu0 0
    %2394 = vmatpush1.bf16.msra.mxu0 0
    %2395 = vmatprep.subr.bf16.mxu0 0
    %2396 = vmatpush1.bf16.msra.mxu0 0
    %2397 = vmatprep.subr.bf16.mxu0 0
    %2398 = vmatpush1.bf16.msra.mxu0 0
    %2399 = vmatprep.subr.bf16.mxu0 0
    %2400 = vmatpush1.bf16.msra.mxu0 0
    %2401 = vmatprep.subr.bf16.mxu0 0
    %2402 = vmatpush1.bf16.msra.mxu0 0
    %2403 = vmatprep.subr.bf16.mxu0 0
    %2404 = vmatpush1.bf16.msra.mxu0 0
    %2405 = vmatprep.mubr.bf16.mxu0 0
    %2406 = vmatmul.mubr.bf16.gmra.mrb[0].mxu0 %v1264
    %v2407 = vpop.f32.mrb[0].mxu0
    %v2408 = vadd.f32 %v2367, %v2407
    %v2409 = vpop.f32.mrb[0].mxu0
    %v2410 = vadd.f32 %v2369, %v2409
    %v2411 = vpop.f32.mrb[0].mxu0
    %v2412 = vpop.f32.mrb[0].mxu0
    %2413 = vdwg.mxu0
    %v2414 = vld [vmem:[%s2] sm:$0xff]
    %v2416 = vlaneseq
    %v2417 = vshrl.u32 %v2416, 7
    %v2418 = vsub.s32 0, %v2417
    %v2419 = vrot.slane %v2414, %v2418
    %v2420 = vlaneseq
    %v2421 = vshrl.u32 %v2420, 7
    %v2422 = vsub.s32 1, %v2421
    %v2423 = vrot.slane %v2414, %v2422
    %v2424 = vlaneseq
    %v2425 = vshrl.u32 %v2424, 7
    %v2426 = vsub.s32 2, %v2425
    %v2427 = vrot.slane %v2414, %v2426
    %v2428 = vlaneseq
    %v2429 = vshrl.u32 %v2428, 7
    %v2430 = vsub.s32 3, %v2429
    %v2431 = vrot.slane %v2414, %v2430
    %v2432 = vlaneseq
    %v2433 = vshrl.u32 %v2432, 7
    %v2434 = vsub.s32 4, %v2433
    %v2435 = vrot.slane %v2414, %v2434
    %v2436 = vlaneseq
    %v2437 = vshrl.u32 %v2436, 7
    %v2438 = vsub.s32 5, %v2437
    %v2439 = vrot.slane %v2414, %v2438
    %v2440 = vlaneseq
    %v2441 = vshrl.u32 %v2440, 7
    %v2442 = vsub.s32 6, %v2441
    %v2443 = vrot.slane %v2414, %v2442
    %v2444 = vlaneseq
    %v2445 = vshrl.u32 %v2444, 7
    %v2446 = vsub.s32 7, %v2445
    %v2447 = vrot.slane %v2414, %v2446
    %v2456 = vmul.f32 %v1547, %v2419
    %v2457 = vmul.f32 %v1549, %v2423
    %v2458 = vmul.f32 %v1834, %v2427
    %v2459 = vmul.f32 %v1836, %v2431
    %v2460 = vmul.f32 %v2121, %v2435
    %v2461 = vmul.f32 %v2123, %v2439
    %v2462 = vmul.f32 %v2408, %v2443
    %v2463 = vmul.f32 %v2410, %v2447
    %v2464 = vld [vmem:[%s3] sm:$0xff]
    %v2466 = vlaneseq
    %v2467 = vshrl.u32 %v2466, 7
    %v2468 = vsub.s32 0, %v2467
    %v2469 = vrot.slane %v2464, %v2468
    %v2470 = vlaneseq
    %v2471 = vshrl.u32 %v2470, 7
    %v2472 = vsub.s32 1, %v2471
    %v2473 = vrot.slane %v2464, %v2472
    %v2474 = vlaneseq
    %v2475 = vshrl.u32 %v2474, 7
    %v2476 = vsub.s32 2, %v2475
    %v2477 = vrot.slane %v2464, %v2476
    %v2478 = vlaneseq
    %v2479 = vshrl.u32 %v2478, 7
    %v2480 = vsub.s32 3, %v2479
    %v2481 = vrot.slane %v2464, %v2480
    %v2482 = vlaneseq
    %v2483 = vshrl.u32 %v2482, 7
    %v2484 = vsub.s32 4, %v2483
    %v2485 = vrot.slane %v2464, %v2484
    %v2486 = vlaneseq
    %v2487 = vshrl.u32 %v2486, 7
    %v2488 = vsub.s32 5, %v2487
    %v2489 = vrot.slane %v2464, %v2488
    %v2490 = vlaneseq
    %v2491 = vshrl.u32 %v2490, 7
    %v2492 = vsub.s32 6, %v2491
    %v2493 = vrot.slane %v2464, %v2492
    %v2494 = vlaneseq
    %v2495 = vshrl.u32 %v2494, 7
    %v2496 = vsub.s32 7, %v2495
    %v2497 = vrot.slane %v2464, %v2496
    %v2506 = vadd.f32 %v2456, %v2469
    %v2507 = vadd.f32 %v2457, %v2473
    %v2508 = vadd.f32 %v2458, %v2477
    %v2509 = vadd.f32 %v2459, %v2481
    %v2510 = vadd.f32 %v2460, %v2485
    %v2511 = vadd.f32 %v2461, %v2489
    %v2512 = vadd.f32 %v2462, %v2493
    %v2513 = vadd.f32 %v2463, %v2497
    %v2514 = vmax.f32 %v2506, 0.0
    %v2515 = vmax.f32 %v2507, 0.0
    %v2516 = vmax.f32 %v2508, 0.0
    %v2517 = vmax.f32 %v2509, 0.0
    %v2518 = vmax.f32 %v2510, 0.0
    %v2519 = vmax.f32 %v2511, 0.0
    %v2520 = vmax.f32 %v2512, 0.0
    %v2521 = vmax.f32 %v2513, 0.0
    %v2522 = vpack.c.bf16 %v2514, %v2514
    %v2523 = vpack.c.bf16 %v2515, %v2515
    %v2524 = vpack.c.bf16 %v2516, %v2516
    %v2525 = vpack.c.bf16 %v2517, %v2517
    %v2526 = vpack.c.bf16 %v2518, %v2518
    %v2527 = vpack.c.bf16 %v2519, %v2519
    %v2528 = vpack.c.bf16 %v2520, %v2520
    %v2529 = vpack.c.bf16 %v2521, %v2521
    %v2530 = vld [vmem:[%s4] sm:$0xff]
    %v2531 = vld [vmem:[%s4 + $0x8] sm:$0xff]
    %v2532 = vld [vmem:[%s4 + $0x10] sm:$0xff]
    %v2533 = vld [vmem:[%s4 + $0x18] sm:$0xff]
    %v2534 = vld [vmem:[%s4 + $0x20] sm:$0xff]
    %v2535 = vld [vmem:[%s4 + $0x28] sm:$0xff]
    %v2536 = vld [vmem:[%s4 + $0x30] sm:$0xff]
    %v2537 = vld [vmem:[%s4 + $0x38] sm:$0xff]
    %v2538 = vld [vmem:[%s4 + $0x40] sm:$0xff]
    %v2539 = vld [vmem:[%s4 + $0x48] sm:$0xff]
    %v2540 = vld [vmem:[%s4 + $0x50] sm:$0xff]
    %v2541 = vld [vmem:[%s4 + $0x58] sm:$0xff]
    %v2542 = vld [vmem:[%s4 + $0x60] sm:$0xff]
    %v2543 = vld [vmem:[%s4 + $0x68] sm:$0xff]
    %v2544 = vld [vmem:[%s4 + $0x70] sm:$0xff]
    %v2545 = vld [vmem:[%s4 + $0x78] sm:$0xff]
    %v2546 = vld [vmem:[%s4 + $0x80] sm:$0xff]
    %v2547 = vld [vmem:[%s4 + $0x88] sm:$0xff]
    %v2548 = vld [vmem:[%s4 + $0x90] sm:$0xff]
    %v2549 = vld [vmem:[%s4 + $0x98] sm:$0xff]
    %v2550 = vld [vmem:[%s4 + $0xa0] sm:$0xff]
    %v2551 = vld [vmem:[%s4 + $0xa8] sm:$0xff]
    %v2552 = vld [vmem:[%s4 + $0xb0] sm:$0xff]
    %v2553 = vld [vmem:[%s4 + $0xb8] sm:$0xff]
    %v2554 = vld [vmem:[%s4 + $0xc0] sm:$0xff]
    %v2555 = vld [vmem:[%s4 + $0xc8] sm:$0xff]
    %v2556 = vld [vmem:[%s4 + $0xd0] sm:$0xff]
    %v2557 = vld [vmem:[%s4 + $0xd8] sm:$0xff]
    %v2558 = vld [vmem:[%s4 + $0xe0] sm:$0xff]
    %v2559 = vld [vmem:[%s4 + $0xe8] sm:$0xff]
    %v2560 = vld [vmem:[%s4 + $0xf0] sm:$0xff]
    %v2561 = vld [vmem:[%s4 + $0xf8] sm:$0xff]
    %v2562 = vld [vmem:[%s4 + $0x100] sm:$0xff]
    %v2563 = vld [vmem:[%s4 + $0x108] sm:$0xff]
    %v2564 = vld [vmem:[%s4 + $0x110] sm:$0xff]
    %v2565 = vld [vmem:[%s4 + $0x118] sm:$0xff]
    %v2566 = vld [vmem:[%s4 + $0x120] sm:$0xff]
    %v2567 = vld [vmem:[%s4 + $0x128] sm:$0xff]
    %v2568 = vld [vmem:[%s4 + $0x130] sm:$0xff]
    %v2569 = vld [vmem:[%s4 + $0x138] sm:$0xff]
    %v2570 = vld [vmem:[%s4 + $0x140] sm:$0xff]
    %v2571 = vld [vmem:[%s4 + $0x148] sm:$0xff]
    %v2572 = vld [vmem:[%s4 + $0x150] sm:$0xff]
    %v2573 = vld [vmem:[%s4 + $0x158] sm:$0xff]
    %v2574 = vld [vmem:[%s4 + $0x160] sm:$0xff]
    %v2575 = vld [vmem:[%s4 + $0x168] sm:$0xff]
    %v2576 = vld [vmem:[%s4 + $0x170] sm:$0xff]
    %v2577 = vld [vmem:[%s4 + $0x178] sm:$0xff]
    %v2578 = vld [vmem:[%s4 + $0x180] sm:$0xff]
    %v2579 = vld [vmem:[%s4 + $0x188] sm:$0xff]
    %v2580 = vld [vmem:[%s4 + $0x190] sm:$0xff]
    %v2581 = vld [vmem:[%s4 + $0x198] sm:$0xff]
    %v2582 = vld [vmem:[%s4 + $0x1a0] sm:$0xff]
    %v2583 = vld [vmem:[%s4 + $0x1a8] sm:$0xff]
    %v2584 = vld [vmem:[%s4 + $0x1b0] sm:$0xff]
    %v2585 = vld [vmem:[%s4 + $0x1b8] sm:$0xff]
    %v2586 = vld [vmem:[%s4 + $0x1c0] sm:$0xff]
    %v2587 = vld [vmem:[%s4 + $0x1c8] sm:$0xff]
    %v2588 = vld [vmem:[%s4 + $0x1d0] sm:$0xff]
    %v2589 = vld [vmem:[%s4 + $0x1d8] sm:$0xff]
    %v2590 = vld [vmem:[%s4 + $0x1e0] sm:$0xff]
    %v2591 = vld [vmem:[%s4 + $0x1e8] sm:$0xff]
    %v2592 = vld [vmem:[%s4 + $0x1f0] sm:$0xff]
    %v2593 = vld [vmem:[%s4 + $0x1f8] sm:$0xff]
    %v2594 = vld [vmem:[%s4 + $0x200] sm:$0xff]
    %v2595 = vld [vmem:[%s4 + $0x208] sm:$0xff]
    %v2596 = vld [vmem:[%s4 + $0x210] sm:$0xff]
    %v2597 = vld [vmem:[%s4 + $0x218] sm:$0xff]
    %v2598 = vld [vmem:[%s4 + $0x220] sm:$0xff]
    %v2599 = vld [vmem:[%s4 + $0x228] sm:$0xff]
    %v2600 = vld [vmem:[%s4 + $0x230] sm:$0xff]
    %v2601 = vld [vmem:[%s4 + $0x238] sm:$0xff]
    %v2602 = vld [vmem:[%s4 + $0x240] sm:$0xff]
    %v2603 = vld [vmem:[%s4 + $0x248] sm:$0xff]
    %v2604 = vld [vmem:[%s4 + $0x250] sm:$0xff]
    %v2605 = vld [vmem:[%s4 + $0x258] sm:$0xff]
    %v2606 = vld [vmem:[%s4 + $0x260] sm:$0xff]
    %v2607 = vld [vmem:[%s4 + $0x268] sm:$0xff]
    %v2608 = vld [vmem:[%s4 + $0x270] sm:$0xff]
    %v2609 = vld [vmem:[%s4 + $0x278] sm:$0xff]
    %v2610 = vld [vmem:[%s4 + $0x280] sm:$0xff]
    %v2611 = vld [vmem:[%s4 + $0x288] sm:$0xff]
    %v2612 = vld [vmem:[%s4 + $0x290] sm:$0xff]
    %v2613 = vld [vmem:[%s4 + $0x298] sm:$0xff]
    %v2614 = vld [vmem:[%s4 + $0x2a0] sm:$0xff]
    %v2615 = vld [vmem:[%s4 + $0x2a8] sm:$0xff]
    %v2616 = vld [vmem:[%s4 + $0x2b0] sm:$0xff]
    %v2617 = vld [vmem:[%s4 + $0x2b8] sm:$0xff]
    %v2618 = vld [vmem:[%s4 + $0x2c0] sm:$0xff]
    %v2619 = vld [vmem:[%s4 + $0x2c8] sm:$0xff]
    %v2620 = vld [vmem:[%s4 + $0x2d0] sm:$0xff]
    %v2621 = vld [vmem:[%s4 + $0x2d8] sm:$0xff]
    %v2622 = vld [vmem:[%s4 + $0x2e0] sm:$0xff]
    %v2623 = vld [vmem:[%s4 + $0x2e8] sm:$0xff]
    %v2624 = vld [vmem:[%s4 + $0x2f0] sm:$0xff]
    %v2625 = vld [vmem:[%s4 + $0x2f8] sm:$0xff]
    %v2626 = vld [vmem:[%s4 + $0x300] sm:$0xff]
    %v2627 = vld [vmem:[%s4 + $0x308] sm:$0xff]
    %v2628 = vld [vmem:[%s4 + $0x310] sm:$0xff]
    %v2629 = vld [vmem:[%s4 + $0x318] sm:$0xff]
    %v2630 = vld [vmem:[%s4 + $0x320] sm:$0xff]
    %v2631 = vld [vmem:[%s4 + $0x328] sm:$0xff]
    %v2632 = vld [vmem:[%s4 + $0x330] sm:$0xff]
    %v2633 = vld [vmem:[%s4 + $0x338] sm:$0xff]
    %v2634 = vld [vmem:[%s4 + $0x340] sm:$0xff]
    %v2635 = vld [vmem:[%s4 + $0x348] sm:$0xff]
    %v2636 = vld [vmem:[%s4 + $0x350] sm:$0xff]
    %v2637 = vld [vmem:[%s4 + $0x358] sm:$0xff]
    %v2638 = vld [vmem:[%s4 + $0x360] sm:$0xff]
    %v2639 = vld [vmem:[%s4 + $0x368] sm:$0xff]
    %v2640 = vld [vmem:[%s4 + $0x370] sm:$0xff]
    %v2641 = vld [vmem:[%s4 + $0x378] sm:$0xff]
    %v2642 = vld [vmem:[%s4 + $0x380] sm:$0xff]
    %v2643 = vld [vmem:[%s4 + $0x388] sm:$0xff]
    %v2644 = vld [vmem:[%s4 + $0x390] sm:$0xff]
    %v2645 = vld [vmem:[%s4 + $0x398] sm:$0xff]
    %v2646 = vld [vmem:[%s4 + $0x3a0] sm:$0xff]
    %v2647 = vld [vmem:[%s4 + $0x3a8] sm:$0xff]
    %v2648 = vld [vmem:[%s4 + $0x3b0] sm:$0xff]
    %v2649 = vld [vmem:[%s4 + $0x3b8] sm:$0xff]
    %v2650 = vld [vmem:[%s4 + $0x3c0] sm:$0xff]
    %v2651 = vld [vmem:[%s4 + $0x3c8] sm:$0xff]
    %v2652 = vld [vmem:[%s4 + $0x3d0] sm:$0xff]
    %v2653 = vld [vmem:[%s4 + $0x3d8] sm:$0xff]
    %v2654 = vld [vmem:[%s4 + $0x3e0] sm:$0xff]
    %v2655 = vld [vmem:[%s4 + $0x3e8] sm:$0xff]
    %v2656 = vld [vmem:[%s4 + $0x3f0] sm:$0xff]
    %v2657 = vld [vmem:[%s4 + $0x3f8] sm:$0xff]
    %v2658 = vunpack.c.l.s8.bf16 %v2530
    %v2659 = vunpack.c.l.s8.bf16 %v2531
    %v2660 = vunpack.c.l.s8.bf16 %v2532
    %v2661 = vunpack.c.l.s8.bf16 %v2533
    %v2662 = vunpack.c.h.s8.bf16 %v2530
    %v2663 = vunpack.c.h.s8.bf16 %v2531
    %v2664 = vunpack.c.h.s8.bf16 %v2532
    %v2665 = vunpack.c.h.s8.bf16 %v2533
    %v2666 = vunpack.c.l.s8.bf16 %v2534
    %v2667 = vunpack.c.l.s8.bf16 %v2535
    %v2668 = vunpack.c.l.s8.bf16 %v2536
    %v2669 = vunpack.c.l.s8.bf16 %v2537
    %v2670 = vunpack.c.h.s8.bf16 %v2534
    %v2671 = vunpack.c.h.s8.bf16 %v2535
    %v2672 = vunpack.c.h.s8.bf16 %v2536
    %v2673 = vunpack.c.h.s8.bf16 %v2537
    %v2674 = vunpack.c.l.s8.bf16 %v2538
    %v2675 = vunpack.c.l.s8.bf16 %v2539
    %v2676 = vunpack.c.l.s8.bf16 %v2540
    %v2677 = vunpack.c.l.s8.bf16 %v2541
    %v2678 = vunpack.c.h.s8.bf16 %v2538
    %v2679 = vunpack.c.h.s8.bf16 %v2539
    %v2680 = vunpack.c.h.s8.bf16 %v2540
    %v2681 = vunpack.c.h.s8.bf16 %v2541
    %v2682 = vunpack.c.l.s8.bf16 %v2542
    %v2683 = vunpack.c.l.s8.bf16 %v2543
    %v2684 = vunpack.c.l.s8.bf16 %v2544
    %v2685 = vunpack.c.l.s8.bf16 %v2545
    %v2686 = vunpack.c.h.s8.bf16 %v2542
    %v2687 = vunpack.c.h.s8.bf16 %v2543
    %v2688 = vunpack.c.h.s8.bf16 %v2544
    %v2689 = vunpack.c.h.s8.bf16 %v2545
    %v2690 = vunpack.c.l.s8.bf16 %v2546
    %v2691 = vunpack.c.l.s8.bf16 %v2547
    %v2692 = vunpack.c.l.s8.bf16 %v2548
    %v2693 = vunpack.c.l.s8.bf16 %v2549
    %v2694 = vunpack.c.h.s8.bf16 %v2546
    %v2695 = vunpack.c.h.s8.bf16 %v2547
    %v2696 = vunpack.c.h.s8.bf16 %v2548
    %v2697 = vunpack.c.h.s8.bf16 %v2549
    %v2698 = vunpack.c.l.s8.bf16 %v2550
    %v2699 = vunpack.c.l.s8.bf16 %v2551
    %v2700 = vunpack.c.l.s8.bf16 %v2552
    %v2701 = vunpack.c.l.s8.bf16 %v2553
    %v2702 = vunpack.c.h.s8.bf16 %v2550
    %v2703 = vunpack.c.h.s8.bf16 %v2551
    %v2704 = vunpack.c.h.s8.bf16 %v2552
    %v2705 = vunpack.c.h.s8.bf16 %v2553
    %v2706 = vunpack.c.l.s8.bf16 %v2554
    %v2707 = vunpack.c.l.s8.bf16 %v2555
    %v2708 = vunpack.c.l.s8.bf16 %v2556
    %v2709 = vunpack.c.l.s8.bf16 %v2557
    %v2710 = vunpack.c.h.s8.bf16 %v2554
    %v2711 = vunpack.c.h.s8.bf16 %v2555
    %v2712 = vunpack.c.h.s8.bf16 %v2556
    %v2713 = vunpack.c.h.s8.bf16 %v2557
    %v2714 = vunpack.c.l.s8.bf16 %v2558
    %v2715 = vunpack.c.l.s8.bf16 %v2559
    %v2716 = vunpack.c.l.s8.bf16 %v2560
    %v2717 = vunpack.c.l.s8.bf16 %v2561
    %v2718 = vunpack.c.h.s8.bf16 %v2558
    %v2719 = vunpack.c.h.s8.bf16 %v2559
    %v2720 = vunpack.c.h.s8.bf16 %v2560
    %v2721 = vunpack.c.h.s8.bf16 %v2561
    %v2722 = vunpack.c.l.s8.bf16 %v2562
    %v2723 = vunpack.c.l.s8.bf16 %v2563
    %v2724 = vunpack.c.l.s8.bf16 %v2564
    %v2725 = vunpack.c.l.s8.bf16 %v2565
    %v2726 = vunpack.c.h.s8.bf16 %v2562
    %v2727 = vunpack.c.h.s8.bf16 %v2563
    %v2728 = vunpack.c.h.s8.bf16 %v2564
    %v2729 = vunpack.c.h.s8.bf16 %v2565
    %v2730 = vunpack.c.l.s8.bf16 %v2566
    %v2731 = vunpack.c.l.s8.bf16 %v2567
    %v2732 = vunpack.c.l.s8.bf16 %v2568
    %v2733 = vunpack.c.l.s8.bf16 %v2569
    %v2734 = vunpack.c.h.s8.bf16 %v2566
    %v2735 = vunpack.c.h.s8.bf16 %v2567
    %v2736 = vunpack.c.h.s8.bf16 %v2568
    %v2737 = vunpack.c.h.s8.bf16 %v2569
    %v2738 = vunpack.c.l.s8.bf16 %v2570
    %v2739 = vunpack.c.l.s8.bf16 %v2571
    %v2740 = vunpack.c.l.s8.bf16 %v2572
    %v2741 = vunpack.c.l.s8.bf16 %v2573
    %v2742 = vunpack.c.h.s8.bf16 %v2570
    %v2743 = vunpack.c.h.s8.bf16 %v2571
    %v2744 = vunpack.c.h.s8.bf16 %v2572
    %v2745 = vunpack.c.h.s8.bf16 %v2573
    %v2746 = vunpack.c.l.s8.bf16 %v2574
    %v2747 = vunpack.c.l.s8.bf16 %v2575
    %v2748 = vunpack.c.l.s8.bf16 %v2576
    %v2749 = vunpack.c.l.s8.bf16 %v2577
    %v2750 = vunpack.c.h.s8.bf16 %v2574
    %v2751 = vunpack.c.h.s8.bf16 %v2575
    %v2752 = vunpack.c.h.s8.bf16 %v2576
    %v2753 = vunpack.c.h.s8.bf16 %v2577
    %v2754 = vunpack.c.l.s8.bf16 %v2578
    %v2755 = vunpack.c.l.s8.bf16 %v2579
    %v2756 = vunpack.c.l.s8.bf16 %v2580
    %v2757 = vunpack.c.l.s8.bf16 %v2581
    %v2758 = vunpack.c.h.s8.bf16 %v2578
    %v2759 = vunpack.c.h.s8.bf16 %v2579
    %v2760 = vunpack.c.h.s8.bf16 %v2580
    %v2761 = vunpack.c.h.s8.bf16 %v2581
    %v2762 = vunpack.c.l.s8.bf16 %v2582
    %v2763 = vunpack.c.l.s8.bf16 %v2583
    %v2764 = vunpack.c.l.s8.bf16 %v2584
    %v2765 = vunpack.c.l.s8.bf16 %v2585
    %v2766 = vunpack.c.h.s8.bf16 %v2582
    %v2767 = vunpack.c.h.s8.bf16 %v2583
    %v2768 = vunpack.c.h.s8.bf16 %v2584
    %v2769 = vunpack.c.h.s8.bf16 %v2585
    %v2770 = vunpack.c.l.s8.bf16 %v2586
    %v2771 = vunpack.c.l.s8.bf16 %v2587
    %v2772 = vunpack.c.l.s8.bf16 %v2588
    %v2773 = vunpack.c.l.s8.bf16 %v2589
    %v2774 = vunpack.c.h.s8.bf16 %v2586
    %v2775 = vunpack.c.h.s8.bf16 %v2587
    %v2776 = vunpack.c.h.s8.bf16 %v2588
    %v2777 = vunpack.c.h.s8.bf16 %v2589
    %v2778 = vunpack.c.l.s8.bf16 %v2590
    %v2779 = vunpack.c.l.s8.bf16 %v2591
    %v2780 = vunpack.c.l.s8.bf16 %v2592
    %v2781 = vunpack.c.l.s8.bf16 %v2593
    %v2782 = vunpack.c.h.s8.bf16 %v2590
    %v2783 = vunpack.c.h.s8.bf16 %v2591
    %v2784 = vunpack.c.h.s8.bf16 %v2592
    %v2785 = vunpack.c.h.s8.bf16 %v2593
    %v2786 = vunpack.c.l.s8.bf16 %v2594
    %v2787 = vunpack.c.l.s8.bf16 %v2595
    %v2788 = vunpack.c.l.s8.bf16 %v2596
    %v2789 = vunpack.c.l.s8.bf16 %v2597
    %v2790 = vunpack.c.h.s8.bf16 %v2594
    %v2791 = vunpack.c.h.s8.bf16 %v2595
    %v2792 = vunpack.c.h.s8.bf16 %v2596
    %v2793 = vunpack.c.h.s8.bf16 %v2597
    %v2794 = vunpack.c.l.s8.bf16 %v2598
    %v2795 = vunpack.c.l.s8.bf16 %v2599
    %v2796 = vunpack.c.l.s8.bf16 %v2600
    %v2797 = vunpack.c.l.s8.bf16 %v2601
    %v2798 = vunpack.c.h.s8.bf16 %v2598
    %v2799 = vunpack.c.h.s8.bf16 %v2599
    %v2800 = vunpack.c.h.s8.bf16 %v2600
    %v2801 = vunpack.c.h.s8.bf16 %v2601
    %v2802 = vunpack.c.l.s8.bf16 %v2602
    %v2803 = vunpack.c.l.s8.bf16 %v2603
    %v2804 = vunpack.c.l.s8.bf16 %v2604
    %v2805 = vunpack.c.l.s8.bf16 %v2605
    %v2806 = vunpack.c.h.s8.bf16 %v2602
    %v2807 = vunpack.c.h.s8.bf16 %v2603
    %v2808 = vunpack.c.h.s8.bf16 %v2604
    %v2809 = vunpack.c.h.s8.bf16 %v2605
    %v2810 = vunpack.c.l.s8.bf16 %v2606
    %v2811 = vunpack.c.l.s8.bf16 %v2607
    %v2812 = vunpack.c.l.s8.bf16 %v2608
    %v2813 = vunpack.c.l.s8.bf16 %v2609
    %v2814 = vunpack.c.h.s8.bf16 %v2606
    %v2815 = vunpack.c.h.s8.bf16 %v2607
    %v2816 = vunpack.c.h.s8.bf16 %v2608
    %v2817 = vunpack.c.h.s8.bf16 %v2609
    %v2818 = vunpack.c.l.s8.bf16 %v2610
    %v2819 = vunpack.c.l.s8.bf16 %v2611
    %v2820 = vunpack.c.l.s8.bf16 %v2612
    %v2821 = vunpack.c.l.s8.bf16 %v2613
    %v2822 = vunpack.c.h.s8.bf16 %v2610
    %v2823 = vunpack.c.h.s8.bf16 %v2611
    %v2824 = vunpack.c.h.s8.bf16 %v2612
    %v2825 = vunpack.c.h.s8.bf16 %v2613
    %v2826 = vunpack.c.l.s8.bf16 %v2614
    %v2827 = vunpack.c.l.s8.bf16 %v2615
    %v2828 = vunpack.c.l.s8.bf16 %v2616
    %v2829 = vunpack.c.l.s8.bf16 %v2617
    %v2830 = vunpack.c.h.s8.bf16 %v2614
    %v2831 = vunpack.c.h.s8.bf16 %v2615
    %v2832 = vunpack.c.h.s8.bf16 %v2616
    %v2833 = vunpack.c.h.s8.bf16 %v2617
    %v2834 = vunpack.c.l.s8.bf16 %v2618
    %v2835 = vunpack.c.l.s8.bf16 %v2619
    %v2836 = vunpack.c.l.s8.bf16 %v2620
    %v2837 = vunpack.c.l.s8.bf16 %v2621
    %v2838 = vunpack.c.h.s8.bf16 %v2618
    %v2839 = vunpack.c.h.s8.bf16 %v2619
    %v2840 = vunpack.c.h.s8.bf16 %v2620
    %v2841 = vunpack.c.h.s8.bf16 %v2621
    %v2842 = vunpack.c.l.s8.bf16 %v2622
    %v2843 = vunpack.c.l.s8.bf16 %v2623
    %v2844 = vunpack.c.l.s8.bf16 %v2624
    %v2845 = vunpack.c.l.s8.bf16 %v2625
    %v2846 = vunpack.c.h.s8.bf16 %v2622
    %v2847 = vunpack.c.h.s8.bf16 %v2623
    %v2848 = vunpack.c.h.s8.bf16 %v2624
    %v2849 = vunpack.c.h.s8.bf16 %v2625
    %v2850 = vunpack.c.l.s8.bf16 %v2626
    %v2851 = vunpack.c.l.s8.bf16 %v2627
    %v2852 = vunpack.c.l.s8.bf16 %v2628
    %v2853 = vunpack.c.l.s8.bf16 %v2629
    %v2854 = vunpack.c.h.s8.bf16 %v2626
    %v2855 = vunpack.c.h.s8.bf16 %v2627
    %v2856 = vunpack.c.h.s8.bf16 %v2628
    %v2857 = vunpack.c.h.s8.bf16 %v2629
    %v2858 = vunpack.c.l.s8.bf16 %v2630
    %v2859 = vunpack.c.l.s8.bf16 %v2631
    %v2860 = vunpack.c.l.s8.bf16 %v2632
    %v2861 = vunpack.c.l.s8.bf16 %v2633
    %v2862 = vunpack.c.h.s8.bf16 %v2630
    %v2863 = vunpack.c.h.s8.bf16 %v2631
    %v2864 = vunpack.c.h.s8.bf16 %v2632
    %v2865 = vunpack.c.h.s8.bf16 %v2633
    %v2866 = vunpack.c.l.s8.bf16 %v2634
    %v2867 = vunpack.c.l.s8.bf16 %v2635
    %v2868 = vunpack.c.l.s8.bf16 %v2636
    %v2869 = vunpack.c.l.s8.bf16 %v2637
    %v2870 = vunpack.c.h.s8.bf16 %v2634
    %v2871 = vunpack.c.h.s8.bf16 %v2635
    %v2872 = vunpack.c.h.s8.bf16 %v2636
    %v2873 = vunpack.c.h.s8.bf16 %v2637
    %v2874 = vunpack.c.l.s8.bf16 %v2638
    %v2875 = vunpack.c.l.s8.bf16 %v2639
    %v2876 = vunpack.c.l.s8.bf16 %v2640
    %v2877 = vunpack.c.l.s8.bf16 %v2641
    %v2878 = vunpack.c.h.s8.bf16 %v2638
    %v2879 = vunpack.c.h.s8.bf16 %v2639
    %v2880 = vunpack.c.h.s8.bf16 %v2640
    %v2881 = vunpack.c.h.s8.bf16 %v2641
    %v2882 = vunpack.c.l.s8.bf16 %v2642
    %v2883 = vunpack.c.l.s8.bf16 %v2643
    %v2884 = vunpack.c.l.s8.bf16 %v2644
    %v2885 = vunpack.c.l.s8.bf16 %v2645
    %v2886 = vunpack.c.h.s8.bf16 %v2642
    %v2887 = vunpack.c.h.s8.bf16 %v2643
    %v2888 = vunpack.c.h.s8.bf16 %v2644
    %v2889 = vunpack.c.h.s8.bf16 %v2645
    %v2890 = vunpack.c.l.s8.bf16 %v2646
    %v2891 = vunpack.c.l.s8.bf16 %v2647
    %v2892 = vunpack.c.l.s8.bf16 %v2648
    %v2893 = vunpack.c.l.s8.bf16 %v2649
    %v2894 = vunpack.c.h.s8.bf16 %v2646
    %v2895 = vunpack.c.h.s8.bf16 %v2647
    %v2896 = vunpack.c.h.s8.bf16 %v2648
    %v2897 = vunpack.c.h.s8.bf16 %v2649
    %v2898 = vunpack.c.l.s8.bf16 %v2650
    %v2899 = vunpack.c.l.s8.bf16 %v2651
    %v2900 = vunpack.c.l.s8.bf16 %v2652
    %v2901 = vunpack.c.l.s8.bf16 %v2653
    %v2902 = vunpack.c.h.s8.bf16 %v2650
    %v2903 = vunpack.c.h.s8.bf16 %v2651
    %v2904 = vunpack.c.h.s8.bf16 %v2652
    %v2905 = vunpack.c.h.s8.bf16 %v2653
    %v2906 = vunpack.c.l.s8.bf16 %v2654
    %v2907 = vunpack.c.l.s8.bf16 %v2655
    %v2908 = vunpack.c.l.s8.bf16 %v2656
    %v2909 = vunpack.c.l.s8.bf16 %v2657
    %v2910 = vunpack.c.h.s8.bf16 %v2654
    %v2911 = vunpack.c.h.s8.bf16 %v2655
    %v2912 = vunpack.c.h.s8.bf16 %v2656
    %v2913 = vunpack.c.h.s8.bf16 %v2657
    %2914 = vmatprep.subr.bf16.mxu0 %v2659
    %2915 = vmatpush1.bf16.msra.mxu0 %v2658
    %2916 = vmatprep.subr.bf16.mxu0 %v2663
    %2917 = vmatpush1.bf16.msra.mxu0 %v2662
    %2918 = vmatprep.subr.bf16.mxu0 %v2667
    %2919 = vmatpush1.bf16.msra.mxu0 %v2666
    %2920 = vmatprep.subr.bf16.mxu0 %v2671
    %2921 = vmatpush1.bf16.msra.mxu0 %v2670
    %2922 = vmatprep.subr.bf16.mxu0 %v2675
    %2923 = vmatpush1.bf16.msra.mxu0 %v2674
    %2924 = vmatprep.subr.bf16.mxu0 %v2679
    %2925 = vmatpush1.bf16.msra.mxu0 %v2678
    %2926 = vmatprep.subr.bf16.mxu0 %v2683
    %2927 = vmatpush1.bf16.msra.mxu0 %v2682
    %2928 = vmatprep.subr.bf16.mxu0 %v2687
    %2929 = vmatpush1.bf16.msra.mxu0 %v2686
    %2930 = vmatprep.subr.bf16.mxu0 %v2691
    %2931 = vmatpush1.bf16.msra.mxu0 %v2690
    %2932 = vmatprep.subr.bf16.mxu0 %v2695
    %2933 = vmatpush1.bf16.msra.mxu0 %v2694
    %2934 = vmatprep.subr.bf16.mxu0 %v2699
    %2935 = vmatpush1.bf16.msra.mxu0 %v2698
    %2936 = vmatprep.subr.bf16.mxu0 %v2703
    %2937 = vmatpush1.bf16.msra.mxu0 %v2702
    %2938 = vmatprep.subr.bf16.mxu0 %v2707
    %2939 = vmatpush1.bf16.msra.mxu0 %v2706
    %2940 = vmatprep.subr.bf16.mxu0 %v2711
    %2941 = vmatpush1.bf16.msra.mxu0 %v2710
    %2942 = vmatprep.subr.bf16.mxu0 %v2715
    %2943 = vmatpush1.bf16.msra.mxu0 %v2714
    %2944 = vmatprep.subr.bf16.mxu0 %v2719
    %2945 = vmatpush1.bf16.msra.mxu0 %v2718
    %2946 = vmatprep.mubr.bf16.mxu0 %v2523
    %2947 = vmatmul.mubr.bf16.gmra.mrb[0].mxu0 %v2522
    %v2948 = vpop.f32.mrb[0].mxu0
    %v2949 = vadd.f32 0.0, %v2948
    %v2950 = vpop.f32.mrb[0].mxu0
    %v2951 = vadd.f32 0.0, %v2950
    %v2952 = vpop.f32.mrb[0].mxu0
    %v2953 = vpop.f32.mrb[0].mxu0
    %2954 = vdwg.mxu0
    %2955 = vmatprep.subr.bf16.mxu0 %v2723
    %2956 = vmatpush1.bf16.msra.mxu0 %v2722
    %2957 = vmatprep.subr.bf16.mxu0 %v2727
    %2958 = vmatpush1.bf16.msra.mxu0 %v2726
    %2959 = vmatprep.subr.bf16.mxu0 %v2731
    %2960 = vmatpush1.bf16.msra.mxu0 %v2730
    %2961 = vmatprep.subr.bf16.mxu0 %v2735
    %2962 = vmatpush1.bf16.msra.mxu0 %v2734
    %2963 = vmatprep.subr.bf16.mxu0 %v2739
    %2964 = vmatpush1.bf16.msra.mxu0 %v2738
    %2965 = vmatprep.subr.bf16.mxu0 %v2743
    %2966 = vmatpush1.bf16.msra.mxu0 %v2742
    %2967 = vmatprep.subr.bf16.mxu0 %v2747
    %2968 = vmatpush1.bf16.msra.mxu0 %v2746
    %2969 = vmatprep.subr.bf16.mxu0 %v2751
    %2970 = vmatpush1.bf16.msra.mxu0 %v2750
    %2971 = vmatprep.subr.bf16.mxu0 %v2755
    %2972 = vmatpush1.bf16.msra.mxu0 %v2754
    %2973 = vmatprep.subr.bf16.mxu0 %v2759
    %2974 = vmatpush1.bf16.msra.mxu0 %v2758
    %2975 = vmatprep.subr.bf16.mxu0 %v2763
    %2976 = vmatpush1.bf16.msra.mxu0 %v2762
    %2977 = vmatprep.subr.bf16.mxu0 %v2767
    %2978 = vmatpush1.bf16.msra.mxu0 %v2766
    %2979 = vmatprep.subr.bf16.mxu0 %v2771
    %2980 = vmatpush1.bf16.msra.mxu0 %v2770
    %2981 = vmatprep.subr.bf16.mxu0 %v2775
    %2982 = vmatpush1.bf16.msra.mxu0 %v2774
    %2983 = vmatprep.subr.bf16.mxu0 %v2779
    %2984 = vmatpush1.bf16.msra.mxu0 %v2778
    %2985 = vmatprep.subr.bf16.mxu0 %v2783
    %2986 = vmatpush1.bf16.msra.mxu0 %v2782
    %2987 = vmatprep.mubr.bf16.mxu0 %v2525
    %2988 = vmatmul.mubr.bf16.gmra.mrb[0].mxu0 %v2524
    %v2989 = vpop.f32.mrb[0].mxu0
    %v2990 = vadd.f32 %v2949, %v2989
    %v2991 = vpop.f32.mrb[0].mxu0
    %v2992 = vadd.f32 %v2951, %v2991
    %v2993 = vpop.f32.mrb[0].mxu0
    %v2994 = vpop.f32.mrb[0].mxu0
    %2995 = vdwg.mxu0
    %2996 = vmatprep.subr.bf16.mxu0 %v2787
    %2997 = vmatpush1.bf16.msra.mxu0 %v2786
    %2998 = vmatprep.subr.bf16.mxu0 %v2791
    %2999 = vmatpush1.bf16.msra.mxu0 %v2790
    %3000 = vmatprep.subr.bf16.mxu0 %v2795
    %3001 = vmatpush1.bf16.msra.mxu0 %v2794
    %3002 = vmatprep.subr.bf16.mxu0 %v2799
    %3003 = vmatpush1.bf16.msra.mxu0 %v2798
    %3004 = vmatprep.subr.bf16.mxu0 %v2803
    %3005 = vmatpush1.bf16.msra.mxu0 %v2802
    %3006 = vmatprep.subr.bf16.mxu0 %v2807
    %3007 = vmatpush1.bf16.msra.mxu0 %v2806
    %3008 = vmatprep.subr.bf16.mxu0 %v2811
    %3009 = vmatpush1.bf16.msra.mxu0 %v2810
    %3010 = vmatprep.subr.bf16.mxu0 %v2815
    %3011 = vmatpush1.bf16.msra.mxu0 %v2814
    %3012 = vmatprep.subr.bf16.mxu0 %v2819
    %3013 = vmatpush1.bf16.msra.mxu0 %v2818
    %3014 = vmatprep.subr.bf16.mxu0 %v2823
    %3015 = vmatpush1.bf16.msra.mxu0 %v2822
    %3016 = vmatprep.subr.bf16.mxu0 %v2827
    %3017 = vmatpush1.bf16.msra.mxu0 %v2826
    %3018 = vmatprep.subr.bf16.mxu0 %v2831
    %3019 = vmatpush1.bf16.msra.mxu0 %v2830
    %3020 = vmatprep.subr.bf16.mxu0 %v2835
    %3021 = vmatpush1.bf16.msra.mxu0 %v2834
    %3022 = vmatprep.subr.bf16.mxu0 %v2839
    %3023 = vmatpush1.bf16.msra.mxu0 %v2838
    %3024 = vmatprep.subr.bf16.mxu0 %v2843
    %3025 = vmatpush1.bf16.msra.mxu0 %v2842
    %3026 = vmatprep.subr.bf16.mxu0 %v2847
    %3027 = vmatpush1.bf16.msra.mxu0 %v2846
    %3028 = vmatprep.mubr.bf16.mxu0 %v2527
    %3029 = vmatmul.mubr.bf16.gmra.mrb[0].mxu0 %v2526
    %v3030 = vpop.f32.mrb[0].mxu0
    %v3031 = vadd.f32 %v2990, %v3030
    %v3032 = vpop.f32.mrb[0].mxu0
    %v3033 = vadd.f32 %v2992, %v3032
    %v3034 = vpop.f32.mrb[0].mxu0
    %v3035 = vpop.f32.mrb[0].mxu0
    %3036 = vdwg.mxu0
    %3037 = vmatprep.subr.bf16.mxu0 %v2851
    %3038 = vmatpush1.bf16.msra.mxu0 %v2850
    %3039 = vmatprep.subr.bf16.mxu0 %v2855
    %3040 = vmatpush1.bf16.msra.mxu0 %v2854
    %3041 = vmatprep.subr.bf16.mxu0 %v2859
    %3042 = vmatpush1.bf16.msra.mxu0 %v2858
    %3043 = vmatprep.subr.bf16.mxu0 %v2863
    %3044 = vmatpush1.bf16.msra.mxu0 %v2862
    %3045 = vmatprep.subr.bf16.mxu0 %v2867
    %3046 = vmatpush1.bf16.msra.mxu0 %v2866
    %3047 = vmatprep.subr.bf16.mxu0 %v2871
    %3048 = vmatpush1.bf16.msra.mxu0 %v2870
    %3049 = vmatprep.subr.bf16.mxu0 %v2875
    %3050 = vmatpush1.bf16.msra.mxu0 %v2874
    %3051 = vmatprep.subr.bf16.mxu0 %v2879
    %3052 = vmatpush1.bf16.msra.mxu0 %v2878
    %3053 = vmatprep.subr.bf16.mxu0 %v2883
    %3054 = vmatpush1.bf16.msra.mxu0 %v2882
    %3055 = vmatprep.subr.bf16.mxu0 %v2887
    %3056 = vmatpush1.bf16.msra.mxu0 %v2886
    %3057 = vmatprep.subr.bf16.mxu0 %v2891
    %3058 = vmatpush1.bf16.msra.mxu0 %v2890
    %3059 = vmatprep.subr.bf16.mxu0 %v2895
    %3060 = vmatpush1.bf16.msra.mxu0 %v2894
    %3061 = vmatprep.subr.bf16.mxu0 %v2899
    %3062 = vmatpush1.bf16.msra.mxu0 %v2898
    %3063 = vmatprep.subr.bf16.mxu0 %v2903
    %3064 = vmatpush1.bf16.msra.mxu0 %v2902
    %3065 = vmatprep.subr.bf16.mxu0 %v2907
    %3066 = vmatpush1.bf16.msra.mxu0 %v2906
    %3067 = vmatprep.subr.bf16.mxu0 %v2911
    %3068 = vmatpush1.bf16.msra.mxu0 %v2910
    %3069 = vmatprep.mubr.bf16.mxu0 %v2529
    %3070 = vmatmul.mubr.bf16.gmra.mrb[0].mxu0 %v2528
    %v3071 = vpop.f32.mrb[0].mxu0
    %v3072 = vadd.f32 %v3031, %v3071
    %v3073 = vpop.f32.mrb[0].mxu0
    %v3074 = vadd.f32 %v3033, %v3073
    %v3075 = vpop.f32.mrb[0].mxu0
    %v3076 = vpop.f32.mrb[0].mxu0
    %3077 = vdwg.mxu0
    %3078 = vmatprep.subr.bf16.mxu0 %v2661
    %3079 = vmatpush1.bf16.msra.mxu0 %v2660
    %3080 = vmatprep.subr.bf16.mxu0 %v2665
    %3081 = vmatpush1.bf16.msra.mxu0 %v2664
    %3082 = vmatprep.subr.bf16.mxu0 %v2669
    %3083 = vmatpush1.bf16.msra.mxu0 %v2668
    %3084 = vmatprep.subr.bf16.mxu0 %v2673
    %3085 = vmatpush1.bf16.msra.mxu0 %v2672
    %3086 = vmatprep.subr.bf16.mxu0 %v2677
    %3087 = vmatpush1.bf16.msra.mxu0 %v2676
    %3088 = vmatprep.subr.bf16.mxu0 %v2681
    %3089 = vmatpush1.bf16.msra.mxu0 %v2680
    %3090 = vmatprep.subr.bf16.mxu0 %v2685
    %3091 = vmatpush1.bf16.msra.mxu0 %v2684
    %3092 = vmatprep.subr.bf16.mxu0 %v2689
    %3093 = vmatpush1.bf16.msra.mxu0 %v2688
    %3094 = vmatprep.subr.bf16.mxu0 %v2693
    %3095 = vmatpush1.bf16.msra.mxu0 %v2692
    %3096 = vmatprep.subr.bf16.mxu0 %v2697
    %3097 = vmatpush1.bf16.msra.mxu0 %v2696
    %3098 = vmatprep.subr.bf16.mxu0 %v2701
    %3099 = vmatpush1.bf16.msra.mxu0 %v2700
    %3100 = vmatprep.subr.bf16.mxu0 %v2705
    %3101 = vmatpush1.bf16.msra.mxu0 %v2704
    %3102 = vmatprep.subr.bf16.mxu0 %v2709
    %3103 = vmatpush1.bf16.msra.mxu0 %v2708
    %3104 = vmatprep.subr.bf16.mxu0 %v2713
    %3105 = vmatpush1.bf16.msra.mxu0 %v2712
    %3106 = vmatprep.subr.bf16.mxu0 %v2717
    %3107 = vmatpush1.bf16.msra.mxu0 %v2716
    %3108 = vmatprep.subr.bf16.mxu0 %v2721
    %3109 = vmatpush1.bf16.msra.mxu0 %v2720
    %3110 = vmatprep.mubr.bf16.mxu0 %v2523
    %3111 = vmatmul.mubr.bf16.gmra.mrb[0].mxu0 %v2522
    %v3112 = vpop.f32.mrb[0].mxu0
    %v3113 = vadd.f32 0.0, %v3112
    %v3114 = vpop.f32.mrb[0].mxu0
    %v3115 = vadd.f32 0.0, %v3114
    %v3116 = vpop.f32.mrb[0].mxu0
    %v3117 = vpop.f32.mrb[0].mxu0
    %3118 = vdwg.mxu0
    %3119 = vmatprep.subr.bf16.mxu0 %v2725
    %3120 = vmatpush1.bf16.msra.mxu0 %v2724
    %3121 = vmatprep.subr.bf16.mxu0 %v2729
    %3122 = vmatpush1.bf16.msra.mxu0 %v2728
    %3123 = vmatprep.subr.bf16.mxu0 %v2733
    %3124 = vmatpush1.bf16.msra.mxu0 %v2732
    %3125 = vmatprep.subr.bf16.mxu0 %v2737
    %3126 = vmatpush1.bf16.msra.mxu0 %v2736
    %3127 = vmatprep.subr.bf16.mxu0 %v2741
    %3128 = vmatpush1.bf16.msra.mxu0 %v2740
    %3129 = vmatprep.subr.bf16.mxu0 %v2745
    %3130 = vmatpush1.bf16.msra.mxu0 %v2744
    %3131 = vmatprep.subr.bf16.mxu0 %v2749
    %3132 = vmatpush1.bf16.msra.mxu0 %v2748
    %3133 = vmatprep.subr.bf16.mxu0 %v2753
    %3134 = vmatpush1.bf16.msra.mxu0 %v2752
    %3135 = vmatprep.subr.bf16.mxu0 %v2757
    %3136 = vmatpush1.bf16.msra.mxu0 %v2756
    %3137 = vmatprep.subr.bf16.mxu0 %v2761
    %3138 = vmatpush1.bf16.msra.mxu0 %v2760
    %3139 = vmatprep.subr.bf16.mxu0 %v2765
    %3140 = vmatpush1.bf16.msra.mxu0 %v2764
    %3141 = vmatprep.subr.bf16.mxu0 %v2769
    %3142 = vmatpush1.bf16.msra.mxu0 %v2768
    %3143 = vmatprep.subr.bf16.mxu0 %v2773
    %3144 = vmatpush1.bf16.msra.mxu0 %v2772
    %3145 = vmatprep.subr.bf16.mxu0 %v2777
    %3146 = vmatpush1.bf16.msra.mxu0 %v2776
    %3147 = vmatprep.subr.bf16.mxu0 %v2781
    %3148 = vmatpush1.bf16.msra.mxu0 %v2780
    %3149 = vmatprep.subr.bf16.mxu0 %v2785
    %3150 = vmatpush1.bf16.msra.mxu0 %v2784
    %3151 = vmatprep.mubr.bf16.mxu0 %v2525
    %3152 = vmatmul.mubr.bf16.gmra.mrb[0].mxu0 %v2524
    %v3153 = vpop.f32.mrb[0].mxu0
    %v3154 = vadd.f32 %v3113, %v3153
    %v3155 = vpop.f32.mrb[0].mxu0
    %v3156 = vadd.f32 %v3115, %v3155
    %v3157 = vpop.f32.mrb[0].mxu0
    %v3158 = vpop.f32.mrb[0].mxu0
    %3159 = vdwg.mxu0
    %3160 = vmatprep.subr.bf16.mxu0 %v2789
    %3161 = vmatpush1.bf16.msra.mxu0 %v2788
    %3162 = vmatprep.subr.bf16.mxu0 %v2793
    %3163 = vmatpush1.bf16.msra.mxu0 %v2792
    %3164 = vmatprep.subr.bf16.mxu0 %v2797
    %3165 = vmatpush1.bf16.msra.mxu0 %v2796
    %3166 = vmatprep.subr.bf16.mxu0 %v2801
    %3167 = vmatpush1.bf16.msra.mxu0 %v2800
    %3168 = vmatprep.subr.bf16.mxu0 %v2805
    %3169 = vmatpush1.bf16.msra.mxu0 %v2804
    %3170 = vmatprep.subr.bf16.mxu0 %v2809
    %3171 = vmatpush1.bf16.msra.mxu0 %v2808
    %3172 = vmatprep.subr.bf16.mxu0 %v2813
    %3173 = vmatpush1.bf16.msra.mxu0 %v2812
    %3174 = vmatprep.subr.bf16.mxu0 %v2817
    %3175 = vmatpush1.bf16.msra.mxu0 %v2816
    %3176 = vmatprep.subr.bf16.mxu0 %v2821
    %3177 = vmatpush1.bf16.msra.mxu0 %v2820
    %3178 = vmatprep.subr.bf16.mxu0 %v2825
    %3179 = vmatpush1.bf16.msra.mxu0 %v2824
    %3180 = vmatprep.subr.bf16.mxu0 %v2829
    %3181 = vmatpush1.bf16.msra.mxu0 %v2828
    %3182 = vmatprep.subr.bf16.mxu0 %v2833
    %3183 = vmatpush1.bf16.msra.mxu0 %v2832
    %3184 = vmatprep.subr.bf16.mxu0 %v2837
    %3185 = vmatpush1.bf16.msra.mxu0 %v2836
    %3186 = vmatprep.subr.bf16.mxu0 %v2841
    %3187 = vmatpush1.bf16.msra.mxu0 %v2840
    %3188 = vmatprep.subr.bf16.mxu0 %v2845
    %3189 = vmatpush1.bf16.msra.mxu0 %v2844
    %3190 = vmatprep.subr.bf16.mxu0 %v2849
    %3191 = vmatpush1.bf16.msra.mxu0 %v2848
    %3192 = vmatprep.mubr.bf16.mxu0 %v2527
    %3193 = vmatmul.mubr.bf16.gmra.mrb[0].mxu0 %v2526
    %v3194 = vpop.f32.mrb[0].mxu0
    %v3195 = vadd.f32 %v3154, %v3194
    %v3196 = vpop.f32.mrb[0].mxu0
    %v3197 = vadd.f32 %v3156, %v3196
    %v3198 = vpop.f32.mrb[0].mxu0
    %v3199 = vpop.f32.mrb[0].mxu0
    %3200 = vdwg.mxu0
    %3201 = vmatprep.subr.bf16.mxu0 %v2853
    %3202 = vmatpush1.bf16.msra.mxu0 %v2852
    %3203 = vmatprep.subr.bf16.mxu0 %v2857
    %3204 = vmatpush1.bf16.msra.mxu0 %v2856
    %3205 = vmatprep.subr.bf16.mxu0 %v2861
    %3206 = vmatpush1.bf16.msra.mxu0 %v2860
    %3207 = vmatprep.subr.bf16.mxu0 %v2865
    %3208 = vmatpush1.bf16.msra.mxu0 %v2864
    %3209 = vmatprep.subr.bf16.mxu0 %v2869
    %3210 = vmatpush1.bf16.msra.mxu0 %v2868
    %3211 = vmatprep.subr.bf16.mxu0 %v2873
    %3212 = vmatpush1.bf16.msra.mxu0 %v2872
    %3213 = vmatprep.subr.bf16.mxu0 %v2877
    %3214 = vmatpush1.bf16.msra.mxu0 %v2876
    %3215 = vmatprep.subr.bf16.mxu0 %v2881
    %3216 = vmatpush1.bf16.msra.mxu0 %v2880
    %3217 = vmatprep.subr.bf16.mxu0 %v2885
    %3218 = vmatpush1.bf16.msra.mxu0 %v2884
    %3219 = vmatprep.subr.bf16.mxu0 %v2889
    %3220 = vmatpush1.bf16.msra.mxu0 %v2888
    %3221 = vmatprep.subr.bf16.mxu0 %v2893
    %3222 = vmatpush1.bf16.msra.mxu0 %v2892
    %3223 = vmatprep.subr.bf16.mxu0 %v2897
    %3224 = vmatpush1.bf16.msra.mxu0 %v2896
    %3225 = vmatprep.subr.bf16.mxu0 %v2901
    %3226 = vmatpush1.bf16.msra.mxu0 %v2900
    %3227 = vmatprep.subr.bf16.mxu0 %v2905
    %3228 = vmatpush1.bf16.msra.mxu0 %v2904
    %3229 = vmatprep.subr.bf16.mxu0 %v2909
    %3230 = vmatpush1.bf16.msra.mxu0 %v2908
    %3231 = vmatprep.subr.bf16.mxu0 %v2913
    %3232 = vmatpush1.bf16.msra.mxu0 %v2912
    %3233 = vmatprep.mubr.bf16.mxu0 %v2529
    %3234 = vmatmul.mubr.bf16.gmra.mrb[0].mxu0 %v2528
    %v3235 = vpop.f32.mrb[0].mxu0
    %v3236 = vadd.f32 %v3195, %v3235
    %v3237 = vpop.f32.mrb[0].mxu0
    %v3238 = vadd.f32 %v3197, %v3237
    %v3239 = vpop.f32.mrb[0].mxu0
    %v3240 = vpop.f32.mrb[0].mxu0
    %3241 = vdwg.mxu0
    %v3242 = vld [vmem:[%s5] sm:$0xf]
    %v3244 = vlaneseq
    %v3245 = vshrl.u32 %v3244, 7
    %v3246 = vsub.s32 0, %v3245
    %v3247 = vrot.slane %v3242, %v3246
    %v3248 = vlaneseq
    %v3249 = vshrl.u32 %v3248, 7
    %v3250 = vsub.s32 1, %v3249
    %v3251 = vrot.slane %v3242, %v3250
    %v3252 = vlaneseq
    %v3253 = vshrl.u32 %v3252, 7
    %v3254 = vsub.s32 2, %v3253
    %v3255 = vrot.slane %v3242, %v3254
    %v3256 = vlaneseq
    %v3257 = vshrl.u32 %v3256, 7
    %v3258 = vsub.s32 3, %v3257
    %v3259 = vrot.slane %v3242, %v3258
    %v3264 = vmul.f32 %v3072, %v3247
    %v3265 = vmul.f32 %v3074, %v3251
    %v3266 = vmul.f32 %v3236, %v3255
    %v3267 = vmul.f32 %v3238, %v3259
    %v3268 = vld [vmem:[%s6] sm:$0xf]
    %v3270 = vlaneseq
    %v3271 = vshrl.u32 %v3270, 7
    %v3272 = vsub.s32 0, %v3271
    %v3273 = vrot.slane %v3268, %v3272
    %v3274 = vlaneseq
    %v3275 = vshrl.u32 %v3274, 7
    %v3276 = vsub.s32 1, %v3275
    %v3277 = vrot.slane %v3268, %v3276
    %v3278 = vlaneseq
    %v3279 = vshrl.u32 %v3278, 7
    %v3280 = vsub.s32 2, %v3279
    %v3281 = vrot.slane %v3268, %v3280
    %v3282 = vlaneseq
    %v3283 = vshrl.u32 %v3282, 7
    %v3284 = vsub.s32 3, %v3283
    %v3285 = vrot.slane %v3268, %v3284
    %v3290 = vadd.f32 %v3264, %v3273
    %v3291 = vadd.f32 %v3265, %v3277
    %v3292 = vadd.f32 %v3266, %v3281
    %v3293 = vadd.f32 %v3267, %v3285
    %v3294 = vmax.f32 %v3290, 0.0
    %v3295 = vmax.f32 %v3291, 0.0
    %v3296 = vmax.f32 %v3292, 0.0
    %v3297 = vmax.f32 %v3293, 0.0
    %v3298 = vpack.c.bf16 %v3294, %v3294
    %v3299 = vpack.c.bf16 %v3295, %v3295
    %v3300 = vpack.c.bf16 %v3296, %v3296
    %v3301 = vpack.c.bf16 %v3297, %v3297
    %v3302 = vld [vmem:[%s7] sm:$0xf]
    %v3303 = vld [vmem:[%s7 + $0x4] sm:$0xf]
    %v3304 = vld [vmem:[%s7 + $0x8] sm:$0xf]
    %v3305 = vld [vmem:[%s7 + $0xc] sm:$0xf]
    %v3306 = vld [vmem:[%s7 + $0x10] sm:$0xf]
    %v3307 = vld [vmem:[%s7 + $0x14] sm:$0xf]
    %v3308 = vld [vmem:[%s7 + $0x18] sm:$0xf]
    %v3309 = vld [vmem:[%s7 + $0x1c] sm:$0xf]
    %v3310 = vld [vmem:[%s7 + $0x20] sm:$0xf]
    %v3311 = vld [vmem:[%s7 + $0x24] sm:$0xf]
    %v3312 = vld [vmem:[%s7 + $0x28] sm:$0xf]
    %v3313 = vld [vmem:[%s7 + $0x2c] sm:$0xf]
    %v3314 = vld [vmem:[%s7 + $0x30] sm:$0xf]
    %v3315 = vld [vmem:[%s7 + $0x34] sm:$0xf]
    %v3316 = vld [vmem:[%s7 + $0x38] sm:$0xf]
    %v3317 = vld [vmem:[%s7 + $0x3c] sm:$0xf]
    %v3318 = vld [vmem:[%s7 + $0x40] sm:$0xf]
    %v3319 = vld [vmem:[%s7 + $0x44] sm:$0xf]
    %v3320 = vld [vmem:[%s7 + $0x48] sm:$0xf]
    %v3321 = vld [vmem:[%s7 + $0x4c] sm:$0xf]
    %v3322 = vld [vmem:[%s7 + $0x50] sm:$0xf]
    %v3323 = vld [vmem:[%s7 + $0x54] sm:$0xf]
    %v3324 = vld [vmem:[%s7 + $0x58] sm:$0xf]
    %v3325 = vld [vmem:[%s7 + $0x5c] sm:$0xf]
    %v3326 = vld [vmem:[%s7 + $0x60] sm:$0xf]
    %v3327 = vld [vmem:[%s7 + $0x64] sm:$0xf]
    %v3328 = vld [vmem:[%s7 + $0x68] sm:$0xf]
    %v3329 = vld [vmem:[%s7 + $0x6c] sm:$0xf]
    %v3330 = vld [vmem:[%s7 + $0x70] sm:$0xf]
    %v3331 = vld [vmem:[%s7 + $0x74] sm:$0xf]
    %v3332 = vld [vmem:[%s7 + $0x78] sm:$0xf]
    %v3333 = vld [vmem:[%s7 + $0x7c] sm:$0xf]
    %v3334 = vld [vmem:[%s7 + $0x80] sm:$0xf]
    %v3335 = vld [vmem:[%s7 + $0x84] sm:$0xf]
    %v3336 = vld [vmem:[%s7 + $0x88] sm:$0xf]
    %v3337 = vld [vmem:[%s7 + $0x8c] sm:$0xf]
    %v3338 = vld [vmem:[%s7 + $0x90] sm:$0xf]
    %v3339 = vld [vmem:[%s7 + $0x94] sm:$0xf]
    %v3340 = vld [vmem:[%s7 + $0x98] sm:$0xf]
    %v3341 = vld [vmem:[%s7 + $0x9c] sm:$0xf]
    %v3342 = vld [vmem:[%s7 + $0xa0] sm:$0xf]
    %v3343 = vld [vmem:[%s7 + $0xa4] sm:$0xf]
    %v3344 = vld [vmem:[%s7 + $0xa8] sm:$0xf]
    %v3345 = vld [vmem:[%s7 + $0xac] sm:$0xf]
    %v3346 = vld [vmem:[%s7 + $0xb0] sm:$0xf]
    %v3347 = vld [vmem:[%s7 + $0xb4] sm:$0xf]
    %v3348 = vld [vmem:[%s7 + $0xb8] sm:$0xf]
    %v3349 = vld [vmem:[%s7 + $0xbc] sm:$0xf]
    %v3350 = vld [vmem:[%s7 + $0xc0] sm:$0xf]
    %v3351 = vld [vmem:[%s7 + $0xc4] sm:$0xf]
    %v3352 = vld [vmem:[%s7 + $0xc8] sm:$0xf]
    %v3353 = vld [vmem:[%s7 + $0xcc] sm:$0xf]
    %v3354 = vld [vmem:[%s7 + $0xd0] sm:$0xf]
    %v3355 = vld [vmem:[%s7 + $0xd4] sm:$0xf]
    %v3356 = vld [vmem:[%s7 + $0xd8] sm:$0xf]
    %v3357 = vld [vmem:[%s7 + $0xdc] sm:$0xf]
    %v3358 = vld [vmem:[%s7 + $0xe0] sm:$0xf]
    %v3359 = vld [vmem:[%s7 + $0xe4] sm:$0xf]
    %v3360 = vld [vmem:[%s7 + $0xe8] sm:$0xf]
    %v3361 = vld [vmem:[%s7 + $0xec] sm:$0xf]
    %v3362 = vld [vmem:[%s7 + $0xf0] sm:$0xf]
    %v3363 = vld [vmem:[%s7 + $0xf4] sm:$0xf]
    %v3364 = vld [vmem:[%s7 + $0xf8] sm:$0xf]
    %v3365 = vld [vmem:[%s7 + $0xfc] sm:$0xf]
    %v3366 = vld [vmem:[%s8] sm:$0x1]
    %v3368 = vlaneseq
    %v3369 = vshrl.u32 %v3368, 7
    %v3370 = vsub.s32 0, %v3369
    %v3371 = vrot.slane %v3366, %v3370
    %v3437 = vunpack.c.l.b16 %v3302
    %v3438 = vunpack.c.l.b16 %v3303
    %v3439 = vunpack.c.l.b16 %v3304
    %v3440 = vunpack.c.l.b16 %v3305
    %v3441 = vunpack.c.l.b16 %v3306
    %v3442 = vunpack.c.l.b16 %v3307
    %v3443 = vunpack.c.l.b16 %v3308
    %v3444 = vunpack.c.l.b16 %v3309
    %v3445 = vunpack.c.l.b16 %v3310
    %v3446 = vunpack.c.l.b16 %v3311
    %v3447 = vunpack.c.l.b16 %v3312
    %v3448 = vunpack.c.l.b16 %v3313
    %v3449 = vunpack.c.l.b16 %v3314
    %v3450 = vunpack.c.l.b16 %v3315
    %v3451 = vunpack.c.l.b16 %v3316
    %v3452 = vunpack.c.l.b16 %v3317
    %v3453 = vunpack.c.l.b16 %v3318
    %v3454 = vunpack.c.l.b16 %v3319
    %v3455 = vunpack.c.l.b16 %v3320
    %v3456 = vunpack.c.l.b16 %v3321
    %v3457 = vunpack.c.l.b16 %v3322
    %v3458 = vunpack.c.l.b16 %v3323
    %v3459 = vunpack.c.l.b16 %v3324
    %v3460 = vunpack.c.l.b16 %v3325
    %v3461 = vunpack.c.l.b16 %v3326
    %v3462 = vunpack.c.l.b16 %v3327
    %v3463 = vunpack.c.l.b16 %v3328
    %v3464 = vunpack.c.l.b16 %v3329
    %v3465 = vunpack.c.l.b16 %v3330
    %v3466 = vunpack.c.l.b16 %v3331
    %v3467 = vunpack.c.l.b16 %v3332
    %v3468 = vunpack.c.l.b16 %v3333
    %v3469 = vunpack.c.l.b16 %v3334
    %v3470 = vunpack.c.l.b16 %v3335
    %v3471 = vunpack.c.l.b16 %v3336
    %v3472 = vunpack.c.l.b16 %v3337
    %v3473 = vunpack.c.l.b16 %v3338
    %v3474 = vunpack.c.l.b16 %v3339
    %v3475 = vunpack.c.l.b16 %v3340
    %v3476 = vunpack.c.l.b16 %v3341
    %v3477 = vunpack.c.l.b16 %v3342
    %v3478 = vunpack.c.l.b16 %v3343
    %v3479 = vunpack.c.l.b16 %v3344
    %v3480 = vunpack.c.l.b16 %v3345
    %v3481 = vunpack.c.l.b16 %v3346
    %v3482 = vunpack.c.l.b16 %v3347
    %v3483 = vunpack.c.l.b16 %v3348
    %v3484 = vunpack.c.l.b16 %v3349
    %v3485 = vunpack.c.l.b16 %v3350
    %v3486 = vunpack.c.l.b16 %v3351
    %v3487 = vunpack.c.l.b16 %v3352
    %v3488 = vunpack.c.l.b16 %v3353
    %v3489 = vunpack.c.l.b16 %v3354
    %v3490 = vunpack.c.l.b16 %v3355
    %v3491 = vunpack.c.l.b16 %v3356
    %v3492 = vunpack.c.l.b16 %v3357
    %v3493 = vunpack.c.l.b16 %v3358
    %v3494 = vunpack.c.l.b16 %v3359
    %v3495 = vunpack.c.l.b16 %v3360
    %v3496 = vunpack.c.l.b16 %v3361
    %v3497 = vunpack.c.l.b16 %v3362
    %v3498 = vunpack.c.l.b16 %v3363
    %v3499 = vunpack.c.l.b16 %v3364
    %v3500 = vunpack.c.l.b16 %v3365
    %v3501 = vpack.c.b16 %v3438, %v3437
    %v3502 = vpack.c.b16 %v3440, %v3439
    %v3503 = vpack.c.b16 %v3442, %v3441
    %v3504 = vpack.c.b16 %v3444, %v3443
    %v3505 = vpack.c.b16 %v3446, %v3445
    %v3506 = vpack.c.b16 %v3448, %v3447
    %v3507 = vpack.c.b16 %v3450, %v3449
    %v3508 = vpack.c.b16 %v3452, %v3451
    %v3509 = vpack.c.b16 %v3454, %v3453
    %v3510 = vpack.c.b16 %v3456, %v3455
    %v3511 = vpack.c.b16 %v3458, %v3457
    %v3512 = vpack.c.b16 %v3460, %v3459
    %v3513 = vpack.c.b16 %v3462, %v3461
    %v3514 = vpack.c.b16 %v3464, %v3463
    %v3515 = vpack.c.b16 %v3466, %v3465
    %v3516 = vpack.c.b16 %v3468, %v3467
    %v3517 = vpack.c.b16 %v3470, %v3469
    %v3518 = vpack.c.b16 %v3472, %v3471
    %v3519 = vpack.c.b16 %v3474, %v3473
    %v3520 = vpack.c.b16 %v3476, %v3475
    %v3521 = vpack.c.b16 %v3478, %v3477
    %v3522 = vpack.c.b16 %v3480, %v3479
    %v3523 = vpack.c.b16 %v3482, %v3481
    %v3524 = vpack.c.b16 %v3484, %v3483
    %v3525 = vpack.c.b16 %v3486, %v3485
    %v3526 = vpack.c.b16 %v3488, %v3487
    %v3527 = vpack.c.b16 %v3490, %v3489
    %v3528 = vpack.c.b16 %v3492, %v3491
    %v3529 = vpack.c.b16 %v3494, %v3493
    %v3530 = vpack.c.b16 %v3496, %v3495
    %v3531 = vpack.c.b16 %v3498, %v3497
    %v3532 = vpack.c.b16 %v3500, %v3499
    %3565 = vmatprep.subr.bf16.mxu0 0
    %3566 = vmatpush1.bf16.msra.mxu0 %v3501
    %3567 = vmatprep.subr.bf16.mxu0 0
    %3568 = vmatpush1.bf16.msra.mxu0 %v3502
    %3569 = vmatprep.subr.bf16.mxu0 0
    %3570 = vmatpush1.bf16.msra.mxu0 %v3503
    %3571 = vmatprep.subr.bf16.mxu0 0
    %3572 = vmatpush1.bf16.msra.mxu0 %v3504
    %3573 = vmatprep.subr.bf16.mxu0 0
    %3574 = vmatpush1.bf16.msra.mxu0 %v3505
    %3575 = vmatprep.subr.bf16.mxu0 0
    %3576 = vmatpush1.bf16.msra.mxu0 %v3506
    %3577 = vmatprep.subr.bf16.mxu0 0
    %3578 = vmatpush1.bf16.msra.mxu0 %v3507
    %3579 = vmatprep.subr.bf16.mxu0 0
    %3580 = vmatpush1.bf16.msra.mxu0 %v3508
    %3581 = vmatprep.subr.bf16.mxu0 0
    %3582 = vmatpush1.bf16.msra.mxu0 %v3509
    %3583 = vmatprep.subr.bf16.mxu0 0
    %3584 = vmatpush1.bf16.msra.mxu0 %v3510
    %3585 = vmatprep.subr.bf16.mxu0 0
    %3586 = vmatpush1.bf16.msra.mxu0 %v3511
    %3587 = vmatprep.subr.bf16.mxu0 0
    %3588 = vmatpush1.bf16.msra.mxu0 %v3512
    %3589 = vmatprep.subr.bf16.mxu0 0
    %3590 = vmatpush1.bf16.msra.mxu0 %v3513
    %3591 = vmatprep.subr.bf16.mxu0 0
    %3592 = vmatpush1.bf16.msra.mxu0 %v3514
    %3593 = vmatprep.subr.bf16.mxu0 0
    %3594 = vmatpush1.bf16.msra.mxu0 %v3515
    %3595 = vmatprep.subr.bf16.mxu0 0
    %3596 = vmatpush1.bf16.msra.mxu0 %v3516
    %3597 = vmatprep.mubr.bf16.mxu0 %v3299
    %3598 = vmatmul.mubr.bf16.gmra.mrb[0].mxu0 %v3298
    %v3599 = vpop.f32.mrb[0].mxu0
    %v3600 = vadd.f32 %v3371, %v3599
    %v3601 = vpop.f32.mrb[0].mxu0
    %v3602 = vpop.f32.mrb[0].mxu0
    %v3603 = vpop.f32.mrb[0].mxu0
    %3604 = vdwg.mxu0
    %3605 = vmatprep.subr.bf16.mxu0 0
    %3606 = vmatpush1.bf16.msra.mxu0 %v3517
    %3607 = vmatprep.subr.bf16.mxu0 0
    %3608 = vmatpush1.bf16.msra.mxu0 %v3518
    %3609 = vmatprep.subr.bf16.mxu0 0
    %3610 = vmatpush1.bf16.msra.mxu0 %v3519
    %3611 = vmatprep.subr.bf16.mxu0 0
    %3612 = vmatpush1.bf16.msra.mxu0 %v3520
    %3613 = vmatprep.subr.bf16.mxu0 0
    %3614 = vmatpush1.bf16.msra.mxu0 %v3521
    %3615 = vmatprep.subr.bf16.mxu0 0
    %3616 = vmatpush1.bf16.msra.mxu0 %v3522
    %3617 = vmatprep.subr.bf16.mxu0 0
    %3618 = vmatpush1.bf16.msra.mxu0 %v3523
    %3619 = vmatprep.subr.bf16.mxu0 0
    %3620 = vmatpush1.bf16.msra.mxu0 %v3524
    %3621 = vmatprep.subr.bf16.mxu0 0
    %3622 = vmatpush1.bf16.msra.mxu0 %v3525
    %3623 = vmatprep.subr.bf16.mxu0 0
    %3624 = vmatpush1.bf16.msra.mxu0 %v3526
    %3625 = vmatprep.subr.bf16.mxu0 0
    %3626 = vmatpush1.bf16.msra.mxu0 %v3527
    %3627 = vmatprep.subr.bf16.mxu0 0
    %3628 = vmatpush1.bf16.msra.mxu0 %v3528
    %3629 = vmatprep.subr.bf16.mxu0 0
    %3630 = vmatpush1.bf16.msra.mxu0 %v3529
    %3631 = vmatprep.subr.bf16.mxu0 0
    %3632 = vmatpush1.bf16.msra.mxu0 %v3530
    %3633 = vmatprep.subr.bf16.mxu0 0
    %3634 = vmatpush1.bf16.msra.mxu0 %v3531
    %3635 = vmatprep.subr.bf16.mxu0 0
    %3636 = vmatpush1.bf16.msra.mxu0 %v3532
    %3637 = vmatprep.mubr.bf16.mxu0 %v3301
    %3638 = vmatmul.mubr.bf16.gmra.mrb[0].mxu0 %v3300
    %v3639 = vpop.f32.mrb[0].mxu0
    %v3640 = vadd.f32 %v3600, %v3639
    %v3641 = vpop.f32.mrb[0].mxu0
    %v3642 = vpop.f32.mrb[0].mxu0
    %v3643 = vpop.f32.mrb[0].mxu0
    %3644 = vdwg.mxu0
    %3645 = vst [vmem:[#allocation2] sm:$0xff] %v3640
    // Predicated region
    $region38: #{nepali_cnn_forward.5} parent=1 // pred_check
      _
    $region39: #{nepali_cnn_forward.5} parent=1 // pred_check_branch
      %3647 = sbr.rel (0) target = $region41
    $region40: #{nepali_cnn_forward.5} parent=1 // pred_region
      %s3649 = ssub.s32 128, 128
      %3650 = vsyncadd [#allocation3], %s3649
      %s3652 = sshll.u32 [#allocation2], 4
      %s3653 = int_to_ptr.vmem [resolvable:$true] %s3652
      %3655 = dma.vmem_to_hbm [thread:$0]  %s3653, 128, %s9, [#allocation3]
    $region41: #{nepali_cnn_forward.5} parent=1 // pred_fallthru
      _
    // Predicated region
    $region42: #{nepali_cnn_forward.5} parent=1 // pred_check
      _
    $region43: #{nepali_cnn_forward.5} parent=1 // pred_check_branch
      %3657 = sbr.rel (0) target = $region45
    $region44: #{nepali_cnn_forward.5} parent=1 // pred_region
      %3658 = dma.done [#allocation3], 128
    $region45: #{nepali_cnn_forward.5} parent=1 // pred_fallthru
      _
    %3659 = vsyncpa [#allocation3], 1

</llo_original>
